<compile_context>
chip_gen: v5e
topology: v5e:2x2
jax: 0.10.0
libtpu: 0.0.40
codegen_flags: <defaults>
</compile_context>

<pallas_src>
import functools
import math

import jax
import jax.numpy as jnp
from jax import lax
from jax.experimental import pallas as pl
from jax.experimental.pallas import tpu as pltpu

# Operand dtype fed to the MXU (accumulation is always float32 via
# preferred_element_type).  Flip to jnp.bfloat16 on v6e/v7x for ~2x MXU rate.
MXU_DTYPE = jnp.float32


# ------------------------------ kernel helpers -------------------------------

def _round_up(v, m):
    return -(-v // m) * m


def _flat_coords(hw, w, c):
    """(flat_index, x) int32 arrays of shape (hw, c) for a row-major (y*w + x)
    flattened image.  w must be a power of two (x = flat & (w-1))."""
    ridx = lax.broadcasted_iota(jnp.int32, (hw, c), 0)
    xx = jnp.bitwise_and(ridx, w - 1)
    return ridx, xx


def _shifted_tap(src_ref, base, hw, h, w, oy, ox, ridx, xx, fill):
    """Read the feature map stored in rows [base, base+hw) of `src_ref`
    (flattened row-major) shifted by (oy, ox) pixels; positions falling
    outside the image are replaced by `fill` (zero padding of the conv)."""
    piece = src_ref[pl.ds(base + oy * w + ox, hw), :]
    conds = []
    if oy > 0:
        conds.append(ridx < (h - oy) * w)      # y + oy <= h-1
    if oy < 0:
        conds.append(ridx >= (-oy) * w)        # y + oy >= 0
    if ox > 0:
        conds.append(xx < w - ox)              # x + ox <= w-1
    if ox < 0:
        conds.append(xx >= -ox)                # x + ox >= 0
    if conds:
        valid = conds[0]
        for cnd in conds[1:]:
            valid = valid & cnd
        piece = jnp.where(valid, piece, fill)
    return piece


def _rev_cummax_inplace(ref, base, hw, stride, extent, coord, scale):
    """Reverse cumulative max along the spatial axis whose flat stride is
    `stride` and length is `extent`, computed in place over rows
    [base, base+hw) of `ref` with log2(extent) Hillis-Steele steps.
    `coord < (extent - s) * scale` is the "neighbour s steps ahead exists"
    predicate (coord = flat index & scale = stride for y, coord = x & 1 for x).
    """
    s = 1
    while s < extent:
        cur = ref[pl.ds(base, hw), :]
        nxt = ref[pl.ds(base + s * stride, hw), :]
        nxt = jnp.where(coord < (extent - s) * scale, nxt, -jnp.inf)
        ref[pl.ds(base, hw), :] = jnp.maximum(cur, nxt)
        s *= 2


def _scratch_rows(H, W):
    """Row counts for the flat halo scratch buffers."""
    HW = H * W
    base = _round_up(W + 1, 8)                 # room for the 3x3 halo reads below
    max_sy = 1
    while max_sy * 2 < H:
        max_sy *= 2
    max_sx = 1
    while max_sx * 2 < W:
        max_sx *= 2
    mpad = _round_up(base + HW + max(W + 1, max_sy * W), 8)
    lpool = _round_up(HW + max_sx, 8)
    lpad = _round_up(base + HW + W + 1, 8)
    return base, mpad, lpool, lpad


# ------------------------------- fused kernel --------------------------------

def _corner_pool_kernel(xpatch_ref, xflat_ref,
                        w1_ref, s1_ref, c1_ref,
                        w2_ref, s2_ref, c2_ref,
                        wm_ref, sm_ref, cm_ref,
                        wsc_ref, ssc_ref, csc_ref,
                        wl_ref, sl_ref, cl_ref,
                        o_ref,
                        mpad_ref, lpool_ref, lpad_ref,
                        *, H, W, base):
    HW = H * W
    Cmid = w1_ref.shape[-1]        # 128
    Cout = o_ref.shape[-1]         # pred_dim

    ridx_m, xx_m = _flat_coords(HW, W, Cmid)
    ridx_o, xx_o = _flat_coords(HW, W, Cout)

    def mm(a, b):                  # MXU matmul, float32 accumulation
        return jnp.dot(a.astype(MXU_DTYPE), b,
                       preferred_element_type=jnp.float32)

    # ---- branch1 / branch2: 3x3 conv as a single K=9*Cin matmul + BN + ReLU.
    xpatch = xpatch_ref[0]                                       # (HW, 9*Cin)
    a1 = jnp.maximum(mm(xpatch, w1_ref[...]) * s1_ref[...] + c1_ref[...], 0.0)
    a2 = jnp.maximum(mm(xpatch, w2_ref[...]) * s2_ref[...] + c2_ref[...], 0.0)

    # ---- TopPool(branch1): reverse cummax along y, in place in the halo
    # scratch that later feeds the merge conv.
    mpad_ref[pl.ds(base, HW), :] = a1
    _rev_cummax_inplace(mpad_ref, base, HW, W, H, ridx_m, W)

    # ---- LeftPool(branch2): reverse cummax along x.
    lpool_ref[pl.ds(0, HW), :] = a2
    _rev_cummax_inplace(lpool_ref, 0, HW, 1, W, xx_m, 1)

    # ---- merged = pool1 + pool2 (fused add, stays in VMEM).
    mpad_ref[pl.ds(base, HW), :] = (mpad_ref[pl.ds(base, HW), :] +
                                    lpool_ref[pl.ds(0, HW), :])

    # ---- branchMerge: 3x3 conv (Cmid -> Cout) as ONE K = 9*Cmid matmul + BN.
    # The nine shifted windows are lane-aligned (128 wide), so the concat
    # along the contraction axis is a pure vreg stacking.
    taps = [(ky - 1, kx - 1) for ky in range(3) for kx in range(3)]
    pieces = [_shifted_tap(mpad_ref, base, HW, H, W, oy, ox, ridx_m, xx_m, 0.0)
              for (oy, ox) in taps]
    patch_m = jnp.concatenate(pieces, axis=-1)                   # (HW, 9*Cmid)
    p_bn1 = mm(patch_m, wm_ref[...]) * sm_ref[...] + cm_ref[...]

    # ---- shortcut 1x1 conv + BN, residual add, mix ReLU (fused epilogue).
    sc = mm(xflat_ref[0], wsc_ref[...]) * ssc_ref[...] + csc_ref[...]
    relu1 = jnp.maximum(p_bn1 + sc, 0.0)                         # (HW, Cout)

    # ---- lastConv: 3x3 conv (Cout -> Cout) + BN + ReLU.  Cout (= pred_dim)
    # is tiny, so keep 9 accumulated matmuls (4-wide windows cannot be
    # lane-aligned-concatenated).
    lpad_ref[pl.ds(base, HW), :] = relu1
    acc = jnp.zeros((HW, Cout), jnp.float32)
    for t, (oy, ox) in enumerate(taps):
        piece = _shifted_tap(lpad_ref, base, HW, H, W, oy, ox,
                             ridx_o, xx_o, 0.0)
        acc = acc + mm(piece, wl_ref[t])
    out = jnp.maximum(acc * sl_ref[...] + cl_ref[...], 0.0)
    o_ref[0] = out.astype(o_ref.dtype)


# --------------------------------- wrapper -----------------------------------

def corner_pool_forward(x_nchw, params):
    """Mirrors CornerPool.forward.  Input/output in NCHW like PyTorch."""
    x = jnp.transpose(x_nchw, (0, 2, 3, 1)).astype(jnp.float32)  # NCHW -> NHWC
    N, H, W, Cin = x.shape
    HW = H * W
    assert W > 0 and (W & (W - 1)) == 0, "flat-index masks assume W = 2**k"

    # im2col of the tiny pred_dim-channel input, built ONCE and shared by
    # branch1 and branch2 (each branch conv becomes a single K=9*Cin matmul).
    xp = jnp.pad(x, ((0, 0), (1, 1), (1, 1), (0, 0)))
    xpatch = jnp.concatenate(
        [xp[:, ky:ky + H, kx:kx + W, :] for ky in range(3) for kx in range(3)],
        axis=-1).reshape(N, HW, 9 * Cin).astype(MXU_DTYPE)
    xflat = x.reshape(N, HW, Cin).astype(MXU_DTYPE)

    w1, s1, c1 = params["branch1"]
    w2, s2, c2 = params["branch2"]
    wm, sm, cm = params["merge"]
    wsc, ssc, csc = params["shortcut"]
    wl, sl, cl = params["last"]
    Cmid = w1.shape[-1]
    Cout = wm.shape[-1]

    # tap order (ky major, kx minor, Cin inner) matches the xpatch / in-kernel
    # window construction.
    w1 = w1.reshape(9 * Cin, Cmid).astype(MXU_DTYPE)
    w2 = w2.reshape(9 * Cin, Cmid).astype(MXU_DTYPE)
    wm = wm.reshape(9 * Cmid, Cout).astype(MXU_DTYPE)
    wsc = wsc.astype(MXU_DTYPE)
    wl = wl.reshape(9, Cout, Cout).astype(MXU_DTYPE)

    base, mpad_rows, lpool_rows, lpad_rows = _scratch_rows(H, W)
    kern = functools.partial(_corner_pool_kernel, H=H, W=W, base=base)

    def bcast(arr):
        nd = arr.ndim

        def imap(n):
            return (0,) * nd

        return pl.BlockSpec(arr.shape, imap)

    out = pl.pallas_call(
        kern,
        out_shape=jax.ShapeDtypeStruct((N, HW, Cout), jnp.float32),
        grid=(N,),
        in_specs=[
            pl.BlockSpec((1, HW, 9 * Cin), lambda n: (n, 0, 0)),
            pl.BlockSpec((1, HW, Cin), lambda n: (n, 0, 0)),
            bcast(w1), bcast(s1), bcast(c1),
            bcast(w2), bcast(s2), bcast(c2),
            bcast(wm), bcast(sm), bcast(cm),
            bcast(wsc), bcast(ssc), bcast(csc),
            bcast(wl), bcast(sl), bcast(cl),
        ],
        out_specs=pl.BlockSpec((1, HW, Cout), lambda n: (n, 0, 0)),
        scratch_shapes=[
            pltpu.VMEM((mpad_rows, Cmid), jnp.float32),   # top-pool + merge halo
            pltpu.VMEM((lpool_rows, Cmid), jnp.float32),  # left-pool buffer
            pltpu.VMEM((lpad_rows, Cout), jnp.float32),   # lastConv halo
        ],
        compiler_params=pltpu.CompilerParams(
            dimension_semantics=("parallel",)),
    )(xpatch, xflat, w1, s1, c1, w2, s2, c2, wm, sm, cm,
      wsc, ssc, csc, wl, sl, cl)

    # reshape-only epilogue; NHWC -> NCHW to match the PyTorch module.
    return jnp.transpose(out.reshape(N, H, W, Cout), (0, 3, 1, 2))


# --------------------------- parameters (synthetic) ---------------------------

def _fold_bn(key, c):
    k1, k2, k3, k4 = jax.random.split(key, 4)
    gamma = jax.random.uniform(k1, (c,), jnp.float32, 0.5, 1.5)
    beta = 0.1 * jax.random.normal(k2, (c,), jnp.float32)
    mean = 0.1 * jax.random.normal(k3, (c,), jnp.float32)
    var = jax.random.uniform(k4, (c,), jnp.float32, 0.5, 1.5)
    eps = 1e-5
    scale = gamma / jnp.sqrt(var + eps)
    shift = beta - mean * scale
    return scale.reshape(1, c), shift.reshape(1, c)


def make_params(key, pred_dim):
    keys = jax.random.split(key, 10)

    def conv_w(k, cin, cout):
        return jax.random.normal(k, (3, 3, cin, cout), jnp.float32) / math.sqrt(9 * cin)

    return {
        "branch1": (conv_w(keys[0], pred_dim, 128), *_fold_bn(keys[1], 128)),
        "branch2": (conv_w(keys[2], pred_dim, 128), *_fold_bn(keys[3], 128)),
        "merge":   (conv_w(keys[4], 128, pred_dim), *_fold_bn(keys[5], pred_dim)),
        "shortcut": (jax.random.normal(keys[6], (pred_dim, pred_dim), jnp.float32)
                     / math.sqrt(pred_dim),
                     *_fold_bn(keys[7], pred_dim)),
        "last":    (conv_w(keys[8], pred_dim, pred_dim), *_fold_bn(keys[9], pred_dim)),
    }


# ----------------------------- pure-JAX reference -----------------------------

def _conv3x3_bn_ref(x, w, s, b, relu):
    y = lax.conv_general_dilated(x, w, (1, 1), ((1, 1), (1, 1)),
                                 dimension_numbers=("NHWC", "HWIO", "NHWC"))
    y = y * s.reshape(1, 1, 1, -1) + b.reshape(1, 1, 1, -1)
    return jnp.maximum(y, 0.0) if relu else y


def corner_pool_ref(x_nchw, params):
    x = jnp.transpose(x_nchw, (0, 2, 3, 1)).astype(jnp.float32)
    p1 = _conv3x3_bn_ref(x, *params["branch1"], True)
    p2 = _conv3x3_bn_ref(x, *params["branch2"], True)
    pool1 = lax.cummax(p1, axis=1, reverse=True)
    pool2 = lax.cummax(p2, axis=2, reverse=True)
    pbn = _conv3x3_bn_ref(pool1 + pool2, *params["merge"], False)
    w_sc, s_sc, b_sc = params["shortcut"]
    sc = jnp.einsum("nhwc,cd->nhwd", x, w_sc)
    sc = sc * s_sc.reshape(1, 1, 1, -1) + b_sc.reshape(1, 1, 1, -1)
    relu1 = jnp.maximum(pbn + sc, 0.0)
    out = _conv3x3_bn_ref(relu1, *params["last"], True)
    return jnp.transpose(out, (0, 3, 1, 2))


# ------------------------------------ main ------------------------------------

if __name__ == "__main__":
    key = jax.random.PRNGKey(0)
    k_x, k_p = jax.random.split(key)

    PRED_DIM, N, H, W = 4, 2, 16, 16
    x = jax.random.normal(k_x, (N, PRED_DIM, H, W), jnp.float32)   # NCHW
    params = make_params(k_p, PRED_DIM)

    out = jax.block_until_ready(jax.jit(corner_pool_forward)(x, params))
    ref = jax.block_until_ready(corner_pool_ref(x, params))

    assert out.shape == (N, PRED_DIM, H, W), out.shape
    max_err = float(jnp.max(jnp.abs(out - ref)))
    # NOTE: with MXU_DTYPE = bfloat16 loosen this tolerance (~5e-2).
    assert jnp.allclose(out, ref, atol=2e-3, rtol=2e-3), max_err

    print("KERNEL_OK")
</pallas_src>

<mosaic_0001>
module attributes {stable_mosaic.version = 11 : i64} {
  func.func @_corner_pool_kernel(%arg0: i32, %arg1: memref<1x256x36xf32, #tpu.memory_space<vmem>>, %arg2: memref<1x256x4xf32, #tpu.memory_space<vmem>>, %arg3: memref<36x128xf32, #tpu.memory_space<vmem>>, %arg4: memref<1x128xf32, #tpu.memory_space<vmem>>, %arg5: memref<1x128xf32, #tpu.memory_space<vmem>>, %arg6: memref<36x128xf32, #tpu.memory_space<vmem>>, %arg7: memref<1x128xf32, #tpu.memory_space<vmem>>, %arg8: memref<1x128xf32, #tpu.memory_space<vmem>>, %arg9: memref<1152x4xf32, #tpu.memory_space<vmem>>, %arg10: memref<1x4xf32, #tpu.memory_space<vmem>>, %arg11: memref<1x4xf32, #tpu.memory_space<vmem>>, %arg12: memref<4x4xf32, #tpu.memory_space<vmem>>, %arg13: memref<1x4xf32, #tpu.memory_space<vmem>>, %arg14: memref<1x4xf32, #tpu.memory_space<vmem>>, %arg15: memref<9x4x4xf32, #tpu.memory_space<vmem>>, %arg16: memref<1x4xf32, #tpu.memory_space<vmem>>, %arg17: memref<1x4xf32, #tpu.memory_space<vmem>>, %arg18: memref<1x256x4xf32, #tpu.memory_space<vmem>>, %arg19: memref<408x128xf32, #tpu.memory_space<vmem>>, %arg20: memref<264x128xf32, #tpu.memory_space<vmem>>, %arg21: memref<304x4xf32, #tpu.memory_space<vmem>>) attributes {dimension_semantics = [#tpu.dimension_semantics<parallel>], iteration_bounds = array<i64: 2>, scalar_prefetch = 0 : i64, scratch_operands = 3 : i64, tpu.core_type = #tpu.core_type<tc>, window_params = [{transform_indices = @transform_0, window_bounds = array<i64: 1, 256, 36>}, {transform_indices = @transform_1, window_bounds = array<i64: 1, 256, 4>}, {pipeline_mode = #tpu.pipeline_mode<synchronous>, transform_indices = @transform_2, window_bounds = array<i64: 36, 128>}, {pipeline_mode = #tpu.pipeline_mode<synchronous>, transform_indices = @transform_3, window_bounds = array<i64: 1, 128>}, {pipeline_mode = #tpu.pipeline_mode<synchronous>, transform_indices = @transform_4, window_bounds = array<i64: 1, 128>}, {pipeline_mode = #tpu.pipeline_mode<synchronous>, transform_indices = @transform_5, window_bounds = array<i64: 36, 128>}, {pipeline_mode = #tpu.pipeline_mode<synchronous>, transform_indices = @transform_6, window_bounds = array<i64: 1, 128>}, {pipeline_mode = #tpu.pipeline_mode<synchronous>, transform_indices = @transform_7, window_bounds = array<i64: 1, 128>}, {pipeline_mode = #tpu.pipeline_mode<synchronous>, transform_indices = @transform_8, window_bounds = array<i64: 1152, 4>}, {pipeline_mode = #tpu.pipeline_mode<synchronous>, transform_indices = @transform_9, window_bounds = array<i64: 1, 4>}, {pipeline_mode = #tpu.pipeline_mode<synchronous>, transform_indices = @transform_10, window_bounds = array<i64: 1, 4>}, {pipeline_mode = #tpu.pipeline_mode<synchronous>, transform_indices = @transform_11, window_bounds = array<i64: 4, 4>}, {pipeline_mode = #tpu.pipeline_mode<synchronous>, transform_indices = @transform_12, window_bounds = array<i64: 1, 4>}, {pipeline_mode = #tpu.pipeline_mode<synchronous>, transform_indices = @transform_13, window_bounds = array<i64: 1, 4>}, {pipeline_mode = #tpu.pipeline_mode<synchronous>, transform_indices = @transform_14, window_bounds = array<i64: 9, 4, 4>}, {pipeline_mode = #tpu.pipeline_mode<synchronous>, transform_indices = @transform_15, window_bounds = array<i64: 1, 4>}, {pipeline_mode = #tpu.pipeline_mode<synchronous>, transform_indices = @transform_16, window_bounds = array<i64: 1, 4>}, {transform_indices = @transform_17, window_bounds = array<i64: 1, 256, 4>}]} {
    %0 = tpu.iota {dimensions = array<i32: 0>} : vector<256x128xi32>
    %c15_i32 = arith.constant 15 : i32
    %1 = vector.broadcast %c15_i32 : i32 to vector<256x128xi32>
    %2 = arith.andi %0, %1 : vector<256x128xi32>
    %3 = tpu.iota {dimensions = array<i32: 0>} : vector<256x4xi32>
    %c15_i32_0 = arith.constant 15 : i32
    %4 = vector.broadcast %c15_i32_0 : i32 to vector<256x4xi32>
    %5 = arith.andi %3, %4 : vector<256x4xi32>
    %c0 = arith.constant 0 : index
    %c0_1 = arith.constant 0 : index
    %c0_2 = arith.constant 0 : index
    %6 = vector.load %arg1[%c0, %c0_1, %c0_2] : memref<1x256x36xf32, #tpu.memory_space<vmem>>, vector<1x256x36xf32>
    %7 = vector.shape_cast %6 : vector<1x256x36xf32> to vector<256x36xf32>
    %c0_3 = arith.constant 0 : index
    %c0_4 = arith.constant 0 : index
    %8 = vector.load %arg3[%c0_3, %c0_4] : memref<36x128xf32, #tpu.memory_space<vmem>>, vector<36x128xf32>
    %cst = arith.constant dense<0.000000e+00> : vector<256x128xf32>
    %9 = tpu.matmul %7, %8, %cst {dimension_numbers = #tpu.dot_dimension_numbers<[1], [0], [0], [1], [0, 0, 1, 1], [], []>} : vector<256x36xf32>, vector<36x128xf32>, vector<256x128xf32> -> vector<256x128xf32>
    %c0_5 = arith.constant 0 : index
    %c0_6 = arith.constant 0 : index
    %10 = vector.load %arg4[%c0_5, %c0_6] : memref<1x128xf32, #tpu.memory_space<vmem>>, vector<1x128xf32>
    %11 = vector.broadcast %10 : vector<1x128xf32> to vector<256x128xf32>
    %12 = arith.mulf %9, %11 : vector<256x128xf32>
    %c0_7 = arith.constant 0 : index
    %c0_8 = arith.constant 0 : index
    %13 = vector.load %arg5[%c0_7, %c0_8] : memref<1x128xf32, #tpu.memory_space<vmem>>, vector<1x128xf32>
    %14 = vector.broadcast %13 : vector<1x128xf32> to vector<256x128xf32>
    %15 = arith.addf %12, %14 : vector<256x128xf32>
    %cst_9 = arith.constant 0.000000e+00 : f32
    %16 = vector.broadcast %cst_9 : f32 to vector<256x128xf32>
    %17 = arith.maximumf %15, %16 : vector<256x128xf32>
    %c0_10 = arith.constant 0 : index
    %c0_11 = arith.constant 0 : index
    %18 = vector.load %arg6[%c0_10, %c0_11] : memref<36x128xf32, #tpu.memory_space<vmem>>, vector<36x128xf32>
    %cst_12 = arith.constant dense<0.000000e+00> : vector<256x128xf32>
    %19 = tpu.matmul %7, %18, %cst_12 {dimension_numbers = #tpu.dot_dimension_numbers<[1], [0], [0], [1], [0, 0, 1, 1], [], []>} : vector<256x36xf32>, vector<36x128xf32>, vector<256x128xf32> -> vector<256x128xf32>
    %c0_13 = arith.constant 0 : index
    %c0_14 = arith.constant 0 : index
    %20 = vector.load %arg7[%c0_13, %c0_14] : memref<1x128xf32, #tpu.memory_space<vmem>>, vector<1x128xf32>
    %21 = vector.broadcast %20 : vector<1x128xf32> to vector<256x128xf32>
    %22 = arith.mulf %19, %21 : vector<256x128xf32>
    %c0_15 = arith.constant 0 : index
    %c0_16 = arith.constant 0 : index
    %23 = vector.load %arg8[%c0_15, %c0_16] : memref<1x128xf32, #tpu.memory_space<vmem>>, vector<1x128xf32>
    %24 = vector.broadcast %23 : vector<1x128xf32> to vector<256x128xf32>
    %25 = arith.addf %22, %24 : vector<256x128xf32>
    %cst_17 = arith.constant 0.000000e+00 : f32
    %26 = vector.broadcast %cst_17 : f32 to vector<256x128xf32>
    %27 = arith.maximumf %25, %26 : vector<256x128xf32>
    %c24 = arith.constant 24 : index
    %c0_18 = arith.constant 0 : index
    %28 = vector.load %arg19[%c24, %c0_18] : memref<408x128xf32, #tpu.memory_space<vmem>>, vector<256x128xf32>
    tpu.vector_store %arg19[%c24, %c0_18], %17 {strides = array<i32>} : memref<408x128xf32, #tpu.memory_space<vmem>>, vector<256x128xf32>,
    %c24_19 = arith.constant 24 : index
    %c0_20 = arith.constant 0 : index
    %29 = vector.load %arg19[%c24_19, %c0_20] : memref<408x128xf32, #tpu.memory_space<vmem>>, vector<256x128xf32>
    %c40 = arith.constant 40 : index
    %c0_21 = arith.constant 0 : index
    %30 = vector.load %arg19[%c40, %c0_21] : memref<408x128xf32, #tpu.memory_space<vmem>>, vector<256x128xf32>
    %c240_i32 = arith.constant 240 : i32
    %31 = vector.broadcast %c240_i32 : i32 to vector<256x128xi32>
    %32 = arith.cmpi slt, %0, %31 : vector<256x128xi32>
    %cst_22 = arith.constant 0xFF800000 : f32
    %33 = vector.broadcast %cst_22 : f32 to vector<256x128xf32>
    %34 = arith.select %32, %30, %33 : vector<256x128xi1>, vector<256x128xf32>
    %35 = arith.maximumf %29, %34 : vector<256x128xf32>
    %c24_23 = arith.constant 24 : index
    %c0_24 = arith.constant 0 : index
    %36 = vector.load %arg19[%c24_23, %c0_24] : memref<408x128xf32, #tpu.memory_space<vmem>>, vector<256x128xf32>
    tpu.vector_store %arg19[%c24_23, %c0_24], %35 {strides = array<i32>} : memref<408x128xf32, #tpu.memory_space<vmem>>, vector<256x128xf32>,
    %c24_25 = arith.constant 24 : index
    %c0_26 = arith.constant 0 : index
    %37 = vector.load %arg19[%c24_25, %c0_26] : memref<408x128xf32, #tpu.memory_space<vmem>>, vector<256x128xf32>
    %c56 = arith.constant 56 : index
    %c0_27 = arith.constant 0 : index
    %38 = vector.load %arg19[%c56, %c0_27] : memref<408x128xf32, #tpu.memory_space<vmem>>, vector<256x128xf32>
    %c224_i32 = arith.constant 224 : i32
    %39 = vector.broadcast %c224_i32 : i32 to vector<256x128xi32>
    %40 = arith.cmpi slt, %0, %39 : vector<256x128xi32>
    %cst_28 = arith.constant 0xFF800000 : f32
    %41 = vector.broadcast %cst_28 : f32 to vector<256x128xf32>
    %42 = arith.select %40, %38, %41 : vector<256x128xi1>, vector<256x128xf32>
    %43 = arith.maximumf %37, %42 : vector<256x128xf32>
    %c24_29 = arith.constant 24 : index
    %c0_30 = arith.constant 0 : index
    %44 = vector.load %arg19[%c24_29, %c0_30] : memref<408x128xf32, #tpu.memory_space<vmem>>, vector<256x128xf32>
    tpu.vector_store %arg19[%c24_29, %c0_30], %43 {strides = array<i32>} : memref<408x128xf32, #tpu.memory_space<vmem>>, vector<256x128xf32>,
    %c24_31 = arith.constant 24 : index
    %c0_32 = arith.constant 0 : index
    %45 = vector.load %arg19[%c24_31, %c0_32] : memref<408x128xf32, #tpu.memory_space<vmem>>, vector<256x128xf32>
    %c88 = arith.constant 88 : index
    %c0_33 = arith.constant 0 : index
    %46 = vector.load %arg19[%c88, %c0_33] : memref<408x128xf32, #tpu.memory_space<vmem>>, vector<256x128xf32>
    %c192_i32 = arith.constant 192 : i32
    %47 = vector.broadcast %c192_i32 : i32 to vector<256x128xi32>
    %48 = arith.cmpi slt, %0, %47 : vector<256x128xi32>
    %cst_34 = arith.constant 0xFF800000 : f32
    %49 = vector.broadcast %cst_34 : f32 to vector<256x128xf32>
    %50 = arith.select %48, %46, %49 : vector<256x128xi1>, vector<256x128xf32>
    %51 = arith.maximumf %45, %50 : vector<256x128xf32>
    %c24_35 = arith.constant 24 : index
    %c0_36 = arith.constant 0 : index
    %52 = vector.load %arg19[%c24_35, %c0_36] : memref<408x128xf32, #tpu.memory_space<vmem>>, vector<256x128xf32>
    tpu.vector_store %arg19[%c24_35, %c0_36], %51 {strides = array<i32>} : memref<408x128xf32, #tpu.memory_space<vmem>>, vector<256x128xf32>,
    %c24_37 = arith.constant 24 : index
    %c0_38 = arith.constant 0 : index
    %53 = vector.load %arg19[%c24_37, %c0_38] : memref<408x128xf32, #tpu.memory_space<vmem>>, vector<256x128xf32>
    %c152 = arith.constant 152 : index
    %c0_39 = arith.constant 0 : index
    %54 = vector.load %arg19[%c152, %c0_39] : memref<408x128xf32, #tpu.memory_space<vmem>>, vector<256x128xf32>
    %c128_i32 = arith.constant 128 : i32
    %55 = vector.broadcast %c128_i32 : i32 to vector<256x128xi32>
    %56 = arith.cmpi slt, %0, %55 : vector<256x128xi32>
    %cst_40 = arith.constant 0xFF800000 : f32
    %57 = vector.broadcast %cst_40 : f32 to vector<256x128xf32>
    %58 = arith.select %56, %54, %57 : vector<256x128xi1>, vector<256x128xf32>
    %59 = arith.maximumf %53, %58 : vector<256x128xf32>
    %c24_41 = arith.constant 24 : index
    %c0_42 = arith.constant 0 : index
    %60 = vector.load %arg19[%c24_41, %c0_42] : memref<408x128xf32, #tpu.memory_space<vmem>>, vector<256x128xf32>
    tpu.vector_store %arg19[%c24_41, %c0_42], %59 {strides = array<i32>} : memref<408x128xf32, #tpu.memory_space<vmem>>, vector<256x128xf32>,
    %c0_43 = arith.constant 0 : index
    %c0_44 = arith.constant 0 : index
    %61 = vector.load %arg20[%c0_43, %c0_44] : memref<264x128xf32, #tpu.memory_space<vmem>>, vector<256x128xf32>
    tpu.vector_store %arg20[%c0_43, %c0_44], %27 {strides = array<i32>} : memref<264x128xf32, #tpu.memory_space<vmem>>, vector<256x128xf32>,
    %c0_45 = arith.constant 0 : index
    %c0_46 = arith.constant 0 : index
    %62 = vector.load %arg20[%c0_45, %c0_46] : memref<264x128xf32, #tpu.memory_space<vmem>>, vector<256x128xf32>
    %c1 = arith.constant 1 : index
    %c0_47 = arith.constant 0 : index
    %63 = vector.load %arg20[%c1, %c0_47] : memref<264x128xf32, #tpu.memory_space<vmem>>, vector<256x128xf32>
    %c15_i32_48 = arith.constant 15 : i32
    %64 = vector.broadcast %c15_i32_48 : i32 to vector<256x128xi32>
    %65 = arith.cmpi slt, %2, %64 : vector<256x128xi32>
    %cst_49 = arith.constant 0xFF800000 : f32
    %66 = vector.broadcast %cst_49 : f32 to vector<256x128xf32>
    %67 = arith.select %65, %63, %66 : vector<256x128xi1>, vector<256x128xf32>
    %68 = arith.maximumf %62, %67 : vector<256x128xf32>
    %c0_50 = arith.constant 0 : index
    %c0_51 = arith.constant 0 : index
    %69 = vector.load %arg20[%c0_50, %c0_51] : memref<264x128xf32, #tpu.memory_space<vmem>>, vector<256x128xf32>
    tpu.vector_store %arg20[%c0_50, %c0_51], %68 {strides = array<i32>} : memref<264x128xf32, #tpu.memory_space<vmem>>, vector<256x128xf32>,
    %c0_52 = arith.constant 0 : index
    %c0_53 = arith.constant 0 : index
    %70 = vector.load %arg20[%c0_52, %c0_53] : memref<264x128xf32, #tpu.memory_space<vmem>>, vector<256x128xf32>
    %c2 = arith.constant 2 : index
    %c0_54 = arith.constant 0 : index
    %71 = vector.load %arg20[%c2, %c0_54] : memref<264x128xf32, #tpu.memory_space<vmem>>, vector<256x128xf32>
    %c14_i32 = arith.constant 14 : i32
    %72 = vector.broadcast %c14_i32 : i32 to vector<256x128xi32>
    %73 = arith.cmpi slt, %2, %72 : vector<256x128xi32>
    %cst_55 = arith.constant 0xFF800000 : f32
    %74 = vector.broadcast %cst_55 : f32 to vector<256x128xf32>
    %75 = arith.select %73, %71, %74 : vector<256x128xi1>, vector<256x128xf32>
    %76 = arith.maximumf %70, %75 : vector<256x128xf32>
    %c0_56 = arith.constant 0 : index
    %c0_57 = arith.constant 0 : index
    %77 = vector.load %arg20[%c0_56, %c0_57] : memref<264x128xf32, #tpu.memory_space<vmem>>, vector<256x128xf32>
    tpu.vector_store %arg20[%c0_56, %c0_57], %76 {strides = array<i32>} : memref<264x128xf32, #tpu.memory_space<vmem>>, vector<256x128xf32>,
    %c0_58 = arith.constant 0 : index
    %c0_59 = arith.constant 0 : index
    %78 = vector.load %arg20[%c0_58, %c0_59] : memref<264x128xf32, #tpu.memory_space<vmem>>, vector<256x128xf32>
    %c4 = arith.constant 4 : index
    %c0_60 = arith.constant 0 : index
    %79 = vector.load %arg20[%c4, %c0_60] : memref<264x128xf32, #tpu.memory_space<vmem>>, vector<256x128xf32>
    %c12_i32 = arith.constant 12 : i32
    %80 = vector.broadcast %c12_i32 : i32 to vector<256x128xi32>
    %81 = arith.cmpi slt, %2, %80 : vector<256x128xi32>
    %cst_61 = arith.constant 0xFF800000 : f32
    %82 = vector.broadcast %cst_61 : f32 to vector<256x128xf32>
    %83 = arith.select %81, %79, %82 : vector<256x128xi1>, vector<256x128xf32>
    %84 = arith.maximumf %78, %83 : vector<256x128xf32>
    %c0_62 = arith.constant 0 : index
    %c0_63 = arith.constant 0 : index
    %85 = vector.load %arg20[%c0_62, %c0_63] : memref<264x128xf32, #tpu.memory_space<vmem>>, vector<256x128xf32>
    tpu.vector_store %arg20[%c0_62, %c0_63], %84 {strides = array<i32>} : memref<264x128xf32, #tpu.memory_space<vmem>>, vector<256x128xf32>,
    %c0_64 = arith.constant 0 : index
    %c0_65 = arith.constant 0 : index
    %86 = vector.load %arg20[%c0_64, %c0_65] : memref<264x128xf32, #tpu.memory_space<vmem>>, vector<256x128xf32>
    %c8 = arith.constant 8 : index
    %c0_66 = arith.constant 0 : index
    %87 = vector.load %arg20[%c8, %c0_66] : memref<264x128xf32, #tpu.memory_space<vmem>>, vector<256x128xf32>
    %c8_i32 = arith.constant 8 : i32
    %88 = vector.broadcast %c8_i32 : i32 to vector<256x128xi32>
    %89 = arith.cmpi slt, %2, %88 : vector<256x128xi32>
    %cst_67 = arith.constant 0xFF800000 : f32
    %90 = vector.broadcast %cst_67 : f32 to vector<256x128xf32>
    %91 = arith.select %89, %87, %90 : vector<256x128xi1>, vector<256x128xf32>
    %92 = arith.maximumf %86, %91 : vector<256x128xf32>
    %c0_68 = arith.constant 0 : index
    %c0_69 = arith.constant 0 : index
    %93 = vector.load %arg20[%c0_68, %c0_69] : memref<264x128xf32, #tpu.memory_space<vmem>>, vector<256x128xf32>
    tpu.vector_store %arg20[%c0_68, %c0_69], %92 {strides = array<i32>} : memref<264x128xf32, #tpu.memory_space<vmem>>, vector<256x128xf32>,
    %c24_70 = arith.constant 24 : index
    %c0_71 = arith.constant 0 : index
    %94 = vector.load %arg19[%c24_70, %c0_71] : memref<408x128xf32, #tpu.memory_space<vmem>>, vector<256x128xf32>
    %c0_72 = arith.constant 0 : index
    %c0_73 = arith.constant 0 : index
    %95 = vector.load %arg20[%c0_72, %c0_73] : memref<264x128xf32, #tpu.memory_space<vmem>>, vector<256x128xf32>
    %96 = arith.addf %94, %95 : vector<256x128xf32>
    %c24_74 = arith.constant 24 : index
    %c0_75 = arith.constant 0 : index
    %97 = vector.load %arg19[%c24_74, %c0_75] : memref<408x128xf32, #tpu.memory_space<vmem>>, vector<256x128xf32>
    tpu.vector_store %arg19[%c24_74, %c0_75], %96 {strides = array<i32>} : memref<408x128xf32, #tpu.memory_space<vmem>>, vector<256x128xf32>,
    %c7 = arith.constant 7 : index
    %c0_76 = arith.constant 0 : index
    %98 = vector.load %arg19[%c7, %c0_76] : memref<408x128xf32, #tpu.memory_space<vmem>>, vector<256x128xf32>
    %c16_i32 = arith.constant 16 : i32
    %99 = vector.broadcast %c16_i32 : i32 to vector<256x128xi32>
    %100 = arith.cmpi sge, %0, %99 : vector<256x128xi32>
    %c1_i32 = arith.constant 1 : i32
    %101 = vector.broadcast %c1_i32 : i32 to vector<256x128xi32>
    %102 = arith.cmpi sge, %2, %101 : vector<256x128xi32>
    %103 = arith.andi %100, %102 : vector<256x128xi1>
    %cst_77 = arith.constant 0.000000e+00 : f32
    %104 = vector.broadcast %cst_77 : f32 to vector<256x128xf32>
    %105 = arith.select %103, %98, %104 : vector<256x128xi1>, vector<256x128xf32>
    %c8_78 = arith.constant 8 : index
    %c0_79 = arith.constant 0 : index
    %106 = vector.load %arg19[%c8_78, %c0_79] : memref<408x128xf32, #tpu.memory_space<vmem>>, vector<256x128xf32>
    %c16_i32_80 = arith.constant 16 : i32
    %107 = vector.broadcast %c16_i32_80 : i32 to vector<256x128xi32>
    %108 = arith.cmpi sge, %0, %107 : vector<256x128xi32>
    %cst_81 = arith.constant 0.000000e+00 : f32
    %109 = vector.broadcast %cst_81 : f32 to vector<256x128xf32>
    %110 = arith.select %108, %106, %109 : vector<256x128xi1>, vector<256x128xf32>
    %c9 = arith.constant 9 : index
    %c0_82 = arith.constant 0 : index
    %111 = vector.load %arg19[%c9, %c0_82] : memref<408x128xf32, #tpu.memory_space<vmem>>, vector<256x128xf32>
    %c16_i32_83 = arith.constant 16 : i32
    %112 = vector.broadcast %c16_i32_83 : i32 to vector<256x128xi32>
    %113 = arith.cmpi sge, %0, %112 : vector<256x128xi32>
    %c15_i32_84 = arith.constant 15 : i32
    %114 = vector.broadcast %c15_i32_84 : i32 to vector<256x128xi32>
    %115 = arith.cmpi slt, %2, %114 : vector<256x128xi32>
    %116 = arith.andi %113, %115 : vector<256x128xi1>
    %cst_85 = arith.constant 0.000000e+00 : f32
    %117 = vector.broadcast %cst_85 : f32 to vector<256x128xf32>
    %118 = arith.select %116, %111, %117 : vector<256x128xi1>, vector<256x128xf32>
    %c23 = arith.constant 23 : index
    %c0_86 = arith.constant 0 : index
    %119 = vector.load %arg19[%c23, %c0_86] : memref<408x128xf32, #tpu.memory_space<vmem>>, vector<256x128xf32>
    %c1_i32_87 = arith.constant 1 : i32
    %120 = vector.broadcast %c1_i32_87 : i32 to vector<256x128xi32>
    %121 = arith.cmpi sge, %2, %120 : vector<256x128xi32>
    %cst_88 = arith.constant 0.000000e+00 : f32
    %122 = vector.broadcast %cst_88 : f32 to vector<256x128xf32>
    %123 = arith.select %121, %119, %122 : vector<256x128xi1>, vector<256x128xf32>
    %c24_89 = arith.constant 24 : index
    %c0_90 = arith.constant 0 : index
    %124 = vector.load %arg19[%c24_89, %c0_90] : memref<408x128xf32, #tpu.memory_space<vmem>>, vector<256x128xf32>
    %c25 = arith.constant 25 : index
    %c0_91 = arith.constant 0 : index
    %125 = vector.load %arg19[%c25, %c0_91] : memref<408x128xf32, #tpu.memory_space<vmem>>, vector<256x128xf32>
    %c15_i32_92 = arith.constant 15 : i32
    %126 = vector.broadcast %c15_i32_92 : i32 to vector<256x128xi32>
    %127 = arith.cmpi slt, %2, %126 : vector<256x128xi32>
    %cst_93 = arith.constant 0.000000e+00 : f32
    %128 = vector.broadcast %cst_93 : f32 to vector<256x128xf32>
    %129 = arith.select %127, %125, %128 : vector<256x128xi1>, vector<256x128xf32>
    %c39 = arith.constant 39 : index
    %c0_94 = arith.constant 0 : index
    %130 = vector.load %arg19[%c39, %c0_94] : memref<408x128xf32, #tpu.memory_space<vmem>>, vector<256x128xf32>
    %c240_i32_95 = arith.constant 240 : i32
    %131 = vector.broadcast %c240_i32_95 : i32 to vector<256x128xi32>
    %132 = arith.cmpi slt, %0, %131 : vector<256x128xi32>
    %c1_i32_96 = arith.constant 1 : i32
    %133 = vector.broadcast %c1_i32_96 : i32 to vector<256x128xi32>
    %134 = arith.cmpi sge, %2, %133 : vector<256x128xi32>
    %135 = arith.andi %132, %134 : vector<256x128xi1>
    %cst_97 = arith.constant 0.000000e+00 : f32
    %136 = vector.broadcast %cst_97 : f32 to vector<256x128xf32>
    %137 = arith.select %135, %130, %136 : vector<256x128xi1>, vector<256x128xf32>
    %c40_98 = arith.constant 40 : index
    %c0_99 = arith.constant 0 : index
    %138 = vector.load %arg19[%c40_98, %c0_99] : memref<408x128xf32, #tpu.memory_space<vmem>>, vector<256x128xf32>
    %c240_i32_100 = arith.constant 240 : i32
    %139 = vector.broadcast %c240_i32_100 : i32 to vector<256x128xi32>
    %140 = arith.cmpi slt, %0, %139 : vector<256x128xi32>
    %cst_101 = arith.constant 0.000000e+00 : f32
    %141 = vector.broadcast %cst_101 : f32 to vector<256x128xf32>
    %142 = arith.select %140, %138, %141 : vector<256x128xi1>, vector<256x128xf32>
    %c41 = arith.constant 41 : index
    %c0_102 = arith.constant 0 : index
    %143 = vector.load %arg19[%c41, %c0_102] : memref<408x128xf32, #tpu.memory_space<vmem>>, vector<256x128xf32>
    %c240_i32_103 = arith.constant 240 : i32
    %144 = vector.broadcast %c240_i32_103 : i32 to vector<256x128xi32>
    %145 = arith.cmpi slt, %0, %144 : vector<256x128xi32>
    %c15_i32_104 = arith.constant 15 : i32
    %146 = vector.broadcast %c15_i32_104 : i32 to vector<256x128xi32>
    %147 = arith.cmpi slt, %2, %146 : vector<256x128xi32>
    %148 = arith.andi %145, %147 : vector<256x128xi1>
    %cst_105 = arith.constant 0.000000e+00 : f32
    %149 = vector.broadcast %cst_105 : f32 to vector<256x128xf32>
    %150 = arith.select %148, %143, %149 : vector<256x128xi1>, vector<256x128xf32>
    %151 = tpu.concatenate %105, %110, %118, %123, %124, %129, %137, %142, %150 in 1 : vector<256x128xf32>, vector<256x128xf32>, vector<256x128xf32>, vector<256x128xf32>, vector<256x128xf32>, vector<256x128xf32>, vector<256x128xf32>, vector<256x128xf32>, vector<256x128xf32> -> vector<256x1152xf32>
    %c0_106 = arith.constant 0 : index
    %c0_107 = arith.constant 0 : index
    %152 = vector.load %arg9[%c0_106, %c0_107] : memref<1152x4xf32, #tpu.memory_space<vmem>>, vector<1152x4xf32>
    %cst_108 = arith.constant dense<0.000000e+00> : vector<256x4xf32>
    %153 = tpu.matmul %151, %152, %cst_108 {dimension_numbers = #tpu.dot_dimension_numbers<[1], [0], [0], [1], [0, 0, 1, 1], [], []>} : vector<256x1152xf32>, vector<1152x4xf32>, vector<256x4xf32> -> vector<256x4xf32>
    %c0_109 = arith.constant 0 : index
    %c0_110 = arith.constant 0 : index
    %154 = vector.load %arg10[%c0_109, %c0_110] : memref<1x4xf32, #tpu.memory_space<vmem>>, vector<1x4xf32>
    %155 = vector.broadcast %154 : vector<1x4xf32> to vector<256x4xf32>
    %156 = arith.mulf %153, %155 : vector<256x4xf32>
    %c0_111 = arith.constant 0 : index
    %c0_112 = arith.constant 0 : index
    %157 = vector.load %arg11[%c0_111, %c0_112] : memref<1x4xf32, #tpu.memory_space<vmem>>, vector<1x4xf32>
    %158 = vector.broadcast %157 : vector<1x4xf32> to vector<256x4xf32>
    %159 = arith.addf %156, %158 : vector<256x4xf32>
    %c0_113 = arith.constant 0 : index
    %c0_114 = arith.constant 0 : index
    %c0_115 = arith.constant 0 : index
    %160 = vector.load %arg2[%c0_113, %c0_114, %c0_115] : memref<1x256x4xf32, #tpu.memory_space<vmem>>, vector<1x256x4xf32>
    %161 = vector.shape_cast %160 : vector<1x256x4xf32> to vector<256x4xf32>
    %c0_116 = arith.constant 0 : index
    %c0_117 = arith.constant 0 : index
    %162 = vector.load %arg12[%c0_116, %c0_117] : memref<4x4xf32, #tpu.memory_space<vmem>>, vector<4x4xf32>
    %cst_118 = arith.constant dense<0.000000e+00> : vector<256x4xf32>
    %163 = tpu.matmul %161, %162, %cst_118 {dimension_numbers = #tpu.dot_dimension_numbers<[1], [0], [0], [1], [0, 0, 1, 1], [], []>} : vector<256x4xf32>, vector<4x4xf32>, vector<256x4xf32> -> vector<256x4xf32>
    %c0_119 = arith.constant 0 : index
    %c0_120 = arith.constant 0 : index
    %164 = vector.load %arg13[%c0_119, %c0_120] : memref<1x4xf32, #tpu.memory_space<vmem>>, vector<1x4xf32>
    %165 = vector.broadcast %164 : vector<1x4xf32> to vector<256x4xf32>
    %166 = arith.mulf %163, %165 : vector<256x4xf32>
    %c0_121 = arith.constant 0 : index
    %c0_122 = arith.constant 0 : index
    %167 = vector.load %arg14[%c0_121, %c0_122] : memref<1x4xf32, #tpu.memory_space<vmem>>, vector<1x4xf32>
    %168 = vector.broadcast %167 : vector<1x4xf32> to vector<256x4xf32>
    %169 = arith.addf %166, %168 : vector<256x4xf32>
    %170 = arith.addf %159, %169 : vector<256x4xf32>
    %cst_123 = arith.constant 0.000000e+00 : f32
    %171 = vector.broadcast %cst_123 : f32 to vector<256x4xf32>
    %172 = arith.maximumf %170, %171 : vector<256x4xf32>
    %c24_124 = arith.constant 24 : index
    %c0_125 = arith.constant 0 : index
    %173 = vector.load %arg21[%c24_124, %c0_125] : memref<304x4xf32, #tpu.memory_space<vmem>>, vector<256x4xf32>
    tpu.vector_store %arg21[%c24_124, %c0_125], %172 {strides = array<i32>} : memref<304x4xf32, #tpu.memory_space<vmem>>, vector<256x4xf32>,
    %cst_126 = arith.constant 0.000000e+00 : f32
    %174 = vector.broadcast %cst_126 : f32 to vector<256x4xf32>
    %c7_127 = arith.constant 7 : index
    %c0_128 = arith.constant 0 : index
    %175 = vector.load %arg21[%c7_127, %c0_128] : memref<304x4xf32, #tpu.memory_space<vmem>>, vector<256x4xf32>
    %c16_i32_129 = arith.constant 16 : i32
    %176 = vector.broadcast %c16_i32_129 : i32 to vector<256x4xi32>
    %177 = arith.cmpi sge, %3, %176 : vector<256x4xi32>
    %c1_i32_130 = arith.constant 1 : i32
    %178 = vector.broadcast %c1_i32_130 : i32 to vector<256x4xi32>
    %179 = arith.cmpi sge, %5, %178 : vector<256x4xi32>
    %180 = arith.andi %177, %179 : vector<256x4xi1>
    %cst_131 = arith.constant 0.000000e+00 : f32
    %181 = vector.broadcast %cst_131 : f32 to vector<256x4xf32>
    %182 = arith.select %180, %175, %181 : vector<256x4xi1>, vector<256x4xf32>
    %c0_132 = arith.constant 0 : index
    %c0_133 = arith.constant 0 : index
    %c0_134 = arith.constant 0 : index
    %183 = vector.load %arg15[%c0_132, %c0_133, %c0_134] : memref<9x4x4xf32, #tpu.memory_space<vmem>>, vector<1x4x4xf32>
    %184 = vector.shape_cast %183 : vector<1x4x4xf32> to vector<4x4xf32>
    %cst_135 = arith.constant dense<0.000000e+00> : vector<256x4xf32>
    %185 = tpu.matmul %182, %184, %cst_135 {dimension_numbers = #tpu.dot_dimension_numbers<[1], [0], [0], [1], [0, 0, 1, 1], [], []>} : vector<256x4xf32>, vector<4x4xf32>, vector<256x4xf32> -> vector<256x4xf32>
    %186 = arith.addf %174, %185 : vector<256x4xf32>
    %c8_136 = arith.constant 8 : index
    %c0_137 = arith.constant 0 : index
    %187 = vector.load %arg21[%c8_136, %c0_137] : memref<304x4xf32, #tpu.memory_space<vmem>>, vector<256x4xf32>
    %c16_i32_138 = arith.constant 16 : i32
    %188 = vector.broadcast %c16_i32_138 : i32 to vector<256x4xi32>
    %189 = arith.cmpi sge, %3, %188 : vector<256x4xi32>
    %cst_139 = arith.constant 0.000000e+00 : f32
    %190 = vector.broadcast %cst_139 : f32 to vector<256x4xf32>
    %191 = arith.select %189, %187, %190 : vector<256x4xi1>, vector<256x4xf32>
    %c1_140 = arith.constant 1 : index
    %c0_141 = arith.constant 0 : index
    %c0_142 = arith.constant 0 : index
    %192 = vector.load %arg15[%c1_140, %c0_141, %c0_142] : memref<9x4x4xf32, #tpu.memory_space<vmem>>, vector<1x4x4xf32>
    %193 = vector.shape_cast %192 : vector<1x4x4xf32> to vector<4x4xf32>
    %cst_143 = arith.constant dense<0.000000e+00> : vector<256x4xf32>
    %194 = tpu.matmul %191, %193, %cst_143 {dimension_numbers = #tpu.dot_dimension_numbers<[1], [0], [0], [1], [0, 0, 1, 1], [], []>} : vector<256x4xf32>, vector<4x4xf32>, vector<256x4xf32> -> vector<256x4xf32>
    %195 = arith.addf %186, %194 : vector<256x4xf32>
    %c9_144 = arith.constant 9 : index
    %c0_145 = arith.constant 0 : index
    %196 = vector.load %arg21[%c9_144, %c0_145] : memref<304x4xf32, #tpu.memory_space<vmem>>, vector<256x4xf32>
    %c16_i32_146 = arith.constant 16 : i32
    %197 = vector.broadcast %c16_i32_146 : i32 to vector<256x4xi32>
    %198 = arith.cmpi sge, %3, %197 : vector<256x4xi32>
    %c15_i32_147 = arith.constant 15 : i32
    %199 = vector.broadcast %c15_i32_147 : i32 to vector<256x4xi32>
    %200 = arith.cmpi slt, %5, %199 : vector<256x4xi32>
    %201 = arith.andi %198, %200 : vector<256x4xi1>
    %cst_148 = arith.constant 0.000000e+00 : f32
    %202 = vector.broadcast %cst_148 : f32 to vector<256x4xf32>
    %203 = arith.select %201, %196, %202 : vector<256x4xi1>, vector<256x4xf32>
    %c2_149 = arith.constant 2 : index
    %c0_150 = arith.constant 0 : index
    %c0_151 = arith.constant 0 : index
    %204 = vector.load %arg15[%c2_149, %c0_150, %c0_151] : memref<9x4x4xf32, #tpu.memory_space<vmem>>, vector<1x4x4xf32>
    %205 = vector.shape_cast %204 : vector<1x4x4xf32> to vector<4x4xf32>
    %cst_152 = arith.constant dense<0.000000e+00> : vector<256x4xf32>
    %206 = tpu.matmul %203, %205, %cst_152 {dimension_numbers = #tpu.dot_dimension_numbers<[1], [0], [0], [1], [0, 0, 1, 1], [], []>} : vector<256x4xf32>, vector<4x4xf32>, vector<256x4xf32> -> vector<256x4xf32>
    %207 = arith.addf %195, %206 : vector<256x4xf32>
    %c23_153 = arith.constant 23 : index
    %c0_154 = arith.constant 0 : index
    %208 = vector.load %arg21[%c23_153, %c0_154] : memref<304x4xf32, #tpu.memory_space<vmem>>, vector<256x4xf32>
    %c1_i32_155 = arith.constant 1 : i32
    %209 = vector.broadcast %c1_i32_155 : i32 to vector<256x4xi32>
    %210 = arith.cmpi sge, %5, %209 : vector<256x4xi32>
    %cst_156 = arith.constant 0.000000e+00 : f32
    %211 = vector.broadcast %cst_156 : f32 to vector<256x4xf32>
    %212 = arith.select %210, %208, %211 : vector<256x4xi1>, vector<256x4xf32>
    %c3 = arith.constant 3 : index
    %c0_157 = arith.constant 0 : index
    %c0_158 = arith.constant 0 : index
    %213 = vector.load %arg15[%c3, %c0_157, %c0_158] : memref<9x4x4xf32, #tpu.memory_space<vmem>>, vector<1x4x4xf32>
    %214 = vector.shape_cast %213 : vector<1x4x4xf32> to vector<4x4xf32>
    %cst_159 = arith.constant dense<0.000000e+00> : vector<256x4xf32>
    %215 = tpu.matmul %212, %214, %cst_159 {dimension_numbers = #tpu.dot_dimension_numbers<[1], [0], [0], [1], [0, 0, 1, 1], [], []>} : vector<256x4xf32>, vector<4x4xf32>, vector<256x4xf32> -> vector<256x4xf32>
    %216 = arith.addf %207, %215 : vector<256x4xf32>
    %c24_160 = arith.constant 24 : index
    %c0_161 = arith.constant 0 : index
    %217 = vector.load %arg21[%c24_160, %c0_161] : memref<304x4xf32, #tpu.memory_space<vmem>>, vector<256x4xf32>
    %c4_162 = arith.constant 4 : index
    %c0_163 = arith.constant 0 : index
    %c0_164 = arith.constant 0 : index
    %218 = vector.load %arg15[%c4_162, %c0_163, %c0_164] : memref<9x4x4xf32, #tpu.memory_space<vmem>>, vector<1x4x4xf32>
    %219 = vector.shape_cast %218 : vector<1x4x4xf32> to vector<4x4xf32>
    %cst_165 = arith.constant dense<0.000000e+00> : vector<256x4xf32>
    %220 = tpu.matmul %217, %219, %cst_165 {dimension_numbers = #tpu.dot_dimension_numbers<[1], [0], [0], [1], [0, 0, 1, 1], [], []>} : vector<256x4xf32>, vector<4x4xf32>, vector<256x4xf32> -> vector<256x4xf32>
    %221 = arith.addf %216, %220 : vector<256x4xf32>
    %c25_166 = arith.constant 25 : index
    %c0_167 = arith.constant 0 : index
    %222 = vector.load %arg21[%c25_166, %c0_167] : memref<304x4xf32, #tpu.memory_space<vmem>>, vector<256x4xf32>
    %c15_i32_168 = arith.constant 15 : i32
    %223 = vector.broadcast %c15_i32_168 : i32 to vector<256x4xi32>
    %224 = arith.cmpi slt, %5, %223 : vector<256x4xi32>
    %cst_169 = arith.constant 0.000000e+00 : f32
    %225 = vector.broadcast %cst_169 : f32 to vector<256x4xf32>
    %226 = arith.select %224, %222, %225 : vector<256x4xi1>, vector<256x4xf32>
    %c5 = arith.constant 5 : index
    %c0_170 = arith.constant 0 : index
    %c0_171 = arith.constant 0 : index
    %227 = vector.load %arg15[%c5, %c0_170, %c0_171] : memref<9x4x4xf32, #tpu.memory_space<vmem>>, vector<1x4x4xf32>
    %228 = vector.shape_cast %227 : vector<1x4x4xf32> to vector<4x4xf32>
    %cst_172 = arith.constant dense<0.000000e+00> : vector<256x4xf32>
    %229 = tpu.matmul %226, %228, %cst_172 {dimension_numbers = #tpu.dot_dimension_numbers<[1], [0], [0], [1], [0, 0, 1, 1], [], []>} : vector<256x4xf32>, vector<4x4xf32>, vector<256x4xf32> -> vector<256x4xf32>
    %230 = arith.addf %221, %229 : vector<256x4xf32>
    %c39_173 = arith.constant 39 : index
    %c0_174 = arith.constant 0 : index
    %231 = vector.load %arg21[%c39_173, %c0_174] : memref<304x4xf32, #tpu.memory_space<vmem>>, vector<256x4xf32>
    %c240_i32_175 = arith.constant 240 : i32
    %232 = vector.broadcast %c240_i32_175 : i32 to vector<256x4xi32>
    %233 = arith.cmpi slt, %3, %232 : vector<256x4xi32>
    %c1_i32_176 = arith.constant 1 : i32
    %234 = vector.broadcast %c1_i32_176 : i32 to vector<256x4xi32>
    %235 = arith.cmpi sge, %5, %234 : vector<256x4xi32>
    %236 = arith.andi %233, %235 : vector<256x4xi1>
    %cst_177 = arith.constant 0.000000e+00 : f32
    %237 = vector.broadcast %cst_177 : f32 to vector<256x4xf32>
    %238 = arith.select %236, %231, %237 : vector<256x4xi1>, vector<256x4xf32>
    %c6 = arith.constant 6 : index
    %c0_178 = arith.constant 0 : index
    %c0_179 = arith.constant 0 : index
    %239 = vector.load %arg15[%c6, %c0_178, %c0_179] : memref<9x4x4xf32, #tpu.memory_space<vmem>>, vector<1x4x4xf32>
    %240 = vector.shape_cast %239 : vector<1x4x4xf32> to vector<4x4xf32>
    %cst_180 = arith.constant dense<0.000000e+00> : vector<256x4xf32>
    %241 = tpu.matmul %238, %240, %cst_180 {dimension_numbers = #tpu.dot_dimension_numbers<[1], [0], [0], [1], [0, 0, 1, 1], [], []>} : vector<256x4xf32>, vector<4x4xf32>, vector<256x4xf32> -> vector<256x4xf32>
    %242 = arith.addf %230, %241 : vector<256x4xf32>
    %c40_181 = arith.constant 40 : index
    %c0_182 = arith.constant 0 : index
    %243 = vector.load %arg21[%c40_181, %c0_182] : memref<304x4xf32, #tpu.memory_space<vmem>>, vector<256x4xf32>
    %c240_i32_183 = arith.constant 240 : i32
    %244 = vector.broadcast %c240_i32_183 : i32 to vector<256x4xi32>
    %245 = arith.cmpi slt, %3, %244 : vector<256x4xi32>
    %cst_184 = arith.constant 0.000000e+00 : f32
    %246 = vector.broadcast %cst_184 : f32 to vector<256x4xf32>
    %247 = arith.select %245, %243, %246 : vector<256x4xi1>, vector<256x4xf32>
    %c7_185 = arith.constant 7 : index
    %c0_186 = arith.constant 0 : index
    %c0_187 = arith.constant 0 : index
    %248 = vector.load %arg15[%c7_185, %c0_186, %c0_187] : memref<9x4x4xf32, #tpu.memory_space<vmem>>, vector<1x4x4xf32>
    %249 = vector.shape_cast %248 : vector<1x4x4xf32> to vector<4x4xf32>
    %cst_188 = arith.constant dense<0.000000e+00> : vector<256x4xf32>
    %250 = tpu.matmul %247, %249, %cst_188 {dimension_numbers = #tpu.dot_dimension_numbers<[1], [0], [0], [1], [0, 0, 1, 1], [], []>} : vector<256x4xf32>, vector<4x4xf32>, vector<256x4xf32> -> vector<256x4xf32>
    %251 = arith.addf %242, %250 : vector<256x4xf32>
    %c41_189 = arith.constant 41 : index
    %c0_190 = arith.constant 0 : index
    %252 = vector.load %arg21[%c41_189, %c0_190] : memref<304x4xf32, #tpu.memory_space<vmem>>, vector<256x4xf32>
    %c240_i32_191 = arith.constant 240 : i32
    %253 = vector.broadcast %c240_i32_191 : i32 to vector<256x4xi32>
    %254 = arith.cmpi slt, %3, %253 : vector<256x4xi32>
    %c15_i32_192 = arith.constant 15 : i32
    %255 = vector.broadcast %c15_i32_192 : i32 to vector<256x4xi32>
    %256 = arith.cmpi slt, %5, %255 : vector<256x4xi32>
    %257 = arith.andi %254, %256 : vector<256x4xi1>
    %cst_193 = arith.constant 0.000000e+00 : f32
    %258 = vector.broadcast %cst_193 : f32 to vector<256x4xf32>
    %259 = arith.select %257, %252, %258 : vector<256x4xi1>, vector<256x4xf32>
    %c8_194 = arith.constant 8 : index
    %c0_195 = arith.constant 0 : index
    %c0_196 = arith.constant 0 : index
    %260 = vector.load %arg15[%c8_194, %c0_195, %c0_196] : memref<9x4x4xf32, #tpu.memory_space<vmem>>, vector<1x4x4xf32>
    %261 = vector.shape_cast %260 : vector<1x4x4xf32> to vector<4x4xf32>
    %cst_197 = arith.constant dense<0.000000e+00> : vector<256x4xf32>
    %262 = tpu.matmul %259, %261, %cst_197 {dimension_numbers = #tpu.dot_dimension_numbers<[1], [0], [0], [1], [0, 0, 1, 1], [], []>} : vector<256x4xf32>, vector<4x4xf32>, vector<256x4xf32> -> vector<256x4xf32>
    %263 = arith.addf %251, %262 : vector<256x4xf32>
    %c0_198 = arith.constant 0 : index
    %c0_199 = arith.constant 0 : index
    %264 = vector.load %arg16[%c0_198, %c0_199] : memref<1x4xf32, #tpu.memory_space<vmem>>, vector<1x4xf32>
    %265 = vector.broadcast %264 : vector<1x4xf32> to vector<256x4xf32>
    %266 = arith.mulf %263, %265 : vector<256x4xf32>
    %c0_200 = arith.constant 0 : index
    %c0_201 = arith.constant 0 : index
    %267 = vector.load %arg17[%c0_200, %c0_201] : memref<1x4xf32, #tpu.memory_space<vmem>>, vector<1x4xf32>
    %268 = vector.broadcast %267 : vector<1x4xf32> to vector<256x4xf32>
    %269 = arith.addf %266, %268 : vector<256x4xf32>
    %cst_202 = arith.constant 0.000000e+00 : f32
    %270 = vector.broadcast %cst_202 : f32 to vector<256x4xf32>
    %271 = arith.maximumf %269, %270 : vector<256x4xf32>
    %c0_203 = arith.constant 0 : index
    %c0_204 = arith.constant 0 : index
    %c0_205 = arith.constant 0 : index
    %272 = vector.load %arg18[%c0_203, %c0_204, %c0_205] : memref<1x256x4xf32, #tpu.memory_space<vmem>>, vector<1x256x4xf32>
    %273 = vector.shape_cast %272 : vector<1x256x4xf32> to vector<256x4xf32>
    %274 = vector.shape_cast %271 : vector<256x4xf32> to vector<1x256x4xf32>
    tpu.vector_store %arg18[%c0_203, %c0_204, %c0_205], %274 {strides = array<i32>} : memref<1x256x4xf32, #tpu.memory_space<vmem>>, vector<1x256x4xf32>,
    return
  }
  func.func @transform_0(%arg0: i32) -> (i32, i32, i32) {
    %c0_i32 = arith.constant 0 : i32
    %c0_i32_0 = arith.constant 0 : i32
    %c0_i32_1 = arith.constant 0 : i32
    return %arg0, %c0_i32, %c0_i32_0 : i32, i32, i32
  }
  func.func @transform_1(%arg0: i32) -> (i32, i32, i32) {
    %c0_i32 = arith.constant 0 : i32
    %c0_i32_0 = arith.constant 0 : i32
    %c0_i32_1 = arith.constant 0 : i32
    return %arg0, %c0_i32, %c0_i32_0 : i32, i32, i32
  }
  func.func @transform_2(%arg0: i32) -> (i32, i32) {
    %c0_i32 = arith.constant 0 : i32
    %c0_i32_0 = arith.constant 0 : i32
    %c0_i32_1 = arith.constant 0 : i32
    return %c0_i32, %c0_i32_0 : i32, i32
  }
  func.func @transform_3(%arg0: i32) -> (i32, i32) {
    %c0_i32 = arith.constant 0 : i32
    %c0_i32_0 = arith.constant 0 : i32
    %c0_i32_1 = arith.constant 0 : i32
    return %c0_i32, %c0_i32_0 : i32, i32
  }
  func.func @transform_4(%arg0: i32) -> (i32, i32) {
    %c0_i32 = arith.constant 0 : i32
    %c0_i32_0 = arith.constant 0 : i32
    %c0_i32_1 = arith.constant 0 : i32
    return %c0_i32, %c0_i32_0 : i32, i32
  }
  func.func @transform_5(%arg0: i32) -> (i32, i32) {
    %c0_i32 = arith.constant 0 : i32
    %c0_i32_0 = arith.constant 0 : i32
    %c0_i32_1 = arith.constant 0 : i32
    return %c0_i32, %c0_i32_0 : i32, i32
  }
  func.func @transform_6(%arg0: i32) -> (i32, i32) {
    %c0_i32 = arith.constant 0 : i32
    %c0_i32_0 = arith.constant 0 : i32
    %c0_i32_1 = arith.constant 0 : i32
    return %c0_i32, %c0_i32_0 : i32, i32
  }
  func.func @transform_7(%arg0: i32) -> (i32, i32) {
    %c0_i32 = arith.constant 0 : i32
    %c0_i32_0 = arith.constant 0 : i32
    %c0_i32_1 = arith.constant 0 : i32
    return %c0_i32, %c0_i32_0 : i32, i32
  }
  func.func @transform_8(%arg0: i32) -> (i32, i32) {
    %c0_i32 = arith.constant 0 : i32
    %c0_i32_0 = arith.constant 0 : i32
    %c0_i32_1 = arith.constant 0 : i32
    return %c0_i32, %c0_i32_0 : i32, i32
  }
  func.func @transform_9(%arg0: i32) -> (i32, i32) {
    %c0_i32 = arith.constant 0 : i32
    %c0_i32_0 = arith.constant 0 : i32
    %c0_i32_1 = arith.constant 0 : i32
    return %c0_i32, %c0_i32_0 : i32, i32
  }
  func.func @transform_10(%arg0: i32) -> (i32, i32) {
    %c0_i32 = arith.constant 0 : i32
    %c0_i32_0 = arith.constant 0 : i32
    %c0_i32_1 = arith.constant 0 : i32
    return %c0_i32, %c0_i32_0 : i32, i32
  }
  func.func @transform_11(%arg0: i32) -> (i32, i32) {
    %c0_i32 = arith.constant 0 : i32
    %c0_i32_0 = arith.constant 0 : i32
    %c0_i32_1 = arith.constant 0 : i32
    return %c0_i32, %c0_i32_0 : i32, i32
  }
  func.func @transform_12(%arg0: i32) -> (i32, i32) {
    %c0_i32 = arith.constant 0 : i32
    %c0_i32_0 = arith.constant 0 : i32
    %c0_i32_1 = arith.constant 0 : i32
    return %c0_i32, %c0_i32_0 : i32, i32
  }
  func.func @transform_13(%arg0: i32) -> (i32, i32) {
    %c0_i32 = arith.constant 0 : i32
    %c0_i32_0 = arith.constant 0 : i32
    %c0_i32_1 = arith.constant 0 : i32
    return %c0_i32, %c0_i32_0 : i32, i32
  }
  func.func @transform_14(%arg0: i32) -> (i32, i32, i32) {
    %c0_i32 = arith.constant 0 : i32
    %c0_i32_0 = arith.constant 0 : i32
    %c0_i32_1 = arith.constant 0 : i32
    %c0_i32_2 = arith.constant 0 : i32
    return %c0_i32, %c0_i32_0, %c0_i32_1 : i32, i32, i32
  }
  func.func @transform_15(%arg0: i32) -> (i32, i32) {
    %c0_i32 = arith.constant 0 : i32
    %c0_i32_0 = arith.constant 0 : i32
    %c0_i32_1 = arith.constant 0 : i32
    return %c0_i32, %c0_i32_0 : i32, i32
  }
  func.func @transform_16(%arg0: i32) -> (i32, i32) {
    %c0_i32 = arith.constant 0 : i32
    %c0_i32_0 = arith.constant 0 : i32
    %c0_i32_1 = arith.constant 0 : i32
    return %c0_i32, %c0_i32_0 : i32, i32
  }
  func.func @transform_17(%arg0: i32) -> (i32, i32, i32) {
    %c0_i32 = arith.constant 0 : i32
    %c0_i32_0 = arith.constant 0 : i32
    %c0_i32_1 = arith.constant 0 : i32
    return %arg0, %c0_i32, %c0_i32_0 : i32, i32, i32
  }
}

</mosaic_0001>

<llo_original>
// kernel: corner_pool_forward.1
$region0: #{corner_pool_forward.1}
  #allocation0 [shape = 'u32[]', space=smem, size = 0x4, offset = 0x4, fixed_abs, tag = 'smem constant byte address 0x4 - core index']
  #allocation1 [shape = 'u32[72,128]{1,0:T(1,128)}', space=vmem, size = 0x9000, scoped, tag = 'internal scratch']
  #allocation2 [shape = 'f32[408,128]{1,0:T(8,128)}', space=vmem, size = 0x33000, scoped, tag = 'scratch operand']
  #allocation3 [shape = 'f32[264,128]{1,0:T(8,128)}', space=vmem, size = 0x21000, scoped, tag = 'scratch operand']
  #allocation4 [shape = 'f32[304,4]{1,0:T(8,128)}', space=vmem, size = 0x26000, scoped, tag = 'scratch operand']
  %s0 = inlined_call_operand.vmem [shape: f32[2,256,36], index: 0, kind: input, shape index: {}]
  %s1 = inlined_call_operand.vmem [shape: f32[2,256,4], index: 1, kind: input, shape index: {}]
  %s2 = inlined_call_operand.vmem [shape: f32[36,128], index: 2, kind: input, shape index: {}]
  %s3 = inlined_call_operand.vmem [shape: f32[1,128], index: 3, kind: input, shape index: {}]
  %s4 = inlined_call_operand.vmem [shape: f32[1,128], index: 4, kind: input, shape index: {}]
  %s5 = inlined_call_operand.vmem [shape: f32[36,128], index: 5, kind: input, shape index: {}]
  %s6 = inlined_call_operand.vmem [shape: f32[1,128], index: 6, kind: input, shape index: {}]
  %s7 = inlined_call_operand.vmem [shape: f32[1,128], index: 7, kind: input, shape index: {}]
  %s8 = inlined_call_operand.vmem [shape: f32[1152,4], index: 8, kind: input, shape index: {}]
  %s9 = inlined_call_operand.vmem [shape: f32[1,4], index: 9, kind: input, shape index: {}]
  %s10 = inlined_call_operand.vmem [shape: f32[1,4], index: 10, kind: input, shape index: {}]
  %s11 = inlined_call_operand.vmem [shape: f32[4,4], index: 11, kind: input, shape index: {}]
  %s12 = inlined_call_operand.vmem [shape: f32[1,4], index: 12, kind: input, shape index: {}]
  %s13 = inlined_call_operand.vmem [shape: f32[1,4], index: 13, kind: input, shape index: {}]
  %s14 = inlined_call_operand.vmem [shape: f32[9,4,4], index: 14, kind: input, shape index: {}]
  %s15 = inlined_call_operand.vmem [shape: f32[1,4], index: 15, kind: input, shape index: {}]
  %s16 = inlined_call_operand.vmem [shape: f32[1,4], index: 16, kind: input, shape index: {}]
  %s17 = inlined_call_operand.vmem [shape: f32[2,256,4], index: 17, kind: output, shape index: {}]
  %s18 = sld [smem:[#allocation0]]
  $region101: #{corner_pool_forward.1} parent=0
    _
  %s20 = ssub.s32 1, %s18
  %s21 = scalar_select 0, %s20, %s18
  loop: start=0, step=1, limit=4
  $region2: #{corner_pool_forward.1} parent=0 // loop_pre_header
    _
  $region3: #{corner_pool_forward.1} parent=0 // loop_header
    %s23 = sphi 0, %s27
    %p24 = scmp.ge.s32.totalorder %s23, 4
    %s33 = sphi 0, %s35
    %s36 = sphi 0, %s33
    %s37 = sphi 0, %s36
    %s53 = sphi 0, %s37
    %s59 = sphi 0, %s61
    %s62 = sphi 0, %s59
    %s63 = sphi 0, %s62
    %s79 = sphi 0, %s63
    %s83 = sphi 0, %s83
    %s85 = sphi 0, %s83
    %s86 = sphi 0, %s85
    %s100 = sphi 0, %s86
    %s104 = sphi 0, %s104
    %s106 = sphi 0, %s104
    %s107 = sphi 0, %s106
    %s121 = sphi 0, %s107
    %s125 = sphi 0, %s125
    %s127 = sphi 0, %s125
    %s128 = sphi 0, %s127
    %s142 = sphi 0, %s128
    %s146 = sphi 0, %s146
    %s148 = sphi 0, %s146
    %s149 = sphi 0, %s148
    %s163 = sphi 0, %s149
    %s167 = sphi 0, %s167
    %s169 = sphi 0, %s167
    %s170 = sphi 0, %s169
    %s184 = sphi 0, %s170
    %s188 = sphi 0, %s188
    %s190 = sphi 0, %s188
    %s191 = sphi 0, %s190
    %s205 = sphi 0, %s191
    %s209 = sphi 0, %s209
    %s211 = sphi 0, %s209
    %s212 = sphi 0, %s211
    %s226 = sphi 0, %s212
    %s230 = sphi 0, %s230
    %s232 = sphi 0, %s230
    %s233 = sphi 0, %s232
    %s247 = sphi 0, %s233
    %s251 = sphi 0, %s251
    %s253 = sphi 0, %s251
    %s254 = sphi 0, %s253
    %s268 = sphi 0, %s254
    %s272 = sphi 0, %s272
    %s274 = sphi 0, %s272
    %s275 = sphi 0, %s274
    %s289 = sphi 0, %s275
    %s293 = sphi 0, %s293
    %s295 = sphi 0, %s293
    %s296 = sphi 0, %s295
    %s310 = sphi 0, %s296
    %s314 = sphi 0, %s314
    %s316 = sphi 0, %s314
    %s317 = sphi 0, %s316
    %s331 = sphi 0, %s317
    %s335 = sphi 0, %s335
    %s337 = sphi 0, %s335
    %s338 = sphi 0, %s337
    %s352 = sphi 0, %s338
    %s356 = sphi 0, %s356
    %s358 = sphi 0, %s356
    %s359 = sphi 0, %s358
    %s373 = sphi 0, %s359
    %s377 = sphi 0, %s377
    %s379 = sphi 0, %s377
    %s380 = sphi 0, %s379
    %s394 = sphi 0, %s380
    %s400 = sphi 0, %s402
    %s403 = sphi 0, %s400
    %s404 = sphi 0, %s403
    %s420 = sphi 0, %s404
  $region4: #{corner_pool_forward.1} parent=0 // loop_header_branch
    %26 = sbr.rel (%p24) target = $region8
  $region5: #{corner_pool_forward.1} parent=0 // loop_body
    %s28 = ssub.s32 %s23, 1
    %s29 = ssub.s32 %s23, 2
    %s30 = sadd.s32 %s23, 1
    %s31 = ssub.s32 %s23, %s30
    %p32 = scmp.eq.s32.totalorder %s31, 0
    %s34 = sadd.s32 %s33, 1
    %s35 = scalar_select %p32, %s33, %s34
    %p38 = pneg %p32
    %p39 = scmp.eq.s32.totalorder %s23, 1
    %p40 = por %p38, %p39
    %p41 = scmp.ne.s32.totalorder %s33, %s36
    %p42 = scmp.eq.s32.totalorder %s23, 0
    %p43 = por %p41, %p42
    %p44 = scmp.ne.s32.totalorder %s33, %s36
    %p45 = scmp.eq.s32.totalorder %s28, 1
    %p46 = por %p44, %p45
    %p47 = scmp.ne.s32.totalorder %s36, %s37
    %p48 = scmp.eq.s32.totalorder %s28, 0
    %p49 = por %p47, %p48
    %p50 = scmp.ne.s32.totalorder %s36, %s37
    %p51 = scmp.eq.s32.totalorder %s29, 1
    %p52 = por %p50, %p51
    %p54 = scmp.ne.s32.totalorder %s37, %s53
    %p55 = scmp.eq.s32.totalorder %s29, 0
    %p56 = por %p54, %p55
    %s57 = ssub.s32 %s23, %s30
    %p58 = scmp.eq.s32.totalorder %s57, 0
    %s60 = sadd.s32 %s59, 1
    %s61 = scalar_select %p58, %s59, %s60
    %p64 = pneg %p58
    %p65 = scmp.eq.s32.totalorder %s23, 1
    %p66 = por %p64, %p65
    %p67 = scmp.ne.s32.totalorder %s59, %s62
    %p68 = scmp.eq.s32.totalorder %s23, 0
    %p69 = por %p67, %p68
    %p70 = scmp.ne.s32.totalorder %s59, %s62
    %p71 = scmp.eq.s32.totalorder %s28, 1
    %p72 = por %p70, %p71
    %p73 = scmp.ne.s32.totalorder %s62, %s63
    %p74 = scmp.eq.s32.totalorder %s28, 0
    %p75 = por %p73, %p74
    %p76 = scmp.ne.s32.totalorder %s62, %s63
    %p77 = scmp.eq.s32.totalorder %s29, 1
    %p78 = por %p76, %p77
    %p80 = scmp.ne.s32.totalorder %s63, %s79
    %p81 = scmp.eq.s32.totalorder %s29, 0
    %p82 = por %p80, %p81
    %s84 = sadd.s32 %s83, 1
    %p87 = scmp.eq.s32.totalorder %s23, 1
    %p88 = scmp.ne.s32.totalorder %s83, %s85
    %p89 = scmp.eq.s32.totalorder %s23, 0
    %p90 = por %p88, %p89
    %p91 = scmp.ne.s32.totalorder %s83, %s85
    %p92 = scmp.eq.s32.totalorder %s28, 1
    %p93 = por %p91, %p92
    %p94 = scmp.ne.s32.totalorder %s85, %s86
    %p95 = scmp.eq.s32.totalorder %s28, 0
    %p96 = por %p94, %p95
    %p97 = scmp.ne.s32.totalorder %s85, %s86
    %p98 = scmp.eq.s32.totalorder %s29, 1
    %p99 = por %p97, %p98
    %p101 = scmp.ne.s32.totalorder %s86, %s100
    %p102 = scmp.eq.s32.totalorder %s29, 0
    %p103 = por %p101, %p102
    %s105 = sadd.s32 %s104, 1
    %p108 = scmp.eq.s32.totalorder %s23, 1
    %p109 = scmp.ne.s32.totalorder %s104, %s106
    %p110 = scmp.eq.s32.totalorder %s23, 0
    %p111 = por %p109, %p110
    %p112 = scmp.ne.s32.totalorder %s104, %s106
    %p113 = scmp.eq.s32.totalorder %s28, 1
    %p114 = por %p112, %p113
    %p115 = scmp.ne.s32.totalorder %s106, %s107
    %p116 = scmp.eq.s32.totalorder %s28, 0
    %p117 = por %p115, %p116
    %p118 = scmp.ne.s32.totalorder %s106, %s107
    %p119 = scmp.eq.s32.totalorder %s29, 1
    %p120 = por %p118, %p119
    %p122 = scmp.ne.s32.totalorder %s107, %s121
    %p123 = scmp.eq.s32.totalorder %s29, 0
    %p124 = por %p122, %p123
    %s126 = sadd.s32 %s125, 1
    %p129 = scmp.eq.s32.totalorder %s23, 1
    %p130 = scmp.ne.s32.totalorder %s125, %s127
    %p131 = scmp.eq.s32.totalorder %s23, 0
    %p132 = por %p130, %p131
    %p133 = scmp.ne.s32.totalorder %s125, %s127
    %p134 = scmp.eq.s32.totalorder %s28, 1
    %p135 = por %p133, %p134
    %p136 = scmp.ne.s32.totalorder %s127, %s128
    %p137 = scmp.eq.s32.totalorder %s28, 0
    %p138 = por %p136, %p137
    %p139 = scmp.ne.s32.totalorder %s127, %s128
    %p140 = scmp.eq.s32.totalorder %s29, 1
    %p141 = por %p139, %p140
    %p143 = scmp.ne.s32.totalorder %s128, %s142
    %p144 = scmp.eq.s32.totalorder %s29, 0
    %p145 = por %p143, %p144
    %s147 = sadd.s32 %s146, 1
    %p150 = scmp.eq.s32.totalorder %s23, 1
    %p151 = scmp.ne.s32.totalorder %s146, %s148
    %p152 = scmp.eq.s32.totalorder %s23, 0
    %p153 = por %p151, %p152
    %p154 = scmp.ne.s32.totalorder %s146, %s148
    %p155 = scmp.eq.s32.totalorder %s28, 1
    %p156 = por %p154, %p155
    %p157 = scmp.ne.s32.totalorder %s148, %s149
    %p158 = scmp.eq.s32.totalorder %s28, 0
    %p159 = por %p157, %p158
    %p160 = scmp.ne.s32.totalorder %s148, %s149
    %p161 = scmp.eq.s32.totalorder %s29, 1
    %p162 = por %p160, %p161
    %p164 = scmp.ne.s32.totalorder %s149, %s163
    %p165 = scmp.eq.s32.totalorder %s29, 0
    %p166 = por %p164, %p165
    %s168 = sadd.s32 %s167, 1
    %p171 = scmp.eq.s32.totalorder %s23, 1
    %p172 = scmp.ne.s32.totalorder %s167, %s169
    %p173 = scmp.eq.s32.totalorder %s23, 0
    %p174 = por %p172, %p173
    %p175 = scmp.ne.s32.totalorder %s167, %s169
    %p176 = scmp.eq.s32.totalorder %s28, 1
    %p177 = por %p175, %p176
    %p178 = scmp.ne.s32.totalorder %s169, %s170
    %p179 = scmp.eq.s32.totalorder %s28, 0
    %p180 = por %p178, %p179
    %p181 = scmp.ne.s32.totalorder %s169, %s170
    %p182 = scmp.eq.s32.totalorder %s29, 1
    %p183 = por %p181, %p182
    %p185 = scmp.ne.s32.totalorder %s170, %s184
    %p186 = scmp.eq.s32.totalorder %s29, 0
    %p187 = por %p185, %p186
    %s189 = sadd.s32 %s188, 1
    %p192 = scmp.eq.s32.totalorder %s23, 1
    %p193 = scmp.ne.s32.totalorder %s188, %s190
    %p194 = scmp.eq.s32.totalorder %s23, 0
    %p195 = por %p193, %p194
    %p196 = scmp.ne.s32.totalorder %s188, %s190
    %p197 = scmp.eq.s32.totalorder %s28, 1
    %p198 = por %p196, %p197
    %p199 = scmp.ne.s32.totalorder %s190, %s191
    %p200 = scmp.eq.s32.totalorder %s28, 0
    %p201 = por %p199, %p200
    %p202 = scmp.ne.s32.totalorder %s190, %s191
    %p203 = scmp.eq.s32.totalorder %s29, 1
    %p204 = por %p202, %p203
    %p206 = scmp.ne.s32.totalorder %s191, %s205
    %p207 = scmp.eq.s32.totalorder %s29, 0
    %p208 = por %p206, %p207
    %s210 = sadd.s32 %s209, 1
    %p213 = scmp.eq.s32.totalorder %s23, 1
    %p214 = scmp.ne.s32.totalorder %s209, %s211
    %p215 = scmp.eq.s32.totalorder %s23, 0
    %p216 = por %p214, %p215
    %p217 = scmp.ne.s32.totalorder %s209, %s211
    %p218 = scmp.eq.s32.totalorder %s28, 1
    %p219 = por %p217, %p218
    %p220 = scmp.ne.s32.totalorder %s211, %s212
    %p221 = scmp.eq.s32.totalorder %s28, 0
    %p222 = por %p220, %p221
    %p223 = scmp.ne.s32.totalorder %s211, %s212
    %p224 = scmp.eq.s32.totalorder %s29, 1
    %p225 = por %p223, %p224
    %p227 = scmp.ne.s32.totalorder %s212, %s226
    %p228 = scmp.eq.s32.totalorder %s29, 0
    %p229 = por %p227, %p228
    %s231 = sadd.s32 %s230, 1
    %p234 = scmp.eq.s32.totalorder %s23, 1
    %p235 = scmp.ne.s32.totalorder %s230, %s232
    %p236 = scmp.eq.s32.totalorder %s23, 0
    %p237 = por %p235, %p236
    %p238 = scmp.ne.s32.totalorder %s230, %s232
    %p239 = scmp.eq.s32.totalorder %s28, 1
    %p240 = por %p238, %p239
    %p241 = scmp.ne.s32.totalorder %s232, %s233
    %p242 = scmp.eq.s32.totalorder %s28, 0
    %p243 = por %p241, %p242
    %p244 = scmp.ne.s32.totalorder %s232, %s233
    %p245 = scmp.eq.s32.totalorder %s29, 1
    %p246 = por %p244, %p245
    %p248 = scmp.ne.s32.totalorder %s233, %s247
    %p249 = scmp.eq.s32.totalorder %s29, 0
    %p250 = por %p248, %p249
    %s252 = sadd.s32 %s251, 1
    %p255 = scmp.eq.s32.totalorder %s23, 1
    %p256 = scmp.ne.s32.totalorder %s251, %s253
    %p257 = scmp.eq.s32.totalorder %s23, 0
    %p258 = por %p256, %p257
    %p259 = scmp.ne.s32.totalorder %s251, %s253
    %p260 = scmp.eq.s32.totalorder %s28, 1
    %p261 = por %p259, %p260
    %p262 = scmp.ne.s32.totalorder %s253, %s254
    %p263 = scmp.eq.s32.totalorder %s28, 0
    %p264 = por %p262, %p263
    %p265 = scmp.ne.s32.totalorder %s253, %s254
    %p266 = scmp.eq.s32.totalorder %s29, 1
    %p267 = por %p265, %p266
    %p269 = scmp.ne.s32.totalorder %s254, %s268
    %p270 = scmp.eq.s32.totalorder %s29, 0
    %p271 = por %p269, %p270
    %s273 = sadd.s32 %s272, 1
    %p276 = scmp.eq.s32.totalorder %s23, 1
    %p277 = scmp.ne.s32.totalorder %s272, %s274
    %p278 = scmp.eq.s32.totalorder %s23, 0
    %p279 = por %p277, %p278
    %p280 = scmp.ne.s32.totalorder %s272, %s274
    %p281 = scmp.eq.s32.totalorder %s28, 1
    %p282 = por %p280, %p281
    %p283 = scmp.ne.s32.totalorder %s274, %s275
    %p284 = scmp.eq.s32.totalorder %s28, 0
    %p285 = por %p283, %p284
    %p286 = scmp.ne.s32.totalorder %s274, %s275
    %p287 = scmp.eq.s32.totalorder %s29, 1
    %p288 = por %p286, %p287
    %p290 = scmp.ne.s32.totalorder %s275, %s289
    %p291 = scmp.eq.s32.totalorder %s29, 0
    %p292 = por %p290, %p291
    %s294 = sadd.s32 %s293, 1
    %p297 = scmp.eq.s32.totalorder %s23, 1
    %p298 = scmp.ne.s32.totalorder %s293, %s295
    %p299 = scmp.eq.s32.totalorder %s23, 0
    %p300 = por %p298, %p299
    %p301 = scmp.ne.s32.totalorder %s293, %s295
    %p302 = scmp.eq.s32.totalorder %s28, 1
    %p303 = por %p301, %p302
    %p304 = scmp.ne.s32.totalorder %s295, %s296
    %p305 = scmp.eq.s32.totalorder %s28, 0
    %p306 = por %p304, %p305
    %p307 = scmp.ne.s32.totalorder %s295, %s296
    %p308 = scmp.eq.s32.totalorder %s29, 1
    %p309 = por %p307, %p308
    %p311 = scmp.ne.s32.totalorder %s296, %s310
    %p312 = scmp.eq.s32.totalorder %s29, 0
    %p313 = por %p311, %p312
    %s315 = sadd.s32 %s314, 1
    %p318 = scmp.eq.s32.totalorder %s23, 1
    %p319 = scmp.ne.s32.totalorder %s314, %s316
    %p320 = scmp.eq.s32.totalorder %s23, 0
    %p321 = por %p319, %p320
    %p322 = scmp.ne.s32.totalorder %s314, %s316
    %p323 = scmp.eq.s32.totalorder %s28, 1
    %p324 = por %p322, %p323
    %p325 = scmp.ne.s32.totalorder %s316, %s317
    %p326 = scmp.eq.s32.totalorder %s28, 0
    %p327 = por %p325, %p326
    %p328 = scmp.ne.s32.totalorder %s316, %s317
    %p329 = scmp.eq.s32.totalorder %s29, 1
    %p330 = por %p328, %p329
    %p332 = scmp.ne.s32.totalorder %s317, %s331
    %p333 = scmp.eq.s32.totalorder %s29, 0
    %p334 = por %p332, %p333
    %s336 = sadd.s32 %s335, 1
    %p339 = scmp.eq.s32.totalorder %s23, 1
    %p340 = scmp.ne.s32.totalorder %s335, %s337
    %p341 = scmp.eq.s32.totalorder %s23, 0
    %p342 = por %p340, %p341
    %p343 = scmp.ne.s32.totalorder %s335, %s337
    %p344 = scmp.eq.s32.totalorder %s28, 1
    %p345 = por %p343, %p344
    %p346 = scmp.ne.s32.totalorder %s337, %s338
    %p347 = scmp.eq.s32.totalorder %s28, 0
    %p348 = por %p346, %p347
    %p349 = scmp.ne.s32.totalorder %s337, %s338
    %p350 = scmp.eq.s32.totalorder %s29, 1
    %p351 = por %p349, %p350
    %p353 = scmp.ne.s32.totalorder %s338, %s352
    %p354 = scmp.eq.s32.totalorder %s29, 0
    %p355 = por %p353, %p354
    %s357 = sadd.s32 %s356, 1
    %p360 = scmp.eq.s32.totalorder %s23, 1
    %p361 = scmp.ne.s32.totalorder %s356, %s358
    %p362 = scmp.eq.s32.totalorder %s23, 0
    %p363 = por %p361, %p362
    %p364 = scmp.ne.s32.totalorder %s356, %s358
    %p365 = scmp.eq.s32.totalorder %s28, 1
    %p366 = por %p364, %p365
    %p367 = scmp.ne.s32.totalorder %s358, %s359
    %p368 = scmp.eq.s32.totalorder %s28, 0
    %p369 = por %p367, %p368
    %p370 = scmp.ne.s32.totalorder %s358, %s359
    %p371 = scmp.eq.s32.totalorder %s29, 1
    %p372 = por %p370, %p371
    %p374 = scmp.ne.s32.totalorder %s359, %s373
    %p375 = scmp.eq.s32.totalorder %s29, 0
    %p376 = por %p374, %p375
    %s378 = sadd.s32 %s377, 1
    %p381 = scmp.eq.s32.totalorder %s23, 1
    %p382 = scmp.ne.s32.totalorder %s377, %s379
    %p383 = scmp.eq.s32.totalorder %s23, 0
    %p384 = por %p382, %p383
    %p385 = scmp.ne.s32.totalorder %s377, %s379
    %p386 = scmp.eq.s32.totalorder %s28, 1
    %p387 = por %p385, %p386
    %p388 = scmp.ne.s32.totalorder %s379, %s380
    %p389 = scmp.eq.s32.totalorder %s28, 0
    %p390 = por %p388, %p389
    %p391 = scmp.ne.s32.totalorder %s379, %s380
    %p392 = scmp.eq.s32.totalorder %s29, 1
    %p393 = por %p391, %p392
    %p395 = scmp.ne.s32.totalorder %s380, %s394
    %p396 = scmp.eq.s32.totalorder %s29, 0
    %p397 = por %p395, %p396
    %s398 = ssub.s32 %s23, %s30
    %p399 = scmp.eq.s32.totalorder %s398, 0
    %s401 = sadd.s32 %s400, 1
    %s402 = scalar_select %p399, %s400, %s401
    %p405 = pneg %p399
    %p406 = scmp.eq.s32.totalorder %s23, 1
    %p407 = por %p405, %p406
    %p408 = scmp.ne.s32.totalorder %s400, %s403
    %p409 = scmp.eq.s32.totalorder %s23, 0
    %p410 = por %p408, %p409
    %p411 = scmp.ne.s32.totalorder %s400, %s403
    %p412 = scmp.eq.s32.totalorder %s28, 1
    %p413 = por %p411, %p412
    %p414 = scmp.ne.s32.totalorder %s403, %s404
    %p415 = scmp.eq.s32.totalorder %s28, 0
    %p416 = por %p414, %p415
    %p417 = scmp.ne.s32.totalorder %s403, %s404
    %p418 = scmp.eq.s32.totalorder %s29, 1
    %p419 = por %p417, %p418
    %p421 = scmp.ne.s32.totalorder %s404, %s420
    %p422 = scmp.eq.s32.totalorder %s29, 0
    %p423 = por %p421, %p422
    %p424 = scmp.le.s32.totalorder 1, %s23
    %p425 = scmp.lt.s32.totalorder %s23, 3
    %p426 = pnand %p424, %p425
    %p427 = pneg %p426
    // Predicated region
    $region9: #{corner_pool_forward.1} parent=5 // pred_check
      _
    $region10: #{corner_pool_forward.1} parent=5 // pred_check_branch
      %429 = sbr.rel (%p426) target = $region12
    $region11: #{corner_pool_forward.1} parent=5 // pred_region
      %s430 = ssub.s32 %s23, 1
      // Predicated region
      $region13: #{corner_pool_forward.1} parent=11 // pred_check
        %p431 = pneg %p96
      $region14: #{corner_pool_forward.1} parent=11 // pred_check_branch
        %433 = sbr.rel (%p431) target = $region16
      $region15: #{corner_pool_forward.1} parent=11 // pred_region
        _
      $region16: #{corner_pool_forward.1} parent=11 // pred_fallthru
        _
      // Predicated region
      $region17: #{corner_pool_forward.1} parent=11 // pred_check
        %p434 = pneg %p117
      $region18: #{corner_pool_forward.1} parent=11 // pred_check_branch
        %436 = sbr.rel (%p434) target = $region20
      $region19: #{corner_pool_forward.1} parent=11 // pred_region
        _
      $region20: #{corner_pool_forward.1} parent=11 // pred_fallthru
        _
      // Predicated region
      $region21: #{corner_pool_forward.1} parent=11 // pred_check
        %p437 = pneg %p138
      $region22: #{corner_pool_forward.1} parent=11 // pred_check_branch
        %439 = sbr.rel (%p437) target = $region24
      $region23: #{corner_pool_forward.1} parent=11 // pred_region
        _
      $region24: #{corner_pool_forward.1} parent=11 // pred_fallthru
        _
      // Predicated region
      $region25: #{corner_pool_forward.1} parent=11 // pred_check
        %p440 = pneg %p159
      $region26: #{corner_pool_forward.1} parent=11 // pred_check_branch
        %442 = sbr.rel (%p440) target = $region28
      $region27: #{corner_pool_forward.1} parent=11 // pred_region
        _
      $region28: #{corner_pool_forward.1} parent=11 // pred_fallthru
        _
      // Predicated region
      $region29: #{corner_pool_forward.1} parent=11 // pred_check
        %p443 = pneg %p180
      $region30: #{corner_pool_forward.1} parent=11 // pred_check_branch
        %445 = sbr.rel (%p443) target = $region32
      $region31: #{corner_pool_forward.1} parent=11 // pred_region
        _
      $region32: #{corner_pool_forward.1} parent=11 // pred_fallthru
        _
      // Predicated region
      $region33: #{corner_pool_forward.1} parent=11 // pred_check
        %p446 = pneg %p201
      $region34: #{corner_pool_forward.1} parent=11 // pred_check_branch
        %448 = sbr.rel (%p446) target = $region36
      $region35: #{corner_pool_forward.1} parent=11 // pred_region
        _
      $region36: #{corner_pool_forward.1} parent=11 // pred_fallthru
        _
      // Predicated region
      $region37: #{corner_pool_forward.1} parent=11 // pred_check
        %p449 = pneg %p222
      $region38: #{corner_pool_forward.1} parent=11 // pred_check_branch
        %451 = sbr.rel (%p449) target = $region40
      $region39: #{corner_pool_forward.1} parent=11 // pred_region
        _
      $region40: #{corner_pool_forward.1} parent=11 // pred_fallthru
        _
      // Predicated region
      $region41: #{corner_pool_forward.1} parent=11 // pred_check
        %p452 = pneg %p243
      $region42: #{corner_pool_forward.1} parent=11 // pred_check_branch
        %454 = sbr.rel (%p452) target = $region44
      $region43: #{corner_pool_forward.1} parent=11 // pred_region
        _
      $region44: #{corner_pool_forward.1} parent=11 // pred_fallthru
        _
      // Predicated region
      $region45: #{corner_pool_forward.1} parent=11 // pred_check
        %p455 = pneg %p264
      $region46: #{corner_pool_forward.1} parent=11 // pred_check_branch
        %457 = sbr.rel (%p455) target = $region48
      $region47: #{corner_pool_forward.1} parent=11 // pred_region
        _
      $region48: #{corner_pool_forward.1} parent=11 // pred_fallthru
        _
      // Predicated region
      $region49: #{corner_pool_forward.1} parent=11 // pred_check
        %p458 = pneg %p285
      $region50: #{corner_pool_forward.1} parent=11 // pred_check_branch
        %460 = sbr.rel (%p458) target = $region52
      $region51: #{corner_pool_forward.1} parent=11 // pred_region
        _
      $region52: #{corner_pool_forward.1} parent=11 // pred_fallthru
        _
      // Predicated region
      $region53: #{corner_pool_forward.1} parent=11 // pred_check
        %p461 = pneg %p306
      $region54: #{corner_pool_forward.1} parent=11 // pred_check_branch
        %463 = sbr.rel (%p461) target = $region56
      $region55: #{corner_pool_forward.1} parent=11 // pred_region
        _
      $region56: #{corner_pool_forward.1} parent=11 // pred_fallthru
        _
      // Predicated region
      $region57: #{corner_pool_forward.1} parent=11 // pred_check
        %p464 = pneg %p327
      $region58: #{corner_pool_forward.1} parent=11 // pred_check_branch
        %466 = sbr.rel (%p464) target = $region60
      $region59: #{corner_pool_forward.1} parent=11 // pred_region
        _
      $region60: #{corner_pool_forward.1} parent=11 // pred_fallthru
        _
      // Predicated region
      $region61: #{corner_pool_forward.1} parent=11 // pred_check
        %p467 = pneg %p348
      $region62: #{corner_pool_forward.1} parent=11 // pred_check_branch
        %469 = sbr.rel (%p467) target = $region64
      $region63: #{corner_pool_forward.1} parent=11 // pred_region
        _
      $region64: #{corner_pool_forward.1} parent=11 // pred_fallthru
        _
      // Predicated region
      $region65: #{corner_pool_forward.1} parent=11 // pred_check
        %p470 = pneg %p369
      $region66: #{corner_pool_forward.1} parent=11 // pred_check_branch
        %472 = sbr.rel (%p470) target = $region68
      $region67: #{corner_pool_forward.1} parent=11 // pred_region
        _
      $region68: #{corner_pool_forward.1} parent=11 // pred_fallthru
        _
      // Predicated region
      $region69: #{corner_pool_forward.1} parent=11 // pred_check
        %p473 = pneg %p390
      $region70: #{corner_pool_forward.1} parent=11 // pred_check_branch
        %475 = sbr.rel (%p473) target = $region72
      $region71: #{corner_pool_forward.1} parent=11 // pred_region
        _
      $region72: #{corner_pool_forward.1} parent=11 // pred_fallthru
        _
    $region12: #{corner_pool_forward.1} parent=5 // pred_fallthru
      _
    %p476 = scmp.lt.s32.totalorder %s23, 2
    // Predicated region
    $region73: #{corner_pool_forward.1} parent=5 // pred_check
      %p477 = pneg %p476
    $region74: #{corner_pool_forward.1} parent=5 // pred_check_branch
      %479 = sbr.rel (%p477) target = $region76
    $region75: #{corner_pool_forward.1} parent=5 // pred_region
      // Predicated region
      $region77: #{corner_pool_forward.1} parent=75 // pred_check
        %p480 = pneg %p43
      $region78: #{corner_pool_forward.1} parent=75 // pred_check_branch
        %482 = sbr.rel (%p480) target = $region80
      $region79: #{corner_pool_forward.1} parent=75 // pred_region
        %p483 = scmp.lt.s32.totalorder %s23, 1
        %s484 = scalar_select %p483, %s23, 1
        %s485 = smul.addr %s484, 32
        %s486 = smul.addr %s485, 8
        %s487 = scalar_lea.vmem %s0, %s486
      $region80: #{corner_pool_forward.1} parent=75 // pred_fallthru
        _
      // Predicated region
      $region81: #{corner_pool_forward.1} parent=75 // pred_check
        %p488 = pneg %p69
      $region82: #{corner_pool_forward.1} parent=75 // pred_check_branch
        %490 = sbr.rel (%p488) target = $region84
      $region83: #{corner_pool_forward.1} parent=75 // pred_region
        %p491 = scmp.lt.s32.totalorder %s23, 1
        %s492 = scalar_select %p491, %s23, 1
        %s493 = smul.addr %s492, 32
        %s494 = smul.addr %s493, 8
        %s495 = scalar_lea.vmem %s1, %s494
      $region84: #{corner_pool_forward.1} parent=75 // pred_fallthru
        _
    $region76: #{corner_pool_forward.1} parent=5 // pred_fallthru
      _
    %p496 = scmp.le.s32.totalorder 1, %s23
    %p497 = scmp.lt.s32.totalorder %s23, 3
    %p498 = pnand %p496, %p497
    %p499 = pneg %p498
    // Predicated region
    $region85: #{corner_pool_forward.1} parent=5 // pred_check
      _
    $region86: #{corner_pool_forward.1} parent=5 // pred_check_branch
      %501 = sbr.rel (%p498) target = $region88
    $region87: #{corner_pool_forward.1} parent=5 // pred_region
      %s502 = ssub.s32 %s23, 1
      %p503 = scmp.lt.s32.totalorder %s28, 1
      %s504 = scalar_select %p503, %s28, 1
      %s505 = smul.addr %s504, 32
      %s506 = smul.addr %s505, 8
      %s507 = scalar_lea.vmem %s0, %s506
      %p508 = pneg %p49
      %p509 = pneg %p46
      %p510 = scmp.lt.s32.totalorder %s28, 1
      %s511 = scalar_select %p510, %s28, 1
      %s512 = smul.addr %s511, 32
      %s513 = smul.addr %s512, 8
      %s514 = scalar_lea.vmem %s1, %s513
      %p515 = pneg %p75
      %p516 = pneg %p72
      %p517 = pneg %p96
      %p518 = pneg %p93
      %p519 = pneg %p117
      %p520 = pneg %p114
      %p521 = pneg %p138
      %p522 = pneg %p135
      %p523 = pneg %p159
      %p524 = pneg %p156
      %p525 = pneg %p180
      %p526 = pneg %p177
      %p527 = pneg %p201
      %p528 = pneg %p198
      %p529 = pneg %p222
      %p530 = pneg %p219
      %p531 = pneg %p243
      %p532 = pneg %p240
      %p533 = pneg %p264
      %p534 = pneg %p261
      %p535 = pneg %p285
      %p536 = pneg %p282
      %p537 = pneg %p306
      %p538 = pneg %p303
      %p539 = pneg %p327
      %p540 = pneg %p324
      %p541 = pneg %p348
      %p542 = pneg %p345
      %p543 = pneg %p369
      %p544 = pneg %p366
      %p545 = pneg %p390
      %p546 = pneg %p387
      %p547 = pneg %p416
      %p548 = pneg %p413
      %p549 = scmp.lt.s32.totalorder %s28, 1
      %s550 = scalar_select %p549, %s28, 1
      %s551 = smul.addr %s550, 32
      %s552 = smul.addr %s551, 8
      %s553 = scalar_lea.vmem %s17, %s552
      %p554 = scmp.lt.s32.totalorder %s28, 1
      %s555 = scalar_select %p554, %s28, 1
      %s556 = smul.addr %s555, 32
      %s557 = smul.addr %s556, 8
      %s558 = scalar_lea.vmem %s0, %s557
      %p559 = scmp.lt.s32.totalorder %s28, 1
      %s560 = scalar_select %p559, %s28, 1
      %s561 = smul.addr %s560, 32
      %s562 = smul.addr %s561, 8
      %s563 = scalar_lea.vmem %s1, %s562
      %p564 = scmp.lt.s32.totalorder %s28, 1
      %s565 = scalar_select %p564, %s28, 1
      %s566 = smul.addr %s565, 32
      %s567 = smul.addr %s566, 8
      %s568 = scalar_lea.vmem %s17, %s567
      %v569 = vlaneseq
      %v570 = vshrl.u32 %v569, 7
      %v571 = vadd.s32 %v570, 8
      %v572 = vadd.s32 %v570, 16
      %v573 = vadd.s32 %v570, 24
      %v574 = vadd.s32 %v570, 32
      %v575 = vadd.s32 %v570, 40
      %v576 = vadd.s32 %v570, 48
      %v577 = vadd.s32 %v570, 56
      %v578 = vadd.s32 %v570, 64
      %v579 = vadd.s32 %v570, 72
      %v580 = vadd.s32 %v570, 80
      %v581 = vadd.s32 %v570, 88
      %v582 = vadd.s32 %v570, 96
      %v583 = vadd.s32 %v570, 104
      %v584 = vadd.s32 %v570, 112
      %v585 = vadd.s32 %v570, 120
      %v586 = vadd.s32 %v570, 128
      %v587 = vadd.s32 %v570, 136
      %v588 = vadd.s32 %v570, 144
      %v589 = vadd.s32 %v570, 152
      %v590 = vadd.s32 %v570, 160
      %v591 = vadd.s32 %v570, 168
      %v592 = vadd.s32 %v570, 176
      %v593 = vadd.s32 %v570, 184
      %v594 = vadd.s32 %v570, 192
      %v595 = vadd.s32 %v570, 200
      %v596 = vadd.s32 %v570, 208
      %v597 = vadd.s32 %v570, 216
      %v598 = vadd.s32 %v570, 224
      %v599 = vadd.s32 %v570, 232
      %v600 = vadd.s32 %v570, 240
      %v601 = vadd.s32 %v570, 248
      %v602 = vand.u32 %v570, 15
      %v603 = vand.u32 %v571, 15
      %v604 = vand.u32 %v572, 15
      %v605 = vand.u32 %v573, 15
      %v606 = vand.u32 %v574, 15
      %v607 = vand.u32 %v575, 15
      %v608 = vand.u32 %v576, 15
      %v609 = vand.u32 %v577, 15
      %v610 = vand.u32 %v578, 15
      %v611 = vand.u32 %v579, 15
      %v612 = vand.u32 %v580, 15
      %v613 = vand.u32 %v581, 15
      %v614 = vand.u32 %v582, 15
      %v615 = vand.u32 %v583, 15
      %v616 = vand.u32 %v584, 15
      %v617 = vand.u32 %v585, 15
      %v618 = vand.u32 %v586, 15
      %v619 = vand.u32 %v587, 15
      %v620 = vand.u32 %v588, 15
      %v621 = vand.u32 %v589, 15
      %v622 = vand.u32 %v590, 15
      %v623 = vand.u32 %v591, 15
      %v624 = vand.u32 %v592, 15
      %v625 = vand.u32 %v593, 15
      %v626 = vand.u32 %v594, 15
      %v627 = vand.u32 %v595, 15
      %v628 = vand.u32 %v596, 15
      %v629 = vand.u32 %v597, 15
      %v630 = vand.u32 %v598, 15
      %v631 = vand.u32 %v599, 15
      %v632 = vand.u32 %v600, 15
      %v633 = vand.u32 %v601, 15
      %v634 = vld [vmem:[%s558] sm:$0xff]
      %v635 = vld [vmem:[%s558 + $0x8] sm:$0xff]
      %v636 = vld [vmem:[%s558 + $0x10] sm:$0xff]
      %v637 = vld [vmem:[%s558 + $0x18] sm:$0xff]
      %v638 = vld [vmem:[%s558 + $0x20] sm:$0xff]
      %v639 = vld [vmem:[%s558 + $0x28] sm:$0xff]
      %v640 = vld [vmem:[%s558 + $0x30] sm:$0xff]
      %v641 = vld [vmem:[%s558 + $0x38] sm:$0xff]
      %v642 = vld [vmem:[%s558 + $0x40] sm:$0xff]
      %v643 = vld [vmem:[%s558 + $0x48] sm:$0xff]
      %v644 = vld [vmem:[%s558 + $0x50] sm:$0xff]
      %v645 = vld [vmem:[%s558 + $0x58] sm:$0xff]
      %v646 = vld [vmem:[%s558 + $0x60] sm:$0xff]
      %v647 = vld [vmem:[%s558 + $0x68] sm:$0xff]
      %v648 = vld [vmem:[%s558 + $0x70] sm:$0xff]
      %v649 = vld [vmem:[%s558 + $0x78] sm:$0xff]
      %v650 = vld [vmem:[%s558 + $0x80] sm:$0xff]
      %v651 = vld [vmem:[%s558 + $0x88] sm:$0xff]
      %v652 = vld [vmem:[%s558 + $0x90] sm:$0xff]
      %v653 = vld [vmem:[%s558 + $0x98] sm:$0xff]
      %v654 = vld [vmem:[%s558 + $0xa0] sm:$0xff]
      %v655 = vld [vmem:[%s558 + $0xa8] sm:$0xff]
      %v656 = vld [vmem:[%s558 + $0xb0] sm:$0xff]
      %v657 = vld [vmem:[%s558 + $0xb8] sm:$0xff]
      %v658 = vld [vmem:[%s558 + $0xc0] sm:$0xff]
      %v659 = vld [vmem:[%s558 + $0xc8] sm:$0xff]
      %v660 = vld [vmem:[%s558 + $0xd0] sm:$0xff]
      %v661 = vld [vmem:[%s558 + $0xd8] sm:$0xff]
      %v662 = vld [vmem:[%s558 + $0xe0] sm:$0xff]
      %v663 = vld [vmem:[%s558 + $0xe8] sm:$0xff]
      %v664 = vld [vmem:[%s558 + $0xf0] sm:$0xff]
      %v665 = vld [vmem:[%s558 + $0xf8] sm:$0xff]
      %v666 = vld [vmem:[%s2] sm:$0xff]
      %v667 = vld [vmem:[%s2 + $0x8] sm:$0xff]
      %v668 = vld [vmem:[%s2 + $0x10] sm:$0xff]
      %v669 = vld [vmem:[%s2 + $0x18] sm:$0xff]
      %v670 = vld [vmem:[%s2 + $0x20] sm:$0xf]
      %vm671 = vcmask 293888
      %v673 = vsel %vm671, %v634, 0
      %v676 = vsel %vm671, %v635, 0
      %v679 = vsel %vm671, %v636, 0
      %v682 = vsel %vm671, %v637, 0
      %v685 = vsel %vm671, %v638, 0
      %v688 = vsel %vm671, %v639, 0
      %v691 = vsel %vm671, %v640, 0
      %v694 = vsel %vm671, %v641, 0
      %v697 = vsel %vm671, %v642, 0
      %v700 = vsel %vm671, %v643, 0
      %v703 = vsel %vm671, %v644, 0
      %v706 = vsel %vm671, %v645, 0
      %v709 = vsel %vm671, %v646, 0
      %v712 = vsel %vm671, %v647, 0
      %v715 = vsel %vm671, %v648, 0
      %v718 = vsel %vm671, %v649, 0
      %v721 = vsel %vm671, %v650, 0
      %v724 = vsel %vm671, %v651, 0
      %v727 = vsel %vm671, %v652, 0
      %v730 = vsel %vm671, %v653, 0
      %v733 = vsel %vm671, %v654, 0
      %v736 = vsel %vm671, %v655, 0
      %v739 = vsel %vm671, %v656, 0
      %v742 = vsel %vm671, %v657, 0
      %v745 = vsel %vm671, %v658, 0
      %v748 = vsel %vm671, %v659, 0
      %v751 = vsel %vm671, %v660, 0
      %v754 = vsel %vm671, %v661, 0
      %v757 = vsel %vm671, %v662, 0
      %v760 = vsel %vm671, %v663, 0
      %v763 = vsel %vm671, %v664, 0
      %v766 = vsel %vm671, %v665, 0
      %vm768 = vcmask 1043456
      %v770 = vsel %vm768, %v670, 0
      %772 = vmatpush.msra.mxu0 0.0
      %773 = vmatpush.msra.mxu0 0.0
      %774 = vmatpush.msra.mxu0 0.0
      %775 = vmatpush.msra.mxu0 0.0
      %776 = vmatpush.msra.mxu0 0.0
      %777 = vmatpush.msra.mxu0 0.0
      %778 = vmatpush.msra.mxu0 0.0
      %779 = vmatpush.msra.mxu0 0.0
      %780 = vmatpush.msra.mxu0 0.0
      %781 = vmatpush.msra.mxu0 0.0
      %782 = vmatpush.msra.mxu0 0.0
      %783 = vmatpush.msra.mxu0 %v770
      %784 = vmatpush.msra.mxu0 %v669
      %785 = vmatpush.msra.mxu0 %v668
      %786 = vmatpush.msra.mxu0 %v667
      %787 = vmatpush.msra.mxu0 %v666
      %788 = vmatmul.f32.gmra.mxu0 %v673
      %v789 = vpop.f32.mrf.mxu0
      %v790 = vadd.f32 0.0, %v789
      %791 = vmatmul.f32.gmra.mxu0 %v676
      %v792 = vpop.f32.mrf.mxu0
      %v793 = vadd.f32 0.0, %v792
      %794 = vmatmul.f32.gmra.mxu0 %v679
      %v795 = vpop.f32.mrf.mxu0
      %v796 = vadd.f32 0.0, %v795
      %797 = vmatmul.f32.gmra.mxu0 %v682
      %v798 = vpop.f32.mrf.mxu0
      %v799 = vadd.f32 0.0, %v798
      %800 = vmatmul.f32.gmra.mxu0 %v685
      %v801 = vpop.f32.mrf.mxu0
      %v802 = vadd.f32 0.0, %v801
      %803 = vmatmul.f32.gmra.mxu0 %v688
      %v804 = vpop.f32.mrf.mxu0
      %v805 = vadd.f32 0.0, %v804
      %806 = vmatmul.f32.gmra.mxu0 %v691
      %v807 = vpop.f32.mrf.mxu0
      %v808 = vadd.f32 0.0, %v807
      %809 = vmatmul.f32.gmra.mxu0 %v694
      %v810 = vpop.f32.mrf.mxu0
      %v811 = vadd.f32 0.0, %v810
      %812 = vmatmul.f32.gmra.mxu0 %v697
      %v813 = vpop.f32.mrf.mxu0
      %v814 = vadd.f32 0.0, %v813
      %815 = vmatmul.f32.gmra.mxu0 %v700
      %v816 = vpop.f32.mrf.mxu0
      %v817 = vadd.f32 0.0, %v816
      %818 = vmatmul.f32.gmra.mxu0 %v703
      %v819 = vpop.f32.mrf.mxu0
      %v820 = vadd.f32 0.0, %v819
      %821 = vmatmul.f32.gmra.mxu0 %v706
      %v822 = vpop.f32.mrf.mxu0
      %v823 = vadd.f32 0.0, %v822
      %824 = vmatmul.f32.gmra.mxu0 %v709
      %v825 = vpop.f32.mrf.mxu0
      %v826 = vadd.f32 0.0, %v825
      %827 = vmatmul.f32.gmra.mxu0 %v712
      %v828 = vpop.f32.mrf.mxu0
      %v829 = vadd.f32 0.0, %v828
      %830 = vmatmul.f32.gmra.mxu0 %v715
      %v831 = vpop.f32.mrf.mxu0
      %v832 = vadd.f32 0.0, %v831
      %833 = vmatmul.f32.gmra.mxu0 %v718
      %v834 = vpop.f32.mrf.mxu0
      %v835 = vadd.f32 0.0, %v834
      %836 = vmatmul.f32.gmra.mxu0 %v721
      %v837 = vpop.f32.mrf.mxu0
      %v838 = vadd.f32 0.0, %v837
      %839 = vmatmul.f32.gmra.mxu0 %v724
      %v840 = vpop.f32.mrf.mxu0
      %v841 = vadd.f32 0.0, %v840
      %842 = vmatmul.f32.gmra.mxu0 %v727
      %v843 = vpop.f32.mrf.mxu0
      %v844 = vadd.f32 0.0, %v843
      %845 = vmatmul.f32.gmra.mxu0 %v730
      %v846 = vpop.f32.mrf.mxu0
      %v847 = vadd.f32 0.0, %v846
      %848 = vmatmul.f32.gmra.mxu0 %v733
      %v849 = vpop.f32.mrf.mxu0
      %v850 = vadd.f32 0.0, %v849
      %851 = vmatmul.f32.gmra.mxu0 %v736
      %v852 = vpop.f32.mrf.mxu0
      %v853 = vadd.f32 0.0, %v852
      %854 = vmatmul.f32.gmra.mxu0 %v739
      %v855 = vpop.f32.mrf.mxu0
      %v856 = vadd.f32 0.0, %v855
      %857 = vmatmul.f32.gmra.mxu0 %v742
      %v858 = vpop.f32.mrf.mxu0
      %v859 = vadd.f32 0.0, %v858
      %860 = vmatmul.f32.gmra.mxu0 %v745
      %v861 = vpop.f32.mrf.mxu0
      %v862 = vadd.f32 0.0, %v861
      %863 = vmatmul.f32.gmra.mxu0 %v748
      %v864 = vpop.f32.mrf.mxu0
      %v865 = vadd.f32 0.0, %v864
      %866 = vmatmul.f32.gmra.mxu0 %v751
      %v867 = vpop.f32.mrf.mxu0
      %v868 = vadd.f32 0.0, %v867
      %869 = vmatmul.f32.gmra.mxu0 %v754
      %v870 = vpop.f32.mrf.mxu0
      %v871 = vadd.f32 0.0, %v870
      %872 = vmatmul.f32.gmra.mxu0 %v757
      %v873 = vpop.f32.mrf.mxu0
      %v874 = vadd.f32 0.0, %v873
      %875 = vmatmul.f32.gmra.mxu0 %v760
      %v876 = vpop.f32.mrf.mxu0
      %v877 = vadd.f32 0.0, %v876
      %878 = vmatmul.f32.gmra.mxu0 %v763
      %v879 = vpop.f32.mrf.mxu0
      %v880 = vadd.f32 0.0, %v879
      %881 = vmatmul.f32.gmra.mxu0 %v766
      %v882 = vpop.f32.mrf.mxu0
      %v883 = vadd.f32 0.0, %v882
      %884 = vdwg.mxu0
      %v885 = vld [vmem:[%s3] sm:$0x1]
      %v887 = vperm.slane %v885, 0
      %v889 = vmul.f32 %v790, %v887
      %v890 = vmul.f32 %v793, %v887
      %v891 = vmul.f32 %v796, %v887
      %v892 = vmul.f32 %v799, %v887
      %v893 = vmul.f32 %v802, %v887
      %v894 = vmul.f32 %v805, %v887
      %v895 = vmul.f32 %v808, %v887
      %v896 = vmul.f32 %v811, %v887
      %v897 = vmul.f32 %v814, %v887
      %v898 = vmul.f32 %v817, %v887
      %v899 = vmul.f32 %v820, %v887
      %v900 = vmul.f32 %v823, %v887
      %v901 = vmul.f32 %v826, %v887
      %v902 = vmul.f32 %v829, %v887
      %v903 = vmul.f32 %v832, %v887
      %v904 = vmul.f32 %v835, %v887
      %v905 = vmul.f32 %v838, %v887
      %v906 = vmul.f32 %v841, %v887
      %v907 = vmul.f32 %v844, %v887
      %v908 = vmul.f32 %v847, %v887
      %v909 = vmul.f32 %v850, %v887
      %v910 = vmul.f32 %v853, %v887
      %v911 = vmul.f32 %v856, %v887
      %v912 = vmul.f32 %v859, %v887
      %v913 = vmul.f32 %v862, %v887
      %v914 = vmul.f32 %v865, %v887
      %v915 = vmul.f32 %v868, %v887
      %v916 = vmul.f32 %v871, %v887
      %v917 = vmul.f32 %v874, %v887
      %v918 = vmul.f32 %v877, %v887
      %v919 = vmul.f32 %v880, %v887
      %v920 = vmul.f32 %v883, %v887
      %v921 = vld [vmem:[%s4] sm:$0x1]
      %v923 = vperm.slane %v921, 0
      %v925 = vadd.f32 %v889, %v923
      %v926 = vadd.f32 %v890, %v923
      %v927 = vadd.f32 %v891, %v923
      %v928 = vadd.f32 %v892, %v923
      %v929 = vadd.f32 %v893, %v923
      %v930 = vadd.f32 %v894, %v923
      %v931 = vadd.f32 %v895, %v923
      %v932 = vadd.f32 %v896, %v923
      %v933 = vadd.f32 %v897, %v923
      %v934 = vadd.f32 %v898, %v923
      %v935 = vadd.f32 %v899, %v923
      %v936 = vadd.f32 %v900, %v923
      %v937 = vadd.f32 %v901, %v923
      %v938 = vadd.f32 %v902, %v923
      %v939 = vadd.f32 %v903, %v923
      %v940 = vadd.f32 %v904, %v923
      %v941 = vadd.f32 %v905, %v923
      %v942 = vadd.f32 %v906, %v923
      %v943 = vadd.f32 %v907, %v923
      %v944 = vadd.f32 %v908, %v923
      %v945 = vadd.f32 %v909, %v923
      %v946 = vadd.f32 %v910, %v923
      %v947 = vadd.f32 %v911, %v923
      %v948 = vadd.f32 %v912, %v923
      %v949 = vadd.f32 %v913, %v923
      %v950 = vadd.f32 %v914, %v923
      %v951 = vadd.f32 %v915, %v923
      %v952 = vadd.f32 %v916, %v923
      %v953 = vadd.f32 %v917, %v923
      %v954 = vadd.f32 %v918, %v923
      %v955 = vadd.f32 %v919, %v923
      %v956 = vadd.f32 %v920, %v923
      %v957 = vmax.f32 %v925, 0.0
      %v958 = vmax.f32 %v926, 0.0
      %v959 = vmax.f32 %v927, 0.0
      %v960 = vmax.f32 %v928, 0.0
      %v961 = vmax.f32 %v929, 0.0
      %v962 = vmax.f32 %v930, 0.0
      %v963 = vmax.f32 %v931, 0.0
      %v964 = vmax.f32 %v932, 0.0
      %v965 = vmax.f32 %v933, 0.0
      %v966 = vmax.f32 %v934, 0.0
      %v967 = vmax.f32 %v935, 0.0
      %v968 = vmax.f32 %v936, 0.0
      %v969 = vmax.f32 %v937, 0.0
      %v970 = vmax.f32 %v938, 0.0
      %v971 = vmax.f32 %v939, 0.0
      %v972 = vmax.f32 %v940, 0.0
      %v973 = vmax.f32 %v941, 0.0
      %v974 = vmax.f32 %v942, 0.0
      %v975 = vmax.f32 %v943, 0.0
      %v976 = vmax.f32 %v944, 0.0
      %v977 = vmax.f32 %v945, 0.0
      %v978 = vmax.f32 %v946, 0.0
      %v979 = vmax.f32 %v947, 0.0
      %v980 = vmax.f32 %v948, 0.0
      %v981 = vmax.f32 %v949, 0.0
      %v982 = vmax.f32 %v950, 0.0
      %v983 = vmax.f32 %v951, 0.0
      %v984 = vmax.f32 %v952, 0.0
      %v985 = vmax.f32 %v953, 0.0
      %v986 = vmax.f32 %v954, 0.0
      %v987 = vmax.f32 %v955, 0.0
      %v988 = vmax.f32 %v956, 0.0
      %v989 = vld [vmem:[%s5] sm:$0xff]
      %v990 = vld [vmem:[%s5 + $0x8] sm:$0xff]
      %v991 = vld [vmem:[%s5 + $0x10] sm:$0xff]
      %v992 = vld [vmem:[%s5 + $0x18] sm:$0xff]
      %v993 = vld [vmem:[%s5 + $0x20] sm:$0xf]
      %v995 = vsel %vm768, %v993, 0
      %997 = vmatpush.msra.mxu0 0.0
      %998 = vmatpush.msra.mxu0 0.0
      %999 = vmatpush.msra.mxu0 0.0
      %1000 = vmatpush.msra.mxu0 0.0
      %1001 = vmatpush.msra.mxu0 0.0
      %1002 = vmatpush.msra.mxu0 0.0
      %1003 = vmatpush.msra.mxu0 0.0
      %1004 = vmatpush.msra.mxu0 0.0
      %1005 = vmatpush.msra.mxu0 0.0
      %1006 = vmatpush.msra.mxu0 0.0
      %1007 = vmatpush.msra.mxu0 0.0
      %1008 = vmatpush.msra.mxu0 %v995
      %1009 = vmatpush.msra.mxu0 %v992
      %1010 = vmatpush.msra.mxu0 %v991
      %1011 = vmatpush.msra.mxu0 %v990
      %1012 = vmatpush.msra.mxu0 %v989
      %1013 = vmatmul.f32.gmra.mxu0 %v673
      %v1014 = vpop.f32.mrf.mxu0
      %v1015 = vadd.f32 0.0, %v1014
      %1016 = vmatmul.f32.gmra.mxu0 %v676
      %v1017 = vpop.f32.mrf.mxu0
      %v1018 = vadd.f32 0.0, %v1017
      %1019 = vmatmul.f32.gmra.mxu0 %v679
      %v1020 = vpop.f32.mrf.mxu0
      %v1021 = vadd.f32 0.0, %v1020
      %1022 = vmatmul.f32.gmra.mxu0 %v682
      %v1023 = vpop.f32.mrf.mxu0
      %v1024 = vadd.f32 0.0, %v1023
      %1025 = vmatmul.f32.gmra.mxu0 %v685
      %v1026 = vpop.f32.mrf.mxu0
      %v1027 = vadd.f32 0.0, %v1026
      %1028 = vmatmul.f32.gmra.mxu0 %v688
      %v1029 = vpop.f32.mrf.mxu0
      %v1030 = vadd.f32 0.0, %v1029
      %1031 = vmatmul.f32.gmra.mxu0 %v691
      %v1032 = vpop.f32.mrf.mxu0
      %v1033 = vadd.f32 0.0, %v1032
      %1034 = vmatmul.f32.gmra.mxu0 %v694
      %v1035 = vpop.f32.mrf.mxu0
      %v1036 = vadd.f32 0.0, %v1035
      %1037 = vmatmul.f32.gmra.mxu0 %v697
      %v1038 = vpop.f32.mrf.mxu0
      %v1039 = vadd.f32 0.0, %v1038
      %1040 = vmatmul.f32.gmra.mxu0 %v700
      %v1041 = vpop.f32.mrf.mxu0
      %v1042 = vadd.f32 0.0, %v1041
      %1043 = vmatmul.f32.gmra.mxu0 %v703
      %v1044 = vpop.f32.mrf.mxu0
      %v1045 = vadd.f32 0.0, %v1044
      %1046 = vmatmul.f32.gmra.mxu0 %v706
      %v1047 = vpop.f32.mrf.mxu0
      %v1048 = vadd.f32 0.0, %v1047
      %1049 = vmatmul.f32.gmra.mxu0 %v709
      %v1050 = vpop.f32.mrf.mxu0
      %v1051 = vadd.f32 0.0, %v1050
      %1052 = vmatmul.f32.gmra.mxu0 %v712
      %v1053 = vpop.f32.mrf.mxu0
      %v1054 = vadd.f32 0.0, %v1053
      %1055 = vmatmul.f32.gmra.mxu0 %v715
      %v1056 = vpop.f32.mrf.mxu0
      %v1057 = vadd.f32 0.0, %v1056
      %1058 = vmatmul.f32.gmra.mxu0 %v718
      %v1059 = vpop.f32.mrf.mxu0
      %v1060 = vadd.f32 0.0, %v1059
      %1061 = vmatmul.f32.gmra.mxu0 %v721
      %v1062 = vpop.f32.mrf.mxu0
      %v1063 = vadd.f32 0.0, %v1062
      %1064 = vmatmul.f32.gmra.mxu0 %v724
      %v1065 = vpop.f32.mrf.mxu0
      %v1066 = vadd.f32 0.0, %v1065
      %1067 = vmatmul.f32.gmra.mxu0 %v727
      %v1068 = vpop.f32.mrf.mxu0
      %v1069 = vadd.f32 0.0, %v1068
      %1070 = vmatmul.f32.gmra.mxu0 %v730
      %v1071 = vpop.f32.mrf.mxu0
      %v1072 = vadd.f32 0.0, %v1071
      %1073 = vmatmul.f32.gmra.mxu0 %v733
      %v1074 = vpop.f32.mrf.mxu0
      %v1075 = vadd.f32 0.0, %v1074
      %1076 = vmatmul.f32.gmra.mxu0 %v736
      %v1077 = vpop.f32.mrf.mxu0
      %v1078 = vadd.f32 0.0, %v1077
      %1079 = vmatmul.f32.gmra.mxu0 %v739
      %v1080 = vpop.f32.mrf.mxu0
      %v1081 = vadd.f32 0.0, %v1080
      %1082 = vmatmul.f32.gmra.mxu0 %v742
      %v1083 = vpop.f32.mrf.mxu0
      %v1084 = vadd.f32 0.0, %v1083
      %1085 = vmatmul.f32.gmra.mxu0 %v745
      %v1086 = vpop.f32.mrf.mxu0
      %v1087 = vadd.f32 0.0, %v1086
      %1088 = vmatmul.f32.gmra.mxu0 %v748
      %v1089 = vpop.f32.mrf.mxu0
      %v1090 = vadd.f32 0.0, %v1089
      %1091 = vmatmul.f32.gmra.mxu0 %v751
      %v1092 = vpop.f32.mrf.mxu0
      %v1093 = vadd.f32 0.0, %v1092
      %1094 = vmatmul.f32.gmra.mxu0 %v754
      %v1095 = vpop.f32.mrf.mxu0
      %v1096 = vadd.f32 0.0, %v1095
      %1097 = vmatmul.f32.gmra.mxu0 %v757
      %v1098 = vpop.f32.mrf.mxu0
      %v1099 = vadd.f32 0.0, %v1098
      %1100 = vmatmul.f32.gmra.mxu0 %v760
      %v1101 = vpop.f32.mrf.mxu0
      %v1102 = vadd.f32 0.0, %v1101
      %1103 = vmatmul.f32.gmra.mxu0 %v763
      %v1104 = vpop.f32.mrf.mxu0
      %v1105 = vadd.f32 0.0, %v1104
      %1106 = vmatmul.f32.gmra.mxu0 %v766
      %v1107 = vpop.f32.mrf.mxu0
      %v1108 = vadd.f32 0.0, %v1107
      %1109 = vdwg.mxu0
      %v1110 = vld [vmem:[%s6] sm:$0x1]
      %v1112 = vperm.slane %v1110, 0
      %v1114 = vmul.f32 %v1015, %v1112
      %v1115 = vmul.f32 %v1018, %v1112
      %v1116 = vmul.f32 %v1021, %v1112
      %v1117 = vmul.f32 %v1024, %v1112
      %v1118 = vmul.f32 %v1027, %v1112
      %v1119 = vmul.f32 %v1030, %v1112
      %v1120 = vmul.f32 %v1033, %v1112
      %v1121 = vmul.f32 %v1036, %v1112
      %v1122 = vmul.f32 %v1039, %v1112
      %v1123 = vmul.f32 %v1042, %v1112
      %v1124 = vmul.f32 %v1045, %v1112
      %v1125 = vmul.f32 %v1048, %v1112
      %v1126 = vmul.f32 %v1051, %v1112
      %v1127 = vmul.f32 %v1054, %v1112
      %v1128 = vmul.f32 %v1057, %v1112
      %v1129 = vmul.f32 %v1060, %v1112
      %v1130 = vmul.f32 %v1063, %v1112
      %v1131 = vmul.f32 %v1066, %v1112
      %v1132 = vmul.f32 %v1069, %v1112
      %v1133 = vmul.f32 %v1072, %v1112
      %v1134 = vmul.f32 %v1075, %v1112
      %v1135 = vmul.f32 %v1078, %v1112
      %v1136 = vmul.f32 %v1081, %v1112
      %v1137 = vmul.f32 %v1084, %v1112
      %v1138 = vmul.f32 %v1087, %v1112
      %v1139 = vmul.f32 %v1090, %v1112
      %v1140 = vmul.f32 %v1093, %v1112
      %v1141 = vmul.f32 %v1096, %v1112
      %v1142 = vmul.f32 %v1099, %v1112
      %v1143 = vmul.f32 %v1102, %v1112
      %v1144 = vmul.f32 %v1105, %v1112
      %v1145 = vmul.f32 %v1108, %v1112
      %v1146 = vld [vmem:[%s7] sm:$0x1]
      %v1148 = vperm.slane %v1146, 0
      %v1150 = vadd.f32 %v1114, %v1148
      %v1151 = vadd.f32 %v1115, %v1148
      %v1152 = vadd.f32 %v1116, %v1148
      %v1153 = vadd.f32 %v1117, %v1148
      %v1154 = vadd.f32 %v1118, %v1148
      %v1155 = vadd.f32 %v1119, %v1148
      %v1156 = vadd.f32 %v1120, %v1148
      %v1157 = vadd.f32 %v1121, %v1148
      %v1158 = vadd.f32 %v1122, %v1148
      %v1159 = vadd.f32 %v1123, %v1148
      %v1160 = vadd.f32 %v1124, %v1148
      %v1161 = vadd.f32 %v1125, %v1148
      %v1162 = vadd.f32 %v1126, %v1148
      %v1163 = vadd.f32 %v1127, %v1148
      %v1164 = vadd.f32 %v1128, %v1148
      %v1165 = vadd.f32 %v1129, %v1148
      %v1166 = vadd.f32 %v1130, %v1148
      %v1167 = vadd.f32 %v1131, %v1148
      %v1168 = vadd.f32 %v1132, %v1148
      %v1169 = vadd.f32 %v1133, %v1148
      %v1170 = vadd.f32 %v1134, %v1148
      %v1171 = vadd.f32 %v1135, %v1148
      %v1172 = vadd.f32 %v1136, %v1148
      %v1173 = vadd.f32 %v1137, %v1148
      %v1174 = vadd.f32 %v1138, %v1148
      %v1175 = vadd.f32 %v1139, %v1148
      %v1176 = vadd.f32 %v1140, %v1148
      %v1177 = vadd.f32 %v1141, %v1148
      %v1178 = vadd.f32 %v1142, %v1148
      %v1179 = vadd.f32 %v1143, %v1148
      %v1180 = vadd.f32 %v1144, %v1148
      %v1181 = vadd.f32 %v1145, %v1148
      %v1182 = vmax.f32 %v1150, 0.0
      %v1183 = vmax.f32 %v1151, 0.0
      %v1184 = vmax.f32 %v1152, 0.0
      %v1185 = vmax.f32 %v1153, 0.0
      %v1186 = vmax.f32 %v1154, 0.0
      %v1187 = vmax.f32 %v1155, 0.0
      %v1188 = vmax.f32 %v1156, 0.0
      %v1189 = vmax.f32 %v1157, 0.0
      %v1190 = vmax.f32 %v1158, 0.0
      %v1191 = vmax.f32 %v1159, 0.0
      %v1192 = vmax.f32 %v1160, 0.0
      %v1193 = vmax.f32 %v1161, 0.0
      %v1194 = vmax.f32 %v1162, 0.0
      %v1195 = vmax.f32 %v1163, 0.0
      %v1196 = vmax.f32 %v1164, 0.0
      %v1197 = vmax.f32 %v1165, 0.0
      %v1198 = vmax.f32 %v1166, 0.0
      %v1199 = vmax.f32 %v1167, 0.0
      %v1200 = vmax.f32 %v1168, 0.0
      %v1201 = vmax.f32 %v1169, 0.0
      %v1202 = vmax.f32 %v1170, 0.0
      %v1203 = vmax.f32 %v1171, 0.0
      %v1204 = vmax.f32 %v1172, 0.0
      %v1205 = vmax.f32 %v1173, 0.0
      %v1206 = vmax.f32 %v1174, 0.0
      %v1207 = vmax.f32 %v1175, 0.0
      %v1208 = vmax.f32 %v1176, 0.0
      %v1209 = vmax.f32 %v1177, 0.0
      %v1210 = vmax.f32 %v1178, 0.0
      %v1211 = vmax.f32 %v1179, 0.0
      %v1212 = vmax.f32 %v1180, 0.0
      %v1213 = vmax.f32 %v1181, 0.0
      %1214 = vst [vmem:[#allocation2 + $0x18] sm:$0xff] %v957
      %1215 = vst [vmem:[#allocation2 + $0x20] sm:$0xff] %v958
      %1216 = vst [vmem:[#allocation2 + $0x28] sm:$0xff] %v959
      %1217 = vst [vmem:[#allocation2 + $0x30] sm:$0xff] %v960
      %1218 = vst [vmem:[#allocation2 + $0x38] sm:$0xff] %v961
      %1219 = vst [vmem:[#allocation2 + $0x40] sm:$0xff] %v962
      %1220 = vst [vmem:[#allocation2 + $0x48] sm:$0xff] %v963
      %1221 = vst [vmem:[#allocation2 + $0x50] sm:$0xff] %v964
      %1222 = vst [vmem:[#allocation2 + $0x58] sm:$0xff] %v965
      %1223 = vst [vmem:[#allocation2 + $0x60] sm:$0xff] %v966
      %1224 = vst [vmem:[#allocation2 + $0x68] sm:$0xff] %v967
      %1225 = vst [vmem:[#allocation2 + $0x70] sm:$0xff] %v968
      %1226 = vst [vmem:[#allocation2 + $0x78] sm:$0xff] %v969
      %1227 = vst [vmem:[#allocation2 + $0x80] sm:$0xff] %v970
      %1228 = vst [vmem:[#allocation2 + $0x88] sm:$0xff] %v971
      %1229 = vst [vmem:[#allocation2 + $0x90] sm:$0xff] %v972
      %1230 = vst [vmem:[#allocation2 + $0x98] sm:$0xff] %v973
      %1231 = vst [vmem:[#allocation2 + $0xa0] sm:$0xff] %v974
      %1232 = vst [vmem:[#allocation2 + $0xa8] sm:$0xff] %v975
      %1233 = vst [vmem:[#allocation2 + $0xb0] sm:$0xff] %v976
      %1234 = vst [vmem:[#allocation2 + $0xb8] sm:$0xff] %v977
      %1235 = vst [vmem:[#allocation2 + $0xc0] sm:$0xff] %v978
      %1236 = vst [vmem:[#allocation2 + $0xc8] sm:$0xff] %v979
      %1237 = vst [vmem:[#allocation2 + $0xd0] sm:$0xff] %v980
      %1238 = vst [vmem:[#allocation2 + $0xd8] sm:$0xff] %v981
      %1239 = vst [vmem:[#allocation2 + $0xe0] sm:$0xff] %v982
      %1240 = vst [vmem:[#allocation2 + $0xe8] sm:$0xff] %v983
      %1241 = vst [vmem:[#allocation2 + $0xf0] sm:$0xff] %v984
      %1242 = vst [vmem:[#allocation2 + $0xf8] sm:$0xff] %v985
      %1243 = vst [vmem:[#allocation2 + $0x100] sm:$0xff] %v986
      %1244 = vst [vmem:[#allocation2 + $0x108] sm:$0xff] %v987
      %1245 = vst [vmem:[#allocation2 + $0x110] sm:$0xff] %v988
      %v1246 = vld [vmem:[#allocation2 + $0x18] sm:$0xff]
      %v1247 = vld [vmem:[#allocation2 + $0x20] sm:$0xff]
      %v1248 = vld [vmem:[#allocation2 + $0x28] sm:$0xff]
      %v1249 = vld [vmem:[#allocation2 + $0x30] sm:$0xff]
      %v1250 = vld [vmem:[#allocation2 + $0x38] sm:$0xff]
      %v1251 = vld [vmem:[#allocation2 + $0x40] sm:$0xff]
      %v1252 = vld [vmem:[#allocation2 + $0x48] sm:$0xff]
      %v1253 = vld [vmem:[#allocation2 + $0x50] sm:$0xff]
      %v1254 = vld [vmem:[#allocation2 + $0x58] sm:$0xff]
      %v1255 = vld [vmem:[#allocation2 + $0x60] sm:$0xff]
      %v1256 = vld [vmem:[#allocation2 + $0x68] sm:$0xff]
      %v1257 = vld [vmem:[#allocation2 + $0x70] sm:$0xff]
      %v1258 = vld [vmem:[#allocation2 + $0x78] sm:$0xff]
      %v1259 = vld [vmem:[#allocation2 + $0x80] sm:$0xff]
      %v1260 = vld [vmem:[#allocation2 + $0x88] sm:$0xff]
      %v1261 = vld [vmem:[#allocation2 + $0x90] sm:$0xff]
      %v1262 = vld [vmem:[#allocation2 + $0x98] sm:$0xff]
      %v1263 = vld [vmem:[#allocation2 + $0xa0] sm:$0xff]
      %v1264 = vld [vmem:[#allocation2 + $0xa8] sm:$0xff]
      %v1265 = vld [vmem:[#allocation2 + $0xb0] sm:$0xff]
      %v1266 = vld [vmem:[#allocation2 + $0xb8] sm:$0xff]
      %v1267 = vld [vmem:[#allocation2 + $0xc0] sm:$0xff]
      %v1268 = vld [vmem:[#allocation2 + $0xc8] sm:$0xff]
      %v1269 = vld [vmem:[#allocation2 + $0xd0] sm:$0xff]
      %v1270 = vld [vmem:[#allocation2 + $0xd8] sm:$0xff]
      %v1271 = vld [vmem:[#allocation2 + $0xe0] sm:$0xff]
      %v1272 = vld [vmem:[#allocation2 + $0xe8] sm:$0xff]
      %v1273 = vld [vmem:[#allocation2 + $0xf0] sm:$0xff]
      %v1274 = vld [vmem:[#allocation2 + $0xf8] sm:$0xff]
      %v1275 = vld [vmem:[#allocation2 + $0x100] sm:$0xff]
      %v1276 = vld [vmem:[#allocation2 + $0x108] sm:$0xff]
      %v1277 = vld [vmem:[#allocation2 + $0x110] sm:$0xff]
      %v1278 = vld [vmem:[#allocation2 + $0x118] sm:$0xff]
      %v1279 = vld [vmem:[#allocation2 + $0x120] sm:$0xff]
      %vm1280 = vcmp.lt.s32.totalorder %v570, 240
      %vm1281 = vcmp.lt.s32.totalorder %v571, 240
      %vm1282 = vcmp.lt.s32.totalorder %v572, 240
      %vm1283 = vcmp.lt.s32.totalorder %v573, 240
      %vm1284 = vcmp.lt.s32.totalorder %v574, 240
      %vm1285 = vcmp.lt.s32.totalorder %v575, 240
      %vm1286 = vcmp.lt.s32.totalorder %v576, 240
      %vm1287 = vcmp.lt.s32.totalorder %v577, 240
      %vm1288 = vcmp.lt.s32.totalorder %v578, 240
      %vm1289 = vcmp.lt.s32.totalorder %v579, 240
      %vm1290 = vcmp.lt.s32.totalorder %v580, 240
      %vm1291 = vcmp.lt.s32.totalorder %v581, 240
      %vm1292 = vcmp.lt.s32.totalorder %v582, 240
      %vm1293 = vcmp.lt.s32.totalorder %v583, 240
      %vm1294 = vcmp.lt.s32.totalorder %v584, 240
      %vm1295 = vcmp.lt.s32.totalorder %v585, 240
      %vm1296 = vcmp.lt.s32.totalorder %v586, 240
      %vm1297 = vcmp.lt.s32.totalorder %v587, 240
      %vm1298 = vcmp.lt.s32.totalorder %v588, 240
      %vm1299 = vcmp.lt.s32.totalorder %v589, 240
      %vm1300 = vcmp.lt.s32.totalorder %v590, 240
      %vm1301 = vcmp.lt.s32.totalorder %v591, 240
      %vm1302 = vcmp.lt.s32.totalorder %v592, 240
      %vm1303 = vcmp.lt.s32.totalorder %v593, 240
      %vm1304 = vcmp.lt.s32.totalorder %v594, 240
      %vm1305 = vcmp.lt.s32.totalorder %v595, 240
      %vm1306 = vcmp.lt.s32.totalorder %v596, 240
      %vm1307 = vcmp.lt.s32.totalorder %v597, 240
      %vm1308 = vcmp.lt.s32.totalorder %v598, 240
      %vm1309 = vcmp.lt.s32.totalorder %v599, 240
      %vm1310 = vcmp.lt.s32.totalorder %v600, 240
      %vm1311 = vcmp.lt.s32.totalorder %v601, 240
      %v1312 = vsel %vm1280, %v1248, -inf
      %v1313 = vsel %vm1281, %v1249, -inf
      %v1314 = vsel %vm1282, %v1250, -inf
      %v1315 = vsel %vm1283, %v1251, -inf
      %v1316 = vsel %vm1284, %v1252, -inf
      %v1317 = vsel %vm1285, %v1253, -inf
      %v1318 = vsel %vm1286, %v1254, -inf
      %v1319 = vsel %vm1287, %v1255, -inf
      %v1320 = vsel %vm1288, %v1256, -inf
      %v1321 = vsel %vm1289, %v1257, -inf
      %v1322 = vsel %vm1290, %v1258, -inf
      %v1323 = vsel %vm1291, %v1259, -inf
      %v1324 = vsel %vm1292, %v1260, -inf
      %v1325 = vsel %vm1293, %v1261, -inf
      %v1326 = vsel %vm1294, %v1262, -inf
      %v1327 = vsel %vm1295, %v1263, -inf
      %v1328 = vsel %vm1296, %v1264, -inf
      %v1329 = vsel %vm1297, %v1265, -inf
      %v1330 = vsel %vm1298, %v1266, -inf
      %v1331 = vsel %vm1299, %v1267, -inf
      %v1332 = vsel %vm1300, %v1268, -inf
      %v1333 = vsel %vm1301, %v1269, -inf
      %v1334 = vsel %vm1302, %v1270, -inf
      %v1335 = vsel %vm1303, %v1271, -inf
      %v1336 = vsel %vm1304, %v1272, -inf
      %v1337 = vsel %vm1305, %v1273, -inf
      %v1338 = vsel %vm1306, %v1274, -inf
      %v1339 = vsel %vm1307, %v1275, -inf
      %v1340 = vsel %vm1308, %v1276, -inf
      %v1341 = vsel %vm1309, %v1277, -inf
      %v1342 = vsel %vm1310, %v1278, -inf
      %v1343 = vsel %vm1311, %v1279, -inf
      %v1344 = vmax.f32 %v1246, %v1312
      %v1345 = vmax.f32 %v1247, %v1313
      %v1346 = vmax.f32 %v1248, %v1314
      %v1347 = vmax.f32 %v1249, %v1315
      %v1348 = vmax.f32 %v1250, %v1316
      %v1349 = vmax.f32 %v1251, %v1317
      %v1350 = vmax.f32 %v1252, %v1318
      %v1351 = vmax.f32 %v1253, %v1319
      %v1352 = vmax.f32 %v1254, %v1320
      %v1353 = vmax.f32 %v1255, %v1321
      %v1354 = vmax.f32 %v1256, %v1322
      %v1355 = vmax.f32 %v1257, %v1323
      %v1356 = vmax.f32 %v1258, %v1324
      %v1357 = vmax.f32 %v1259, %v1325
      %v1358 = vmax.f32 %v1260, %v1326
      %v1359 = vmax.f32 %v1261, %v1327
      %v1360 = vmax.f32 %v1262, %v1328
      %v1361 = vmax.f32 %v1263, %v1329
      %v1362 = vmax.f32 %v1264, %v1330
      %v1363 = vmax.f32 %v1265, %v1331
      %v1364 = vmax.f32 %v1266, %v1332
      %v1365 = vmax.f32 %v1267, %v1333
      %v1366 = vmax.f32 %v1268, %v1334
      %v1367 = vmax.f32 %v1269, %v1335
      %v1368 = vmax.f32 %v1270, %v1336
      %v1369 = vmax.f32 %v1271, %v1337
      %v1370 = vmax.f32 %v1272, %v1338
      %v1371 = vmax.f32 %v1273, %v1339
      %v1372 = vmax.f32 %v1274, %v1340
      %v1373 = vmax.f32 %v1275, %v1341
      %v1374 = vmax.f32 %v1276, %v1342
      %v1375 = vmax.f32 %v1277, %v1343
      %1376 = vst [vmem:[#allocation2 + $0x18] sm:$0xff] %v1344
      %1377 = vst [vmem:[#allocation2 + $0x20] sm:$0xff] %v1345
      %1378 = vst [vmem:[#allocation2 + $0x28] sm:$0xff] %v1346
      %1379 = vst [vmem:[#allocation2 + $0x30] sm:$0xff] %v1347
      %1380 = vst [vmem:[#allocation2 + $0x38] sm:$0xff] %v1348
      %1381 = vst [vmem:[#allocation2 + $0x40] sm:$0xff] %v1349
      %1382 = vst [vmem:[#allocation2 + $0x48] sm:$0xff] %v1350
      %1383 = vst [vmem:[#allocation2 + $0x50] sm:$0xff] %v1351
      %1384 = vst [vmem:[#allocation2 + $0x58] sm:$0xff] %v1352
      %1385 = vst [vmem:[#allocation2 + $0x60] sm:$0xff] %v1353
      %1386 = vst [vmem:[#allocation2 + $0x68] sm:$0xff] %v1354
      %1387 = vst [vmem:[#allocation2 + $0x70] sm:$0xff] %v1355
      %1388 = vst [vmem:[#allocation2 + $0x78] sm:$0xff] %v1356
      %1389 = vst [vmem:[#allocation2 + $0x80] sm:$0xff] %v1357
      %1390 = vst [vmem:[#allocation2 + $0x88] sm:$0xff] %v1358
      %1391 = vst [vmem:[#allocation2 + $0x90] sm:$0xff] %v1359
      %1392 = vst [vmem:[#allocation2 + $0x98] sm:$0xff] %v1360
      %1393 = vst [vmem:[#allocation2 + $0xa0] sm:$0xff] %v1361
      %1394 = vst [vmem:[#allocation2 + $0xa8] sm:$0xff] %v1362
      %1395 = vst [vmem:[#allocation2 + $0xb0] sm:$0xff] %v1363
      %1396 = vst [vmem:[#allocation2 + $0xb8] sm:$0xff] %v1364
      %1397 = vst [vmem:[#allocation2 + $0xc0] sm:$0xff] %v1365
      %1398 = vst [vmem:[#allocation2 + $0xc8] sm:$0xff] %v1366
      %1399 = vst [vmem:[#allocation2 + $0xd0] sm:$0xff] %v1367
      %1400 = vst [vmem:[#allocation2 + $0xd8] sm:$0xff] %v1368
      %1401 = vst [vmem:[#allocation2 + $0xe0] sm:$0xff] %v1369
      %1402 = vst [vmem:[#allocation2 + $0xe8] sm:$0xff] %v1370
      %1403 = vst [vmem:[#allocation2 + $0xf0] sm:$0xff] %v1371
      %1404 = vst [vmem:[#allocation2 + $0xf8] sm:$0xff] %v1372
      %1405 = vst [vmem:[#allocation2 + $0x100] sm:$0xff] %v1373
      %1406 = vst [vmem:[#allocation2 + $0x108] sm:$0xff] %v1374
      %1407 = vst [vmem:[#allocation2 + $0x110] sm:$0xff] %v1375
      %v1408 = vld [vmem:[#allocation2 + $0x18] sm:$0xff]
      %v1409 = vld [vmem:[#allocation2 + $0x20] sm:$0xff]
      %v1410 = vld [vmem:[#allocation2 + $0x28] sm:$0xff]
      %v1411 = vld [vmem:[#allocation2 + $0x30] sm:$0xff]
      %v1412 = vld [vmem:[#allocation2 + $0x38] sm:$0xff]
      %v1413 = vld [vmem:[#allocation2 + $0x40] sm:$0xff]
      %v1414 = vld [vmem:[#allocation2 + $0x48] sm:$0xff]
      %v1415 = vld [vmem:[#allocation2 + $0x50] sm:$0xff]
      %v1416 = vld [vmem:[#allocation2 + $0x58] sm:$0xff]
      %v1417 = vld [vmem:[#allocation2 + $0x60] sm:$0xff]
      %v1418 = vld [vmem:[#allocation2 + $0x68] sm:$0xff]
      %v1419 = vld [vmem:[#allocation2 + $0x70] sm:$0xff]
      %v1420 = vld [vmem:[#allocation2 + $0x78] sm:$0xff]
      %v1421 = vld [vmem:[#allocation2 + $0x80] sm:$0xff]
      %v1422 = vld [vmem:[#allocation2 + $0x88] sm:$0xff]
      %v1423 = vld [vmem:[#allocation2 + $0x90] sm:$0xff]
      %v1424 = vld [vmem:[#allocation2 + $0x98] sm:$0xff]
      %v1425 = vld [vmem:[#allocation2 + $0xa0] sm:$0xff]
      %v1426 = vld [vmem:[#allocation2 + $0xa8] sm:$0xff]
      %v1427 = vld [vmem:[#allocation2 + $0xb0] sm:$0xff]
      %v1428 = vld [vmem:[#allocation2 + $0xb8] sm:$0xff]
      %v1429 = vld [vmem:[#allocation2 + $0xc0] sm:$0xff]
      %v1430 = vld [vmem:[#allocation2 + $0xc8] sm:$0xff]
      %v1431 = vld [vmem:[#allocation2 + $0xd0] sm:$0xff]
      %v1432 = vld [vmem:[#allocation2 + $0xd8] sm:$0xff]
      %v1433 = vld [vmem:[#allocation2 + $0xe0] sm:$0xff]
      %v1434 = vld [vmem:[#allocation2 + $0xe8] sm:$0xff]
      %v1435 = vld [vmem:[#allocation2 + $0xf0] sm:$0xff]
      %v1436 = vld [vmem:[#allocation2 + $0xf8] sm:$0xff]
      %v1437 = vld [vmem:[#allocation2 + $0x100] sm:$0xff]
      %v1438 = vld [vmem:[#allocation2 + $0x108] sm:$0xff]
      %v1439 = vld [vmem:[#allocation2 + $0x110] sm:$0xff]
      %v1440 = vld [vmem:[#allocation2 + $0x118] sm:$0xff]
      %v1441 = vld [vmem:[#allocation2 + $0x120] sm:$0xff]
      %v1442 = vld [vmem:[#allocation2 + $0x128] sm:$0xff]
      %v1443 = vld [vmem:[#allocation2 + $0x130] sm:$0xff]
      %vm1444 = vcmp.lt.s32.totalorder %v570, 224
      %vm1445 = vcmp.lt.s32.totalorder %v571, 224
      %vm1446 = vcmp.lt.s32.totalorder %v572, 224
      %vm1447 = vcmp.lt.s32.totalorder %v573, 224
      %vm1448 = vcmp.lt.s32.totalorder %v574, 224
      %vm1449 = vcmp.lt.s32.totalorder %v575, 224
      %vm1450 = vcmp.lt.s32.totalorder %v576, 224
      %vm1451 = vcmp.lt.s32.totalorder %v577, 224
      %vm1452 = vcmp.lt.s32.totalorder %v578, 224
      %vm1453 = vcmp.lt.s32.totalorder %v579, 224
      %vm1454 = vcmp.lt.s32.totalorder %v580, 224
      %vm1455 = vcmp.lt.s32.totalorder %v581, 224
      %vm1456 = vcmp.lt.s32.totalorder %v582, 224
      %vm1457 = vcmp.lt.s32.totalorder %v583, 224
      %vm1458 = vcmp.lt.s32.totalorder %v584, 224
      %vm1459 = vcmp.lt.s32.totalorder %v585, 224
      %vm1460 = vcmp.lt.s32.totalorder %v586, 224
      %vm1461 = vcmp.lt.s32.totalorder %v587, 224
      %vm1462 = vcmp.lt.s32.totalorder %v588, 224
      %vm1463 = vcmp.lt.s32.totalorder %v589, 224
      %vm1464 = vcmp.lt.s32.totalorder %v590, 224
      %vm1465 = vcmp.lt.s32.totalorder %v591, 224
      %vm1466 = vcmp.lt.s32.totalorder %v592, 224
      %vm1467 = vcmp.lt.s32.totalorder %v593, 224
      %vm1468 = vcmp.lt.s32.totalorder %v594, 224
      %vm1469 = vcmp.lt.s32.totalorder %v595, 224
      %vm1470 = vcmp.lt.s32.totalorder %v596, 224
      %vm1471 = vcmp.lt.s32.totalorder %v597, 224
      %vm1472 = vcmp.lt.s32.totalorder %v598, 224
      %vm1473 = vcmp.lt.s32.totalorder %v599, 224
      %vm1474 = vcmp.lt.s32.totalorder %v600, 224
      %vm1475 = vcmp.lt.s32.totalorder %v601, 224
      %v1476 = vsel %vm1444, %v1412, -inf
      %v1477 = vsel %vm1445, %v1413, -inf
      %v1478 = vsel %vm1446, %v1414, -inf
      %v1479 = vsel %vm1447, %v1415, -inf
      %v1480 = vsel %vm1448, %v1416, -inf
      %v1481 = vsel %vm1449, %v1417, -inf
      %v1482 = vsel %vm1450, %v1418, -inf
      %v1483 = vsel %vm1451, %v1419, -inf
      %v1484 = vsel %vm1452, %v1420, -inf
      %v1485 = vsel %vm1453, %v1421, -inf
      %v1486 = vsel %vm1454, %v1422, -inf
      %v1487 = vsel %vm1455, %v1423, -inf
      %v1488 = vsel %vm1456, %v1424, -inf
      %v1489 = vsel %vm1457, %v1425, -inf
      %v1490 = vsel %vm1458, %v1426, -inf
      %v1491 = vsel %vm1459, %v1427, -inf
      %v1492 = vsel %vm1460, %v1428, -inf
      %v1493 = vsel %vm1461, %v1429, -inf
      %v1494 = vsel %vm1462, %v1430, -inf
      %v1495 = vsel %vm1463, %v1431, -inf
      %v1496 = vsel %vm1464, %v1432, -inf
      %v1497 = vsel %vm1465, %v1433, -inf
      %v1498 = vsel %vm1466, %v1434, -inf
      %v1499 = vsel %vm1467, %v1435, -inf
      %v1500 = vsel %vm1468, %v1436, -inf
      %v1501 = vsel %vm1469, %v1437, -inf
      %v1502 = vsel %vm1470, %v1438, -inf
      %v1503 = vsel %vm1471, %v1439, -inf
      %v1504 = vsel %vm1472, %v1440, -inf
      %v1505 = vsel %vm1473, %v1441, -inf
      %v1506 = vsel %vm1474, %v1442, -inf
      %v1507 = vsel %vm1475, %v1443, -inf
      %v1508 = vmax.f32 %v1408, %v1476
      %v1509 = vmax.f32 %v1409, %v1477
      %v1510 = vmax.f32 %v1410, %v1478
      %v1511 = vmax.f32 %v1411, %v1479
      %v1512 = vmax.f32 %v1412, %v1480
      %v1513 = vmax.f32 %v1413, %v1481
      %v1514 = vmax.f32 %v1414, %v1482
      %v1515 = vmax.f32 %v1415, %v1483
      %v1516 = vmax.f32 %v1416, %v1484
      %v1517 = vmax.f32 %v1417, %v1485
      %v1518 = vmax.f32 %v1418, %v1486
      %v1519 = vmax.f32 %v1419, %v1487
      %v1520 = vmax.f32 %v1420, %v1488
      %v1521 = vmax.f32 %v1421, %v1489
      %v1522 = vmax.f32 %v1422, %v1490
      %v1523 = vmax.f32 %v1423, %v1491
      %v1524 = vmax.f32 %v1424, %v1492
      %v1525 = vmax.f32 %v1425, %v1493
      %v1526 = vmax.f32 %v1426, %v1494
      %v1527 = vmax.f32 %v1427, %v1495
      %v1528 = vmax.f32 %v1428, %v1496
      %v1529 = vmax.f32 %v1429, %v1497
      %v1530 = vmax.f32 %v1430, %v1498
      %v1531 = vmax.f32 %v1431, %v1499
      %v1532 = vmax.f32 %v1432, %v1500
      %v1533 = vmax.f32 %v1433, %v1501
      %v1534 = vmax.f32 %v1434, %v1502
      %v1535 = vmax.f32 %v1435, %v1503
      %v1536 = vmax.f32 %v1436, %v1504
      %v1537 = vmax.f32 %v1437, %v1505
      %v1538 = vmax.f32 %v1438, %v1506
      %v1539 = vmax.f32 %v1439, %v1507
      %1540 = vst [vmem:[#allocation2 + $0x18] sm:$0xff] %v1508
      %1541 = vst [vmem:[#allocation2 + $0x20] sm:$0xff] %v1509
      %1542 = vst [vmem:[#allocation2 + $0x28] sm:$0xff] %v1510
      %1543 = vst [vmem:[#allocation2 + $0x30] sm:$0xff] %v1511
      %1544 = vst [vmem:[#allocation2 + $0x38] sm:$0xff] %v1512
      %1545 = vst [vmem:[#allocation2 + $0x40] sm:$0xff] %v1513
      %1546 = vst [vmem:[#allocation2 + $0x48] sm:$0xff] %v1514
      %1547 = vst [vmem:[#allocation2 + $0x50] sm:$0xff] %v1515
      %1548 = vst [vmem:[#allocation2 + $0x58] sm:$0xff] %v1516
      %1549 = vst [vmem:[#allocation2 + $0x60] sm:$0xff] %v1517
      %1550 = vst [vmem:[#allocation2 + $0x68] sm:$0xff] %v1518
      %1551 = vst [vmem:[#allocation2 + $0x70] sm:$0xff] %v1519
      %1552 = vst [vmem:[#allocation2 + $0x78] sm:$0xff] %v1520
      %1553 = vst [vmem:[#allocation2 + $0x80] sm:$0xff] %v1521
      %1554 = vst [vmem:[#allocation2 + $0x88] sm:$0xff] %v1522
      %1555 = vst [vmem:[#allocation2 + $0x90] sm:$0xff] %v1523
      %1556 = vst [vmem:[#allocation2 + $0x98] sm:$0xff] %v1524
      %1557 = vst [vmem:[#allocation2 + $0xa0] sm:$0xff] %v1525
      %1558 = vst [vmem:[#allocation2 + $0xa8] sm:$0xff] %v1526
      %1559 = vst [vmem:[#allocation2 + $0xb0] sm:$0xff] %v1527
      %1560 = vst [vmem:[#allocation2 + $0xb8] sm:$0xff] %v1528
      %1561 = vst [vmem:[#allocation2 + $0xc0] sm:$0xff] %v1529
      %1562 = vst [vmem:[#allocation2 + $0xc8] sm:$0xff] %v1530
      %1563 = vst [vmem:[#allocation2 + $0xd0] sm:$0xff] %v1531
      %1564 = vst [vmem:[#allocation2 + $0xd8] sm:$0xff] %v1532
      %1565 = vst [vmem:[#allocation2 + $0xe0] sm:$0xff] %v1533
      %1566 = vst [vmem:[#allocation2 + $0xe8] sm:$0xff] %v1534
      %1567 = vst [vmem:[#allocation2 + $0xf0] sm:$0xff] %v1535
      %1568 = vst [vmem:[#allocation2 + $0xf8] sm:$0xff] %v1536
      %1569 = vst [vmem:[#allocation2 + $0x100] sm:$0xff] %v1537
      %1570 = vst [vmem:[#allocation2 + $0x108] sm:$0xff] %v1538
      %1571 = vst [vmem:[#allocation2 + $0x110] sm:$0xff] %v1539
      %v1572 = vld [vmem:[#allocation2 + $0x18] sm:$0xff]
      %v1573 = vld [vmem:[#allocation2 + $0x20] sm:$0xff]
      %v1574 = vld [vmem:[#allocation2 + $0x28] sm:$0xff]
      %v1575 = vld [vmem:[#allocation2 + $0x30] sm:$0xff]
      %v1576 = vld [vmem:[#allocation2 + $0x38] sm:$0xff]
      %v1577 = vld [vmem:[#allocation2 + $0x40] sm:$0xff]
      %v1578 = vld [vmem:[#allocation2 + $0x48] sm:$0xff]
      %v1579 = vld [vmem:[#allocation2 + $0x50] sm:$0xff]
      %v1580 = vld [vmem:[#allocation2 + $0x58] sm:$0xff]
      %v1581 = vld [vmem:[#allocation2 + $0x60] sm:$0xff]
      %v1582 = vld [vmem:[#allocation2 + $0x68] sm:$0xff]
      %v1583 = vld [vmem:[#allocation2 + $0x70] sm:$0xff]
      %v1584 = vld [vmem:[#allocation2 + $0x78] sm:$0xff]
      %v1585 = vld [vmem:[#allocation2 + $0x80] sm:$0xff]
      %v1586 = vld [vmem:[#allocation2 + $0x88] sm:$0xff]
      %v1587 = vld [vmem:[#allocation2 + $0x90] sm:$0xff]
      %v1588 = vld [vmem:[#allocation2 + $0x98] sm:$0xff]
      %v1589 = vld [vmem:[#allocation2 + $0xa0] sm:$0xff]
      %v1590 = vld [vmem:[#allocation2 + $0xa8] sm:$0xff]
      %v1591 = vld [vmem:[#allocation2 + $0xb0] sm:$0xff]
      %v1592 = vld [vmem:[#allocation2 + $0xb8] sm:$0xff]
      %v1593 = vld [vmem:[#allocation2 + $0xc0] sm:$0xff]
      %v1594 = vld [vmem:[#allocation2 + $0xc8] sm:$0xff]
      %v1595 = vld [vmem:[#allocation2 + $0xd0] sm:$0xff]
      %v1596 = vld [vmem:[#allocation2 + $0xd8] sm:$0xff]
      %v1597 = vld [vmem:[#allocation2 + $0xe0] sm:$0xff]
      %v1598 = vld [vmem:[#allocation2 + $0xe8] sm:$0xff]
      %v1599 = vld [vmem:[#allocation2 + $0xf0] sm:$0xff]
      %v1600 = vld [vmem:[#allocation2 + $0xf8] sm:$0xff]
      %v1601 = vld [vmem:[#allocation2 + $0x100] sm:$0xff]
      %v1602 = vld [vmem:[#allocation2 + $0x108] sm:$0xff]
      %v1603 = vld [vmem:[#allocation2 + $0x110] sm:$0xff]
      %v1604 = vld [vmem:[#allocation2 + $0x118] sm:$0xff]
      %v1605 = vld [vmem:[#allocation2 + $0x120] sm:$0xff]
      %v1606 = vld [vmem:[#allocation2 + $0x128] sm:$0xff]
      %v1607 = vld [vmem:[#allocation2 + $0x130] sm:$0xff]
      %v1608 = vld [vmem:[#allocation2 + $0x138] sm:$0xff]
      %v1609 = vld [vmem:[#allocation2 + $0x140] sm:$0xff]
      %v1610 = vld [vmem:[#allocation2 + $0x148] sm:$0xff]
      %v1611 = vld [vmem:[#allocation2 + $0x150] sm:$0xff]
      %vm1612 = vcmp.lt.s32.totalorder %v570, 192
      %vm1613 = vcmp.lt.s32.totalorder %v571, 192
      %vm1614 = vcmp.lt.s32.totalorder %v572, 192
      %vm1615 = vcmp.lt.s32.totalorder %v573, 192
      %vm1616 = vcmp.lt.s32.totalorder %v574, 192
      %vm1617 = vcmp.lt.s32.totalorder %v575, 192
      %vm1618 = vcmp.lt.s32.totalorder %v576, 192
      %vm1619 = vcmp.lt.s32.totalorder %v577, 192
      %vm1620 = vcmp.lt.s32.totalorder %v578, 192
      %vm1621 = vcmp.lt.s32.totalorder %v579, 192
      %vm1622 = vcmp.lt.s32.totalorder %v580, 192
      %vm1623 = vcmp.lt.s32.totalorder %v581, 192
      %vm1624 = vcmp.lt.s32.totalorder %v582, 192
      %vm1625 = vcmp.lt.s32.totalorder %v583, 192
      %vm1626 = vcmp.lt.s32.totalorder %v584, 192
      %vm1627 = vcmp.lt.s32.totalorder %v585, 192
      %vm1628 = vcmp.lt.s32.totalorder %v586, 192
      %vm1629 = vcmp.lt.s32.totalorder %v587, 192
      %vm1630 = vcmp.lt.s32.totalorder %v588, 192
      %vm1631 = vcmp.lt.s32.totalorder %v589, 192
      %vm1632 = vcmp.lt.s32.totalorder %v590, 192
      %vm1633 = vcmp.lt.s32.totalorder %v591, 192
      %vm1634 = vcmp.lt.s32.totalorder %v592, 192
      %vm1635 = vcmp.lt.s32.totalorder %v593, 192
      %vm1636 = vcmp.lt.s32.totalorder %v594, 192
      %vm1637 = vcmp.lt.s32.totalorder %v595, 192
      %vm1638 = vcmp.lt.s32.totalorder %v596, 192
      %vm1639 = vcmp.lt.s32.totalorder %v597, 192
      %vm1640 = vcmp.lt.s32.totalorder %v598, 192
      %vm1641 = vcmp.lt.s32.totalorder %v599, 192
      %vm1642 = vcmp.lt.s32.totalorder %v600, 192
      %vm1643 = vcmp.lt.s32.totalorder %v601, 192
      %v1644 = vsel %vm1612, %v1580, -inf
      %v1645 = vsel %vm1613, %v1581, -inf
      %v1646 = vsel %vm1614, %v1582, -inf
      %v1647 = vsel %vm1615, %v1583, -inf
      %v1648 = vsel %vm1616, %v1584, -inf
      %v1649 = vsel %vm1617, %v1585, -inf
      %v1650 = vsel %vm1618, %v1586, -inf
      %v1651 = vsel %vm1619, %v1587, -inf
      %v1652 = vsel %vm1620, %v1588, -inf
      %v1653 = vsel %vm1621, %v1589, -inf
      %v1654 = vsel %vm1622, %v1590, -inf
      %v1655 = vsel %vm1623, %v1591, -inf
      %v1656 = vsel %vm1624, %v1592, -inf
      %v1657 = vsel %vm1625, %v1593, -inf
      %v1658 = vsel %vm1626, %v1594, -inf
      %v1659 = vsel %vm1627, %v1595, -inf
      %v1660 = vsel %vm1628, %v1596, -inf
      %v1661 = vsel %vm1629, %v1597, -inf
      %v1662 = vsel %vm1630, %v1598, -inf
      %v1663 = vsel %vm1631, %v1599, -inf
      %v1664 = vsel %vm1632, %v1600, -inf
      %v1665 = vsel %vm1633, %v1601, -inf
      %v1666 = vsel %vm1634, %v1602, -inf
      %v1667 = vsel %vm1635, %v1603, -inf
      %v1668 = vsel %vm1636, %v1604, -inf
      %v1669 = vsel %vm1637, %v1605, -inf
      %v1670 = vsel %vm1638, %v1606, -inf
      %v1671 = vsel %vm1639, %v1607, -inf
      %v1672 = vsel %vm1640, %v1608, -inf
      %v1673 = vsel %vm1641, %v1609, -inf
      %v1674 = vsel %vm1642, %v1610, -inf
      %v1675 = vsel %vm1643, %v1611, -inf
      %v1676 = vmax.f32 %v1572, %v1644
      %v1677 = vmax.f32 %v1573, %v1645
      %v1678 = vmax.f32 %v1574, %v1646
      %v1679 = vmax.f32 %v1575, %v1647
      %v1680 = vmax.f32 %v1576, %v1648
      %v1681 = vmax.f32 %v1577, %v1649
      %v1682 = vmax.f32 %v1578, %v1650
      %v1683 = vmax.f32 %v1579, %v1651
      %v1684 = vmax.f32 %v1580, %v1652
      %v1685 = vmax.f32 %v1581, %v1653
      %v1686 = vmax.f32 %v1582, %v1654
      %v1687 = vmax.f32 %v1583, %v1655
      %v1688 = vmax.f32 %v1584, %v1656
      %v1689 = vmax.f32 %v1585, %v1657
      %v1690 = vmax.f32 %v1586, %v1658
      %v1691 = vmax.f32 %v1587, %v1659
      %v1692 = vmax.f32 %v1588, %v1660
      %v1693 = vmax.f32 %v1589, %v1661
      %v1694 = vmax.f32 %v1590, %v1662
      %v1695 = vmax.f32 %v1591, %v1663
      %v1696 = vmax.f32 %v1592, %v1664
      %v1697 = vmax.f32 %v1593, %v1665
      %v1698 = vmax.f32 %v1594, %v1666
      %v1699 = vmax.f32 %v1595, %v1667
      %v1700 = vmax.f32 %v1596, %v1668
      %v1701 = vmax.f32 %v1597, %v1669
      %v1702 = vmax.f32 %v1598, %v1670
      %v1703 = vmax.f32 %v1599, %v1671
      %v1704 = vmax.f32 %v1600, %v1672
      %v1705 = vmax.f32 %v1601, %v1673
      %v1706 = vmax.f32 %v1602, %v1674
      %v1707 = vmax.f32 %v1603, %v1675
      %1708 = vst [vmem:[#allocation2 + $0x18] sm:$0xff] %v1676
      %1709 = vst [vmem:[#allocation2 + $0x20] sm:$0xff] %v1677
      %1710 = vst [vmem:[#allocation2 + $0x28] sm:$0xff] %v1678
      %1711 = vst [vmem:[#allocation2 + $0x30] sm:$0xff] %v1679
      %1712 = vst [vmem:[#allocation2 + $0x38] sm:$0xff] %v1680
      %1713 = vst [vmem:[#allocation2 + $0x40] sm:$0xff] %v1681
      %1714 = vst [vmem:[#allocation2 + $0x48] sm:$0xff] %v1682
      %1715 = vst [vmem:[#allocation2 + $0x50] sm:$0xff] %v1683
      %1716 = vst [vmem:[#allocation2 + $0x58] sm:$0xff] %v1684
      %1717 = vst [vmem:[#allocation2 + $0x60] sm:$0xff] %v1685
      %1718 = vst [vmem:[#allocation2 + $0x68] sm:$0xff] %v1686
      %1719 = vst [vmem:[#allocation2 + $0x70] sm:$0xff] %v1687
      %1720 = vst [vmem:[#allocation2 + $0x78] sm:$0xff] %v1688
      %1721 = vst [vmem:[#allocation2 + $0x80] sm:$0xff] %v1689
      %1722 = vst [vmem:[#allocation2 + $0x88] sm:$0xff] %v1690
      %1723 = vst [vmem:[#allocation2 + $0x90] sm:$0xff] %v1691
      %1724 = vst [vmem:[#allocation2 + $0x98] sm:$0xff] %v1692
      %1725 = vst [vmem:[#allocation2 + $0xa0] sm:$0xff] %v1693
      %1726 = vst [vmem:[#allocation2 + $0xa8] sm:$0xff] %v1694
      %1727 = vst [vmem:[#allocation2 + $0xb0] sm:$0xff] %v1695
      %1728 = vst [vmem:[#allocation2 + $0xb8] sm:$0xff] %v1696
      %1729 = vst [vmem:[#allocation2 + $0xc0] sm:$0xff] %v1697
      %1730 = vst [vmem:[#allocation2 + $0xc8] sm:$0xff] %v1698
      %1731 = vst [vmem:[#allocation2 + $0xd0] sm:$0xff] %v1699
      %1732 = vst [vmem:[#allocation2 + $0xd8] sm:$0xff] %v1700
      %1733 = vst [vmem:[#allocation2 + $0xe0] sm:$0xff] %v1701
      %1734 = vst [vmem:[#allocation2 + $0xe8] sm:$0xff] %v1702
      %1735 = vst [vmem:[#allocation2 + $0xf0] sm:$0xff] %v1703
      %1736 = vst [vmem:[#allocation2 + $0xf8] sm:$0xff] %v1704
      %1737 = vst [vmem:[#allocation2 + $0x100] sm:$0xff] %v1705
      %1738 = vst [vmem:[#allocation2 + $0x108] sm:$0xff] %v1706
      %1739 = vst [vmem:[#allocation2 + $0x110] sm:$0xff] %v1707
      %v1740 = vld [vmem:[#allocation2 + $0x18] sm:$0xff]
      %v1741 = vld [vmem:[#allocation2 + $0x20] sm:$0xff]
      %v1742 = vld [vmem:[#allocation2 + $0x28] sm:$0xff]
      %v1743 = vld [vmem:[#allocation2 + $0x30] sm:$0xff]
      %v1744 = vld [vmem:[#allocation2 + $0x38] sm:$0xff]
      %v1745 = vld [vmem:[#allocation2 + $0x40] sm:$0xff]
      %v1746 = vld [vmem:[#allocation2 + $0x48] sm:$0xff]
      %v1747 = vld [vmem:[#allocation2 + $0x50] sm:$0xff]
      %v1748 = vld [vmem:[#allocation2 + $0x58] sm:$0xff]
      %v1749 = vld [vmem:[#allocation2 + $0x60] sm:$0xff]
      %v1750 = vld [vmem:[#allocation2 + $0x68] sm:$0xff]
      %v1751 = vld [vmem:[#allocation2 + $0x70] sm:$0xff]
      %v1752 = vld [vmem:[#allocation2 + $0x78] sm:$0xff]
      %v1753 = vld [vmem:[#allocation2 + $0x80] sm:$0xff]
      %v1754 = vld [vmem:[#allocation2 + $0x88] sm:$0xff]
      %v1755 = vld [vmem:[#allocation2 + $0x90] sm:$0xff]
      %v1756 = vld [vmem:[#allocation2 + $0x98] sm:$0xff]
      %v1757 = vld [vmem:[#allocation2 + $0xa0] sm:$0xff]
      %v1758 = vld [vmem:[#allocation2 + $0xa8] sm:$0xff]
      %v1759 = vld [vmem:[#allocation2 + $0xb0] sm:$0xff]
      %v1760 = vld [vmem:[#allocation2 + $0xb8] sm:$0xff]
      %v1761 = vld [vmem:[#allocation2 + $0xc0] sm:$0xff]
      %v1762 = vld [vmem:[#allocation2 + $0xc8] sm:$0xff]
      %v1763 = vld [vmem:[#allocation2 + $0xd0] sm:$0xff]
      %v1764 = vld [vmem:[#allocation2 + $0xd8] sm:$0xff]
      %v1765 = vld [vmem:[#allocation2 + $0xe0] sm:$0xff]
      %v1766 = vld [vmem:[#allocation2 + $0xe8] sm:$0xff]
      %v1767 = vld [vmem:[#allocation2 + $0xf0] sm:$0xff]
      %v1768 = vld [vmem:[#allocation2 + $0xf8] sm:$0xff]
      %v1769 = vld [vmem:[#allocation2 + $0x100] sm:$0xff]
      %v1770 = vld [vmem:[#allocation2 + $0x108] sm:$0xff]
      %v1771 = vld [vmem:[#allocation2 + $0x110] sm:$0xff]
      %v1772 = vld [vmem:[#allocation2 + $0x98] sm:$0xff]
      %v1773 = vld [vmem:[#allocation2 + $0xa0] sm:$0xff]
      %v1774 = vld [vmem:[#allocation2 + $0xa8] sm:$0xff]
      %v1775 = vld [vmem:[#allocation2 + $0xb0] sm:$0xff]
      %v1776 = vld [vmem:[#allocation2 + $0xb8] sm:$0xff]
      %v1777 = vld [vmem:[#allocation2 + $0xc0] sm:$0xff]
      %v1778 = vld [vmem:[#allocation2 + $0xc8] sm:$0xff]
      %v1779 = vld [vmem:[#allocation2 + $0xd0] sm:$0xff]
      %v1780 = vld [vmem:[#allocation2 + $0xd8] sm:$0xff]
      %v1781 = vld [vmem:[#allocation2 + $0xe0] sm:$0xff]
      %v1782 = vld [vmem:[#allocation2 + $0xe8] sm:$0xff]
      %v1783 = vld [vmem:[#allocation2 + $0xf0] sm:$0xff]
      %v1784 = vld [vmem:[#allocation2 + $0xf8] sm:$0xff]
      %v1785 = vld [vmem:[#allocation2 + $0x100] sm:$0xff]
      %v1786 = vld [vmem:[#allocation2 + $0x108] sm:$0xff]
      %v1787 = vld [vmem:[#allocation2 + $0x110] sm:$0xff]
      %v1788 = vld [vmem:[#allocation2 + $0x118] sm:$0xff]
      %v1789 = vld [vmem:[#allocation2 + $0x120] sm:$0xff]
      %v1790 = vld [vmem:[#allocation2 + $0x128] sm:$0xff]
      %v1791 = vld [vmem:[#allocation2 + $0x130] sm:$0xff]
      %v1792 = vld [vmem:[#allocation2 + $0x138] sm:$0xff]
      %v1793 = vld [vmem:[#allocation2 + $0x140] sm:$0xff]
      %v1794 = vld [vmem:[#allocation2 + $0x148] sm:$0xff]
      %v1795 = vld [vmem:[#allocation2 + $0x150] sm:$0xff]
      %v1796 = vld [vmem:[#allocation2 + $0x158] sm:$0xff]
      %v1797 = vld [vmem:[#allocation2 + $0x160] sm:$0xff]
      %v1798 = vld [vmem:[#allocation2 + $0x168] sm:$0xff]
      %v1799 = vld [vmem:[#allocation2 + $0x170] sm:$0xff]
      %v1800 = vld [vmem:[#allocation2 + $0x178] sm:$0xff]
      %v1801 = vld [vmem:[#allocation2 + $0x180] sm:$0xff]
      %v1802 = vld [vmem:[#allocation2 + $0x188] sm:$0xff]
      %v1803 = vld [vmem:[#allocation2 + $0x190] sm:$0xff]
      %vm1804 = vcmp.lt.s32.totalorder %v570, 128
      %vm1805 = vcmp.lt.s32.totalorder %v571, 128
      %vm1806 = vcmp.lt.s32.totalorder %v572, 128
      %vm1807 = vcmp.lt.s32.totalorder %v573, 128
      %vm1808 = vcmp.lt.s32.totalorder %v574, 128
      %vm1809 = vcmp.lt.s32.totalorder %v575, 128
      %vm1810 = vcmp.lt.s32.totalorder %v576, 128
      %vm1811 = vcmp.lt.s32.totalorder %v577, 128
      %vm1812 = vcmp.lt.s32.totalorder %v578, 128
      %vm1813 = vcmp.lt.s32.totalorder %v579, 128
      %vm1814 = vcmp.lt.s32.totalorder %v580, 128
      %vm1815 = vcmp.lt.s32.totalorder %v581, 128
      %vm1816 = vcmp.lt.s32.totalorder %v582, 128
      %vm1817 = vcmp.lt.s32.totalorder %v583, 128
      %vm1818 = vcmp.lt.s32.totalorder %v584, 128
      %vm1819 = vcmp.lt.s32.totalorder %v585, 128
      %vm1820 = vcmp.lt.s32.totalorder %v586, 128
      %vm1821 = vcmp.lt.s32.totalorder %v587, 128
      %vm1822 = vcmp.lt.s32.totalorder %v588, 128
      %vm1823 = vcmp.lt.s32.totalorder %v589, 128
      %vm1824 = vcmp.lt.s32.totalorder %v590, 128
      %vm1825 = vcmp.lt.s32.totalorder %v591, 128
      %vm1826 = vcmp.lt.s32.totalorder %v592, 128
      %vm1827 = vcmp.lt.s32.totalorder %v593, 128
      %vm1828 = vcmp.lt.s32.totalorder %v594, 128
      %vm1829 = vcmp.lt.s32.totalorder %v595, 128
      %vm1830 = vcmp.lt.s32.totalorder %v596, 128
      %vm1831 = vcmp.lt.s32.totalorder %v597, 128
      %vm1832 = vcmp.lt.s32.totalorder %v598, 128
      %vm1833 = vcmp.lt.s32.totalorder %v599, 128
      %vm1834 = vcmp.lt.s32.totalorder %v600, 128
      %vm1835 = vcmp.lt.s32.totalorder %v601, 128
      %v1836 = vsel %vm1804, %v1772, -inf
      %v1837 = vsel %vm1805, %v1773, -inf
      %v1838 = vsel %vm1806, %v1774, -inf
      %v1839 = vsel %vm1807, %v1775, -inf
      %v1840 = vsel %vm1808, %v1776, -inf
      %v1841 = vsel %vm1809, %v1777, -inf
      %v1842 = vsel %vm1810, %v1778, -inf
      %v1843 = vsel %vm1811, %v1779, -inf
      %v1844 = vsel %vm1812, %v1780, -inf
      %v1845 = vsel %vm1813, %v1781, -inf
      %v1846 = vsel %vm1814, %v1782, -inf
      %v1847 = vsel %vm1815, %v1783, -inf
      %v1848 = vsel %vm1816, %v1784, -inf
      %v1849 = vsel %vm1817, %v1785, -inf
      %v1850 = vsel %vm1818, %v1786, -inf
      %v1851 = vsel %vm1819, %v1787, -inf
      %v1852 = vsel %vm1820, %v1788, -inf
      %v1853 = vsel %vm1821, %v1789, -inf
      %v1854 = vsel %vm1822, %v1790, -inf
      %v1855 = vsel %vm1823, %v1791, -inf
      %v1856 = vsel %vm1824, %v1792, -inf
      %v1857 = vsel %vm1825, %v1793, -inf
      %v1858 = vsel %vm1826, %v1794, -inf
      %v1859 = vsel %vm1827, %v1795, -inf
      %v1860 = vsel %vm1828, %v1796, -inf
      %v1861 = vsel %vm1829, %v1797, -inf
      %v1862 = vsel %vm1830, %v1798, -inf
      %v1863 = vsel %vm1831, %v1799, -inf
      %v1864 = vsel %vm1832, %v1800, -inf
      %v1865 = vsel %vm1833, %v1801, -inf
      %v1866 = vsel %vm1834, %v1802, -inf
      %v1867 = vsel %vm1835, %v1803, -inf
      %v1868 = vmax.f32 %v1740, %v1836
      %v1869 = vmax.f32 %v1741, %v1837
      %v1870 = vmax.f32 %v1742, %v1838
      %v1871 = vmax.f32 %v1743, %v1839
      %v1872 = vmax.f32 %v1744, %v1840
      %v1873 = vmax.f32 %v1745, %v1841
      %v1874 = vmax.f32 %v1746, %v1842
      %v1875 = vmax.f32 %v1747, %v1843
      %v1876 = vmax.f32 %v1748, %v1844
      %v1877 = vmax.f32 %v1749, %v1845
      %v1878 = vmax.f32 %v1750, %v1846
      %v1879 = vmax.f32 %v1751, %v1847
      %v1880 = vmax.f32 %v1752, %v1848
      %v1881 = vmax.f32 %v1753, %v1849
      %v1882 = vmax.f32 %v1754, %v1850
      %v1883 = vmax.f32 %v1755, %v1851
      %v1884 = vmax.f32 %v1756, %v1852
      %v1885 = vmax.f32 %v1757, %v1853
      %v1886 = vmax.f32 %v1758, %v1854
      %v1887 = vmax.f32 %v1759, %v1855
      %v1888 = vmax.f32 %v1760, %v1856
      %v1889 = vmax.f32 %v1761, %v1857
      %v1890 = vmax.f32 %v1762, %v1858
      %v1891 = vmax.f32 %v1763, %v1859
      %v1892 = vmax.f32 %v1764, %v1860
      %v1893 = vmax.f32 %v1765, %v1861
      %v1894 = vmax.f32 %v1766, %v1862
      %v1895 = vmax.f32 %v1767, %v1863
      %v1896 = vmax.f32 %v1768, %v1864
      %v1897 = vmax.f32 %v1769, %v1865
      %v1898 = vmax.f32 %v1770, %v1866
      %v1899 = vmax.f32 %v1771, %v1867
      %1900 = vst [vmem:[#allocation2 + $0x18] sm:$0xff] %v1868
      %1901 = vst [vmem:[#allocation2 + $0x20] sm:$0xff] %v1869
      %1902 = vst [vmem:[#allocation2 + $0x28] sm:$0xff] %v1870
      %1903 = vst [vmem:[#allocation2 + $0x30] sm:$0xff] %v1871
      %1904 = vst [vmem:[#allocation2 + $0x38] sm:$0xff] %v1872
      %1905 = vst [vmem:[#allocation2 + $0x40] sm:$0xff] %v1873
      %1906 = vst [vmem:[#allocation2 + $0x48] sm:$0xff] %v1874
      %1907 = vst [vmem:[#allocation2 + $0x50] sm:$0xff] %v1875
      %1908 = vst [vmem:[#allocation2 + $0x58] sm:$0xff] %v1876
      %1909 = vst [vmem:[#allocation2 + $0x60] sm:$0xff] %v1877
      %1910 = vst [vmem:[#allocation2 + $0x68] sm:$0xff] %v1878
      %1911 = vst [vmem:[#allocation2 + $0x70] sm:$0xff] %v1879
      %1912 = vst [vmem:[#allocation2 + $0x78] sm:$0xff] %v1880
      %1913 = vst [vmem:[#allocation2 + $0x80] sm:$0xff] %v1881
      %1914 = vst [vmem:[#allocation2 + $0x88] sm:$0xff] %v1882
      %1915 = vst [vmem:[#allocation2 + $0x90] sm:$0xff] %v1883
      %1916 = vst [vmem:[#allocation2 + $0x98] sm:$0xff] %v1884
      %1917 = vst [vmem:[#allocation2 + $0xa0] sm:$0xff] %v1885
      %1918 = vst [vmem:[#allocation2 + $0xa8] sm:$0xff] %v1886
      %1919 = vst [vmem:[#allocation2 + $0xb0] sm:$0xff] %v1887
      %1920 = vst [vmem:[#allocation2 + $0xb8] sm:$0xff] %v1888
      %1921 = vst [vmem:[#allocation2 + $0xc0] sm:$0xff] %v1889
      %1922 = vst [vmem:[#allocation2 + $0xc8] sm:$0xff] %v1890
      %1923 = vst [vmem:[#allocation2 + $0xd0] sm:$0xff] %v1891
      %1924 = vst [vmem:[#allocation2 + $0xd8] sm:$0xff] %v1892
      %1925 = vst [vmem:[#allocation2 + $0xe0] sm:$0xff] %v1893
      %1926 = vst [vmem:[#allocation2 + $0xe8] sm:$0xff] %v1894
      %1927 = vst [vmem:[#allocation2 + $0xf0] sm:$0xff] %v1895
      %1928 = vst [vmem:[#allocation2 + $0xf8] sm:$0xff] %v1896
      %1929 = vst [vmem:[#allocation2 + $0x100] sm:$0xff] %v1897
      %1930 = vst [vmem:[#allocation2 + $0x108] sm:$0xff] %v1898
      %1931 = vst [vmem:[#allocation2 + $0x110] sm:$0xff] %v1899
      %1932 = vst [vmem:[#allocation3] sm:$0xff] %v1182
      %1933 = vst [vmem:[#allocation3 + $0x8] sm:$0xff] %v1183
      %1934 = vst [vmem:[#allocation3 + $0x10] sm:$0xff] %v1184
      %1935 = vst [vmem:[#allocation3 + $0x18] sm:$0xff] %v1185
      %1936 = vst [vmem:[#allocation3 + $0x20] sm:$0xff] %v1186
      %1937 = vst [vmem:[#allocation3 + $0x28] sm:$0xff] %v1187
      %1938 = vst [vmem:[#allocation3 + $0x30] sm:$0xff] %v1188
      %1939 = vst [vmem:[#allocation3 + $0x38] sm:$0xff] %v1189
      %1940 = vst [vmem:[#allocation3 + $0x40] sm:$0xff] %v1190
      %1941 = vst [vmem:[#allocation3 + $0x48] sm:$0xff] %v1191
      %1942 = vst [vmem:[#allocation3 + $0x50] sm:$0xff] %v1192
      %1943 = vst [vmem:[#allocation3 + $0x58] sm:$0xff] %v1193
      %1944 = vst [vmem:[#allocation3 + $0x60] sm:$0xff] %v1194
      %1945 = vst [vmem:[#allocation3 + $0x68] sm:$0xff] %v1195
      %1946 = vst [vmem:[#allocation3 + $0x70] sm:$0xff] %v1196
      %1947 = vst [vmem:[#allocation3 + $0x78] sm:$0xff] %v1197
      %1948 = vst [vmem:[#allocation3 + $0x80] sm:$0xff] %v1198
      %1949 = vst [vmem:[#allocation3 + $0x88] sm:$0xff] %v1199
      %1950 = vst [vmem:[#allocation3 + $0x90] sm:$0xff] %v1200
      %1951 = vst [vmem:[#allocation3 + $0x98] sm:$0xff] %v1201
      %1952 = vst [vmem:[#allocation3 + $0xa0] sm:$0xff] %v1202
      %1953 = vst [vmem:[#allocation3 + $0xa8] sm:$0xff] %v1203
      %1954 = vst [vmem:[#allocation3 + $0xb0] sm:$0xff] %v1204
      %1955 = vst [vmem:[#allocation3 + $0xb8] sm:$0xff] %v1205
      %1956 = vst [vmem:[#allocation3 + $0xc0] sm:$0xff] %v1206
      %1957 = vst [vmem:[#allocation3 + $0xc8] sm:$0xff] %v1207
      %1958 = vst [vmem:[#allocation3 + $0xd0] sm:$0xff] %v1208
      %1959 = vst [vmem:[#allocation3 + $0xd8] sm:$0xff] %v1209
      %1960 = vst [vmem:[#allocation3 + $0xe0] sm:$0xff] %v1210
      %1961 = vst [vmem:[#allocation3 + $0xe8] sm:$0xff] %v1211
      %1962 = vst [vmem:[#allocation3 + $0xf0] sm:$0xff] %v1212
      %1963 = vst [vmem:[#allocation3 + $0xf8] sm:$0xff] %v1213
      %v1964 = vld [vmem:[#allocation3] sm:$0xff]
      %v1965 = vld [vmem:[#allocation3 + $0x8] sm:$0xff]
      %v1966 = vld [vmem:[#allocation3 + $0x10] sm:$0xff]
      %v1967 = vld [vmem:[#allocation3 + $0x18] sm:$0xff]
      %v1968 = vld [vmem:[#allocation3 + $0x20] sm:$0xff]
      %v1969 = vld [vmem:[#allocation3 + $0x28] sm:$0xff]
      %v1970 = vld [vmem:[#allocation3 + $0x30] sm:$0xff]
      %v1971 = vld [vmem:[#allocation3 + $0x38] sm:$0xff]
      %v1972 = vld [vmem:[#allocation3 + $0x40] sm:$0xff]
      %v1973 = vld [vmem:[#allocation3 + $0x48] sm:$0xff]
      %v1974 = vld [vmem:[#allocation3 + $0x50] sm:$0xff]
      %v1975 = vld [vmem:[#allocation3 + $0x58] sm:$0xff]
      %v1976 = vld [vmem:[#allocation3 + $0x60] sm:$0xff]
      %v1977 = vld [vmem:[#allocation3 + $0x68] sm:$0xff]
      %v1978 = vld [vmem:[#allocation3 + $0x70] sm:$0xff]
      %v1979 = vld [vmem:[#allocation3 + $0x78] sm:$0xff]
      %v1980 = vld [vmem:[#allocation3 + $0x80] sm:$0xff]
      %v1981 = vld [vmem:[#allocation3 + $0x88] sm:$0xff]
      %v1982 = vld [vmem:[#allocation3 + $0x90] sm:$0xff]
      %v1983 = vld [vmem:[#allocation3 + $0x98] sm:$0xff]
      %v1984 = vld [vmem:[#allocation3 + $0xa0] sm:$0xff]
      %v1985 = vld [vmem:[#allocation3 + $0xa8] sm:$0xff]
      %v1986 = vld [vmem:[#allocation3 + $0xb0] sm:$0xff]
      %v1987 = vld [vmem:[#allocation3 + $0xb8] sm:$0xff]
      %v1988 = vld [vmem:[#allocation3 + $0xc0] sm:$0xff]
      %v1989 = vld [vmem:[#allocation3 + $0xc8] sm:$0xff]
      %v1990 = vld [vmem:[#allocation3 + $0xd0] sm:$0xff]
      %v1991 = vld [vmem:[#allocation3 + $0xd8] sm:$0xff]
      %v1992 = vld [vmem:[#allocation3 + $0xe0] sm:$0xff]
      %v1993 = vld [vmem:[#allocation3 + $0xe8] sm:$0xff]
      %v1994 = vld [vmem:[#allocation3 + $0xf0] sm:$0xff]
      %v1995 = vld [vmem:[#allocation3 + $0xf8] sm:$0xff]
      %v1996 = vld [vmem:[#allocation3 + $0x1] sm:$0xff]
      %v1997 = vld [vmem:[#allocation3 + $0x9] sm:$0xff]
      %v1998 = vld [vmem:[#allocation3 + $0x11] sm:$0xff]
      %v1999 = vld [vmem:[#allocation3 + $0x19] sm:$0xff]
      %v2000 = vld [vmem:[#allocation3 + $0x21] sm:$0xff]
      %v2001 = vld [vmem:[#allocation3 + $0x29] sm:$0xff]
      %v2002 = vld [vmem:[#allocation3 + $0x31] sm:$0xff]
      %v2003 = vld [vmem:[#allocation3 + $0x39] sm:$0xff]
      %v2004 = vld [vmem:[#allocation3 + $0x41] sm:$0xff]
      %v2005 = vld [vmem:[#allocation3 + $0x49] sm:$0xff]
      %v2006 = vld [vmem:[#allocation3 + $0x51] sm:$0xff]
      %v2007 = vld [vmem:[#allocation3 + $0x59] sm:$0xff]
      %v2008 = vld [vmem:[#allocation3 + $0x61] sm:$0xff]
      %v2009 = vld [vmem:[#allocation3 + $0x69] sm:$0xff]
      %v2010 = vld [vmem:[#allocation3 + $0x71] sm:$0xff]
      %v2011 = vld [vmem:[#allocation3 + $0x79] sm:$0xff]
      %v2012 = vld [vmem:[#allocation3 + $0x81] sm:$0xff]
      %v2013 = vld [vmem:[#allocation3 + $0x89] sm:$0xff]
      %v2014 = vld [vmem:[#allocation3 + $0x91] sm:$0xff]
      %v2015 = vld [vmem:[#allocation3 + $0x99] sm:$0xff]
      %v2016 = vld [vmem:[#allocation3 + $0xa1] sm:$0xff]
      %v2017 = vld [vmem:[#allocation3 + $0xa9] sm:$0xff]
      %v2018 = vld [vmem:[#allocation3 + $0xb1] sm:$0xff]
      %v2019 = vld [vmem:[#allocation3 + $0xb9] sm:$0xff]
      %v2020 = vld [vmem:[#allocation3 + $0xc1] sm:$0xff]
      %v2021 = vld [vmem:[#allocation3 + $0xc9] sm:$0xff]
      %v2022 = vld [vmem:[#allocation3 + $0xd1] sm:$0xff]
      %v2023 = vld [vmem:[#allocation3 + $0xd9] sm:$0xff]
      %v2024 = vld [vmem:[#allocation3 + $0xe1] sm:$0xff]
      %v2025 = vld [vmem:[#allocation3 + $0xe9] sm:$0xff]
      %v2026 = vld [vmem:[#allocation3 + $0xf1] sm:$0xff]
      %v2027 = vld [vmem:[#allocation3 + $0xf9] sm:$0xff]
      %vm2028 = vcmp.lt.s32.totalorder %v602, 15
      %vm2029 = vcmp.lt.s32.totalorder %v603, 15
      %vm2030 = vcmp.lt.s32.totalorder %v604, 15
      %vm2031 = vcmp.lt.s32.totalorder %v605, 15
      %vm2032 = vcmp.lt.s32.totalorder %v606, 15
      %vm2033 = vcmp.lt.s32.totalorder %v607, 15
      %vm2034 = vcmp.lt.s32.totalorder %v608, 15
      %vm2035 = vcmp.lt.s32.totalorder %v609, 15
      %vm2036 = vcmp.lt.s32.totalorder %v610, 15
      %vm2037 = vcmp.lt.s32.totalorder %v611, 15
      %vm2038 = vcmp.lt.s32.totalorder %v612, 15
      %vm2039 = vcmp.lt.s32.totalorder %v613, 15
      %vm2040 = vcmp.lt.s32.totalorder %v614, 15
      %vm2041 = vcmp.lt.s32.totalorder %v615, 15
      %vm2042 = vcmp.lt.s32.totalorder %v616, 15
      %vm2043 = vcmp.lt.s32.totalorder %v617, 15
      %vm2044 = vcmp.lt.s32.totalorder %v618, 15
      %vm2045 = vcmp.lt.s32.totalorder %v619, 15
      %vm2046 = vcmp.lt.s32.totalorder %v620, 15
      %vm2047 = vcmp.lt.s32.totalorder %v621, 15
      %vm2048 = vcmp.lt.s32.totalorder %v622, 15
      %vm2049 = vcmp.lt.s32.totalorder %v623, 15
      %vm2050 = vcmp.lt.s32.totalorder %v624, 15
      %vm2051 = vcmp.lt.s32.totalorder %v625, 15
      %vm2052 = vcmp.lt.s32.totalorder %v626, 15
      %vm2053 = vcmp.lt.s32.totalorder %v627, 15
      %vm2054 = vcmp.lt.s32.totalorder %v628, 15
      %vm2055 = vcmp.lt.s32.totalorder %v629, 15
      %vm2056 = vcmp.lt.s32.totalorder %v630, 15
      %vm2057 = vcmp.lt.s32.totalorder %v631, 15
      %vm2058 = vcmp.lt.s32.totalorder %v632, 15
      %vm2059 = vcmp.lt.s32.totalorder %v633, 15
      %v2060 = vsel %vm2028, %v1996, -inf
      %v2061 = vsel %vm2029, %v1997, -inf
      %v2062 = vsel %vm2030, %v1998, -inf
      %v2063 = vsel %vm2031, %v1999, -inf
      %v2064 = vsel %vm2032, %v2000, -inf
      %v2065 = vsel %vm2033, %v2001, -inf
      %v2066 = vsel %vm2034, %v2002, -inf
      %v2067 = vsel %vm2035, %v2003, -inf
      %v2068 = vsel %vm2036, %v2004, -inf
      %v2069 = vsel %vm2037, %v2005, -inf
      %v2070 = vsel %vm2038, %v2006, -inf
      %v2071 = vsel %vm2039, %v2007, -inf
      %v2072 = vsel %vm2040, %v2008, -inf
      %v2073 = vsel %vm2041, %v2009, -inf
      %v2074 = vsel %vm2042, %v2010, -inf
      %v2075 = vsel %vm2043, %v2011, -inf
      %v2076 = vsel %vm2044, %v2012, -inf
      %v2077 = vsel %vm2045, %v2013, -inf
      %v2078 = vsel %vm2046, %v2014, -inf
      %v2079 = vsel %vm2047, %v2015, -inf
      %v2080 = vsel %vm2048, %v2016, -inf
      %v2081 = vsel %vm2049, %v2017, -inf
      %v2082 = vsel %vm2050, %v2018, -inf
      %v2083 = vsel %vm2051, %v2019, -inf
      %v2084 = vsel %vm2052, %v2020, -inf
      %v2085 = vsel %vm2053, %v2021, -inf
      %v2086 = vsel %vm2054, %v2022, -inf
      %v2087 = vsel %vm2055, %v2023, -inf
      %v2088 = vsel %vm2056, %v2024, -inf
      %v2089 = vsel %vm2057, %v2025, -inf
      %v2090 = vsel %vm2058, %v2026, -inf
      %v2091 = vsel %vm2059, %v2027, -inf
      %v2092 = vmax.f32 %v1964, %v2060
      %v2093 = vmax.f32 %v1965, %v2061
      %v2094 = vmax.f32 %v1966, %v2062
      %v2095 = vmax.f32 %v1967, %v2063
      %v2096 = vmax.f32 %v1968, %v2064
      %v2097 = vmax.f32 %v1969, %v2065
      %v2098 = vmax.f32 %v1970, %v2066
      %v2099 = vmax.f32 %v1971, %v2067
      %v2100 = vmax.f32 %v1972, %v2068
      %v2101 = vmax.f32 %v1973, %v2069
      %v2102 = vmax.f32 %v1974, %v2070
      %v2103 = vmax.f32 %v1975, %v2071
      %v2104 = vmax.f32 %v1976, %v2072
      %v2105 = vmax.f32 %v1977, %v2073
      %v2106 = vmax.f32 %v1978, %v2074
      %v2107 = vmax.f32 %v1979, %v2075
      %v2108 = vmax.f32 %v1980, %v2076
      %v2109 = vmax.f32 %v1981, %v2077
      %v2110 = vmax.f32 %v1982, %v2078
      %v2111 = vmax.f32 %v1983, %v2079
      %v2112 = vmax.f32 %v1984, %v2080
      %v2113 = vmax.f32 %v1985, %v2081
      %v2114 = vmax.f32 %v1986, %v2082
      %v2115 = vmax.f32 %v1987, %v2083
      %v2116 = vmax.f32 %v1988, %v2084
      %v2117 = vmax.f32 %v1989, %v2085
      %v2118 = vmax.f32 %v1990, %v2086
      %v2119 = vmax.f32 %v1991, %v2087
      %v2120 = vmax.f32 %v1992, %v2088
      %v2121 = vmax.f32 %v1993, %v2089
      %v2122 = vmax.f32 %v1994, %v2090
      %v2123 = vmax.f32 %v1995, %v2091
      %2124 = vst [vmem:[#allocation3] sm:$0xff] %v2092
      %2125 = vst [vmem:[#allocation3 + $0x8] sm:$0xff] %v2093
      %2126 = vst [vmem:[#allocation3 + $0x10] sm:$0xff] %v2094
      %2127 = vst [vmem:[#allocation3 + $0x18] sm:$0xff] %v2095
      %2128 = vst [vmem:[#allocation3 + $0x20] sm:$0xff] %v2096
      %2129 = vst [vmem:[#allocation3 + $0x28] sm:$0xff] %v2097
      %2130 = vst [vmem:[#allocation3 + $0x30] sm:$0xff] %v2098
      %2131 = vst [vmem:[#allocation3 + $0x38] sm:$0xff] %v2099
      %2132 = vst [vmem:[#allocation3 + $0x40] sm:$0xff] %v2100
      %2133 = vst [vmem:[#allocation3 + $0x48] sm:$0xff] %v2101
      %2134 = vst [vmem:[#allocation3 + $0x50] sm:$0xff] %v2102
      %2135 = vst [vmem:[#allocation3 + $0x58] sm:$0xff] %v2103
      %2136 = vst [vmem:[#allocation3 + $0x60] sm:$0xff] %v2104
      %2137 = vst [vmem:[#allocation3 + $0x68] sm:$0xff] %v2105
      %2138 = vst [vmem:[#allocation3 + $0x70] sm:$0xff] %v2106
      %2139 = vst [vmem:[#allocation3 + $0x78] sm:$0xff] %v2107
      %2140 = vst [vmem:[#allocation3 + $0x80] sm:$0xff] %v2108
      %2141 = vst [vmem:[#allocation3 + $0x88] sm:$0xff] %v2109
      %2142 = vst [vmem:[#allocation3 + $0x90] sm:$0xff] %v2110
      %2143 = vst [vmem:[#allocation3 + $0x98] sm:$0xff] %v2111
      %2144 = vst [vmem:[#allocation3 + $0xa0] sm:$0xff] %v2112
      %2145 = vst [vmem:[#allocation3 + $0xa8] sm:$0xff] %v2113
      %2146 = vst [vmem:[#allocation3 + $0xb0] sm:$0xff] %v2114
      %2147 = vst [vmem:[#allocation3 + $0xb8] sm:$0xff] %v2115
      %2148 = vst [vmem:[#allocation3 + $0xc0] sm:$0xff] %v2116
      %2149 = vst [vmem:[#allocation3 + $0xc8] sm:$0xff] %v2117
      %2150 = vst [vmem:[#allocation3 + $0xd0] sm:$0xff] %v2118
      %2151 = vst [vmem:[#allocation3 + $0xd8] sm:$0xff] %v2119
      %2152 = vst [vmem:[#allocation3 + $0xe0] sm:$0xff] %v2120
      %2153 = vst [vmem:[#allocation3 + $0xe8] sm:$0xff] %v2121
      %2154 = vst [vmem:[#allocation3 + $0xf0] sm:$0xff] %v2122
      %2155 = vst [vmem:[#allocation3 + $0xf8] sm:$0xff] %v2123
      %v2156 = vld [vmem:[#allocation3] sm:$0xff]
      %v2157 = vld [vmem:[#allocation3 + $0x8] sm:$0xff]
      %v2158 = vld [vmem:[#allocation3 + $0x10] sm:$0xff]
      %v2159 = vld [vmem:[#allocation3 + $0x18] sm:$0xff]
      %v2160 = vld [vmem:[#allocation3 + $0x20] sm:$0xff]
      %v2161 = vld [vmem:[#allocation3 + $0x28] sm:$0xff]
      %v2162 = vld [vmem:[#allocation3 + $0x30] sm:$0xff]
      %v2163 = vld [vmem:[#allocation3 + $0x38] sm:$0xff]
      %v2164 = vld [vmem:[#allocation3 + $0x40] sm:$0xff]
      %v2165 = vld [vmem:[#allocation3 + $0x48] sm:$0xff]
      %v2166 = vld [vmem:[#allocation3 + $0x50] sm:$0xff]
      %v2167 = vld [vmem:[#allocation3 + $0x58] sm:$0xff]
      %v2168 = vld [vmem:[#allocation3 + $0x60] sm:$0xff]
      %v2169 = vld [vmem:[#allocation3 + $0x68] sm:$0xff]
      %v2170 = vld [vmem:[#allocation3 + $0x70] sm:$0xff]
      %v2171 = vld [vmem:[#allocation3 + $0x78] sm:$0xff]
      %v2172 = vld [vmem:[#allocation3 + $0x80] sm:$0xff]
      %v2173 = vld [vmem:[#allocation3 + $0x88] sm:$0xff]
      %v2174 = vld [vmem:[#allocation3 + $0x90] sm:$0xff]
      %v2175 = vld [vmem:[#allocation3 + $0x98] sm:$0xff]
      %v2176 = vld [vmem:[#allocation3 + $0xa0] sm:$0xff]
      %v2177 = vld [vmem:[#allocation3 + $0xa8] sm:$0xff]
      %v2178 = vld [vmem:[#allocation3 + $0xb0] sm:$0xff]
      %v2179 = vld [vmem:[#allocation3 + $0xb8] sm:$0xff]
      %v2180 = vld [vmem:[#allocation3 + $0xc0] sm:$0xff]
      %v2181 = vld [vmem:[#allocation3 + $0xc8] sm:$0xff]
      %v2182 = vld [vmem:[#allocation3 + $0xd0] sm:$0xff]
      %v2183 = vld [vmem:[#allocation3 + $0xd8] sm:$0xff]
      %v2184 = vld [vmem:[#allocation3 + $0xe0] sm:$0xff]
      %v2185 = vld [vmem:[#allocation3 + $0xe8] sm:$0xff]
      %v2186 = vld [vmem:[#allocation3 + $0xf0] sm:$0xff]
      %v2187 = vld [vmem:[#allocation3 + $0xf8] sm:$0xff]
      %v2188 = vld [vmem:[#allocation3 + $0x2] sm:$0xff]
      %v2189 = vld [vmem:[#allocation3 + $0xa] sm:$0xff]
      %v2190 = vld [vmem:[#allocation3 + $0x12] sm:$0xff]
      %v2191 = vld [vmem:[#allocation3 + $0x1a] sm:$0xff]
      %v2192 = vld [vmem:[#allocation3 + $0x22] sm:$0xff]
      %v2193 = vld [vmem:[#allocation3 + $0x2a] sm:$0xff]
      %v2194 = vld [vmem:[#allocation3 + $0x32] sm:$0xff]
      %v2195 = vld [vmem:[#allocation3 + $0x3a] sm:$0xff]
      %v2196 = vld [vmem:[#allocation3 + $0x42] sm:$0xff]
      %v2197 = vld [vmem:[#allocation3 + $0x4a] sm:$0xff]
      %v2198 = vld [vmem:[#allocation3 + $0x52] sm:$0xff]
      %v2199 = vld [vmem:[#allocation3 + $0x5a] sm:$0xff]
      %v2200 = vld [vmem:[#allocation3 + $0x62] sm:$0xff]
      %v2201 = vld [vmem:[#allocation3 + $0x6a] sm:$0xff]
      %v2202 = vld [vmem:[#allocation3 + $0x72] sm:$0xff]
      %v2203 = vld [vmem:[#allocation3 + $0x7a] sm:$0xff]
      %v2204 = vld [vmem:[#allocation3 + $0x82] sm:$0xff]
      %v2205 = vld [vmem:[#allocation3 + $0x8a] sm:$0xff]
      %v2206 = vld [vmem:[#allocation3 + $0x92] sm:$0xff]
      %v2207 = vld [vmem:[#allocation3 + $0x9a] sm:$0xff]
      %v2208 = vld [vmem:[#allocation3 + $0xa2] sm:$0xff]
      %v2209 = vld [vmem:[#allocation3 + $0xaa] sm:$0xff]
      %v2210 = vld [vmem:[#allocation3 + $0xb2] sm:$0xff]
      %v2211 = vld [vmem:[#allocation3 + $0xba] sm:$0xff]
      %v2212 = vld [vmem:[#allocation3 + $0xc2] sm:$0xff]
      %v2213 = vld [vmem:[#allocation3 + $0xca] sm:$0xff]
      %v2214 = vld [vmem:[#allocation3 + $0xd2] sm:$0xff]
      %v2215 = vld [vmem:[#allocation3 + $0xda] sm:$0xff]
      %v2216 = vld [vmem:[#allocation3 + $0xe2] sm:$0xff]
      %v2217 = vld [vmem:[#allocation3 + $0xea] sm:$0xff]
      %v2218 = vld [vmem:[#allocation3 + $0xf2] sm:$0xff]
      %v2219 = vld [vmem:[#allocation3 + $0xfa] sm:$0xff]
      %vm2220 = vcmp.lt.s32.totalorder %v602, 14
      %vm2221 = vcmp.lt.s32.totalorder %v603, 14
      %vm2222 = vcmp.lt.s32.totalorder %v604, 14
      %vm2223 = vcmp.lt.s32.totalorder %v605, 14
      %vm2224 = vcmp.lt.s32.totalorder %v606, 14
      %vm2225 = vcmp.lt.s32.totalorder %v607, 14
      %vm2226 = vcmp.lt.s32.totalorder %v608, 14
      %vm2227 = vcmp.lt.s32.totalorder %v609, 14
      %vm2228 = vcmp.lt.s32.totalorder %v610, 14
      %vm2229 = vcmp.lt.s32.totalorder %v611, 14
      %vm2230 = vcmp.lt.s32.totalorder %v612, 14
      %vm2231 = vcmp.lt.s32.totalorder %v613, 14
      %vm2232 = vcmp.lt.s32.totalorder %v614, 14
      %vm2233 = vcmp.lt.s32.totalorder %v615, 14
      %vm2234 = vcmp.lt.s32.totalorder %v616, 14
      %vm2235 = vcmp.lt.s32.totalorder %v617, 14
      %vm2236 = vcmp.lt.s32.totalorder %v618, 14
      %vm2237 = vcmp.lt.s32.totalorder %v619, 14
      %vm2238 = vcmp.lt.s32.totalorder %v620, 14
      %vm2239 = vcmp.lt.s32.totalorder %v621, 14
      %vm2240 = vcmp.lt.s32.totalorder %v622, 14
      %vm2241 = vcmp.lt.s32.totalorder %v623, 14
      %vm2242 = vcmp.lt.s32.totalorder %v624, 14
      %vm2243 = vcmp.lt.s32.totalorder %v625, 14
      %vm2244 = vcmp.lt.s32.totalorder %v626, 14
      %vm2245 = vcmp.lt.s32.totalorder %v627, 14
      %vm2246 = vcmp.lt.s32.totalorder %v628, 14
      %vm2247 = vcmp.lt.s32.totalorder %v629, 14
      %vm2248 = vcmp.lt.s32.totalorder %v630, 14
      %vm2249 = vcmp.lt.s32.totalorder %v631, 14
      %vm2250 = vcmp.lt.s32.totalorder %v632, 14
      %vm2251 = vcmp.lt.s32.totalorder %v633, 14
      %v2252 = vsel %vm2220, %v2188, -inf
      %v2253 = vsel %vm2221, %v2189, -inf
      %v2254 = vsel %vm2222, %v2190, -inf
      %v2255 = vsel %vm2223, %v2191, -inf
      %v2256 = vsel %vm2224, %v2192, -inf
      %v2257 = vsel %vm2225, %v2193, -inf
      %v2258 = vsel %vm2226, %v2194, -inf
      %v2259 = vsel %vm2227, %v2195, -inf
      %v2260 = vsel %vm2228, %v2196, -inf
      %v2261 = vsel %vm2229, %v2197, -inf
      %v2262 = vsel %vm2230, %v2198, -inf
      %v2263 = vsel %vm2231, %v2199, -inf
      %v2264 = vsel %vm2232, %v2200, -inf
      %v2265 = vsel %vm2233, %v2201, -inf
      %v2266 = vsel %vm2234, %v2202, -inf
      %v2267 = vsel %vm2235, %v2203, -inf
      %v2268 = vsel %vm2236, %v2204, -inf
      %v2269 = vsel %vm2237, %v2205, -inf
      %v2270 = vsel %vm2238, %v2206, -inf
      %v2271 = vsel %vm2239, %v2207, -inf
      %v2272 = vsel %vm2240, %v2208, -inf
      %v2273 = vsel %vm2241, %v2209, -inf
      %v2274 = vsel %vm2242, %v2210, -inf
      %v2275 = vsel %vm2243, %v2211, -inf
      %v2276 = vsel %vm2244, %v2212, -inf
      %v2277 = vsel %vm2245, %v2213, -inf
      %v2278 = vsel %vm2246, %v2214, -inf
      %v2279 = vsel %vm2247, %v2215, -inf
      %v2280 = vsel %vm2248, %v2216, -inf
      %v2281 = vsel %vm2249, %v2217, -inf
      %v2282 = vsel %vm2250, %v2218, -inf
      %v2283 = vsel %vm2251, %v2219, -inf
      %v2284 = vmax.f32 %v2156, %v2252
      %v2285 = vmax.f32 %v2157, %v2253
      %v2286 = vmax.f32 %v2158, %v2254
      %v2287 = vmax.f32 %v2159, %v2255
      %v2288 = vmax.f32 %v2160, %v2256
      %v2289 = vmax.f32 %v2161, %v2257
      %v2290 = vmax.f32 %v2162, %v2258
      %v2291 = vmax.f32 %v2163, %v2259
      %v2292 = vmax.f32 %v2164, %v2260
      %v2293 = vmax.f32 %v2165, %v2261
      %v2294 = vmax.f32 %v2166, %v2262
      %v2295 = vmax.f32 %v2167, %v2263
      %v2296 = vmax.f32 %v2168, %v2264
      %v2297 = vmax.f32 %v2169, %v2265
      %v2298 = vmax.f32 %v2170, %v2266
      %v2299 = vmax.f32 %v2171, %v2267
      %v2300 = vmax.f32 %v2172, %v2268
      %v2301 = vmax.f32 %v2173, %v2269
      %v2302 = vmax.f32 %v2174, %v2270
      %v2303 = vmax.f32 %v2175, %v2271
      %v2304 = vmax.f32 %v2176, %v2272
      %v2305 = vmax.f32 %v2177, %v2273
      %v2306 = vmax.f32 %v2178, %v2274
      %v2307 = vmax.f32 %v2179, %v2275
      %v2308 = vmax.f32 %v2180, %v2276
      %v2309 = vmax.f32 %v2181, %v2277
      %v2310 = vmax.f32 %v2182, %v2278
      %v2311 = vmax.f32 %v2183, %v2279
      %v2312 = vmax.f32 %v2184, %v2280
      %v2313 = vmax.f32 %v2185, %v2281
      %v2314 = vmax.f32 %v2186, %v2282
      %v2315 = vmax.f32 %v2187, %v2283
      %2316 = vst [vmem:[#allocation3] sm:$0xff] %v2284
      %2317 = vst [vmem:[#allocation3 + $0x8] sm:$0xff] %v2285
      %2318 = vst [vmem:[#allocation3 + $0x10] sm:$0xff] %v2286
      %2319 = vst [vmem:[#allocation3 + $0x18] sm:$0xff] %v2287
      %2320 = vst [vmem:[#allocation3 + $0x20] sm:$0xff] %v2288
      %2321 = vst [vmem:[#allocation3 + $0x28] sm:$0xff] %v2289
      %2322 = vst [vmem:[#allocation3 + $0x30] sm:$0xff] %v2290
      %2323 = vst [vmem:[#allocation3 + $0x38] sm:$0xff] %v2291
      %2324 = vst [vmem:[#allocation3 + $0x40] sm:$0xff] %v2292
      %2325 = vst [vmem:[#allocation3 + $0x48] sm:$0xff] %v2293
      %2326 = vst [vmem:[#allocation3 + $0x50] sm:$0xff] %v2294
      %2327 = vst [vmem:[#allocation3 + $0x58] sm:$0xff] %v2295
      %2328 = vst [vmem:[#allocation3 + $0x60] sm:$0xff] %v2296
      %2329 = vst [vmem:[#allocation3 + $0x68] sm:$0xff] %v2297
      %2330 = vst [vmem:[#allocation3 + $0x70] sm:$0xff] %v2298
      %2331 = vst [vmem:[#allocation3 + $0x78] sm:$0xff] %v2299
      %2332 = vst [vmem:[#allocation3 + $0x80] sm:$0xff] %v2300
      %2333 = vst [vmem:[#allocation3 + $0x88] sm:$0xff] %v2301
      %2334 = vst [vmem:[#allocation3 + $0x90] sm:$0xff] %v2302
      %2335 = vst [vmem:[#allocation3 + $0x98] sm:$0xff] %v2303
      %2336 = vst [vmem:[#allocation3 + $0xa0] sm:$0xff] %v2304
      %2337 = vst [vmem:[#allocation3 + $0xa8] sm:$0xff] %v2305
      %2338 = vst [vmem:[#allocation3 + $0xb0] sm:$0xff] %v2306
      %2339 = vst [vmem:[#allocation3 + $0xb8] sm:$0xff] %v2307
      %2340 = vst [vmem:[#allocation3 + $0xc0] sm:$0xff] %v2308
      %2341 = vst [vmem:[#allocation3 + $0xc8] sm:$0xff] %v2309
      %2342 = vst [vmem:[#allocation3 + $0xd0] sm:$0xff] %v2310
      %2343 = vst [vmem:[#allocation3 + $0xd8] sm:$0xff] %v2311
      %2344 = vst [vmem:[#allocation3 + $0xe0] sm:$0xff] %v2312
      %2345 = vst [vmem:[#allocation3 + $0xe8] sm:$0xff] %v2313
      %2346 = vst [vmem:[#allocation3 + $0xf0] sm:$0xff] %v2314
      %2347 = vst [vmem:[#allocation3 + $0xf8] sm:$0xff] %v2315
      %v2348 = vld [vmem:[#allocation3] sm:$0xff]
      %v2349 = vld [vmem:[#allocation3 + $0x8] sm:$0xff]
      %v2350 = vld [vmem:[#allocation3 + $0x10] sm:$0xff]
      %v2351 = vld [vmem:[#allocation3 + $0x18] sm:$0xff]
      %v2352 = vld [vmem:[#allocation3 + $0x20] sm:$0xff]
      %v2353 = vld [vmem:[#allocation3 + $0x28] sm:$0xff]
      %v2354 = vld [vmem:[#allocation3 + $0x30] sm:$0xff]
      %v2355 = vld [vmem:[#allocation3 + $0x38] sm:$0xff]
      %v2356 = vld [vmem:[#allocation3 + $0x40] sm:$0xff]
      %v2357 = vld [vmem:[#allocation3 + $0x48] sm:$0xff]
      %v2358 = vld [vmem:[#allocation3 + $0x50] sm:$0xff]
      %v2359 = vld [vmem:[#allocation3 + $0x58] sm:$0xff]
      %v2360 = vld [vmem:[#allocation3 + $0x60] sm:$0xff]
      %v2361 = vld [vmem:[#allocation3 + $0x68] sm:$0xff]
      %v2362 = vld [vmem:[#allocation3 + $0x70] sm:$0xff]
      %v2363 = vld [vmem:[#allocation3 + $0x78] sm:$0xff]
      %v2364 = vld [vmem:[#allocation3 + $0x80] sm:$0xff]
      %v2365 = vld [vmem:[#allocation3 + $0x88] sm:$0xff]
      %v2366 = vld [vmem:[#allocation3 + $0x90] sm:$0xff]
      %v2367 = vld [vmem:[#allocation3 + $0x98] sm:$0xff]
      %v2368 = vld [vmem:[#allocation3 + $0xa0] sm:$0xff]
      %v2369 = vld [vmem:[#allocation3 + $0xa8] sm:$0xff]
      %v2370 = vld [vmem:[#allocation3 + $0xb0] sm:$0xff]
      %v2371 = vld [vmem:[#allocation3 + $0xb8] sm:$0xff]
      %v2372 = vld [vmem:[#allocation3 + $0xc0] sm:$0xff]
      %v2373 = vld [vmem:[#allocation3 + $0xc8] sm:$0xff]
      %v2374 = vld [vmem:[#allocation3 + $0xd0] sm:$0xff]
      %v2375 = vld [vmem:[#allocation3 + $0xd8] sm:$0xff]
      %v2376 = vld [vmem:[#allocation3 + $0xe0] sm:$0xff]
      %v2377 = vld [vmem:[#allocation3 + $0xe8] sm:$0xff]
      %v2378 = vld [vmem:[#allocation3 + $0xf0] sm:$0xff]
      %v2379 = vld [vmem:[#allocation3 + $0xf8] sm:$0xff]
      %v2380 = vld [vmem:[#allocation3 + $0x4] sm:$0xff]
      %v2381 = vld [vmem:[#allocation3 + $0xc] sm:$0xff]
      %v2382 = vld [vmem:[#allocation3 + $0x14] sm:$0xff]
      %v2383 = vld [vmem:[#allocation3 + $0x1c] sm:$0xff]
      %v2384 = vld [vmem:[#allocation3 + $0x24] sm:$0xff]
      %v2385 = vld [vmem:[#allocation3 + $0x2c] sm:$0xff]
      %v2386 = vld [vmem:[#allocation3 + $0x34] sm:$0xff]
      %v2387 = vld [vmem:[#allocation3 + $0x3c] sm:$0xff]
      %v2388 = vld [vmem:[#allocation3 + $0x44] sm:$0xff]
      %v2389 = vld [vmem:[#allocation3 + $0x4c] sm:$0xff]
      %v2390 = vld [vmem:[#allocation3 + $0x54] sm:$0xff]
      %v2391 = vld [vmem:[#allocation3 + $0x5c] sm:$0xff]
      %v2392 = vld [vmem:[#allocation3 + $0x64] sm:$0xff]
      %v2393 = vld [vmem:[#allocation3 + $0x6c] sm:$0xff]
      %v2394 = vld [vmem:[#allocation3 + $0x74] sm:$0xff]
      %v2395 = vld [vmem:[#allocation3 + $0x7c] sm:$0xff]
      %v2396 = vld [vmem:[#allocation3 + $0x84] sm:$0xff]
      %v2397 = vld [vmem:[#allocation3 + $0x8c] sm:$0xff]
      %v2398 = vld [vmem:[#allocation3 + $0x94] sm:$0xff]
      %v2399 = vld [vmem:[#allocation3 + $0x9c] sm:$0xff]
      %v2400 = vld [vmem:[#allocation3 + $0xa4] sm:$0xff]
      %v2401 = vld [vmem:[#allocation3 + $0xac] sm:$0xff]
      %v2402 = vld [vmem:[#allocation3 + $0xb4] sm:$0xff]
      %v2403 = vld [vmem:[#allocation3 + $0xbc] sm:$0xff]
      %v2404 = vld [vmem:[#allocation3 + $0xc4] sm:$0xff]
      %v2405 = vld [vmem:[#allocation3 + $0xcc] sm:$0xff]
      %v2406 = vld [vmem:[#allocation3 + $0xd4] sm:$0xff]
      %v2407 = vld [vmem:[#allocation3 + $0xdc] sm:$0xff]
      %v2408 = vld [vmem:[#allocation3 + $0xe4] sm:$0xff]
      %v2409 = vld [vmem:[#allocation3 + $0xec] sm:$0xff]
      %v2410 = vld [vmem:[#allocation3 + $0xf4] sm:$0xff]
      %v2411 = vld [vmem:[#allocation3 + $0xfc] sm:$0xff]
      %vm2412 = vcmp.lt.s32.totalorder %v602, 12
      %vm2413 = vcmp.lt.s32.totalorder %v603, 12
      %vm2414 = vcmp.lt.s32.totalorder %v604, 12
      %vm2415 = vcmp.lt.s32.totalorder %v605, 12
      %vm2416 = vcmp.lt.s32.totalorder %v606, 12
      %vm2417 = vcmp.lt.s32.totalorder %v607, 12
      %vm2418 = vcmp.lt.s32.totalorder %v608, 12
      %vm2419 = vcmp.lt.s32.totalorder %v609, 12
      %vm2420 = vcmp.lt.s32.totalorder %v610, 12
      %vm2421 = vcmp.lt.s32.totalorder %v611, 12
      %vm2422 = vcmp.lt.s32.totalorder %v612, 12
      %vm2423 = vcmp.lt.s32.totalorder %v613, 12
      %vm2424 = vcmp.lt.s32.totalorder %v614, 12
      %vm2425 = vcmp.lt.s32.totalorder %v615, 12
      %vm2426 = vcmp.lt.s32.totalorder %v616, 12
      %vm2427 = vcmp.lt.s32.totalorder %v617, 12
      %vm2428 = vcmp.lt.s32.totalorder %v618, 12
      %vm2429 = vcmp.lt.s32.totalorder %v619, 12
      %vm2430 = vcmp.lt.s32.totalorder %v620, 12
      %vm2431 = vcmp.lt.s32.totalorder %v621, 12
      %vm2432 = vcmp.lt.s32.totalorder %v622, 12
      %vm2433 = vcmp.lt.s32.totalorder %v623, 12
      %vm2434 = vcmp.lt.s32.totalorder %v624, 12
      %vm2435 = vcmp.lt.s32.totalorder %v625, 12
      %vm2436 = vcmp.lt.s32.totalorder %v626, 12
      %vm2437 = vcmp.lt.s32.totalorder %v627, 12
      %vm2438 = vcmp.lt.s32.totalorder %v628, 12
      %vm2439 = vcmp.lt.s32.totalorder %v629, 12
      %vm2440 = vcmp.lt.s32.totalorder %v630, 12
      %vm2441 = vcmp.lt.s32.totalorder %v631, 12
      %vm2442 = vcmp.lt.s32.totalorder %v632, 12
      %vm2443 = vcmp.lt.s32.totalorder %v633, 12
      %v2444 = vsel %vm2412, %v2380, -inf
      %v2445 = vsel %vm2413, %v2381, -inf
      %v2446 = vsel %vm2414, %v2382, -inf
      %v2447 = vsel %vm2415, %v2383, -inf
      %v2448 = vsel %vm2416, %v2384, -inf
      %v2449 = vsel %vm2417, %v2385, -inf
      %v2450 = vsel %vm2418, %v2386, -inf
      %v2451 = vsel %vm2419, %v2387, -inf
      %v2452 = vsel %vm2420, %v2388, -inf
      %v2453 = vsel %vm2421, %v2389, -inf
      %v2454 = vsel %vm2422, %v2390, -inf
      %v2455 = vsel %vm2423, %v2391, -inf
      %v2456 = vsel %vm2424, %v2392, -inf
      %v2457 = vsel %vm2425, %v2393, -inf
      %v2458 = vsel %vm2426, %v2394, -inf
      %v2459 = vsel %vm2427, %v2395, -inf
      %v2460 = vsel %vm2428, %v2396, -inf
      %v2461 = vsel %vm2429, %v2397, -inf
      %v2462 = vsel %vm2430, %v2398, -inf
      %v2463 = vsel %vm2431, %v2399, -inf
      %v2464 = vsel %vm2432, %v2400, -inf
      %v2465 = vsel %vm2433, %v2401, -inf
      %v2466 = vsel %vm2434, %v2402, -inf
      %v2467 = vsel %vm2435, %v2403, -inf
      %v2468 = vsel %vm2436, %v2404, -inf
      %v2469 = vsel %vm2437, %v2405, -inf
      %v2470 = vsel %vm2438, %v2406, -inf
      %v2471 = vsel %vm2439, %v2407, -inf
      %v2472 = vsel %vm2440, %v2408, -inf
      %v2473 = vsel %vm2441, %v2409, -inf
      %v2474 = vsel %vm2442, %v2410, -inf
      %v2475 = vsel %vm2443, %v2411, -inf
      %v2476 = vmax.f32 %v2348, %v2444
      %v2477 = vmax.f32 %v2349, %v2445
      %v2478 = vmax.f32 %v2350, %v2446
      %v2479 = vmax.f32 %v2351, %v2447
      %v2480 = vmax.f32 %v2352, %v2448
      %v2481 = vmax.f32 %v2353, %v2449
      %v2482 = vmax.f32 %v2354, %v2450
      %v2483 = vmax.f32 %v2355, %v2451
      %v2484 = vmax.f32 %v2356, %v2452
      %v2485 = vmax.f32 %v2357, %v2453
      %v2486 = vmax.f32 %v2358, %v2454
      %v2487 = vmax.f32 %v2359, %v2455
      %v2488 = vmax.f32 %v2360, %v2456
      %v2489 = vmax.f32 %v2361, %v2457
      %v2490 = vmax.f32 %v2362, %v2458
      %v2491 = vmax.f32 %v2363, %v2459
      %v2492 = vmax.f32 %v2364, %v2460
      %v2493 = vmax.f32 %v2365, %v2461
      %v2494 = vmax.f32 %v2366, %v2462
      %v2495 = vmax.f32 %v2367, %v2463
      %v2496 = vmax.f32 %v2368, %v2464
      %v2497 = vmax.f32 %v2369, %v2465
      %v2498 = vmax.f32 %v2370, %v2466
      %v2499 = vmax.f32 %v2371, %v2467
      %v2500 = vmax.f32 %v2372, %v2468
      %v2501 = vmax.f32 %v2373, %v2469
      %v2502 = vmax.f32 %v2374, %v2470
      %v2503 = vmax.f32 %v2375, %v2471
      %v2504 = vmax.f32 %v2376, %v2472
      %v2505 = vmax.f32 %v2377, %v2473
      %v2506 = vmax.f32 %v2378, %v2474
      %v2507 = vmax.f32 %v2379, %v2475
      %2508 = vst [vmem:[#allocation3] sm:$0xff] %v2476
      %2509 = vst [vmem:[#allocation3 + $0x8] sm:$0xff] %v2477
      %2510 = vst [vmem:[#allocation3 + $0x10] sm:$0xff] %v2478
      %2511 = vst [vmem:[#allocation3 + $0x18] sm:$0xff] %v2479
      %2512 = vst [vmem:[#allocation3 + $0x20] sm:$0xff] %v2480
      %2513 = vst [vmem:[#allocation3 + $0x28] sm:$0xff] %v2481
      %2514 = vst [vmem:[#allocation3 + $0x30] sm:$0xff] %v2482
      %2515 = vst [vmem:[#allocation3 + $0x38] sm:$0xff] %v2483
      %2516 = vst [vmem:[#allocation3 + $0x40] sm:$0xff] %v2484
      %2517 = vst [vmem:[#allocation3 + $0x48] sm:$0xff] %v2485
      %2518 = vst [vmem:[#allocation3 + $0x50] sm:$0xff] %v2486
      %2519 = vst [vmem:[#allocation3 + $0x58] sm:$0xff] %v2487
      %2520 = vst [vmem:[#allocation3 + $0x60] sm:$0xff] %v2488
      %2521 = vst [vmem:[#allocation3 + $0x68] sm:$0xff] %v2489
      %2522 = vst [vmem:[#allocation3 + $0x70] sm:$0xff] %v2490
      %2523 = vst [vmem:[#allocation3 + $0x78] sm:$0xff] %v2491
      %2524 = vst [vmem:[#allocation3 + $0x80] sm:$0xff] %v2492
      %2525 = vst [vmem:[#allocation3 + $0x88] sm:$0xff] %v2493
      %2526 = vst [vmem:[#allocation3 + $0x90] sm:$0xff] %v2494
      %2527 = vst [vmem:[#allocation3 + $0x98] sm:$0xff] %v2495
      %2528 = vst [vmem:[#allocation3 + $0xa0] sm:$0xff] %v2496
      %2529 = vst [vmem:[#allocation3 + $0xa8] sm:$0xff] %v2497
      %2530 = vst [vmem:[#allocation3 + $0xb0] sm:$0xff] %v2498
      %2531 = vst [vmem:[#allocation3 + $0xb8] sm:$0xff] %v2499
      %2532 = vst [vmem:[#allocation3 + $0xc0] sm:$0xff] %v2500
      %2533 = vst [vmem:[#allocation3 + $0xc8] sm:$0xff] %v2501
      %2534 = vst [vmem:[#allocation3 + $0xd0] sm:$0xff] %v2502
      %2535 = vst [vmem:[#allocation3 + $0xd8] sm:$0xff] %v2503
      %2536 = vst [vmem:[#allocation3 + $0xe0] sm:$0xff] %v2504
      %2537 = vst [vmem:[#allocation3 + $0xe8] sm:$0xff] %v2505
      %2538 = vst [vmem:[#allocation3 + $0xf0] sm:$0xff] %v2506
      %2539 = vst [vmem:[#allocation3 + $0xf8] sm:$0xff] %v2507
      %v2540 = vld [vmem:[#allocation3] sm:$0xff]
      %v2541 = vld [vmem:[#allocation3 + $0x8] sm:$0xff]
      %v2542 = vld [vmem:[#allocation3 + $0x10] sm:$0xff]
      %v2543 = vld [vmem:[#allocation3 + $0x18] sm:$0xff]
      %v2544 = vld [vmem:[#allocation3 + $0x20] sm:$0xff]
      %v2545 = vld [vmem:[#allocation3 + $0x28] sm:$0xff]
      %v2546 = vld [vmem:[#allocation3 + $0x30] sm:$0xff]
      %v2547 = vld [vmem:[#allocation3 + $0x38] sm:$0xff]
      %v2548 = vld [vmem:[#allocation3 + $0x40] sm:$0xff]
      %v2549 = vld [vmem:[#allocation3 + $0x48] sm:$0xff]
      %v2550 = vld [vmem:[#allocation3 + $0x50] sm:$0xff]
      %v2551 = vld [vmem:[#allocation3 + $0x58] sm:$0xff]
      %v2552 = vld [vmem:[#allocation3 + $0x60] sm:$0xff]
      %v2553 = vld [vmem:[#allocation3 + $0x68] sm:$0xff]
      %v2554 = vld [vmem:[#allocation3 + $0x70] sm:$0xff]
      %v2555 = vld [vmem:[#allocation3 + $0x78] sm:$0xff]
      %v2556 = vld [vmem:[#allocation3 + $0x80] sm:$0xff]
      %v2557 = vld [vmem:[#allocation3 + $0x88] sm:$0xff]
      %v2558 = vld [vmem:[#allocation3 + $0x90] sm:$0xff]
      %v2559 = vld [vmem:[#allocation3 + $0x98] sm:$0xff]
      %v2560 = vld [vmem:[#allocation3 + $0xa0] sm:$0xff]
      %v2561 = vld [vmem:[#allocation3 + $0xa8] sm:$0xff]
      %v2562 = vld [vmem:[#allocation3 + $0xb0] sm:$0xff]
      %v2563 = vld [vmem:[#allocation3 + $0xb8] sm:$0xff]
      %v2564 = vld [vmem:[#allocation3 + $0xc0] sm:$0xff]
      %v2565 = vld [vmem:[#allocation3 + $0xc8] sm:$0xff]
      %v2566 = vld [vmem:[#allocation3 + $0xd0] sm:$0xff]
      %v2567 = vld [vmem:[#allocation3 + $0xd8] sm:$0xff]
      %v2568 = vld [vmem:[#allocation3 + $0xe0] sm:$0xff]
      %v2569 = vld [vmem:[#allocation3 + $0xe8] sm:$0xff]
      %v2570 = vld [vmem:[#allocation3 + $0xf0] sm:$0xff]
      %v2571 = vld [vmem:[#allocation3 + $0xf8] sm:$0xff]
      %v2572 = vld [vmem:[#allocation3 + $0x8] sm:$0xff]
      %v2573 = vld [vmem:[#allocation3 + $0x10] sm:$0xff]
      %v2574 = vld [vmem:[#allocation3 + $0x18] sm:$0xff]
      %v2575 = vld [vmem:[#allocation3 + $0x20] sm:$0xff]
      %v2576 = vld [vmem:[#allocation3 + $0x28] sm:$0xff]
      %v2577 = vld [vmem:[#allocation3 + $0x30] sm:$0xff]
      %v2578 = vld [vmem:[#allocation3 + $0x38] sm:$0xff]
      %v2579 = vld [vmem:[#allocation3 + $0x40] sm:$0xff]
      %v2580 = vld [vmem:[#allocation3 + $0x48] sm:$0xff]
      %v2581 = vld [vmem:[#allocation3 + $0x50] sm:$0xff]
      %v2582 = vld [vmem:[#allocation3 + $0x58] sm:$0xff]
      %v2583 = vld [vmem:[#allocation3 + $0x60] sm:$0xff]
      %v2584 = vld [vmem:[#allocation3 + $0x68] sm:$0xff]
      %v2585 = vld [vmem:[#allocation3 + $0x70] sm:$0xff]
      %v2586 = vld [vmem:[#allocation3 + $0x78] sm:$0xff]
      %v2587 = vld [vmem:[#allocation3 + $0x80] sm:$0xff]
      %v2588 = vld [vmem:[#allocation3 + $0x88] sm:$0xff]
      %v2589 = vld [vmem:[#allocation3 + $0x90] sm:$0xff]
      %v2590 = vld [vmem:[#allocation3 + $0x98] sm:$0xff]
      %v2591 = vld [vmem:[#allocation3 + $0xa0] sm:$0xff]
      %v2592 = vld [vmem:[#allocation3 + $0xa8] sm:$0xff]
      %v2593 = vld [vmem:[#allocation3 + $0xb0] sm:$0xff]
      %v2594 = vld [vmem:[#allocation3 + $0xb8] sm:$0xff]
      %v2595 = vld [vmem:[#allocation3 + $0xc0] sm:$0xff]
      %v2596 = vld [vmem:[#allocation3 + $0xc8] sm:$0xff]
      %v2597 = vld [vmem:[#allocation3 + $0xd0] sm:$0xff]
      %v2598 = vld [vmem:[#allocation3 + $0xd8] sm:$0xff]
      %v2599 = vld [vmem:[#allocation3 + $0xe0] sm:$0xff]
      %v2600 = vld [vmem:[#allocation3 + $0xe8] sm:$0xff]
      %v2601 = vld [vmem:[#allocation3 + $0xf0] sm:$0xff]
      %v2602 = vld [vmem:[#allocation3 + $0xf8] sm:$0xff]
      %v2603 = vld [vmem:[#allocation3 + $0x100] sm:$0xff]
      %vm2604 = vcmp.lt.s32.totalorder %v602, 8
      %vm2605 = vcmp.lt.s32.totalorder %v603, 8
      %vm2606 = vcmp.lt.s32.totalorder %v604, 8
      %vm2607 = vcmp.lt.s32.totalorder %v605, 8
      %vm2608 = vcmp.lt.s32.totalorder %v606, 8
      %vm2609 = vcmp.lt.s32.totalorder %v607, 8
      %vm2610 = vcmp.lt.s32.totalorder %v608, 8
      %vm2611 = vcmp.lt.s32.totalorder %v609, 8
      %vm2612 = vcmp.lt.s32.totalorder %v610, 8
      %vm2613 = vcmp.lt.s32.totalorder %v611, 8
      %vm2614 = vcmp.lt.s32.totalorder %v612, 8
      %vm2615 = vcmp.lt.s32.totalorder %v613, 8
      %vm2616 = vcmp.lt.s32.totalorder %v614, 8
      %vm2617 = vcmp.lt.s32.totalorder %v615, 8
      %vm2618 = vcmp.lt.s32.totalorder %v616, 8
      %vm2619 = vcmp.lt.s32.totalorder %v617, 8
      %vm2620 = vcmp.lt.s32.totalorder %v618, 8
      %vm2621 = vcmp.lt.s32.totalorder %v619, 8
      %vm2622 = vcmp.lt.s32.totalorder %v620, 8
      %vm2623 = vcmp.lt.s32.totalorder %v621, 8
      %vm2624 = vcmp.lt.s32.totalorder %v622, 8
      %vm2625 = vcmp.lt.s32.totalorder %v623, 8
      %vm2626 = vcmp.lt.s32.totalorder %v624, 8
      %vm2627 = vcmp.lt.s32.totalorder %v625, 8
      %vm2628 = vcmp.lt.s32.totalorder %v626, 8
      %vm2629 = vcmp.lt.s32.totalorder %v627, 8
      %vm2630 = vcmp.lt.s32.totalorder %v628, 8
      %vm2631 = vcmp.lt.s32.totalorder %v629, 8
      %vm2632 = vcmp.lt.s32.totalorder %v630, 8
      %vm2633 = vcmp.lt.s32.totalorder %v631, 8
      %vm2634 = vcmp.lt.s32.totalorder %v632, 8
      %vm2635 = vcmp.lt.s32.totalorder %v633, 8
      %v2636 = vsel %vm2604, %v2572, -inf
      %v2637 = vsel %vm2605, %v2573, -inf
      %v2638 = vsel %vm2606, %v2574, -inf
      %v2639 = vsel %vm2607, %v2575, -inf
      %v2640 = vsel %vm2608, %v2576, -inf
      %v2641 = vsel %vm2609, %v2577, -inf
      %v2642 = vsel %vm2610, %v2578, -inf
      %v2643 = vsel %vm2611, %v2579, -inf
      %v2644 = vsel %vm2612, %v2580, -inf
      %v2645 = vsel %vm2613, %v2581, -inf
      %v2646 = vsel %vm2614, %v2582, -inf
      %v2647 = vsel %vm2615, %v2583, -inf
      %v2648 = vsel %vm2616, %v2584, -inf
      %v2649 = vsel %vm2617, %v2585, -inf
      %v2650 = vsel %vm2618, %v2586, -inf
      %v2651 = vsel %vm2619, %v2587, -inf
      %v2652 = vsel %vm2620, %v2588, -inf
      %v2653 = vsel %vm2621, %v2589, -inf
      %v2654 = vsel %vm2622, %v2590, -inf
      %v2655 = vsel %vm2623, %v2591, -inf
      %v2656 = vsel %vm2624, %v2592, -inf
      %v2657 = vsel %vm2625, %v2593, -inf
      %v2658 = vsel %vm2626, %v2594, -inf
      %v2659 = vsel %vm2627, %v2595, -inf
      %v2660 = vsel %vm2628, %v2596, -inf
      %v2661 = vsel %vm2629, %v2597, -inf
      %v2662 = vsel %vm2630, %v2598, -inf
      %v2663 = vsel %vm2631, %v2599, -inf
      %v2664 = vsel %vm2632, %v2600, -inf
      %v2665 = vsel %vm2633, %v2601, -inf
      %v2666 = vsel %vm2634, %v2602, -inf
      %v2667 = vsel %vm2635, %v2603, -inf
      %v2668 = vmax.f32 %v2540, %v2636
      %v2669 = vmax.f32 %v2541, %v2637
      %v2670 = vmax.f32 %v2542, %v2638
      %v2671 = vmax.f32 %v2543, %v2639
      %v2672 = vmax.f32 %v2544, %v2640
      %v2673 = vmax.f32 %v2545, %v2641
      %v2674 = vmax.f32 %v2546, %v2642
      %v2675 = vmax.f32 %v2547, %v2643
      %v2676 = vmax.f32 %v2548, %v2644
      %v2677 = vmax.f32 %v2549, %v2645
      %v2678 = vmax.f32 %v2550, %v2646
      %v2679 = vmax.f32 %v2551, %v2647
      %v2680 = vmax.f32 %v2552, %v2648
      %v2681 = vmax.f32 %v2553, %v2649
      %v2682 = vmax.f32 %v2554, %v2650
      %v2683 = vmax.f32 %v2555, %v2651
      %v2684 = vmax.f32 %v2556, %v2652
      %v2685 = vmax.f32 %v2557, %v2653
      %v2686 = vmax.f32 %v2558, %v2654
      %v2687 = vmax.f32 %v2559, %v2655
      %v2688 = vmax.f32 %v2560, %v2656
      %v2689 = vmax.f32 %v2561, %v2657
      %v2690 = vmax.f32 %v2562, %v2658
      %v2691 = vmax.f32 %v2563, %v2659
      %v2692 = vmax.f32 %v2564, %v2660
      %v2693 = vmax.f32 %v2565, %v2661
      %v2694 = vmax.f32 %v2566, %v2662
      %v2695 = vmax.f32 %v2567, %v2663
      %v2696 = vmax.f32 %v2568, %v2664
      %v2697 = vmax.f32 %v2569, %v2665
      %v2698 = vmax.f32 %v2570, %v2666
      %v2699 = vmax.f32 %v2571, %v2667
      %2700 = vst [vmem:[#allocation3] sm:$0xff] %v2668
      %2701 = vst [vmem:[#allocation3 + $0x8] sm:$0xff] %v2669
      %2702 = vst [vmem:[#allocation3 + $0x10] sm:$0xff] %v2670
      %2703 = vst [vmem:[#allocation3 + $0x18] sm:$0xff] %v2671
      %2704 = vst [vmem:[#allocation3 + $0x20] sm:$0xff] %v2672
      %2705 = vst [vmem:[#allocation3 + $0x28] sm:$0xff] %v2673
      %2706 = vst [vmem:[#allocation3 + $0x30] sm:$0xff] %v2674
      %2707 = vst [vmem:[#allocation3 + $0x38] sm:$0xff] %v2675
      %2708 = vst [vmem:[#allocation3 + $0x40] sm:$0xff] %v2676
      %2709 = vst [vmem:[#allocation3 + $0x48] sm:$0xff] %v2677
      %2710 = vst [vmem:[#allocation3 + $0x50] sm:$0xff] %v2678
      %2711 = vst [vmem:[#allocation3 + $0x58] sm:$0xff] %v2679
      %2712 = vst [vmem:[#allocation3 + $0x60] sm:$0xff] %v2680
      %2713 = vst [vmem:[#allocation3 + $0x68] sm:$0xff] %v2681
      %2714 = vst [vmem:[#allocation3 + $0x70] sm:$0xff] %v2682
      %2715 = vst [vmem:[#allocation3 + $0x78] sm:$0xff] %v2683
      %2716 = vst [vmem:[#allocation3 + $0x80] sm:$0xff] %v2684
      %2717 = vst [vmem:[#allocation3 + $0x88] sm:$0xff] %v2685
      %2718 = vst [vmem:[#allocation3 + $0x90] sm:$0xff] %v2686
      %2719 = vst [vmem:[#allocation3 + $0x98] sm:$0xff] %v2687
      %2720 = vst [vmem:[#allocation3 + $0xa0] sm:$0xff] %v2688
      %2721 = vst [vmem:[#allocation3 + $0xa8] sm:$0xff] %v2689
      %2722 = vst [vmem:[#allocation3 + $0xb0] sm:$0xff] %v2690
      %2723 = vst [vmem:[#allocation3 + $0xb8] sm:$0xff] %v2691
      %2724 = vst [vmem:[#allocation3 + $0xc0] sm:$0xff] %v2692
      %2725 = vst [vmem:[#allocation3 + $0xc8] sm:$0xff] %v2693
      %2726 = vst [vmem:[#allocation3 + $0xd0] sm:$0xff] %v2694
      %2727 = vst [vmem:[#allocation3 + $0xd8] sm:$0xff] %v2695
      %2728 = vst [vmem:[#allocation3 + $0xe0] sm:$0xff] %v2696
      %2729 = vst [vmem:[#allocation3 + $0xe8] sm:$0xff] %v2697
      %2730 = vst [vmem:[#allocation3 + $0xf0] sm:$0xff] %v2698
      %2731 = vst [vmem:[#allocation3 + $0xf8] sm:$0xff] %v2699
      %v2732 = vld [vmem:[#allocation2 + $0x18] sm:$0xff]
      %v2733 = vld [vmem:[#allocation2 + $0x20] sm:$0xff]
      %v2734 = vld [vmem:[#allocation2 + $0x28] sm:$0xff]
      %v2735 = vld [vmem:[#allocation2 + $0x30] sm:$0xff]
      %v2736 = vld [vmem:[#allocation2 + $0x38] sm:$0xff]
      %v2737 = vld [vmem:[#allocation2 + $0x40] sm:$0xff]
      %v2738 = vld [vmem:[#allocation2 + $0x48] sm:$0xff]
      %v2739 = vld [vmem:[#allocation2 + $0x50] sm:$0xff]
      %v2740 = vld [vmem:[#allocation2 + $0x58] sm:$0xff]
      %v2741 = vld [vmem:[#allocation2 + $0x60] sm:$0xff]
      %v2742 = vld [vmem:[#allocation2 + $0x68] sm:$0xff]
      %v2743 = vld [vmem:[#allocation2 + $0x70] sm:$0xff]
      %v2744 = vld [vmem:[#allocation2 + $0x78] sm:$0xff]
      %v2745 = vld [vmem:[#allocation2 + $0x80] sm:$0xff]
      %v2746 = vld [vmem:[#allocation2 + $0x88] sm:$0xff]
      %v2747 = vld [vmem:[#allocation2 + $0x90] sm:$0xff]
      %v2748 = vld [vmem:[#allocation2 + $0x98] sm:$0xff]
      %v2749 = vld [vmem:[#allocation2 + $0xa0] sm:$0xff]
      %v2750 = vld [vmem:[#allocation2 + $0xa8] sm:$0xff]
      %v2751 = vld [vmem:[#allocation2 + $0xb0] sm:$0xff]
      %v2752 = vld [vmem:[#allocation2 + $0xb8] sm:$0xff]
      %v2753 = vld [vmem:[#allocation2 + $0xc0] sm:$0xff]
      %v2754 = vld [vmem:[#allocation2 + $0xc8] sm:$0xff]
      %v2755 = vld [vmem:[#allocation2 + $0xd0] sm:$0xff]
      %v2756 = vld [vmem:[#allocation2 + $0xd8] sm:$0xff]
      %v2757 = vld [vmem:[#allocation2 + $0xe0] sm:$0xff]
      %v2758 = vld [vmem:[#allocation2 + $0xe8] sm:$0xff]
      %v2759 = vld [vmem:[#allocation2 + $0xf0] sm:$0xff]
      %v2760 = vld [vmem:[#allocation2 + $0xf8] sm:$0xff]
      %v2761 = vld [vmem:[#allocation2 + $0x100] sm:$0xff]
      %v2762 = vld [vmem:[#allocation2 + $0x108] sm:$0xff]
      %v2763 = vld [vmem:[#allocation2 + $0x110] sm:$0xff]
      %v2764 = vld [vmem:[#allocation3] sm:$0xff]
      %v2765 = vld [vmem:[#allocation3 + $0x8] sm:$0xff]
      %v2766 = vld [vmem:[#allocation3 + $0x10] sm:$0xff]
      %v2767 = vld [vmem:[#allocation3 + $0x18] sm:$0xff]
      %v2768 = vld [vmem:[#allocation3 + $0x20] sm:$0xff]
      %v2769 = vld [vmem:[#allocation3 + $0x28] sm:$0xff]
      %v2770 = vld [vmem:[#allocation3 + $0x30] sm:$0xff]
      %v2771 = vld [vmem:[#allocation3 + $0x38] sm:$0xff]
      %v2772 = vld [vmem:[#allocation3 + $0x40] sm:$0xff]
      %v2773 = vld [vmem:[#allocation3 + $0x48] sm:$0xff]
      %v2774 = vld [vmem:[#allocation3 + $0x50] sm:$0xff]
      %v2775 = vld [vmem:[#allocation3 + $0x58] sm:$0xff]
      %v2776 = vld [vmem:[#allocation3 + $0x60] sm:$0xff]
      %v2777 = vld [vmem:[#allocation3 + $0x68] sm:$0xff]
      %v2778 = vld [vmem:[#allocation3 + $0x70] sm:$0xff]
      %v2779 = vld [vmem:[#allocation3 + $0x78] sm:$0xff]
      %v2780 = vld [vmem:[#allocation3 + $0x80] sm:$0xff]
      %v2781 = vld [vmem:[#allocation3 + $0x88] sm:$0xff]
      %v2782 = vld [vmem:[#allocation3 + $0x90] sm:$0xff]
      %v2783 = vld [vmem:[#allocation3 + $0x98] sm:$0xff]
      %v2784 = vld [vmem:[#allocation3 + $0xa0] sm:$0xff]
      %v2785 = vld [vmem:[#allocation3 + $0xa8] sm:$0xff]
      %v2786 = vld [vmem:[#allocation3 + $0xb0] sm:$0xff]
      %v2787 = vld [vmem:[#allocation3 + $0xb8] sm:$0xff]
      %v2788 = vld [vmem:[#allocation3 + $0xc0] sm:$0xff]
      %v2789 = vld [vmem:[#allocation3 + $0xc8] sm:$0xff]
      %v2790 = vld [vmem:[#allocation3 + $0xd0] sm:$0xff]
      %v2791 = vld [vmem:[#allocation3 + $0xd8] sm:$0xff]
      %v2792 = vld [vmem:[#allocation3 + $0xe0] sm:$0xff]
      %v2793 = vld [vmem:[#allocation3 + $0xe8] sm:$0xff]
      %v2794 = vld [vmem:[#allocation3 + $0xf0] sm:$0xff]
      %v2795 = vld [vmem:[#allocation3 + $0xf8] sm:$0xff]
      %v2796 = vadd.f32 %v2732, %v2764
      %v2797 = vadd.f32 %v2733, %v2765
      %v2798 = vadd.f32 %v2734, %v2766
      %v2799 = vadd.f32 %v2735, %v2767
      %v2800 = vadd.f32 %v2736, %v2768
      %v2801 = vadd.f32 %v2737, %v2769
      %v2802 = vadd.f32 %v2738, %v2770
      %v2803 = vadd.f32 %v2739, %v2771
      %v2804 = vadd.f32 %v2740, %v2772
      %v2805 = vadd.f32 %v2741, %v2773
      %v2806 = vadd.f32 %v2742, %v2774
      %v2807 = vadd.f32 %v2743, %v2775
      %v2808 = vadd.f32 %v2744, %v2776
      %v2809 = vadd.f32 %v2745, %v2777
      %v2810 = vadd.f32 %v2746, %v2778
      %v2811 = vadd.f32 %v2747, %v2779
      %v2812 = vadd.f32 %v2748, %v2780
      %v2813 = vadd.f32 %v2749, %v2781
      %v2814 = vadd.f32 %v2750, %v2782
      %v2815 = vadd.f32 %v2751, %v2783
      %v2816 = vadd.f32 %v2752, %v2784
      %v2817 = vadd.f32 %v2753, %v2785
      %v2818 = vadd.f32 %v2754, %v2786
      %v2819 = vadd.f32 %v2755, %v2787
      %v2820 = vadd.f32 %v2756, %v2788
      %v2821 = vadd.f32 %v2757, %v2789
      %v2822 = vadd.f32 %v2758, %v2790
      %v2823 = vadd.f32 %v2759, %v2791
      %v2824 = vadd.f32 %v2760, %v2792
      %v2825 = vadd.f32 %v2761, %v2793
      %v2826 = vadd.f32 %v2762, %v2794
      %v2827 = vadd.f32 %v2763, %v2795
      %2828 = vst [vmem:[#allocation2 + $0x18] sm:$0xff] %v2796
      %2829 = vst [vmem:[#allocation2 + $0x20] sm:$0xff] %v2797
      %2830 = vst [vmem:[#allocation2 + $0x28] sm:$0xff] %v2798
      %2831 = vst [vmem:[#allocation2 + $0x30] sm:$0xff] %v2799
      %2832 = vst [vmem:[#allocation2 + $0x38] sm:$0xff] %v2800
      %2833 = vst [vmem:[#allocation2 + $0x40] sm:$0xff] %v2801
      %2834 = vst [vmem:[#allocation2 + $0x48] sm:$0xff] %v2802
      %2835 = vst [vmem:[#allocation2 + $0x50] sm:$0xff] %v2803
      %2836 = vst [vmem:[#allocation2 + $0x58] sm:$0xff] %v2804
      %2837 = vst [vmem:[#allocation2 + $0x60] sm:$0xff] %v2805
      %2838 = vst [vmem:[#allocation2 + $0x68] sm:$0xff] %v2806
      %2839 = vst [vmem:[#allocation2 + $0x70] sm:$0xff] %v2807
      %2840 = vst [vmem:[#allocation2 + $0x78] sm:$0xff] %v2808
      %2841 = vst [vmem:[#allocation2 + $0x80] sm:$0xff] %v2809
      %2842 = vst [vmem:[#allocation2 + $0x88] sm:$0xff] %v2810
      %2843 = vst [vmem:[#allocation2 + $0x90] sm:$0xff] %v2811
      %2844 = vst [vmem:[#allocation2 + $0x98] sm:$0xff] %v2812
      %2845 = vst [vmem:[#allocation2 + $0xa0] sm:$0xff] %v2813
      %2846 = vst [vmem:[#allocation2 + $0xa8] sm:$0xff] %v2814
      %2847 = vst [vmem:[#allocation2 + $0xb0] sm:$0xff] %v2815
      %2848 = vst [vmem:[#allocation2 + $0xb8] sm:$0xff] %v2816
      %2849 = vst [vmem:[#allocation2 + $0xc0] sm:$0xff] %v2817
      %2850 = vst [vmem:[#allocation2 + $0xc8] sm:$0xff] %v2818
      %2851 = vst [vmem:[#allocation2 + $0xd0] sm:$0xff] %v2819
      %2852 = vst [vmem:[#allocation2 + $0xd8] sm:$0xff] %v2820
      %2853 = vst [vmem:[#allocation2 + $0xe0] sm:$0xff] %v2821
      %2854 = vst [vmem:[#allocation2 + $0xe8] sm:$0xff] %v2822
      %2855 = vst [vmem:[#allocation2 + $0xf0] sm:$0xff] %v2823
      %2856 = vst [vmem:[#allocation2 + $0xf8] sm:$0xff] %v2824
      %2857 = vst [vmem:[#allocation2 + $0x100] sm:$0xff] %v2825
      %2858 = vst [vmem:[#allocation2 + $0x108] sm:$0xff] %v2826
      %2859 = vst [vmem:[#allocation2 + $0x110] sm:$0xff] %v2827
      %v2860 = vld [vmem:[#allocation2 + $0x7] sm:$0xff]
      %v2861 = vld [vmem:[#allocation2 + $0xf] sm:$0xff]
      %v2862 = vld [vmem:[#allocation2 + $0x17] sm:$0xff]
      %v2863 = vld [vmem:[#allocation2 + $0x1f] sm:$0xff]
      %v2864 = vld [vmem:[#allocation2 + $0x27] sm:$0xff]
      %v2865 = vld [vmem:[#allocation2 + $0x2f] sm:$0xff]
      %v2866 = vld [vmem:[#allocation2 + $0x37] sm:$0xff]
      %v2867 = vld [vmem:[#allocation2 + $0x3f] sm:$0xff]
      %v2868 = vld [vmem:[#allocation2 + $0x47] sm:$0xff]
      %v2869 = vld [vmem:[#allocation2 + $0x4f] sm:$0xff]
      %v2870 = vld [vmem:[#allocation2 + $0x57] sm:$0xff]
      %v2871 = vld [vmem:[#allocation2 + $0x5f] sm:$0xff]
      %v2872 = vld [vmem:[#allocation2 + $0x67] sm:$0xff]
      %v2873 = vld [vmem:[#allocation2 + $0x6f] sm:$0xff]
      %v2874 = vld [vmem:[#allocation2 + $0x77] sm:$0xff]
      %v2875 = vld [vmem:[#allocation2 + $0x7f] sm:$0xff]
      %v2876 = vld [vmem:[#allocation2 + $0x87] sm:$0xff]
      %v2877 = vld [vmem:[#allocation2 + $0x8f] sm:$0xff]
      %v2878 = vld [vmem:[#allocation2 + $0x97] sm:$0xff]
      %v2879 = vld [vmem:[#allocation2 + $0x9f] sm:$0xff]
      %v2880 = vld [vmem:[#allocation2 + $0xa7] sm:$0xff]
      %v2881 = vld [vmem:[#allocation2 + $0xaf] sm:$0xff]
      %v2882 = vld [vmem:[#allocation2 + $0xb7] sm:$0xff]
      %v2883 = vld [vmem:[#allocation2 + $0xbf] sm:$0xff]
      %v2884 = vld [vmem:[#allocation2 + $0xc7] sm:$0xff]
      %v2885 = vld [vmem:[#allocation2 + $0xcf] sm:$0xff]
      %v2886 = vld [vmem:[#allocation2 + $0xd7] sm:$0xff]
      %v2887 = vld [vmem:[#allocation2 + $0xdf] sm:$0xff]
      %v2888 = vld [vmem:[#allocation2 + $0xe7] sm:$0xff]
      %v2889 = vld [vmem:[#allocation2 + $0xef] sm:$0xff]
      %v2890 = vld [vmem:[#allocation2 + $0xf7] sm:$0xff]
      %v2891 = vld [vmem:[#allocation2 + $0xff] sm:$0xff]
      %vm2892 = vcmp.ge.s32.totalorder %v570, 16
      %vm2893 = vcmp.ge.s32.totalorder %v571, 16
      %vm2894 = vcmp.ge.s32.totalorder %v572, 16
      %vm2895 = vcmp.ge.s32.totalorder %v573, 16
      %vm2896 = vcmp.ge.s32.totalorder %v574, 16
      %vm2897 = vcmp.ge.s32.totalorder %v575, 16
      %vm2898 = vcmp.ge.s32.totalorder %v576, 16
      %vm2899 = vcmp.ge.s32.totalorder %v577, 16
      %vm2900 = vcmp.ge.s32.totalorder %v578, 16
      %vm2901 = vcmp.ge.s32.totalorder %v579, 16
      %vm2902 = vcmp.ge.s32.totalorder %v580, 16
      %vm2903 = vcmp.ge.s32.totalorder %v581, 16
      %vm2904 = vcmp.ge.s32.totalorder %v582, 16
      %vm2905 = vcmp.ge.s32.totalorder %v583, 16
      %vm2906 = vcmp.ge.s32.totalorder %v584, 16
      %vm2907 = vcmp.ge.s32.totalorder %v585, 16
      %vm2908 = vcmp.ge.s32.totalorder %v586, 16
      %vm2909 = vcmp.ge.s32.totalorder %v587, 16
      %vm2910 = vcmp.ge.s32.totalorder %v588, 16
      %vm2911 = vcmp.ge.s32.totalorder %v589, 16
      %vm2912 = vcmp.ge.s32.totalorder %v590, 16
      %vm2913 = vcmp.ge.s32.totalorder %v591, 16
      %vm2914 = vcmp.ge.s32.totalorder %v592, 16
      %vm2915 = vcmp.ge.s32.totalorder %v593, 16
      %vm2916 = vcmp.ge.s32.totalorder %v594, 16
      %vm2917 = vcmp.ge.s32.totalorder %v595, 16
      %vm2918 = vcmp.ge.s32.totalorder %v596, 16
      %vm2919 = vcmp.ge.s32.totalorder %v597, 16
      %vm2920 = vcmp.ge.s32.totalorder %v598, 16
      %vm2921 = vcmp.ge.s32.totalorder %v599, 16
      %vm2922 = vcmp.ge.s32.totalorder %v600, 16
      %vm2923 = vcmp.ge.s32.totalorder %v601, 16
      %vm2924 = vcmp.ge.s32.totalorder %v602, 1
      %vm2925 = vcmp.ge.s32.totalorder %v603, 1
      %vm2926 = vcmp.ge.s32.totalorder %v604, 1
      %vm2927 = vcmp.ge.s32.totalorder %v605, 1
      %vm2928 = vcmp.ge.s32.totalorder %v606, 1
      %vm2929 = vcmp.ge.s32.totalorder %v607, 1
      %vm2930 = vcmp.ge.s32.totalorder %v608, 1
      %vm2931 = vcmp.ge.s32.totalorder %v609, 1
      %vm2932 = vcmp.ge.s32.totalorder %v610, 1
      %vm2933 = vcmp.ge.s32.totalorder %v611, 1
      %vm2934 = vcmp.ge.s32.totalorder %v612, 1
      %vm2935 = vcmp.ge.s32.totalorder %v613, 1
      %vm2936 = vcmp.ge.s32.totalorder %v614, 1
      %vm2937 = vcmp.ge.s32.totalorder %v615, 1
      %vm2938 = vcmp.ge.s32.totalorder %v616, 1
      %vm2939 = vcmp.ge.s32.totalorder %v617, 1
      %vm2940 = vcmp.ge.s32.totalorder %v618, 1
      %vm2941 = vcmp.ge.s32.totalorder %v619, 1
      %vm2942 = vcmp.ge.s32.totalorder %v620, 1
      %vm2943 = vcmp.ge.s32.totalorder %v621, 1
      %vm2944 = vcmp.ge.s32.totalorder %v622, 1
      %vm2945 = vcmp.ge.s32.totalorder %v623, 1
      %vm2946 = vcmp.ge.s32.totalorder %v624, 1
      %vm2947 = vcmp.ge.s32.totalorder %v625, 1
      %vm2948 = vcmp.ge.s32.totalorder %v626, 1
      %vm2949 = vcmp.ge.s32.totalorder %v627, 1
      %vm2950 = vcmp.ge.s32.totalorder %v628, 1
      %vm2951 = vcmp.ge.s32.totalorder %v629, 1
      %vm2952 = vcmp.ge.s32.totalorder %v630, 1
      %vm2953 = vcmp.ge.s32.totalorder %v631, 1
      %vm2954 = vcmp.ge.s32.totalorder %v632, 1
      %vm2955 = vcmp.ge.s32.totalorder %v633, 1
      %vm2956 = vmand %vm2892, %vm2924
      %vm2957 = vmand %vm2893, %vm2925
      %vm2958 = vmand %vm2894, %vm2926
      %vm2959 = vmand %vm2895, %vm2927
      %vm2960 = vmand %vm2896, %vm2928
      %vm2961 = vmand %vm2897, %vm2929
      %vm2962 = vmand %vm2898, %vm2930
      %vm2963 = vmand %vm2899, %vm2931
      %vm2964 = vmand %vm2900, %vm2932
      %vm2965 = vmand %vm2901, %vm2933
      %vm2966 = vmand %vm2902, %vm2934
      %vm2967 = vmand %vm2903, %vm2935
      %vm2968 = vmand %vm2904, %vm2936
      %vm2969 = vmand %vm2905, %vm2937
      %vm2970 = vmand %vm2906, %vm2938
      %vm2971 = vmand %vm2907, %vm2939
      %vm2972 = vmand %vm2908, %vm2940
      %vm2973 = vmand %vm2909, %vm2941
      %vm2974 = vmand %vm2910, %vm2942
      %vm2975 = vmand %vm2911, %vm2943
      %vm2976 = vmand %vm2912, %vm2944
      %vm2977 = vmand %vm2913, %vm2945
      %vm2978 = vmand %vm2914, %vm2946
      %vm2979 = vmand %vm2915, %vm2947
      %vm2980 = vmand %vm2916, %vm2948
      %vm2981 = vmand %vm2917, %vm2949
      %vm2982 = vmand %vm2918, %vm2950
      %vm2983 = vmand %vm2919, %vm2951
      %vm2984 = vmand %vm2920, %vm2952
      %vm2985 = vmand %vm2921, %vm2953
      %vm2986 = vmand %vm2922, %vm2954
      %vm2987 = vmand %vm2923, %vm2955
      %v2988 = vsel %vm2956, %v2860, 0.0
      %v2989 = vsel %vm2957, %v2861, 0.0
      %v2990 = vsel %vm2958, %v2862, 0.0
      %v2991 = vsel %vm2959, %v2863, 0.0
      %v2992 = vsel %vm2960, %v2864, 0.0
      %v2993 = vsel %vm2961, %v2865, 0.0
      %v2994 = vsel %vm2962, %v2866, 0.0
      %v2995 = vsel %vm2963, %v2867, 0.0
      %v2996 = vsel %vm2964, %v2868, 0.0
      %v2997 = vsel %vm2965, %v2869, 0.0
      %v2998 = vsel %vm2966, %v2870, 0.0
      %v2999 = vsel %vm2967, %v2871, 0.0
      %v3000 = vsel %vm2968, %v2872, 0.0
      %v3001 = vsel %vm2969, %v2873, 0.0
      %v3002 = vsel %vm2970, %v2874, 0.0
      %v3003 = vsel %vm2971, %v2875, 0.0
      %v3004 = vsel %vm2972, %v2876, 0.0
      %v3005 = vsel %vm2973, %v2877, 0.0
      %v3006 = vsel %vm2974, %v2878, 0.0
      %v3007 = vsel %vm2975, %v2879, 0.0
      %v3008 = vsel %vm2976, %v2880, 0.0
      %v3009 = vsel %vm2977, %v2881, 0.0
      %v3010 = vsel %vm2978, %v2882, 0.0
      %v3011 = vsel %vm2979, %v2883, 0.0
      %v3012 = vsel %vm2980, %v2884, 0.0
      %v3013 = vsel %vm2981, %v2885, 0.0
      %v3014 = vsel %vm2982, %v2886, 0.0
      %v3015 = vsel %vm2983, %v2887, 0.0
      %v3016 = vsel %vm2984, %v2888, 0.0
      %v3017 = vsel %vm2985, %v2889, 0.0
      %v3018 = vsel %vm2986, %v2890, 0.0
      %v3019 = vsel %vm2987, %v2891, 0.0
      %v3020 = vld [vmem:[#allocation2 + $0x8] sm:$0xff]
      %v3021 = vld [vmem:[#allocation2 + $0x10] sm:$0xff]
      %v3022 = vld [vmem:[#allocation2 + $0x18] sm:$0xff]
      %v3023 = vld [vmem:[#allocation2 + $0x20] sm:$0xff]
      %v3024 = vld [vmem:[#allocation2 + $0x28] sm:$0xff]
      %v3025 = vld [vmem:[#allocation2 + $0x30] sm:$0xff]
      %v3026 = vld [vmem:[#allocation2 + $0x38] sm:$0xff]
      %v3027 = vld [vmem:[#allocation2 + $0x40] sm:$0xff]
      %v3028 = vld [vmem:[#allocation2 + $0x48] sm:$0xff]
      %v3029 = vld [vmem:[#allocation2 + $0x50] sm:$0xff]
      %v3030 = vld [vmem:[#allocation2 + $0x58] sm:$0xff]
      %v3031 = vld [vmem:[#allocation2 + $0x60] sm:$0xff]
      %v3032 = vld [vmem:[#allocation2 + $0x68] sm:$0xff]
      %v3033 = vld [vmem:[#allocation2 + $0x70] sm:$0xff]
      %v3034 = vld [vmem:[#allocation2 + $0x78] sm:$0xff]
      %v3035 = vld [vmem:[#allocation2 + $0x80] sm:$0xff]
      %v3036 = vld [vmem:[#allocation2 + $0x88] sm:$0xff]
      %v3037 = vld [vmem:[#allocation2 + $0x90] sm:$0xff]
      %v3038 = vld [vmem:[#allocation2 + $0x98] sm:$0xff]
      %v3039 = vld [vmem:[#allocation2 + $0xa0] sm:$0xff]
      %v3040 = vld [vmem:[#allocation2 + $0xa8] sm:$0xff]
      %v3041 = vld [vmem:[#allocation2 + $0xb0] sm:$0xff]
      %v3042 = vld [vmem:[#allocation2 + $0xb8] sm:$0xff]
      %v3043 = vld [vmem:[#allocation2 + $0xc0] sm:$0xff]
      %v3044 = vld [vmem:[#allocation2 + $0xc8] sm:$0xff]
      %v3045 = vld [vmem:[#allocation2 + $0xd0] sm:$0xff]
      %v3046 = vld [vmem:[#allocation2 + $0xd8] sm:$0xff]
      %v3047 = vld [vmem:[#allocation2 + $0xe0] sm:$0xff]
      %v3048 = vld [vmem:[#allocation2 + $0xe8] sm:$0xff]
      %v3049 = vld [vmem:[#allocation2 + $0xf0] sm:$0xff]
      %v3050 = vld [vmem:[#allocation2 + $0xf8] sm:$0xff]
      %v3051 = vld [vmem:[#allocation2 + $0x100] sm:$0xff]
      %v3052 = vsel %vm2892, %v3020, 0.0
      %v3053 = vsel %vm2893, %v3021, 0.0
      %v3054 = vsel %vm2894, %v3022, 0.0
      %v3055 = vsel %vm2895, %v3023, 0.0
      %v3056 = vsel %vm2896, %v3024, 0.0
      %v3057 = vsel %vm2897, %v3025, 0.0
      %v3058 = vsel %vm2898, %v3026, 0.0
      %v3059 = vsel %vm2899, %v3027, 0.0
      %v3060 = vsel %vm2900, %v3028, 0.0
      %v3061 = vsel %vm2901, %v3029, 0.0
      %v3062 = vsel %vm2902, %v3030, 0.0
      %v3063 = vsel %vm2903, %v3031, 0.0
      %v3064 = vsel %vm2904, %v3032, 0.0
      %v3065 = vsel %vm2905, %v3033, 0.0
      %v3066 = vsel %vm2906, %v3034, 0.0
      %v3067 = vsel %vm2907, %v3035, 0.0
      %v3068 = vsel %vm2908, %v3036, 0.0
      %v3069 = vsel %vm2909, %v3037, 0.0
      %v3070 = vsel %vm2910, %v3038, 0.0
      %v3071 = vsel %vm2911, %v3039, 0.0
      %v3072 = vsel %vm2912, %v3040, 0.0
      %v3073 = vsel %vm2913, %v3041, 0.0
      %v3074 = vsel %vm2914, %v3042, 0.0
      %v3075 = vsel %vm2915, %v3043, 0.0
      %v3076 = vsel %vm2916, %v3044, 0.0
      %v3077 = vsel %vm2917, %v3045, 0.0
      %v3078 = vsel %vm2918, %v3046, 0.0
      %v3079 = vsel %vm2919, %v3047, 0.0
      %v3080 = vsel %vm2920, %v3048, 0.0
      %v3081 = vsel %vm2921, %v3049, 0.0
      %v3082 = vsel %vm2922, %v3050, 0.0
      %v3083 = vsel %vm2923, %v3051, 0.0
      %v3084 = vld [vmem:[#allocation2 + $0x9] sm:$0xff]
      %v3085 = vld [vmem:[#allocation2 + $0x11] sm:$0xff]
      %v3086 = vld [vmem:[#allocation2 + $0x19] sm:$0xff]
      %v3087 = vld [vmem:[#allocation2 + $0x21] sm:$0xff]
      %v3088 = vld [vmem:[#allocation2 + $0x29] sm:$0xff]
      %v3089 = vld [vmem:[#allocation2 + $0x31] sm:$0xff]
      %v3090 = vld [vmem:[#allocation2 + $0x39] sm:$0xff]
      %v3091 = vld [vmem:[#allocation2 + $0x41] sm:$0xff]
      %v3092 = vld [vmem:[#allocation2 + $0x49] sm:$0xff]
      %v3093 = vld [vmem:[#allocation2 + $0x51] sm:$0xff]
      %v3094 = vld [vmem:[#allocation2 + $0x59] sm:$0xff]
      %v3095 = vld [vmem:[#allocation2 + $0x61] sm:$0xff]
      %v3096 = vld [vmem:[#allocation2 + $0x69] sm:$0xff]
      %v3097 = vld [vmem:[#allocation2 + $0x71] sm:$0xff]
      %v3098 = vld [vmem:[#allocation2 + $0x79] sm:$0xff]
      %v3099 = vld [vmem:[#allocation2 + $0x81] sm:$0xff]
      %v3100 = vld [vmem:[#allocation2 + $0x89] sm:$0xff]
      %v3101 = vld [vmem:[#allocation2 + $0x91] sm:$0xff]
      %v3102 = vld [vmem:[#allocation2 + $0x99] sm:$0xff]
      %v3103 = vld [vmem:[#allocation2 + $0xa1] sm:$0xff]
      %v3104 = vld [vmem:[#allocation2 + $0xa9] sm:$0xff]
      %v3105 = vld [vmem:[#allocation2 + $0xb1] sm:$0xff]
      %v3106 = vld [vmem:[#allocation2 + $0xb9] sm:$0xff]
      %v3107 = vld [vmem:[#allocation2 + $0xc1] sm:$0xff]
      %v3108 = vld [vmem:[#allocation2 + $0xc9] sm:$0xff]
      %v3109 = vld [vmem:[#allocation2 + $0xd1] sm:$0xff]
      %v3110 = vld [vmem:[#allocation2 + $0xd9] sm:$0xff]
      %v3111 = vld [vmem:[#allocation2 + $0xe1] sm:$0xff]
      %v3112 = vld [vmem:[#allocation2 + $0xe9] sm:$0xff]
      %v3113 = vld [vmem:[#allocation2 + $0xf1] sm:$0xff]
      %v3114 = vld [vmem:[#allocation2 + $0xf9] sm:$0xff]
      %v3115 = vld [vmem:[#allocation2 + $0x101] sm:$0xff]
      %vm3116 = vmand %vm2892, %vm2028
      %vm3117 = vmand %vm2893, %vm2029
      %vm3118 = vmand %vm2894, %vm2030
      %vm3119 = vmand %vm2895, %vm2031
      %vm3120 = vmand %vm2896, %vm2032
      %vm3121 = vmand %vm2897, %vm2033
      %vm3122 = vmand %vm2898, %vm2034
      %vm3123 = vmand %vm2899, %vm2035
      %vm3124 = vmand %vm2900, %vm2036
      %vm3125 = vmand %vm2901, %vm2037
      %vm3126 = vmand %vm2902, %vm2038
      %vm3127 = vmand %vm2903, %vm2039
      %vm3128 = vmand %vm2904, %vm2040
      %vm3129 = vmand %vm2905, %vm2041
      %vm3130 = vmand %vm2906, %vm2042
      %vm3131 = vmand %vm2907, %vm2043
      %vm3132 = vmand %vm2908, %vm2044
      %vm3133 = vmand %vm2909, %vm2045
      %vm3134 = vmand %vm2910, %vm2046
      %vm3135 = vmand %vm2911, %vm2047
      %vm3136 = vmand %vm2912, %vm2048
      %vm3137 = vmand %vm2913, %vm2049
      %vm3138 = vmand %vm2914, %vm2050
      %vm3139 = vmand %vm2915, %vm2051
      %vm3140 = vmand %vm2916, %vm2052
      %vm3141 = vmand %vm2917, %vm2053
      %vm3142 = vmand %vm2918, %vm2054
      %vm3143 = vmand %vm2919, %vm2055
      %vm3144 = vmand %vm2920, %vm2056
      %vm3145 = vmand %vm2921, %vm2057
      %vm3146 = vmand %vm2922, %vm2058
      %vm3147 = vmand %vm2923, %vm2059
      %v3148 = vsel %vm3116, %v3084, 0.0
      %v3149 = vsel %vm3117, %v3085, 0.0
      %v3150 = vsel %vm3118, %v3086, 0.0
      %v3151 = vsel %vm3119, %v3087, 0.0
      %v3152 = vsel %vm3120, %v3088, 0.0
      %v3153 = vsel %vm3121, %v3089, 0.0
      %v3154 = vsel %vm3122, %v3090, 0.0
      %v3155 = vsel %vm3123, %v3091, 0.0
      %v3156 = vsel %vm3124, %v3092, 0.0
      %v3157 = vsel %vm3125, %v3093, 0.0
      %v3158 = vsel %vm3126, %v3094, 0.0
      %v3159 = vsel %vm3127, %v3095, 0.0
      %v3160 = vsel %vm3128, %v3096, 0.0
      %v3161 = vsel %vm3129, %v3097, 0.0
      %v3162 = vsel %vm3130, %v3098, 0.0
      %v3163 = vsel %vm3131, %v3099, 0.0
      %v3164 = vsel %vm3132, %v3100, 0.0
      %v3165 = vsel %vm3133, %v3101, 0.0
      %v3166 = vsel %vm3134, %v3102, 0.0
      %v3167 = vsel %vm3135, %v3103, 0.0
      %v3168 = vsel %vm3136, %v3104, 0.0
      %v3169 = vsel %vm3137, %v3105, 0.0
      %v3170 = vsel %vm3138, %v3106, 0.0
      %v3171 = vsel %vm3139, %v3107, 0.0
      %v3172 = vsel %vm3140, %v3108, 0.0
      %v3173 = vsel %vm3141, %v3109, 0.0
      %v3174 = vsel %vm3142, %v3110, 0.0
      %v3175 = vsel %vm3143, %v3111, 0.0
      %v3176 = vsel %vm3144, %v3112, 0.0
      %v3177 = vsel %vm3145, %v3113, 0.0
      %v3178 = vsel %vm3146, %v3114, 0.0
      %v3179 = vsel %vm3147, %v3115, 0.0
      %v3180 = vld [vmem:[#allocation2 + $0x107] sm:$0xff]
      %v3181 = vld [vmem:[#allocation2 + $0x10f] sm:$0xff]
      %v3182 = vsel %vm2924, %v2862, 0.0
      %v3183 = vsel %vm2925, %v2863, 0.0
      %v3184 = vsel %vm2926, %v2864, 0.0
      %v3185 = vsel %vm2927, %v2865, 0.0
      %v3186 = vsel %vm2928, %v2866, 0.0
      %v3187 = vsel %vm2929, %v2867, 0.0
      %v3188 = vsel %vm2930, %v2868, 0.0
      %v3189 = vsel %vm2931, %v2869, 0.0
      %v3190 = vsel %vm2932, %v2870, 0.0
      %v3191 = vsel %vm2933, %v2871, 0.0
      %v3192 = vsel %vm2934, %v2872, 0.0
      %v3193 = vsel %vm2935, %v2873, 0.0
      %v3194 = vsel %vm2936, %v2874, 0.0
      %v3195 = vsel %vm2937, %v2875, 0.0
      %v3196 = vsel %vm2938, %v2876, 0.0
      %v3197 = vsel %vm2939, %v2877, 0.0
      %v3198 = vsel %vm2940, %v2878, 0.0
      %v3199 = vsel %vm2941, %v2879, 0.0
      %v3200 = vsel %vm2942, %v2880, 0.0
      %v3201 = vsel %vm2943, %v2881, 0.0
      %v3202 = vsel %vm2944, %v2882, 0.0
      %v3203 = vsel %vm2945, %v2883, 0.0
      %v3204 = vsel %vm2946, %v2884, 0.0
      %v3205 = vsel %vm2947, %v2885, 0.0
      %v3206 = vsel %vm2948, %v2886, 0.0
      %v3207 = vsel %vm2949, %v2887, 0.0
      %v3208 = vsel %vm2950, %v2888, 0.0
      %v3209 = vsel %vm2951, %v2889, 0.0
      %v3210 = vsel %vm2952, %v2890, 0.0
      %v3211 = vsel %vm2953, %v2891, 0.0
      %v3212 = vsel %vm2954, %v3180, 0.0
      %v3213 = vsel %vm2955, %v3181, 0.0
      %v3214 = vld [vmem:[#allocation2 + $0x108] sm:$0xff]
      %v3215 = vld [vmem:[#allocation2 + $0x110] sm:$0xff]
      %v3216 = vld [vmem:[#allocation2 + $0x109] sm:$0xff]
      %v3217 = vld [vmem:[#allocation2 + $0x111] sm:$0xff]
      %v3218 = vsel %vm2028, %v3086, 0.0
      %v3219 = vsel %vm2029, %v3087, 0.0
      %v3220 = vsel %vm2030, %v3088, 0.0
      %v3221 = vsel %vm2031, %v3089, 0.0
      %v3222 = vsel %vm2032, %v3090, 0.0
      %v3223 = vsel %vm2033, %v3091, 0.0
      %v3224 = vsel %vm2034, %v3092, 0.0
      %v3225 = vsel %vm2035, %v3093, 0.0
      %v3226 = vsel %vm2036, %v3094, 0.0
      %v3227 = vsel %vm2037, %v3095, 0.0
      %v3228 = vsel %vm2038, %v3096, 0.0
      %v3229 = vsel %vm2039, %v3097, 0.0
      %v3230 = vsel %vm2040, %v3098, 0.0
      %v3231 = vsel %vm2041, %v3099, 0.0
      %v3232 = vsel %vm2042, %v3100, 0.0
      %v3233 = vsel %vm2043, %v3101, 0.0
      %v3234 = vsel %vm2044, %v3102, 0.0
      %v3235 = vsel %vm2045, %v3103, 0.0
      %v3236 = vsel %vm2046, %v3104, 0.0
      %v3237 = vsel %vm2047, %v3105, 0.0
      %v3238 = vsel %vm2048, %v3106, 0.0
      %v3239 = vsel %vm2049, %v3107, 0.0
      %v3240 = vsel %vm2050, %v3108, 0.0
      %v3241 = vsel %vm2051, %v3109, 0.0
      %v3242 = vsel %vm2052, %v3110, 0.0
      %v3243 = vsel %vm2053, %v3111, 0.0
      %v3244 = vsel %vm2054, %v3112, 0.0
      %v3245 = vsel %vm2055, %v3113, 0.0
      %v3246 = vsel %vm2056, %v3114, 0.0
      %v3247 = vsel %vm2057, %v3115, 0.0
      %v3248 = vsel %vm2058, %v3216, 0.0
      %v3249 = vsel %vm2059, %v3217, 0.0
      %v3250 = vld [vmem:[#allocation2 + $0x117] sm:$0xff]
      %v3251 = vld [vmem:[#allocation2 + $0x11f] sm:$0xff]
      %vm3252 = vmand %vm1280, %vm2924
      %vm3253 = vmand %vm1281, %vm2925
      %vm3254 = vmand %vm1282, %vm2926
      %vm3255 = vmand %vm1283, %vm2927
      %vm3256 = vmand %vm1284, %vm2928
      %vm3257 = vmand %vm1285, %vm2929
      %vm3258 = vmand %vm1286, %vm2930
      %vm3259 = vmand %vm1287, %vm2931
      %vm3260 = vmand %vm1288, %vm2932
      %vm3261 = vmand %vm1289, %vm2933
      %vm3262 = vmand %vm1290, %vm2934
      %vm3263 = vmand %vm1291, %vm2935
      %vm3264 = vmand %vm1292, %vm2936
      %vm3265 = vmand %vm1293, %vm2937
      %vm3266 = vmand %vm1294, %vm2938
      %vm3267 = vmand %vm1295, %vm2939
      %vm3268 = vmand %vm1296, %vm2940
      %vm3269 = vmand %vm1297, %vm2941
      %vm3270 = vmand %vm1298, %vm2942
      %vm3271 = vmand %vm1299, %vm2943
      %vm3272 = vmand %vm1300, %vm2944
      %vm3273 = vmand %vm1301, %vm2945
      %vm3274 = vmand %vm1302, %vm2946
      %vm3275 = vmand %vm1303, %vm2947
      %vm3276 = vmand %vm1304, %vm2948
      %vm3277 = vmand %vm1305, %vm2949
      %vm3278 = vmand %vm1306, %vm2950
      %vm3279 = vmand %vm1307, %vm2951
      %vm3280 = vmand %vm1308, %vm2952
      %vm3281 = vmand %vm1309, %vm2953
      %vm3282 = vmand %vm1310, %vm2954
      %vm3283 = vmand %vm1311, %vm2955
      %v3284 = vsel %vm3252, %v2864, 0.0
      %v3285 = vsel %vm3253, %v2865, 0.0
      %v3286 = vsel %vm3254, %v2866, 0.0
      %v3287 = vsel %vm3255, %v2867, 0.0
      %v3288 = vsel %vm3256, %v2868, 0.0
      %v3289 = vsel %vm3257, %v2869, 0.0
      %v3290 = vsel %vm3258, %v2870, 0.0
      %v3291 = vsel %vm3259, %v2871, 0.0
      %v3292 = vsel %vm3260, %v2872, 0.0
      %v3293 = vsel %vm3261, %v2873, 0.0
      %v3294 = vsel %vm3262, %v2874, 0.0
      %v3295 = vsel %vm3263, %v2875, 0.0
      %v3296 = vsel %vm3264, %v2876, 0.0
      %v3297 = vsel %vm3265, %v2877, 0.0
      %v3298 = vsel %vm3266, %v2878, 0.0
      %v3299 = vsel %vm3267, %v2879, 0.0
      %v3300 = vsel %vm3268, %v2880, 0.0
      %v3301 = vsel %vm3269, %v2881, 0.0
      %v3302 = vsel %vm3270, %v2882, 0.0
      %v3303 = vsel %vm3271, %v2883, 0.0
      %v3304 = vsel %vm3272, %v2884, 0.0
      %v3305 = vsel %vm3273, %v2885, 0.0
      %v3306 = vsel %vm3274, %v2886, 0.0
      %v3307 = vsel %vm3275, %v2887, 0.0
      %v3308 = vsel %vm3276, %v2888, 0.0
      %v3309 = vsel %vm3277, %v2889, 0.0
      %v3310 = vsel %vm3278, %v2890, 0.0
      %v3311 = vsel %vm3279, %v2891, 0.0
      %v3312 = vsel %vm3280, %v3180, 0.0
      %v3313 = vsel %vm3281, %v3181, 0.0
      %v3314 = vsel %vm3282, %v3250, 0.0
      %v3315 = vsel %vm3283, %v3251, 0.0
      %v3316 = vld [vmem:[#allocation2 + $0x118] sm:$0xff]
      %v3317 = vld [vmem:[#allocation2 + $0x120] sm:$0xff]
      %v3318 = vsel %vm1280, %v3024, 0.0
      %v3319 = vsel %vm1281, %v3025, 0.0
      %v3320 = vsel %vm1282, %v3026, 0.0
      %v3321 = vsel %vm1283, %v3027, 0.0
      %v3322 = vsel %vm1284, %v3028, 0.0
      %v3323 = vsel %vm1285, %v3029, 0.0
      %v3324 = vsel %vm1286, %v3030, 0.0
      %v3325 = vsel %vm1287, %v3031, 0.0
      %v3326 = vsel %vm1288, %v3032, 0.0
      %v3327 = vsel %vm1289, %v3033, 0.0
      %v3328 = vsel %vm1290, %v3034, 0.0
      %v3329 = vsel %vm1291, %v3035, 0.0
      %v3330 = vsel %vm1292, %v3036, 0.0
      %v3331 = vsel %vm1293, %v3037, 0.0
      %v3332 = vsel %vm1294, %v3038, 0.0
      %v3333 = vsel %vm1295, %v3039, 0.0
      %v3334 = vsel %vm1296, %v3040, 0.0
      %v3335 = vsel %vm1297, %v3041, 0.0
      %v3336 = vsel %vm1298, %v3042, 0.0
      %v3337 = vsel %vm1299, %v3043, 0.0
      %v3338 = vsel %vm1300, %v3044, 0.0
      %v3339 = vsel %vm1301, %v3045, 0.0
      %v3340 = vsel %vm1302, %v3046, 0.0
      %v3341 = vsel %vm1303, %v3047, 0.0
      %v3342 = vsel %vm1304, %v3048, 0.0
      %v3343 = vsel %vm1305, %v3049, 0.0
      %v3344 = vsel %vm1306, %v3050, 0.0
      %v3345 = vsel %vm1307, %v3051, 0.0
      %v3346 = vsel %vm1308, %v3214, 0.0
      %v3347 = vsel %vm1309, %v3215, 0.0
      %v3348 = vsel %vm1310, %v3316, 0.0
      %v3349 = vsel %vm1311, %v3317, 0.0
      %v3350 = vld [vmem:[#allocation2 + $0x119] sm:$0xff]
      %v3351 = vld [vmem:[#allocation2 + $0x121] sm:$0xff]
      %vm3352 = vmand %vm1280, %vm2028
      %vm3353 = vmand %vm1281, %vm2029
      %vm3354 = vmand %vm1282, %vm2030
      %vm3355 = vmand %vm1283, %vm2031
      %vm3356 = vmand %vm1284, %vm2032
      %vm3357 = vmand %vm1285, %vm2033
      %vm3358 = vmand %vm1286, %vm2034
      %vm3359 = vmand %vm1287, %vm2035
      %vm3360 = vmand %vm1288, %vm2036
      %vm3361 = vmand %vm1289, %vm2037
      %vm3362 = vmand %vm1290, %vm2038
      %vm3363 = vmand %vm1291, %vm2039
      %vm3364 = vmand %vm1292, %vm2040
      %vm3365 = vmand %vm1293, %vm2041
      %vm3366 = vmand %vm1294, %vm2042
      %vm3367 = vmand %vm1295, %vm2043
      %vm3368 = vmand %vm1296, %vm2044
      %vm3369 = vmand %vm1297, %vm2045
      %vm3370 = vmand %vm1298, %vm2046
      %vm3371 = vmand %vm1299, %vm2047
      %vm3372 = vmand %vm1300, %vm2048
      %vm3373 = vmand %vm1301, %vm2049
      %vm3374 = vmand %vm1302, %vm2050
      %vm3375 = vmand %vm1303, %vm2051
      %vm3376 = vmand %vm1304, %vm2052
      %vm3377 = vmand %vm1305, %vm2053
      %vm3378 = vmand %vm1306, %vm2054
      %vm3379 = vmand %vm1307, %vm2055
      %vm3380 = vmand %vm1308, %vm2056
      %vm3381 = vmand %vm1309, %vm2057
      %vm3382 = vmand %vm1310, %vm2058
      %vm3383 = vmand %vm1311, %vm2059
      %v3384 = vsel %vm3352, %v3088, 0.0
      %v3385 = vsel %vm3353, %v3089, 0.0
      %v3386 = vsel %vm3354, %v3090, 0.0
      %v3387 = vsel %vm3355, %v3091, 0.0
      %v3388 = vsel %vm3356, %v3092, 0.0
      %v3389 = vsel %vm3357, %v3093, 0.0
      %v3390 = vsel %vm3358, %v3094, 0.0
      %v3391 = vsel %vm3359, %v3095, 0.0
      %v3392 = vsel %vm3360, %v3096, 0.0
      %v3393 = vsel %vm3361, %v3097, 0.0
      %v3394 = vsel %vm3362, %v3098, 0.0
      %v3395 = vsel %vm3363, %v3099, 0.0
      %v3396 = vsel %vm3364, %v3100, 0.0
      %v3397 = vsel %vm3365, %v3101, 0.0
      %v3398 = vsel %vm3366, %v3102, 0.0
      %v3399 = vsel %vm3367, %v3103, 0.0
      %v3400 = vsel %vm3368, %v3104, 0.0
      %v3401 = vsel %vm3369, %v3105, 0.0
      %v3402 = vsel %vm3370, %v3106, 0.0
      %v3403 = vsel %vm3371, %v3107, 0.0
      %v3404 = vsel %vm3372, %v3108, 0.0
      %v3405 = vsel %vm3373, %v3109, 0.0
      %v3406 = vsel %vm3374, %v3110, 0.0
      %v3407 = vsel %vm3375, %v3111, 0.0
      %v3408 = vsel %vm3376, %v3112, 0.0
      %v3409 = vsel %vm3377, %v3113, 0.0
      %v3410 = vsel %vm3378, %v3114, 0.0
      %v3411 = vsel %vm3379, %v3115, 0.0
      %v3412 = vsel %vm3380, %v3216, 0.0
      %v3413 = vsel %vm3381, %v3217, 0.0
      %v3414 = vsel %vm3382, %v3350, 0.0
      %v3415 = vsel %vm3383, %v3351, 0.0
      %v3416 = vld [vmem:[%s8] sm:$0xff]
      %v3417 = vld [vmem:[%s8 + $0x8] sm:$0xff]
      %v3418 = vld [vmem:[%s8 + $0x10] sm:$0xff]
      %v3419 = vld [vmem:[%s8 + $0x18] sm:$0xff]
      %v3420 = vld [vmem:[%s8 + $0x20] sm:$0xff]
      %v3421 = vld [vmem:[%s8 + $0x28] sm:$0xff]
      %v3422 = vld [vmem:[%s8 + $0x30] sm:$0xff]
      %v3423 = vld [vmem:[%s8 + $0x38] sm:$0xff]
      %v3424 = vld [vmem:[%s8 + $0x40] sm:$0xff]
      %v3425 = vld [vmem:[%s8 + $0x48] sm:$0xff]
      %v3426 = vld [vmem:[%s8 + $0x50] sm:$0xff]
      %v3427 = vld [vmem:[%s8 + $0x58] sm:$0xff]
      %v3428 = vld [vmem:[%s8 + $0x60] sm:$0xff]
      %v3429 = vld [vmem:[%s8 + $0x68] sm:$0xff]
      %v3430 = vld [vmem:[%s8 + $0x70] sm:$0xff]
      %v3431 = vld [vmem:[%s8 + $0x78] sm:$0xff]
      %v3432 = vld [vmem:[%s8 + $0x80] sm:$0xff]
      %v3433 = vld [vmem:[%s8 + $0x88] sm:$0xff]
      %v3434 = vld [vmem:[%s8 + $0x90] sm:$0xff]
      %v3435 = vld [vmem:[%s8 + $0x98] sm:$0xff]
      %v3436 = vld [vmem:[%s8 + $0xa0] sm:$0xff]
      %v3437 = vld [vmem:[%s8 + $0xa8] sm:$0xff]
      %v3438 = vld [vmem:[%s8 + $0xb0] sm:$0xff]
      %v3439 = vld [vmem:[%s8 + $0xb8] sm:$0xff]
      %v3440 = vld [vmem:[%s8 + $0xc0] sm:$0xff]
      %v3441 = vld [vmem:[%s8 + $0xc8] sm:$0xff]
      %v3442 = vld [vmem:[%s8 + $0xd0] sm:$0xff]
      %v3443 = vld [vmem:[%s8 + $0xd8] sm:$0xff]
      %v3444 = vld [vmem:[%s8 + $0xe0] sm:$0xff]
      %v3445 = vld [vmem:[%s8 + $0xe8] sm:$0xff]
      %v3446 = vld [vmem:[%s8 + $0xf0] sm:$0xff]
      %v3447 = vld [vmem:[%s8 + $0xf8] sm:$0xff]
      %v3448 = vld [vmem:[%s8 + $0x100] sm:$0xff]
      %v3449 = vld [vmem:[%s8 + $0x108] sm:$0xff]
      %v3450 = vld [vmem:[%s8 + $0x110] sm:$0xff]
      %v3451 = vld [vmem:[%s8 + $0x118] sm:$0xff]
      %v3452 = vld [vmem:[%s8 + $0x120] sm:$0xff]
      %v3453 = vld [vmem:[%s8 + $0x128] sm:$0xff]
      %v3454 = vld [vmem:[%s8 + $0x130] sm:$0xff]
      %v3455 = vld [vmem:[%s8 + $0x138] sm:$0xff]
      %v3456 = vld [vmem:[%s8 + $0x140] sm:$0xff]
      %v3457 = vld [vmem:[%s8 + $0x148] sm:$0xff]
      %v3458 = vld [vmem:[%s8 + $0x150] sm:$0xff]
      %v3459 = vld [vmem:[%s8 + $0x158] sm:$0xff]
      %v3460 = vld [vmem:[%s8 + $0x160] sm:$0xff]
      %v3461 = vld [vmem:[%s8 + $0x168] sm:$0xff]
      %v3462 = vld [vmem:[%s8 + $0x170] sm:$0xff]
      %v3463 = vld [vmem:[%s8 + $0x178] sm:$0xff]
      %v3464 = vld [vmem:[%s8 + $0x180] sm:$0xff]
      %v3465 = vld [vmem:[%s8 + $0x188] sm:$0xff]
      %v3466 = vld [vmem:[%s8 + $0x190] sm:$0xff]
      %v3467 = vld [vmem:[%s8 + $0x198] sm:$0xff]
      %v3468 = vld [vmem:[%s8 + $0x1a0] sm:$0xff]
      %v3469 = vld [vmem:[%s8 + $0x1a8] sm:$0xff]
      %v3470 = vld [vmem:[%s8 + $0x1b0] sm:$0xff]
      %v3471 = vld [vmem:[%s8 + $0x1b8] sm:$0xff]
      %v3472 = vld [vmem:[%s8 + $0x1c0] sm:$0xff]
      %v3473 = vld [vmem:[%s8 + $0x1c8] sm:$0xff]
      %v3474 = vld [vmem:[%s8 + $0x1d0] sm:$0xff]
      %v3475 = vld [vmem:[%s8 + $0x1d8] sm:$0xff]
      %v3476 = vld [vmem:[%s8 + $0x1e0] sm:$0xff]
      %v3477 = vld [vmem:[%s8 + $0x1e8] sm:$0xff]
      %v3478 = vld [vmem:[%s8 + $0x1f0] sm:$0xff]
      %v3479 = vld [vmem:[%s8 + $0x1f8] sm:$0xff]
      %v3480 = vld [vmem:[%s8 + $0x200] sm:$0xff]
      %v3481 = vld [vmem:[%s8 + $0x208] sm:$0xff]
      %v3482 = vld [vmem:[%s8 + $0x210] sm:$0xff]
      %v3483 = vld [vmem:[%s8 + $0x218] sm:$0xff]
      %v3484 = vld [vmem:[%s8 + $0x220] sm:$0xff]
      %v3485 = vld [vmem:[%s8 + $0x228] sm:$0xff]
      %v3486 = vld [vmem:[%s8 + $0x230] sm:$0xff]
      %v3487 = vld [vmem:[%s8 + $0x238] sm:$0xff]
      %v3488 = vld [vmem:[%s8 + $0x240] sm:$0xff]
      %v3489 = vld [vmem:[%s8 + $0x248] sm:$0xff]
      %v3490 = vld [vmem:[%s8 + $0x250] sm:$0xff]
      %v3491 = vld [vmem:[%s8 + $0x258] sm:$0xff]
      %v3492 = vld [vmem:[%s8 + $0x260] sm:$0xff]
      %v3493 = vld [vmem:[%s8 + $0x268] sm:$0xff]
      %v3494 = vld [vmem:[%s8 + $0x270] sm:$0xff]
      %v3495 = vld [vmem:[%s8 + $0x278] sm:$0xff]
      %v3496 = vld [vmem:[%s8 + $0x280] sm:$0xff]
      %v3497 = vld [vmem:[%s8 + $0x288] sm:$0xff]
      %v3498 = vld [vmem:[%s8 + $0x290] sm:$0xff]
      %v3499 = vld [vmem:[%s8 + $0x298] sm:$0xff]
      %v3500 = vld [vmem:[%s8 + $0x2a0] sm:$0xff]
      %v3501 = vld [vmem:[%s8 + $0x2a8] sm:$0xff]
      %v3502 = vld [vmem:[%s8 + $0x2b0] sm:$0xff]
      %v3503 = vld [vmem:[%s8 + $0x2b8] sm:$0xff]
      %v3504 = vld [vmem:[%s8 + $0x2c0] sm:$0xff]
      %v3505 = vld [vmem:[%s8 + $0x2c8] sm:$0xff]
      %v3506 = vld [vmem:[%s8 + $0x2d0] sm:$0xff]
      %v3507 = vld [vmem:[%s8 + $0x2d8] sm:$0xff]
      %v3508 = vld [vmem:[%s8 + $0x2e0] sm:$0xff]
      %v3509 = vld [vmem:[%s8 + $0x2e8] sm:$0xff]
      %v3510 = vld [vmem:[%s8 + $0x2f0] sm:$0xff]
      %v3511 = vld [vmem:[%s8 + $0x2f8] sm:$0xff]
      %v3512 = vld [vmem:[%s8 + $0x300] sm:$0xff]
      %v3513 = vld [vmem:[%s8 + $0x308] sm:$0xff]
      %v3514 = vld [vmem:[%s8 + $0x310] sm:$0xff]
      %v3515 = vld [vmem:[%s8 + $0x318] sm:$0xff]
      %v3516 = vld [vmem:[%s8 + $0x320] sm:$0xff]
      %v3517 = vld [vmem:[%s8 + $0x328] sm:$0xff]
      %v3518 = vld [vmem:[%s8 + $0x330] sm:$0xff]
      %v3519 = vld [vmem:[%s8 + $0x338] sm:$0xff]
      %v3520 = vld [vmem:[%s8 + $0x340] sm:$0xff]
      %v3521 = vld [vmem:[%s8 + $0x348] sm:$0xff]
      %v3522 = vld [vmem:[%s8 + $0x350] sm:$0xff]
      %v3523 = vld [vmem:[%s8 + $0x358] sm:$0xff]
      %v3524 = vld [vmem:[%s8 + $0x360] sm:$0xff]
      %v3525 = vld [vmem:[%s8 + $0x368] sm:$0xff]
      %v3526 = vld [vmem:[%s8 + $0x370] sm:$0xff]
      %v3527 = vld [vmem:[%s8 + $0x378] sm:$0xff]
      %v3528 = vld [vmem:[%s8 + $0x380] sm:$0xff]
      %v3529 = vld [vmem:[%s8 + $0x388] sm:$0xff]
      %v3530 = vld [vmem:[%s8 + $0x390] sm:$0xff]
      %v3531 = vld [vmem:[%s8 + $0x398] sm:$0xff]
      %v3532 = vld [vmem:[%s8 + $0x3a0] sm:$0xff]
      %v3533 = vld [vmem:[%s8 + $0x3a8] sm:$0xff]
      %v3534 = vld [vmem:[%s8 + $0x3b0] sm:$0xff]
      %v3535 = vld [vmem:[%s8 + $0x3b8] sm:$0xff]
      %v3536 = vld [vmem:[%s8 + $0x3c0] sm:$0xff]
      %v3537 = vld [vmem:[%s8 + $0x3c8] sm:$0xff]
      %v3538 = vld [vmem:[%s8 + $0x3d0] sm:$0xff]
      %v3539 = vld [vmem:[%s8 + $0x3d8] sm:$0xff]
      %v3540 = vld [vmem:[%s8 + $0x3e0] sm:$0xff]
      %v3541 = vld [vmem:[%s8 + $0x3e8] sm:$0xff]
      %v3542 = vld [vmem:[%s8 + $0x3f0] sm:$0xff]
      %v3543 = vld [vmem:[%s8 + $0x3f8] sm:$0xff]
      %v3544 = vld [vmem:[%s8 + $0x400] sm:$0xff]
      %v3545 = vld [vmem:[%s8 + $0x408] sm:$0xff]
      %v3546 = vld [vmem:[%s8 + $0x410] sm:$0xff]
      %v3547 = vld [vmem:[%s8 + $0x418] sm:$0xff]
      %v3548 = vld [vmem:[%s8 + $0x420] sm:$0xff]
      %v3549 = vld [vmem:[%s8 + $0x428] sm:$0xff]
      %v3550 = vld [vmem:[%s8 + $0x430] sm:$0xff]
      %v3551 = vld [vmem:[%s8 + $0x438] sm:$0xff]
      %v3552 = vld [vmem:[%s8 + $0x440] sm:$0xff]
      %v3553 = vld [vmem:[%s8 + $0x448] sm:$0xff]
      %v3554 = vld [vmem:[%s8 + $0x450] sm:$0xff]
      %v3555 = vld [vmem:[%s8 + $0x458] sm:$0xff]
      %v3556 = vld [vmem:[%s8 + $0x460] sm:$0xff]
      %v3557 = vld [vmem:[%s8 + $0x468] sm:$0xff]
      %v3558 = vld [vmem:[%s8 + $0x470] sm:$0xff]
      %v3559 = vld [vmem:[%s8 + $0x478] sm:$0xff]
      %3560 = vmatpush.msra.mxu0 %v3431
      %3561 = vmatpush.msra.mxu0 %v3430
      %3562 = vmatpush.msra.mxu0 %v3429
      %3563 = vmatpush.msra.mxu0 %v3428
      %3564 = vmatpush.msra.mxu0 %v3427
      %3565 = vmatpush.msra.mxu0 %v3426
      %3566 = vmatpush.msra.mxu0 %v3425
      %3567 = vmatpush.msra.mxu0 %v3424
      %3568 = vmatpush.msra.mxu0 %v3423
      %3569 = vmatpush.msra.mxu0 %v3422
      %3570 = vmatpush.msra.mxu0 %v3421
      %3571 = vmatpush.msra.mxu0 %v3420
      %3572 = vmatpush.msra.mxu0 %v3419
      %3573 = vmatpush.msra.mxu0 %v3418
      %3574 = vmatpush.msra.mxu0 %v3417
      %3575 = vmatpush.msra.mxu0 %v3416
      %3576 = vmatmul.f32.gmra.mxu0 %v2988
      %v3577 = vpop.f32.mrf.mxu0
      %v3578 = vadd.f32 0.0, %v3577
      %3579 = vmatmul.f32.gmra.mxu0 %v2989
      %v3580 = vpop.f32.mrf.mxu0
      %v3581 = vadd.f32 0.0, %v3580
      %3582 = vmatmul.f32.gmra.mxu0 %v2990
      %v3583 = vpop.f32.mrf.mxu0
      %v3584 = vadd.f32 0.0, %v3583
      %3585 = vmatmul.f32.gmra.mxu0 %v2991
      %v3586 = vpop.f32.mrf.mxu0
      %v3587 = vadd.f32 0.0, %v3586
      %3588 = vmatmul.f32.gmra.mxu0 %v2992
      %v3589 = vpop.f32.mrf.mxu0
      %v3590 = vadd.f32 0.0, %v3589
      %3591 = vmatmul.f32.gmra.mxu0 %v2993
      %v3592 = vpop.f32.mrf.mxu0
      %v3593 = vadd.f32 0.0, %v3592
      %3594 = vmatmul.f32.gmra.mxu0 %v2994
      %v3595 = vpop.f32.mrf.mxu0
      %v3596 = vadd.f32 0.0, %v3595
      %3597 = vmatmul.f32.gmra.mxu0 %v2995
      %v3598 = vpop.f32.mrf.mxu0
      %v3599 = vadd.f32 0.0, %v3598
      %3600 = vmatmul.f32.gmra.mxu0 %v2996
      %v3601 = vpop.f32.mrf.mxu0
      %v3602 = vadd.f32 0.0, %v3601
      %3603 = vmatmul.f32.gmra.mxu0 %v2997
      %v3604 = vpop.f32.mrf.mxu0
      %v3605 = vadd.f32 0.0, %v3604
      %3606 = vmatmul.f32.gmra.mxu0 %v2998
      %v3607 = vpop.f32.mrf.mxu0
      %v3608 = vadd.f32 0.0, %v3607
      %3609 = vmatmul.f32.gmra.mxu0 %v2999
      %v3610 = vpop.f32.mrf.mxu0
      %v3611 = vadd.f32 0.0, %v3610
      %3612 = vmatmul.f32.gmra.mxu0 %v3000
      %v3613 = vpop.f32.mrf.mxu0
      %v3614 = vadd.f32 0.0, %v3613
      %3615 = vmatmul.f32.gmra.mxu0 %v3001
      %v3616 = vpop.f32.mrf.mxu0
      %v3617 = vadd.f32 0.0, %v3616
      %3618 = vmatmul.f32.gmra.mxu0 %v3002
      %v3619 = vpop.f32.mrf.mxu0
      %v3620 = vadd.f32 0.0, %v3619
      %3621 = vmatmul.f32.gmra.mxu0 %v3003
      %v3622 = vpop.f32.mrf.mxu0
      %v3623 = vadd.f32 0.0, %v3622
      %3624 = vmatmul.f32.gmra.mxu0 %v3004
      %v3625 = vpop.f32.mrf.mxu0
      %v3626 = vadd.f32 0.0, %v3625
      %3627 = vmatmul.f32.gmra.mxu0 %v3005
      %v3628 = vpop.f32.mrf.mxu0
      %v3629 = vadd.f32 0.0, %v3628
      %3630 = vmatmul.f32.gmra.mxu0 %v3006
      %v3631 = vpop.f32.mrf.mxu0
      %v3632 = vadd.f32 0.0, %v3631
      %3633 = vmatmul.f32.gmra.mxu0 %v3007
      %v3634 = vpop.f32.mrf.mxu0
      %v3635 = vadd.f32 0.0, %v3634
      %3636 = vmatmul.f32.gmra.mxu0 %v3008
      %v3637 = vpop.f32.mrf.mxu0
      %v3638 = vadd.f32 0.0, %v3637
      %3639 = vmatmul.f32.gmra.mxu0 %v3009
      %v3640 = vpop.f32.mrf.mxu0
      %v3641 = vadd.f32 0.0, %v3640
      %3642 = vmatmul.f32.gmra.mxu0 %v3010
      %v3643 = vpop.f32.mrf.mxu0
      %v3644 = vadd.f32 0.0, %v3643
      %3645 = vmatmul.f32.gmra.mxu0 %v3011
      %v3646 = vpop.f32.mrf.mxu0
      %v3647 = vadd.f32 0.0, %v3646
      %3648 = vmatmul.f32.gmra.mxu0 %v3012
      %v3649 = vpop.f32.mrf.mxu0
      %v3650 = vadd.f32 0.0, %v3649
      %3651 = vmatmul.f32.gmra.mxu0 %v3013
      %v3652 = vpop.f32.mrf.mxu0
      %v3653 = vadd.f32 0.0, %v3652
      %3654 = vmatmul.f32.gmra.mxu0 %v3014
      %v3655 = vpop.f32.mrf.mxu0
      %v3656 = vadd.f32 0.0, %v3655
      %3657 = vmatmul.f32.gmra.mxu0 %v3015
      %v3658 = vpop.f32.mrf.mxu0
      %v3659 = vadd.f32 0.0, %v3658
      %3660 = vmatmul.f32.gmra.mxu0 %v3016
      %v3661 = vpop.f32.mrf.mxu0
      %v3662 = vadd.f32 0.0, %v3661
      %3663 = vmatmul.f32.gmra.mxu0 %v3017
      %v3664 = vpop.f32.mrf.mxu0
      %v3665 = vadd.f32 0.0, %v3664
      %3666 = vmatmul.f32.gmra.mxu0 %v3018
      %v3667 = vpop.f32.mrf.mxu0
      %v3668 = vadd.f32 0.0, %v3667
      %3669 = vmatmul.f32.gmra.mxu0 %v3019
      %v3670 = vpop.f32.mrf.mxu0
      %v3671 = vadd.f32 0.0, %v3670
      %3672 = vdwg.mxu0
      %3673 = vmatpush.msra.mxu0 %v3447
      %3674 = vmatpush.msra.mxu0 %v3446
      %3675 = vmatpush.msra.mxu0 %v3445
      %3676 = vmatpush.msra.mxu0 %v3444
      %3677 = vmatpush.msra.mxu0 %v3443
      %3678 = vmatpush.msra.mxu0 %v3442
      %3679 = vmatpush.msra.mxu0 %v3441
      %3680 = vmatpush.msra.mxu0 %v3440
      %3681 = vmatpush.msra.mxu0 %v3439
      %3682 = vmatpush.msra.mxu0 %v3438
      %3683 = vmatpush.msra.mxu0 %v3437
      %3684 = vmatpush.msra.mxu0 %v3436
      %3685 = vmatpush.msra.mxu0 %v3435
      %3686 = vmatpush.msra.mxu0 %v3434
      %3687 = vmatpush.msra.mxu0 %v3433
      %3688 = vmatpush.msra.mxu0 %v3432
      %3689 = vmatmul.f32.gmra.mxu0 %v3052
      %v3690 = vpop.f32.mrf.mxu0
      %v3691 = vadd.f32 %v3578, %v3690
      %3692 = vmatmul.f32.gmra.mxu0 %v3053
      %v3693 = vpop.f32.mrf.mxu0
      %v3694 = vadd.f32 %v3581, %v3693
      %3695 = vmatmul.f32.gmra.mxu0 %v3054
      %v3696 = vpop.f32.mrf.mxu0
      %v3697 = vadd.f32 %v3584, %v3696
      %3698 = vmatmul.f32.gmra.mxu0 %v3055
      %v3699 = vpop.f32.mrf.mxu0
      %v3700 = vadd.f32 %v3587, %v3699
      %3701 = vmatmul.f32.gmra.mxu0 %v3056
      %v3702 = vpop.f32.mrf.mxu0
      %v3703 = vadd.f32 %v3590, %v3702
      %3704 = vmatmul.f32.gmra.mxu0 %v3057
      %v3705 = vpop.f32.mrf.mxu0
      %v3706 = vadd.f32 %v3593, %v3705
      %3707 = vmatmul.f32.gmra.mxu0 %v3058
      %v3708 = vpop.f32.mrf.mxu0
      %v3709 = vadd.f32 %v3596, %v3708
      %3710 = vmatmul.f32.gmra.mxu0 %v3059
      %v3711 = vpop.f32.mrf.mxu0
      %v3712 = vadd.f32 %v3599, %v3711
      %3713 = vmatmul.f32.gmra.mxu0 %v3060
      %v3714 = vpop.f32.mrf.mxu0
      %v3715 = vadd.f32 %v3602, %v3714
      %3716 = vmatmul.f32.gmra.mxu0 %v3061
      %v3717 = vpop.f32.mrf.mxu0
      %v3718 = vadd.f32 %v3605, %v3717
      %3719 = vmatmul.f32.gmra.mxu0 %v3062
      %v3720 = vpop.f32.mrf.mxu0
      %v3721 = vadd.f32 %v3608, %v3720
      %3722 = vmatmul.f32.gmra.mxu0 %v3063
      %v3723 = vpop.f32.mrf.mxu0
      %v3724 = vadd.f32 %v3611, %v3723
      %3725 = vmatmul.f32.gmra.mxu0 %v3064
      %v3726 = vpop.f32.mrf.mxu0
      %v3727 = vadd.f32 %v3614, %v3726
      %3728 = vmatmul.f32.gmra.mxu0 %v3065
      %v3729 = vpop.f32.mrf.mxu0
      %v3730 = vadd.f32 %v3617, %v3729
      %3731 = vmatmul.f32.gmra.mxu0 %v3066
      %v3732 = vpop.f32.mrf.mxu0
      %v3733 = vadd.f32 %v3620, %v3732
      %3734 = vmatmul.f32.gmra.mxu0 %v3067
      %v3735 = vpop.f32.mrf.mxu0
      %v3736 = vadd.f32 %v3623, %v3735
      %3737 = vmatmul.f32.gmra.mxu0 %v3068
      %v3738 = vpop.f32.mrf.mxu0
      %v3739 = vadd.f32 %v3626, %v3738
      %3740 = vmatmul.f32.gmra.mxu0 %v3069
      %v3741 = vpop.f32.mrf.mxu0
      %v3742 = vadd.f32 %v3629, %v3741
      %3743 = vmatmul.f32.gmra.mxu0 %v3070
      %v3744 = vpop.f32.mrf.mxu0
      %v3745 = vadd.f32 %v3632, %v3744
      %3746 = vmatmul.f32.gmra.mxu0 %v3071
      %v3747 = vpop.f32.mrf.mxu0
      %v3748 = vadd.f32 %v3635, %v3747
      %3749 = vmatmul.f32.gmra.mxu0 %v3072
      %v3750 = vpop.f32.mrf.mxu0
      %v3751 = vadd.f32 %v3638, %v3750
      %3752 = vmatmul.f32.gmra.mxu0 %v3073
      %v3753 = vpop.f32.mrf.mxu0
      %v3754 = vadd.f32 %v3641, %v3753
      %3755 = vmatmul.f32.gmra.mxu0 %v3074
      %v3756 = vpop.f32.mrf.mxu0
      %v3757 = vadd.f32 %v3644, %v3756
      %3758 = vmatmul.f32.gmra.mxu0 %v3075
      %v3759 = vpop.f32.mrf.mxu0
      %v3760 = vadd.f32 %v3647, %v3759
      %3761 = vmatmul.f32.gmra.mxu0 %v3076
      %v3762 = vpop.f32.mrf.mxu0
      %v3763 = vadd.f32 %v3650, %v3762
      %3764 = vmatmul.f32.gmra.mxu0 %v3077
      %v3765 = vpop.f32.mrf.mxu0
      %v3766 = vadd.f32 %v3653, %v3765
      %3767 = vmatmul.f32.gmra.mxu0 %v3078
      %v3768 = vpop.f32.mrf.mxu0
      %v3769 = vadd.f32 %v3656, %v3768
      %3770 = vmatmul.f32.gmra.mxu0 %v3079
      %v3771 = vpop.f32.mrf.mxu0
      %v3772 = vadd.f32 %v3659, %v3771
      %3773 = vmatmul.f32.gmra.mxu0 %v3080
      %v3774 = vpop.f32.mrf.mxu0
      %v3775 = vadd.f32 %v3662, %v3774
      %3776 = vmatmul.f32.gmra.mxu0 %v3081
      %v3777 = vpop.f32.mrf.mxu0
      %v3778 = vadd.f32 %v3665, %v3777
      %3779 = vmatmul.f32.gmra.mxu0 %v3082
      %v3780 = vpop.f32.mrf.mxu0
      %v3781 = vadd.f32 %v3668, %v3780
      %3782 = vmatmul.f32.gmra.mxu0 %v3083
      %v3783 = vpop.f32.mrf.mxu0
      %v3784 = vadd.f32 %v3671, %v3783
      %3785 = vdwg.mxu0
      %3786 = vmatpush.msra.mxu0 %v3463
      %3787 = vmatpush.msra.mxu0 %v3462
      %3788 = vmatpush.msra.mxu0 %v3461
      %3789 = vmatpush.msra.mxu0 %v3460
      %3790 = vmatpush.msra.mxu0 %v3459
      %3791 = vmatpush.msra.mxu0 %v3458
      %3792 = vmatpush.msra.mxu0 %v3457
      %3793 = vmatpush.msra.mxu0 %v3456
      %3794 = vmatpush.msra.mxu0 %v3455
      %3795 = vmatpush.msra.mxu0 %v3454
      %3796 = vmatpush.msra.mxu0 %v3453
      %3797 = vmatpush.msra.mxu0 %v3452
      %3798 = vmatpush.msra.mxu0 %v3451
      %3799 = vmatpush.msra.mxu0 %v3450
      %3800 = vmatpush.msra.mxu0 %v3449
      %3801 = vmatpush.msra.mxu0 %v3448
      %3802 = vmatmul.f32.gmra.mxu0 %v3148
      %v3803 = vpop.f32.mrf.mxu0
      %v3804 = vadd.f32 %v3691, %v3803
      %3805 = vmatmul.f32.gmra.mxu0 %v3149
      %v3806 = vpop.f32.mrf.mxu0
      %v3807 = vadd.f32 %v3694, %v3806
      %3808 = vmatmul.f32.gmra.mxu0 %v3150
      %v3809 = vpop.f32.mrf.mxu0
      %v3810 = vadd.f32 %v3697, %v3809
      %3811 = vmatmul.f32.gmra.mxu0 %v3151
      %v3812 = vpop.f32.mrf.mxu0
      %v3813 = vadd.f32 %v3700, %v3812
      %3814 = vmatmul.f32.gmra.mxu0 %v3152
      %v3815 = vpop.f32.mrf.mxu0
      %v3816 = vadd.f32 %v3703, %v3815
      %3817 = vmatmul.f32.gmra.mxu0 %v3153
      %v3818 = vpop.f32.mrf.mxu0
      %v3819 = vadd.f32 %v3706, %v3818
      %3820 = vmatmul.f32.gmra.mxu0 %v3154
      %v3821 = vpop.f32.mrf.mxu0
      %v3822 = vadd.f32 %v3709, %v3821
      %3823 = vmatmul.f32.gmra.mxu0 %v3155
      %v3824 = vpop.f32.mrf.mxu0
      %v3825 = vadd.f32 %v3712, %v3824
      %3826 = vmatmul.f32.gmra.mxu0 %v3156
      %v3827 = vpop.f32.mrf.mxu0
      %v3828 = vadd.f32 %v3715, %v3827
      %3829 = vmatmul.f32.gmra.mxu0 %v3157
      %v3830 = vpop.f32.mrf.mxu0
      %v3831 = vadd.f32 %v3718, %v3830
      %3832 = vmatmul.f32.gmra.mxu0 %v3158
      %v3833 = vpop.f32.mrf.mxu0
      %v3834 = vadd.f32 %v3721, %v3833
      %3835 = vmatmul.f32.gmra.mxu0 %v3159
      %v3836 = vpop.f32.mrf.mxu0
      %v3837 = vadd.f32 %v3724, %v3836
      %3838 = vmatmul.f32.gmra.mxu0 %v3160
      %v3839 = vpop.f32.mrf.mxu0
      %v3840 = vadd.f32 %v3727, %v3839
      %3841 = vmatmul.f32.gmra.mxu0 %v3161
      %v3842 = vpop.f32.mrf.mxu0
      %v3843 = vadd.f32 %v3730, %v3842
      %3844 = vmatmul.f32.gmra.mxu0 %v3162
      %v3845 = vpop.f32.mrf.mxu0
      %v3846 = vadd.f32 %v3733, %v3845
      %3847 = vmatmul.f32.gmra.mxu0 %v3163
      %v3848 = vpop.f32.mrf.mxu0
      %v3849 = vadd.f32 %v3736, %v3848
      %3850 = vmatmul.f32.gmra.mxu0 %v3164
      %v3851 = vpop.f32.mrf.mxu0
      %v3852 = vadd.f32 %v3739, %v3851
      %3853 = vmatmul.f32.gmra.mxu0 %v3165
      %v3854 = vpop.f32.mrf.mxu0
      %v3855 = vadd.f32 %v3742, %v3854
      %3856 = vmatmul.f32.gmra.mxu0 %v3166
      %v3857 = vpop.f32.mrf.mxu0
      %v3858 = vadd.f32 %v3745, %v3857
      %3859 = vmatmul.f32.gmra.mxu0 %v3167
      %v3860 = vpop.f32.mrf.mxu0
      %v3861 = vadd.f32 %v3748, %v3860
      %3862 = vmatmul.f32.gmra.mxu0 %v3168
      %v3863 = vpop.f32.mrf.mxu0
      %v3864 = vadd.f32 %v3751, %v3863
      %3865 = vmatmul.f32.gmra.mxu0 %v3169
      %v3866 = vpop.f32.mrf.mxu0
      %v3867 = vadd.f32 %v3754, %v3866
      %3868 = vmatmul.f32.gmra.mxu0 %v3170
      %v3869 = vpop.f32.mrf.mxu0
      %v3870 = vadd.f32 %v3757, %v3869
      %3871 = vmatmul.f32.gmra.mxu0 %v3171
      %v3872 = vpop.f32.mrf.mxu0
      %v3873 = vadd.f32 %v3760, %v3872
      %3874 = vmatmul.f32.gmra.mxu0 %v3172
      %v3875 = vpop.f32.mrf.mxu0
      %v3876 = vadd.f32 %v3763, %v3875
      %3877 = vmatmul.f32.gmra.mxu0 %v3173
      %v3878 = vpop.f32.mrf.mxu0
      %v3879 = vadd.f32 %v3766, %v3878
      %3880 = vmatmul.f32.gmra.mxu0 %v3174
      %v3881 = vpop.f32.mrf.mxu0
      %v3882 = vadd.f32 %v3769, %v3881
      %3883 = vmatmul.f32.gmra.mxu0 %v3175
      %v3884 = vpop.f32.mrf.mxu0
      %v3885 = vadd.f32 %v3772, %v3884
      %3886 = vmatmul.f32.gmra.mxu0 %v3176
      %v3887 = vpop.f32.mrf.mxu0
      %v3888 = vadd.f32 %v3775, %v3887
      %3889 = vmatmul.f32.gmra.mxu0 %v3177
      %v3890 = vpop.f32.mrf.mxu0
      %v3891 = vadd.f32 %v3778, %v3890
      %3892 = vmatmul.f32.gmra.mxu0 %v3178
      %v3893 = vpop.f32.mrf.mxu0
      %v3894 = vadd.f32 %v3781, %v3893
      %3895 = vmatmul.f32.gmra.mxu0 %v3179
      %v3896 = vpop.f32.mrf.mxu0
      %v3897 = vadd.f32 %v3784, %v3896
      %3898 = vdwg.mxu0
      %3899 = vmatpush.msra.mxu0 %v3479
      %3900 = vmatpush.msra.mxu0 %v3478
      %3901 = vmatpush.msra.mxu0 %v3477
      %3902 = vmatpush.msra.mxu0 %v3476
      %3903 = vmatpush.msra.mxu0 %v3475
      %3904 = vmatpush.msra.mxu0 %v3474
      %3905 = vmatpush.msra.mxu0 %v3473
      %3906 = vmatpush.msra.mxu0 %v3472
      %3907 = vmatpush.msra.mxu0 %v3471
      %3908 = vmatpush.msra.mxu0 %v3470
      %3909 = vmatpush.msra.mxu0 %v3469
      %3910 = vmatpush.msra.mxu0 %v3468
      %3911 = vmatpush.msra.mxu0 %v3467
      %3912 = vmatpush.msra.mxu0 %v3466
      %3913 = vmatpush.msra.mxu0 %v3465
      %3914 = vmatpush.msra.mxu0 %v3464
      %3915 = vmatmul.f32.gmra.mxu0 %v3182
      %v3916 = vpop.f32.mrf.mxu0
      %v3917 = vadd.f32 %v3804, %v3916
      %3918 = vmatmul.f32.gmra.mxu0 %v3183
      %v3919 = vpop.f32.mrf.mxu0
      %v3920 = vadd.f32 %v3807, %v3919
      %3921 = vmatmul.f32.gmra.mxu0 %v3184
      %v3922 = vpop.f32.mrf.mxu0
      %v3923 = vadd.f32 %v3810, %v3922
      %3924 = vmatmul.f32.gmra.mxu0 %v3185
      %v3925 = vpop.f32.mrf.mxu0
      %v3926 = vadd.f32 %v3813, %v3925
      %3927 = vmatmul.f32.gmra.mxu0 %v3186
      %v3928 = vpop.f32.mrf.mxu0
      %v3929 = vadd.f32 %v3816, %v3928
      %3930 = vmatmul.f32.gmra.mxu0 %v3187
      %v3931 = vpop.f32.mrf.mxu0
      %v3932 = vadd.f32 %v3819, %v3931
      %3933 = vmatmul.f32.gmra.mxu0 %v3188
      %v3934 = vpop.f32.mrf.mxu0
      %v3935 = vadd.f32 %v3822, %v3934
      %3936 = vmatmul.f32.gmra.mxu0 %v3189
      %v3937 = vpop.f32.mrf.mxu0
      %v3938 = vadd.f32 %v3825, %v3937
      %3939 = vmatmul.f32.gmra.mxu0 %v3190
      %v3940 = vpop.f32.mrf.mxu0
      %v3941 = vadd.f32 %v3828, %v3940
      %3942 = vmatmul.f32.gmra.mxu0 %v3191
      %v3943 = vpop.f32.mrf.mxu0
      %v3944 = vadd.f32 %v3831, %v3943
      %3945 = vmatmul.f32.gmra.mxu0 %v3192
      %v3946 = vpop.f32.mrf.mxu0
      %v3947 = vadd.f32 %v3834, %v3946
      %3948 = vmatmul.f32.gmra.mxu0 %v3193
      %v3949 = vpop.f32.mrf.mxu0
      %v3950 = vadd.f32 %v3837, %v3949
      %3951 = vmatmul.f32.gmra.mxu0 %v3194
      %v3952 = vpop.f32.mrf.mxu0
      %v3953 = vadd.f32 %v3840, %v3952
      %3954 = vmatmul.f32.gmra.mxu0 %v3195
      %v3955 = vpop.f32.mrf.mxu0
      %v3956 = vadd.f32 %v3843, %v3955
      %3957 = vmatmul.f32.gmra.mxu0 %v3196
      %v3958 = vpop.f32.mrf.mxu0
      %v3959 = vadd.f32 %v3846, %v3958
      %3960 = vmatmul.f32.gmra.mxu0 %v3197
      %v3961 = vpop.f32.mrf.mxu0
      %v3962 = vadd.f32 %v3849, %v3961
      %3963 = vmatmul.f32.gmra.mxu0 %v3198
      %v3964 = vpop.f32.mrf.mxu0
      %v3965 = vadd.f32 %v3852, %v3964
      %3966 = vmatmul.f32.gmra.mxu0 %v3199
      %v3967 = vpop.f32.mrf.mxu0
      %v3968 = vadd.f32 %v3855, %v3967
      %3969 = vmatmul.f32.gmra.mxu0 %v3200
      %v3970 = vpop.f32.mrf.mxu0
      %v3971 = vadd.f32 %v3858, %v3970
      %3972 = vmatmul.f32.gmra.mxu0 %v3201
      %v3973 = vpop.f32.mrf.mxu0
      %v3974 = vadd.f32 %v3861, %v3973
      %3975 = vmatmul.f32.gmra.mxu0 %v3202
      %v3976 = vpop.f32.mrf.mxu0
      %v3977 = vadd.f32 %v3864, %v3976
      %3978 = vmatmul.f32.gmra.mxu0 %v3203
      %v3979 = vpop.f32.mrf.mxu0
      %v3980 = vadd.f32 %v3867, %v3979
      %3981 = vmatmul.f32.gmra.mxu0 %v3204
      %v3982 = vpop.f32.mrf.mxu0
      %v3983 = vadd.f32 %v3870, %v3982
      %3984 = vmatmul.f32.gmra.mxu0 %v3205
      %v3985 = vpop.f32.mrf.mxu0
      %v3986 = vadd.f32 %v3873, %v3985
      %3987 = vmatmul.f32.gmra.mxu0 %v3206
      %v3988 = vpop.f32.mrf.mxu0
      %v3989 = vadd.f32 %v3876, %v3988
      %3990 = vmatmul.f32.gmra.mxu0 %v3207
      %v3991 = vpop.f32.mrf.mxu0
      %v3992 = vadd.f32 %v3879, %v3991
      %3993 = vmatmul.f32.gmra.mxu0 %v3208
      %v3994 = vpop.f32.mrf.mxu0
      %v3995 = vadd.f32 %v3882, %v3994
      %3996 = vmatmul.f32.gmra.mxu0 %v3209
      %v3997 = vpop.f32.mrf.mxu0
      %v3998 = vadd.f32 %v3885, %v3997
      %3999 = vmatmul.f32.gmra.mxu0 %v3210
      %v4000 = vpop.f32.mrf.mxu0
      %v4001 = vadd.f32 %v3888, %v4000
      %4002 = vmatmul.f32.gmra.mxu0 %v3211
      %v4003 = vpop.f32.mrf.mxu0
      %v4004 = vadd.f32 %v3891, %v4003
      %4005 = vmatmul.f32.gmra.mxu0 %v3212
      %v4006 = vpop.f32.mrf.mxu0
      %v4007 = vadd.f32 %v3894, %v4006
      %4008 = vmatmul.f32.gmra.mxu0 %v3213
      %v4009 = vpop.f32.mrf.mxu0
      %v4010 = vadd.f32 %v3897, %v4009
      %4011 = vdwg.mxu0
      %4012 = vmatpush.msra.mxu0 %v3495
      %4013 = vmatpush.msra.mxu0 %v3494
      %4014 = vmatpush.msra.mxu0 %v3493
      %4015 = vmatpush.msra.mxu0 %v3492
      %4016 = vmatpush.msra.mxu0 %v3491
      %4017 = vmatpush.msra.mxu0 %v3490
      %4018 = vmatpush.msra.mxu0 %v3489
      %4019 = vmatpush.msra.mxu0 %v3488
      %4020 = vmatpush.msra.mxu0 %v3487
      %4021 = vmatpush.msra.mxu0 %v3486
      %4022 = vmatpush.msra.mxu0 %v3485
      %4023 = vmatpush.msra.mxu0 %v3484
      %4024 = vmatpush.msra.mxu0 %v3483
      %4025 = vmatpush.msra.mxu0 %v3482
      %4026 = vmatpush.msra.mxu0 %v3481
      %4027 = vmatpush.msra.mxu0 %v3480
      %4028 = vmatmul.f32.gmra.mxu0 %v3022
      %v4029 = vpop.f32.mrf.mxu0
      %v4030 = vadd.f32 %v3917, %v4029
      %4031 = vmatmul.f32.gmra.mxu0 %v3023
      %v4032 = vpop.f32.mrf.mxu0
      %v4033 = vadd.f32 %v3920, %v4032
      %4034 = vmatmul.f32.gmra.mxu0 %v3024
      %v4035 = vpop.f32.mrf.mxu0
      %v4036 = vadd.f32 %v3923, %v4035
      %4037 = vmatmul.f32.gmra.mxu0 %v3025
      %v4038 = vpop.f32.mrf.mxu0
      %v4039 = vadd.f32 %v3926, %v4038
      %4040 = vmatmul.f32.gmra.mxu0 %v3026
      %v4041 = vpop.f32.mrf.mxu0
      %v4042 = vadd.f32 %v3929, %v4041
      %4043 = vmatmul.f32.gmra.mxu0 %v3027
      %v4044 = vpop.f32.mrf.mxu0
      %v4045 = vadd.f32 %v3932, %v4044
      %4046 = vmatmul.f32.gmra.mxu0 %v3028
      %v4047 = vpop.f32.mrf.mxu0
      %v4048 = vadd.f32 %v3935, %v4047
      %4049 = vmatmul.f32.gmra.mxu0 %v3029
      %v4050 = vpop.f32.mrf.mxu0
      %v4051 = vadd.f32 %v3938, %v4050
      %4052 = vmatmul.f32.gmra.mxu0 %v3030
      %v4053 = vpop.f32.mrf.mxu0
      %v4054 = vadd.f32 %v3941, %v4053
      %4055 = vmatmul.f32.gmra.mxu0 %v3031
      %v4056 = vpop.f32.mrf.mxu0
      %v4057 = vadd.f32 %v3944, %v4056
      %4058 = vmatmul.f32.gmra.mxu0 %v3032
      %v4059 = vpop.f32.mrf.mxu0
      %v4060 = vadd.f32 %v3947, %v4059
      %4061 = vmatmul.f32.gmra.mxu0 %v3033
      %v4062 = vpop.f32.mrf.mxu0
      %v4063 = vadd.f32 %v3950, %v4062
      %4064 = vmatmul.f32.gmra.mxu0 %v3034
      %v4065 = vpop.f32.mrf.mxu0
      %v4066 = vadd.f32 %v3953, %v4065
      %4067 = vmatmul.f32.gmra.mxu0 %v3035
      %v4068 = vpop.f32.mrf.mxu0
      %v4069 = vadd.f32 %v3956, %v4068
      %4070 = vmatmul.f32.gmra.mxu0 %v3036
      %v4071 = vpop.f32.mrf.mxu0
      %v4072 = vadd.f32 %v3959, %v4071
      %4073 = vmatmul.f32.gmra.mxu0 %v3037
      %v4074 = vpop.f32.mrf.mxu0
      %v4075 = vadd.f32 %v3962, %v4074
      %4076 = vmatmul.f32.gmra.mxu0 %v3038
      %v4077 = vpop.f32.mrf.mxu0
      %v4078 = vadd.f32 %v3965, %v4077
      %4079 = vmatmul.f32.gmra.mxu0 %v3039
      %v4080 = vpop.f32.mrf.mxu0
      %v4081 = vadd.f32 %v3968, %v4080
      %4082 = vmatmul.f32.gmra.mxu0 %v3040
      %v4083 = vpop.f32.mrf.mxu0
      %v4084 = vadd.f32 %v3971, %v4083
      %4085 = vmatmul.f32.gmra.mxu0 %v3041
      %v4086 = vpop.f32.mrf.mxu0
      %v4087 = vadd.f32 %v3974, %v4086
      %4088 = vmatmul.f32.gmra.mxu0 %v3042
      %v4089 = vpop.f32.mrf.mxu0
      %v4090 = vadd.f32 %v3977, %v4089
      %4091 = vmatmul.f32.gmra.mxu0 %v3043
      %v4092 = vpop.f32.mrf.mxu0
      %v4093 = vadd.f32 %v3980, %v4092
      %4094 = vmatmul.f32.gmra.mxu0 %v3044
      %v4095 = vpop.f32.mrf.mxu0
      %v4096 = vadd.f32 %v3983, %v4095
      %4097 = vmatmul.f32.gmra.mxu0 %v3045
      %v4098 = vpop.f32.mrf.mxu0
      %v4099 = vadd.f32 %v3986, %v4098
      %4100 = vmatmul.f32.gmra.mxu0 %v3046
      %v4101 = vpop.f32.mrf.mxu0
      %v4102 = vadd.f32 %v3989, %v4101
      %4103 = vmatmul.f32.gmra.mxu0 %v3047
      %v4104 = vpop.f32.mrf.mxu0
      %v4105 = vadd.f32 %v3992, %v4104
      %4106 = vmatmul.f32.gmra.mxu0 %v3048
      %v4107 = vpop.f32.mrf.mxu0
      %v4108 = vadd.f32 %v3995, %v4107
      %4109 = vmatmul.f32.gmra.mxu0 %v3049
      %v4110 = vpop.f32.mrf.mxu0
      %v4111 = vadd.f32 %v3998, %v4110
      %4112 = vmatmul.f32.gmra.mxu0 %v3050
      %v4113 = vpop.f32.mrf.mxu0
      %v4114 = vadd.f32 %v4001, %v4113
      %4115 = vmatmul.f32.gmra.mxu0 %v3051
      %v4116 = vpop.f32.mrf.mxu0
      %v4117 = vadd.f32 %v4004, %v4116
      %4118 = vmatmul.f32.gmra.mxu0 %v3214
      %v4119 = vpop.f32.mrf.mxu0
      %v4120 = vadd.f32 %v4007, %v4119
      %4121 = vmatmul.f32.gmra.mxu0 %v3215
      %v4122 = vpop.f32.mrf.mxu0
      %v4123 = vadd.f32 %v4010, %v4122
      %4124 = vdwg.mxu0
      %4125 = vmatpush.msra.mxu0 %v3511
      %4126 = vmatpush.msra.mxu0 %v3510
      %4127 = vmatpush.msra.mxu0 %v3509
      %4128 = vmatpush.msra.mxu0 %v3508
      %4129 = vmatpush.msra.mxu0 %v3507
      %4130 = vmatpush.msra.mxu0 %v3506
      %4131 = vmatpush.msra.mxu0 %v3505
      %4132 = vmatpush.msra.mxu0 %v3504
      %4133 = vmatpush.msra.mxu0 %v3503
      %4134 = vmatpush.msra.mxu0 %v3502
      %4135 = vmatpush.msra.mxu0 %v3501
      %4136 = vmatpush.msra.mxu0 %v3500
      %4137 = vmatpush.msra.mxu0 %v3499
      %4138 = vmatpush.msra.mxu0 %v3498
      %4139 = vmatpush.msra.mxu0 %v3497
      %4140 = vmatpush.msra.mxu0 %v3496
      %4141 = vmatmul.f32.gmra.mxu0 %v3218
      %v4142 = vpop.f32.mrf.mxu0
      %v4143 = vadd.f32 %v4030, %v4142
      %4144 = vmatmul.f32.gmra.mxu0 %v3219
      %v4145 = vpop.f32.mrf.mxu0
      %v4146 = vadd.f32 %v4033, %v4145
      %4147 = vmatmul.f32.gmra.mxu0 %v3220
      %v4148 = vpop.f32.mrf.mxu0
      %v4149 = vadd.f32 %v4036, %v4148
      %4150 = vmatmul.f32.gmra.mxu0 %v3221
      %v4151 = vpop.f32.mrf.mxu0
      %v4152 = vadd.f32 %v4039, %v4151
      %4153 = vmatmul.f32.gmra.mxu0 %v3222
      %v4154 = vpop.f32.mrf.mxu0
      %v4155 = vadd.f32 %v4042, %v4154
      %4156 = vmatmul.f32.gmra.mxu0 %v3223
      %v4157 = vpop.f32.mrf.mxu0
      %v4158 = vadd.f32 %v4045, %v4157
      %4159 = vmatmul.f32.gmra.mxu0 %v3224
      %v4160 = vpop.f32.mrf.mxu0
      %v4161 = vadd.f32 %v4048, %v4160
      %4162 = vmatmul.f32.gmra.mxu0 %v3225
      %v4163 = vpop.f32.mrf.mxu0
      %v4164 = vadd.f32 %v4051, %v4163
      %4165 = vmatmul.f32.gmra.mxu0 %v3226
      %v4166 = vpop.f32.mrf.mxu0
      %v4167 = vadd.f32 %v4054, %v4166
      %4168 = vmatmul.f32.gmra.mxu0 %v3227
      %v4169 = vpop.f32.mrf.mxu0
      %v4170 = vadd.f32 %v4057, %v4169
      %4171 = vmatmul.f32.gmra.mxu0 %v3228
      %v4172 = vpop.f32.mrf.mxu0
      %v4173 = vadd.f32 %v4060, %v4172
      %4174 = vmatmul.f32.gmra.mxu0 %v3229
      %v4175 = vpop.f32.mrf.mxu0
      %v4176 = vadd.f32 %v4063, %v4175
      %4177 = vmatmul.f32.gmra.mxu0 %v3230
      %v4178 = vpop.f32.mrf.mxu0
      %v4179 = vadd.f32 %v4066, %v4178
      %4180 = vmatmul.f32.gmra.mxu0 %v3231
      %v4181 = vpop.f32.mrf.mxu0
      %v4182 = vadd.f32 %v4069, %v4181
      %4183 = vmatmul.f32.gmra.mxu0 %v3232
      %v4184 = vpop.f32.mrf.mxu0
      %v4185 = vadd.f32 %v4072, %v4184
      %4186 = vmatmul.f32.gmra.mxu0 %v3233
      %v4187 = vpop.f32.mrf.mxu0
      %v4188 = vadd.f32 %v4075, %v4187
      %4189 = vmatmul.f32.gmra.mxu0 %v3234
      %v4190 = vpop.f32.mrf.mxu0
      %v4191 = vadd.f32 %v4078, %v4190
      %4192 = vmatmul.f32.gmra.mxu0 %v3235
      %v4193 = vpop.f32.mrf.mxu0
      %v4194 = vadd.f32 %v4081, %v4193
      %4195 = vmatmul.f32.gmra.mxu0 %v3236
      %v4196 = vpop.f32.mrf.mxu0
      %v4197 = vadd.f32 %v4084, %v4196
      %4198 = vmatmul.f32.gmra.mxu0 %v3237
      %v4199 = vpop.f32.mrf.mxu0
      %v4200 = vadd.f32 %v4087, %v4199
      %4201 = vmatmul.f32.gmra.mxu0 %v3238
      %v4202 = vpop.f32.mrf.mxu0
      %v4203 = vadd.f32 %v4090, %v4202
      %4204 = vmatmul.f32.gmra.mxu0 %v3239
      %v4205 = vpop.f32.mrf.mxu0
      %v4206 = vadd.f32 %v4093, %v4205
      %4207 = vmatmul.f32.gmra.mxu0 %v3240
      %v4208 = vpop.f32.mrf.mxu0
      %v4209 = vadd.f32 %v4096, %v4208
      %4210 = vmatmul.f32.gmra.mxu0 %v3241
      %v4211 = vpop.f32.mrf.mxu0
      %v4212 = vadd.f32 %v4099, %v4211
      %4213 = vmatmul.f32.gmra.mxu0 %v3242
      %v4214 = vpop.f32.mrf.mxu0
      %v4215 = vadd.f32 %v4102, %v4214
      %4216 = vmatmul.f32.gmra.mxu0 %v3243
      %v4217 = vpop.f32.mrf.mxu0
      %v4218 = vadd.f32 %v4105, %v4217
      %4219 = vmatmul.f32.gmra.mxu0 %v3244
      %v4220 = vpop.f32.mrf.mxu0
      %v4221 = vadd.f32 %v4108, %v4220
      %4222 = vmatmul.f32.gmra.mxu0 %v3245
      %v4223 = vpop.f32.mrf.mxu0
      %v4224 = vadd.f32 %v4111, %v4223
      %4225 = vmatmul.f32.gmra.mxu0 %v3246
      %v4226 = vpop.f32.mrf.mxu0
      %v4227 = vadd.f32 %v4114, %v4226
      %4228 = vmatmul.f32.gmra.mxu0 %v3247
      %v4229 = vpop.f32.mrf.mxu0
      %v4230 = vadd.f32 %v4117, %v4229
      %4231 = vmatmul.f32.gmra.mxu0 %v3248
      %v4232 = vpop.f32.mrf.mxu0
      %v4233 = vadd.f32 %v4120, %v4232
      %4234 = vmatmul.f32.gmra.mxu0 %v3249
      %v4235 = vpop.f32.mrf.mxu0
      %v4236 = vadd.f32 %v4123, %v4235
      %4237 = vdwg.mxu0
      %4238 = vmatpush.msra.mxu0 %v3527
      %4239 = vmatpush.msra.mxu0 %v3526
      %4240 = vmatpush.msra.mxu0 %v3525
      %4241 = vmatpush.msra.mxu0 %v3524
      %4242 = vmatpush.msra.mxu0 %v3523
      %4243 = vmatpush.msra.mxu0 %v3522
      %4244 = vmatpush.msra.mxu0 %v3521
      %4245 = vmatpush.msra.mxu0 %v3520
      %4246 = vmatpush.msra.mxu0 %v3519
      %4247 = vmatpush.msra.mxu0 %v3518
      %4248 = vmatpush.msra.mxu0 %v3517
      %4249 = vmatpush.msra.mxu0 %v3516
      %4250 = vmatpush.msra.mxu0 %v3515
      %4251 = vmatpush.msra.mxu0 %v3514
      %4252 = vmatpush.msra.mxu0 %v3513
      %4253 = vmatpush.msra.mxu0 %v3512
      %4254 = vmatmul.f32.gmra.mxu0 %v3284
      %v4255 = vpop.f32.mrf.mxu0
      %v4256 = vadd.f32 %v4143, %v4255
      %4257 = vmatmul.f32.gmra.mxu0 %v3285
      %v4258 = vpop.f32.mrf.mxu0
      %v4259 = vadd.f32 %v4146, %v4258
      %4260 = vmatmul.f32.gmra.mxu0 %v3286
      %v4261 = vpop.f32.mrf.mxu0
      %v4262 = vadd.f32 %v4149, %v4261
      %4263 = vmatmul.f32.gmra.mxu0 %v3287
      %v4264 = vpop.f32.mrf.mxu0
      %v4265 = vadd.f32 %v4152, %v4264
      %4266 = vmatmul.f32.gmra.mxu0 %v3288
      %v4267 = vpop.f32.mrf.mxu0
      %v4268 = vadd.f32 %v4155, %v4267
      %4269 = vmatmul.f32.gmra.mxu0 %v3289
      %v4270 = vpop.f32.mrf.mxu0
      %v4271 = vadd.f32 %v4158, %v4270
      %4272 = vmatmul.f32.gmra.mxu0 %v3290
      %v4273 = vpop.f32.mrf.mxu0
      %v4274 = vadd.f32 %v4161, %v4273
      %4275 = vmatmul.f32.gmra.mxu0 %v3291
      %v4276 = vpop.f32.mrf.mxu0
      %v4277 = vadd.f32 %v4164, %v4276
      %4278 = vmatmul.f32.gmra.mxu0 %v3292
      %v4279 = vpop.f32.mrf.mxu0
      %v4280 = vadd.f32 %v4167, %v4279
      %4281 = vmatmul.f32.gmra.mxu0 %v3293
      %v4282 = vpop.f32.mrf.mxu0
      %v4283 = vadd.f32 %v4170, %v4282
      %4284 = vmatmul.f32.gmra.mxu0 %v3294
      %v4285 = vpop.f32.mrf.mxu0
      %v4286 = vadd.f32 %v4173, %v4285
      %4287 = vmatmul.f32.gmra.mxu0 %v3295
      %v4288 = vpop.f32.mrf.mxu0
      %v4289 = vadd.f32 %v4176, %v4288
      %4290 = vmatmul.f32.gmra.mxu0 %v3296
      %v4291 = vpop.f32.mrf.mxu0
      %v4292 = vadd.f32 %v4179, %v4291
      %4293 = vmatmul.f32.gmra.mxu0 %v3297
      %v4294 = vpop.f32.mrf.mxu0
      %v4295 = vadd.f32 %v4182, %v4294
      %4296 = vmatmul.f32.gmra.mxu0 %v3298
      %v4297 = vpop.f32.mrf.mxu0
      %v4298 = vadd.f32 %v4185, %v4297
      %4299 = vmatmul.f32.gmra.mxu0 %v3299
      %v4300 = vpop.f32.mrf.mxu0
      %v4301 = vadd.f32 %v4188, %v4300
      %4302 = vmatmul.f32.gmra.mxu0 %v3300
      %v4303 = vpop.f32.mrf.mxu0
      %v4304 = vadd.f32 %v4191, %v4303
      %4305 = vmatmul.f32.gmra.mxu0 %v3301
      %v4306 = vpop.f32.mrf.mxu0
      %v4307 = vadd.f32 %v4194, %v4306
      %4308 = vmatmul.f32.gmra.mxu0 %v3302
      %v4309 = vpop.f32.mrf.mxu0
      %v4310 = vadd.f32 %v4197, %v4309
      %4311 = vmatmul.f32.gmra.mxu0 %v3303
      %v4312 = vpop.f32.mrf.mxu0
      %v4313 = vadd.f32 %v4200, %v4312
      %4314 = vmatmul.f32.gmra.mxu0 %v3304
      %v4315 = vpop.f32.mrf.mxu0
      %v4316 = vadd.f32 %v4203, %v4315
      %4317 = vmatmul.f32.gmra.mxu0 %v3305
      %v4318 = vpop.f32.mrf.mxu0
      %v4319 = vadd.f32 %v4206, %v4318
      %4320 = vmatmul.f32.gmra.mxu0 %v3306
      %v4321 = vpop.f32.mrf.mxu0
      %v4322 = vadd.f32 %v4209, %v4321
      %4323 = vmatmul.f32.gmra.mxu0 %v3307
      %v4324 = vpop.f32.mrf.mxu0
      %v4325 = vadd.f32 %v4212, %v4324
      %4326 = vmatmul.f32.gmra.mxu0 %v3308
      %v4327 = vpop.f32.mrf.mxu0
      %v4328 = vadd.f32 %v4215, %v4327
      %4329 = vmatmul.f32.gmra.mxu0 %v3309
      %v4330 = vpop.f32.mrf.mxu0
      %v4331 = vadd.f32 %v4218, %v4330
      %4332 = vmatmul.f32.gmra.mxu0 %v3310
      %v4333 = vpop.f32.mrf.mxu0
      %v4334 = vadd.f32 %v4221, %v4333
      %4335 = vmatmul.f32.gmra.mxu0 %v3311
      %v4336 = vpop.f32.mrf.mxu0
      %v4337 = vadd.f32 %v4224, %v4336
      %4338 = vmatmul.f32.gmra.mxu0 %v3312
      %v4339 = vpop.f32.mrf.mxu0
      %v4340 = vadd.f32 %v4227, %v4339
      %4341 = vmatmul.f32.gmra.mxu0 %v3313
      %v4342 = vpop.f32.mrf.mxu0
      %v4343 = vadd.f32 %v4230, %v4342
      %4344 = vmatmul.f32.gmra.mxu0 %v3314
      %v4345 = vpop.f32.mrf.mxu0
      %v4346 = vadd.f32 %v4233, %v4345
      %4347 = vmatmul.f32.gmra.mxu0 %v3315
      %v4348 = vpop.f32.mrf.mxu0
      %v4349 = vadd.f32 %v4236, %v4348
      %4350 = vdwg.mxu0
      %4351 = vmatpush.msra.mxu0 %v3543
      %4352 = vmatpush.msra.mxu0 %v3542
      %4353 = vmatpush.msra.mxu0 %v3541
      %4354 = vmatpush.msra.mxu0 %v3540
      %4355 = vmatpush.msra.mxu0 %v3539
      %4356 = vmatpush.msra.mxu0 %v3538
      %4357 = vmatpush.msra.mxu0 %v3537
      %4358 = vmatpush.msra.mxu0 %v3536
      %4359 = vmatpush.msra.mxu0 %v3535
      %4360 = vmatpush.msra.mxu0 %v3534
      %4361 = vmatpush.msra.mxu0 %v3533
      %4362 = vmatpush.msra.mxu0 %v3532
      %4363 = vmatpush.msra.mxu0 %v3531
      %4364 = vmatpush.msra.mxu0 %v3530
      %4365 = vmatpush.msra.mxu0 %v3529
      %4366 = vmatpush.msra.mxu0 %v3528
      %4367 = vmatmul.f32.gmra.mxu0 %v3318
      %v4368 = vpop.f32.mrf.mxu0
      %v4369 = vadd.f32 %v4256, %v4368
      %4370 = vmatmul.f32.gmra.mxu0 %v3319
      %v4371 = vpop.f32.mrf.mxu0
      %v4372 = vadd.f32 %v4259, %v4371
      %4373 = vmatmul.f32.gmra.mxu0 %v3320
      %v4374 = vpop.f32.mrf.mxu0
      %v4375 = vadd.f32 %v4262, %v4374
      %4376 = vmatmul.f32.gmra.mxu0 %v3321
      %v4377 = vpop.f32.mrf.mxu0
      %v4378 = vadd.f32 %v4265, %v4377
      %4379 = vmatmul.f32.gmra.mxu0 %v3322
      %v4380 = vpop.f32.mrf.mxu0
      %v4381 = vadd.f32 %v4268, %v4380
      %4382 = vmatmul.f32.gmra.mxu0 %v3323
      %v4383 = vpop.f32.mrf.mxu0
      %v4384 = vadd.f32 %v4271, %v4383
      %4385 = vmatmul.f32.gmra.mxu0 %v3324
      %v4386 = vpop.f32.mrf.mxu0
      %v4387 = vadd.f32 %v4274, %v4386
      %4388 = vmatmul.f32.gmra.mxu0 %v3325
      %v4389 = vpop.f32.mrf.mxu0
      %v4390 = vadd.f32 %v4277, %v4389
      %4391 = vmatmul.f32.gmra.mxu0 %v3326
      %v4392 = vpop.f32.mrf.mxu0
      %v4393 = vadd.f32 %v4280, %v4392
      %4394 = vmatmul.f32.gmra.mxu0 %v3327
      %v4395 = vpop.f32.mrf.mxu0
      %v4396 = vadd.f32 %v4283, %v4395
      %4397 = vmatmul.f32.gmra.mxu0 %v3328
      %v4398 = vpop.f32.mrf.mxu0
      %v4399 = vadd.f32 %v4286, %v4398
      %4400 = vmatmul.f32.gmra.mxu0 %v3329
      %v4401 = vpop.f32.mrf.mxu0
      %v4402 = vadd.f32 %v4289, %v4401
      %4403 = vmatmul.f32.gmra.mxu0 %v3330
      %v4404 = vpop.f32.mrf.mxu0
      %v4405 = vadd.f32 %v4292, %v4404
      %4406 = vmatmul.f32.gmra.mxu0 %v3331
      %v4407 = vpop.f32.mrf.mxu0
      %v4408 = vadd.f32 %v4295, %v4407
      %4409 = vmatmul.f32.gmra.mxu0 %v3332
      %v4410 = vpop.f32.mrf.mxu0
      %v4411 = vadd.f32 %v4298, %v4410
      %4412 = vmatmul.f32.gmra.mxu0 %v3333
      %v4413 = vpop.f32.mrf.mxu0
      %v4414 = vadd.f32 %v4301, %v4413
      %4415 = vmatmul.f32.gmra.mxu0 %v3334
      %v4416 = vpop.f32.mrf.mxu0
      %v4417 = vadd.f32 %v4304, %v4416
      %4418 = vmatmul.f32.gmra.mxu0 %v3335
      %v4419 = vpop.f32.mrf.mxu0
      %v4420 = vadd.f32 %v4307, %v4419
      %4421 = vmatmul.f32.gmra.mxu0 %v3336
      %v4422 = vpop.f32.mrf.mxu0
      %v4423 = vadd.f32 %v4310, %v4422
      %4424 = vmatmul.f32.gmra.mxu0 %v3337
      %v4425 = vpop.f32.mrf.mxu0
      %v4426 = vadd.f32 %v4313, %v4425
      %4427 = vmatmul.f32.gmra.mxu0 %v3338
      %v4428 = vpop.f32.mrf.mxu0
      %v4429 = vadd.f32 %v4316, %v4428
      %4430 = vmatmul.f32.gmra.mxu0 %v3339
      %v4431 = vpop.f32.mrf.mxu0
      %v4432 = vadd.f32 %v4319, %v4431
      %4433 = vmatmul.f32.gmra.mxu0 %v3340
      %v4434 = vpop.f32.mrf.mxu0
      %v4435 = vadd.f32 %v4322, %v4434
      %4436 = vmatmul.f32.gmra.mxu0 %v3341
      %v4437 = vpop.f32.mrf.mxu0
      %v4438 = vadd.f32 %v4325, %v4437
      %4439 = vmatmul.f32.gmra.mxu0 %v3342
      %v4440 = vpop.f32.mrf.mxu0
      %v4441 = vadd.f32 %v4328, %v4440
      %4442 = vmatmul.f32.gmra.mxu0 %v3343
      %v4443 = vpop.f32.mrf.mxu0
      %v4444 = vadd.f32 %v4331, %v4443
      %4445 = vmatmul.f32.gmra.mxu0 %v3344
      %v4446 = vpop.f32.mrf.mxu0
      %v4447 = vadd.f32 %v4334, %v4446
      %4448 = vmatmul.f32.gmra.mxu0 %v3345
      %v4449 = vpop.f32.mrf.mxu0
      %v4450 = vadd.f32 %v4337, %v4449
      %4451 = vmatmul.f32.gmra.mxu0 %v3346
      %v4452 = vpop.f32.mrf.mxu0
      %v4453 = vadd.f32 %v4340, %v4452
      %4454 = vmatmul.f32.gmra.mxu0 %v3347
      %v4455 = vpop.f32.mrf.mxu0
      %v4456 = vadd.f32 %v4343, %v4455
      %4457 = vmatmul.f32.gmra.mxu0 %v3348
      %v4458 = vpop.f32.mrf.mxu0
      %v4459 = vadd.f32 %v4346, %v4458
      %4460 = vmatmul.f32.gmra.mxu0 %v3349
      %v4461 = vpop.f32.mrf.mxu0
      %v4462 = vadd.f32 %v4349, %v4461
      %4463 = vdwg.mxu0
      %4464 = vmatpush.msra.mxu0 %v3559
      %4465 = vmatpush.msra.mxu0 %v3558
      %4466 = vmatpush.msra.mxu0 %v3557
      %4467 = vmatpush.msra.mxu0 %v3556
      %4468 = vmatpush.msra.mxu0 %v3555
      %4469 = vmatpush.msra.mxu0 %v3554
      %4470 = vmatpush.msra.mxu0 %v3553
      %4471 = vmatpush.msra.mxu0 %v3552
      %4472 = vmatpush.msra.mxu0 %v3551
      %4473 = vmatpush.msra.mxu0 %v3550
      %4474 = vmatpush.msra.mxu0 %v3549
      %4475 = vmatpush.msra.mxu0 %v3548
      %4476 = vmatpush.msra.mxu0 %v3547
      %4477 = vmatpush.msra.mxu0 %v3546
      %4478 = vmatpush.msra.mxu0 %v3545
      %4479 = vmatpush.msra.mxu0 %v3544
      %4480 = vmatmul.f32.gmra.mxu0 %v3384
      %v4481 = vpop.f32.mrf.mxu0
      %v4482 = vadd.f32 %v4369, %v4481
      %4483 = vmatmul.f32.gmra.mxu0 %v3385
      %v4484 = vpop.f32.mrf.mxu0
      %v4485 = vadd.f32 %v4372, %v4484
      %4486 = vmatmul.f32.gmra.mxu0 %v3386
      %v4487 = vpop.f32.mrf.mxu0
      %v4488 = vadd.f32 %v4375, %v4487
      %4489 = vmatmul.f32.gmra.mxu0 %v3387
      %v4490 = vpop.f32.mrf.mxu0
      %v4491 = vadd.f32 %v4378, %v4490
      %4492 = vmatmul.f32.gmra.mxu0 %v3388
      %v4493 = vpop.f32.mrf.mxu0
      %v4494 = vadd.f32 %v4381, %v4493
      %4495 = vmatmul.f32.gmra.mxu0 %v3389
      %v4496 = vpop.f32.mrf.mxu0
      %v4497 = vadd.f32 %v4384, %v4496
      %4498 = vmatmul.f32.gmra.mxu0 %v3390
      %v4499 = vpop.f32.mrf.mxu0
      %v4500 = vadd.f32 %v4387, %v4499
      %4501 = vmatmul.f32.gmra.mxu0 %v3391
      %v4502 = vpop.f32.mrf.mxu0
      %v4503 = vadd.f32 %v4390, %v4502
      %4504 = vmatmul.f32.gmra.mxu0 %v3392
      %v4505 = vpop.f32.mrf.mxu0
      %v4506 = vadd.f32 %v4393, %v4505
      %4507 = vmatmul.f32.gmra.mxu0 %v3393
      %v4508 = vpop.f32.mrf.mxu0
      %v4509 = vadd.f32 %v4396, %v4508
      %4510 = vmatmul.f32.gmra.mxu0 %v3394
      %v4511 = vpop.f32.mrf.mxu0
      %v4512 = vadd.f32 %v4399, %v4511
      %4513 = vmatmul.f32.gmra.mxu0 %v3395
      %v4514 = vpop.f32.mrf.mxu0
      %v4515 = vadd.f32 %v4402, %v4514
      %4516 = vmatmul.f32.gmra.mxu0 %v3396
      %v4517 = vpop.f32.mrf.mxu0
      %v4518 = vadd.f32 %v4405, %v4517
      %4519 = vmatmul.f32.gmra.mxu0 %v3397
      %v4520 = vpop.f32.mrf.mxu0
      %v4521 = vadd.f32 %v4408, %v4520
      %4522 = vmatmul.f32.gmra.mxu0 %v3398
      %v4523 = vpop.f32.mrf.mxu0
      %v4524 = vadd.f32 %v4411, %v4523
      %4525 = vmatmul.f32.gmra.mxu0 %v3399
      %v4526 = vpop.f32.mrf.mxu0
      %v4527 = vadd.f32 %v4414, %v4526
      %4528 = vmatmul.f32.gmra.mxu0 %v3400
      %v4529 = vpop.f32.mrf.mxu0
      %v4530 = vadd.f32 %v4417, %v4529
      %4531 = vmatmul.f32.gmra.mxu0 %v3401
      %v4532 = vpop.f32.mrf.mxu0
      %v4533 = vadd.f32 %v4420, %v4532
      %4534 = vmatmul.f32.gmra.mxu0 %v3402
      %v4535 = vpop.f32.mrf.mxu0
      %v4536 = vadd.f32 %v4423, %v4535
      %4537 = vmatmul.f32.gmra.mxu0 %v3403
      %v4538 = vpop.f32.mrf.mxu0
      %v4539 = vadd.f32 %v4426, %v4538
      %4540 = vmatmul.f32.gmra.mxu0 %v3404
      %v4541 = vpop.f32.mrf.mxu0
      %v4542 = vadd.f32 %v4429, %v4541
      %4543 = vmatmul.f32.gmra.mxu0 %v3405
      %v4544 = vpop.f32.mrf.mxu0
      %v4545 = vadd.f32 %v4432, %v4544
      %4546 = vmatmul.f32.gmra.mxu0 %v3406
      %v4547 = vpop.f32.mrf.mxu0
      %v4548 = vadd.f32 %v4435, %v4547
      %4549 = vmatmul.f32.gmra.mxu0 %v3407
      %v4550 = vpop.f32.mrf.mxu0
      %v4551 = vadd.f32 %v4438, %v4550
      %4552 = vmatmul.f32.gmra.mxu0 %v3408
      %v4553 = vpop.f32.mrf.mxu0
      %v4554 = vadd.f32 %v4441, %v4553
      %4555 = vmatmul.f32.gmra.mxu0 %v3409
      %v4556 = vpop.f32.mrf.mxu0
      %v4557 = vadd.f32 %v4444, %v4556
      %4558 = vmatmul.f32.gmra.mxu0 %v3410
      %v4559 = vpop.f32.mrf.mxu0
      %v4560 = vadd.f32 %v4447, %v4559
      %4561 = vmatmul.f32.gmra.mxu0 %v3411
      %v4562 = vpop.f32.mrf.mxu0
      %v4563 = vadd.f32 %v4450, %v4562
      %4564 = vmatmul.f32.gmra.mxu0 %v3412
      %v4565 = vpop.f32.mrf.mxu0
      %v4566 = vadd.f32 %v4453, %v4565
      %4567 = vmatmul.f32.gmra.mxu0 %v3413
      %v4568 = vpop.f32.mrf.mxu0
      %v4569 = vadd.f32 %v4456, %v4568
      %4570 = vmatmul.f32.gmra.mxu0 %v3414
      %v4571 = vpop.f32.mrf.mxu0
      %v4572 = vadd.f32 %v4459, %v4571
      %4573 = vmatmul.f32.gmra.mxu0 %v3415
      %v4574 = vpop.f32.mrf.mxu0
      %v4575 = vadd.f32 %v4462, %v4574
      %4576 = vdwg.mxu0
      %v4577 = vld [vmem:[%s9] sm:$0x1]
      %v4579 = vperm.slane %v4577, 0
      %v4581 = vmul.f32 %v4482, %v4579
      %v4582 = vmul.f32 %v4485, %v4579
      %v4583 = vmul.f32 %v4488, %v4579
      %v4584 = vmul.f32 %v4491, %v4579
      %v4585 = vmul.f32 %v4494, %v4579
      %v4586 = vmul.f32 %v4497, %v4579
      %v4587 = vmul.f32 %v4500, %v4579
      %v4588 = vmul.f32 %v4503, %v4579
      %v4589 = vmul.f32 %v4506, %v4579
      %v4590 = vmul.f32 %v4509, %v4579
      %v4591 = vmul.f32 %v4512, %v4579
      %v4592 = vmul.f32 %v4515, %v4579
      %v4593 = vmul.f32 %v4518, %v4579
      %v4594 = vmul.f32 %v4521, %v4579
      %v4595 = vmul.f32 %v4524, %v4579
      %v4596 = vmul.f32 %v4527, %v4579
      %v4597 = vmul.f32 %v4530, %v4579
      %v4598 = vmul.f32 %v4533, %v4579
      %v4599 = vmul.f32 %v4536, %v4579
      %v4600 = vmul.f32 %v4539, %v4579
      %v4601 = vmul.f32 %v4542, %v4579
      %v4602 = vmul.f32 %v4545, %v4579
      %v4603 = vmul.f32 %v4548, %v4579
      %v4604 = vmul.f32 %v4551, %v4579
      %v4605 = vmul.f32 %v4554, %v4579
      %v4606 = vmul.f32 %v4557, %v4579
      %v4607 = vmul.f32 %v4560, %v4579
      %v4608 = vmul.f32 %v4563, %v4579
      %v4609 = vmul.f32 %v4566, %v4579
      %v4610 = vmul.f32 %v4569, %v4579
      %v4611 = vmul.f32 %v4572, %v4579
      %v4612 = vmul.f32 %v4575, %v4579
      %v4613 = vld [vmem:[%s10] sm:$0x1]
      %v4615 = vperm.slane %v4613, 0
      %v4617 = vadd.f32 %v4581, %v4615
      %v4618 = vadd.f32 %v4582, %v4615
      %v4619 = vadd.f32 %v4583, %v4615
      %v4620 = vadd.f32 %v4584, %v4615
      %v4621 = vadd.f32 %v4585, %v4615
      %v4622 = vadd.f32 %v4586, %v4615
      %v4623 = vadd.f32 %v4587, %v4615
      %v4624 = vadd.f32 %v4588, %v4615
      %v4625 = vadd.f32 %v4589, %v4615
      %v4626 = vadd.f32 %v4590, %v4615
      %v4627 = vadd.f32 %v4591, %v4615
      %v4628 = vadd.f32 %v4592, %v4615
      %v4629 = vadd.f32 %v4593, %v4615
      %v4630 = vadd.f32 %v4594, %v4615
      %v4631 = vadd.f32 %v4595, %v4615
      %v4632 = vadd.f32 %v4596, %v4615
      %v4633 = vadd.f32 %v4597, %v4615
      %v4634 = vadd.f32 %v4598, %v4615
      %v4635 = vadd.f32 %v4599, %v4615
      %v4636 = vadd.f32 %v4600, %v4615
      %v4637 = vadd.f32 %v4601, %v4615
      %v4638 = vadd.f32 %v4602, %v4615
      %v4639 = vadd.f32 %v4603, %v4615
      %v4640 = vadd.f32 %v4604, %v4615
      %v4641 = vadd.f32 %v4605, %v4615
      %v4642 = vadd.f32 %v4606, %v4615
      %v4643 = vadd.f32 %v4607, %v4615
      %v4644 = vadd.f32 %v4608, %v4615
      %v4645 = vadd.f32 %v4609, %v4615
      %v4646 = vadd.f32 %v4610, %v4615
      %v4647 = vadd.f32 %v4611, %v4615
      %v4648 = vadd.f32 %v4612, %v4615
      %v4649 = vld [vmem:[%s563] sm:$0xff]
      %v4650 = vld [vmem:[%s563 + $0x8] sm:$0xff]
      %v4651 = vld [vmem:[%s563 + $0x10] sm:$0xff]
      %v4652 = vld [vmem:[%s563 + $0x18] sm:$0xff]
      %v4653 = vld [vmem:[%s563 + $0x20] sm:$0xff]
      %v4654 = vld [vmem:[%s563 + $0x28] sm:$0xff]
      %v4655 = vld [vmem:[%s563 + $0x30] sm:$0xff]
      %v4656 = vld [vmem:[%s563 + $0x38] sm:$0xff]
      %v4657 = vld [vmem:[%s563 + $0x40] sm:$0xff]
      %v4658 = vld [vmem:[%s563 + $0x48] sm:$0xff]
      %v4659 = vld [vmem:[%s563 + $0x50] sm:$0xff]
      %v4660 = vld [vmem:[%s563 + $0x58] sm:$0xff]
      %v4661 = vld [vmem:[%s563 + $0x60] sm:$0xff]
      %v4662 = vld [vmem:[%s563 + $0x68] sm:$0xff]
      %v4663 = vld [vmem:[%s563 + $0x70] sm:$0xff]
      %v4664 = vld [vmem:[%s563 + $0x78] sm:$0xff]
      %v4665 = vld [vmem:[%s563 + $0x80] sm:$0xff]
      %v4666 = vld [vmem:[%s563 + $0x88] sm:$0xff]
      %v4667 = vld [vmem:[%s563 + $0x90] sm:$0xff]
      %v4668 = vld [vmem:[%s563 + $0x98] sm:$0xff]
      %v4669 = vld [vmem:[%s563 + $0xa0] sm:$0xff]
      %v4670 = vld [vmem:[%s563 + $0xa8] sm:$0xff]
      %v4671 = vld [vmem:[%s563 + $0xb0] sm:$0xff]
      %v4672 = vld [vmem:[%s563 + $0xb8] sm:$0xff]
      %v4673 = vld [vmem:[%s563 + $0xc0] sm:$0xff]
      %v4674 = vld [vmem:[%s563 + $0xc8] sm:$0xff]
      %v4675 = vld [vmem:[%s563 + $0xd0] sm:$0xff]
      %v4676 = vld [vmem:[%s563 + $0xd8] sm:$0xff]
      %v4677 = vld [vmem:[%s563 + $0xe0] sm:$0xff]
      %v4678 = vld [vmem:[%s563 + $0xe8] sm:$0xff]
      %v4679 = vld [vmem:[%s563 + $0xf0] sm:$0xff]
      %v4680 = vld [vmem:[%s563 + $0xf8] sm:$0xff]
      %v4681 = vld [vmem:[%s11] sm:$0xf]
      %vm4682 = vcmask 31744
      %v4684 = vsel %vm4682, %v4649, 0
      %v4687 = vsel %vm4682, %v4650, 0
      %v4690 = vsel %vm4682, %v4651, 0
      %v4693 = vsel %vm4682, %v4652, 0
      %v4696 = vsel %vm4682, %v4653, 0
      %v4699 = vsel %vm4682, %v4654, 0
      %v4702 = vsel %vm4682, %v4655, 0
      %v4705 = vsel %vm4682, %v4656, 0
      %v4708 = vsel %vm4682, %v4657, 0
      %v4711 = vsel %vm4682, %v4658, 0
      %v4714 = vsel %vm4682, %v4659, 0
      %v4717 = vsel %vm4682, %v4660, 0
      %v4720 = vsel %vm4682, %v4661, 0
      %v4723 = vsel %vm4682, %v4662, 0
      %v4726 = vsel %vm4682, %v4663, 0
      %v4729 = vsel %vm4682, %v4664, 0
      %v4732 = vsel %vm4682, %v4665, 0
      %v4735 = vsel %vm4682, %v4666, 0
      %v4738 = vsel %vm4682, %v4667, 0
      %v4741 = vsel %vm4682, %v4668, 0
      %v4744 = vsel %vm4682, %v4669, 0
      %v4747 = vsel %vm4682, %v4670, 0
      %v4750 = vsel %vm4682, %v4671, 0
      %v4753 = vsel %vm4682, %v4672, 0
      %v4756 = vsel %vm4682, %v4673, 0
      %v4759 = vsel %vm4682, %v4674, 0
      %v4762 = vsel %vm4682, %v4675, 0
      %v4765 = vsel %vm4682, %v4676, 0
      %v4768 = vsel %vm4682, %v4677, 0
      %v4771 = vsel %vm4682, %v4678, 0
      %v4774 = vsel %vm4682, %v4679, 0
      %v4777 = vsel %vm4682, %v4680, 0
      %v4780 = vsel %vm768, %v4681, 0
      %4782 = vmatpush.msra.mxu0 0.0
      %4783 = vmatpush.msra.mxu0 0.0
      %4784 = vmatpush.msra.mxu0 0.0
      %4785 = vmatpush.msra.mxu0 0.0
      %4786 = vmatpush.msra.mxu0 0.0
      %4787 = vmatpush.msra.mxu0 0.0
      %4788 = vmatpush.msra.mxu0 0.0
      %4789 = vmatpush.msra.mxu0 0.0
      %4790 = vmatpush.msra.mxu0 0.0
      %4791 = vmatpush.msra.mxu0 0.0
      %4792 = vmatpush.msra.mxu0 0.0
      %4793 = vmatpush.msra.mxu0 0.0
      %4794 = vmatpush.msra.mxu0 0.0
      %4795 = vmatpush.msra.mxu0 0.0
      %4796 = vmatpush.msra.mxu0 0.0
      %4797 = vmatpush.msra.mxu0 %v4780
      %4798 = vmatmul.f32.gmra.mxu0 %v4684
      %v4799 = vpop.f32.mrf.mxu0
      %v4800 = vadd.f32 0.0, %v4799
      %4801 = vmatmul.f32.gmra.mxu0 %v4687
      %v4802 = vpop.f32.mrf.mxu0
      %v4803 = vadd.f32 0.0, %v4802
      %4804 = vmatmul.f32.gmra.mxu0 %v4690
      %v4805 = vpop.f32.mrf.mxu0
      %v4806 = vadd.f32 0.0, %v4805
      %4807 = vmatmul.f32.gmra.mxu0 %v4693
      %v4808 = vpop.f32.mrf.mxu0
      %v4809 = vadd.f32 0.0, %v4808
      %4810 = vmatmul.f32.gmra.mxu0 %v4696
      %v4811 = vpop.f32.mrf.mxu0
      %v4812 = vadd.f32 0.0, %v4811
      %4813 = vmatmul.f32.gmra.mxu0 %v4699
      %v4814 = vpop.f32.mrf.mxu0
      %v4815 = vadd.f32 0.0, %v4814
      %4816 = vmatmul.f32.gmra.mxu0 %v4702
      %v4817 = vpop.f32.mrf.mxu0
      %v4818 = vadd.f32 0.0, %v4817
      %4819 = vmatmul.f32.gmra.mxu0 %v4705
      %v4820 = vpop.f32.mrf.mxu0
      %v4821 = vadd.f32 0.0, %v4820
      %4822 = vmatmul.f32.gmra.mxu0 %v4708
      %v4823 = vpop.f32.mrf.mxu0
      %v4824 = vadd.f32 0.0, %v4823
      %4825 = vmatmul.f32.gmra.mxu0 %v4711
      %v4826 = vpop.f32.mrf.mxu0
      %v4827 = vadd.f32 0.0, %v4826
      %4828 = vmatmul.f32.gmra.mxu0 %v4714
      %v4829 = vpop.f32.mrf.mxu0
      %v4830 = vadd.f32 0.0, %v4829
      %4831 = vmatmul.f32.gmra.mxu0 %v4717
      %v4832 = vpop.f32.mrf.mxu0
      %v4833 = vadd.f32 0.0, %v4832
      %4834 = vmatmul.f32.gmra.mxu0 %v4720
      %v4835 = vpop.f32.mrf.mxu0
      %v4836 = vadd.f32 0.0, %v4835
      %4837 = vmatmul.f32.gmra.mxu0 %v4723
      %v4838 = vpop.f32.mrf.mxu0
      %v4839 = vadd.f32 0.0, %v4838
      %4840 = vmatmul.f32.gmra.mxu0 %v4726
      %v4841 = vpop.f32.mrf.mxu0
      %v4842 = vadd.f32 0.0, %v4841
      %4843 = vmatmul.f32.gmra.mxu0 %v4729
      %v4844 = vpop.f32.mrf.mxu0
      %v4845 = vadd.f32 0.0, %v4844
      %4846 = vmatmul.f32.gmra.mxu0 %v4732
      %v4847 = vpop.f32.mrf.mxu0
      %v4848 = vadd.f32 0.0, %v4847
      %4849 = vmatmul.f32.gmra.mxu0 %v4735
      %v4850 = vpop.f32.mrf.mxu0
      %v4851 = vadd.f32 0.0, %v4850
      %4852 = vmatmul.f32.gmra.mxu0 %v4738
      %v4853 = vpop.f32.mrf.mxu0
      %v4854 = vadd.f32 0.0, %v4853
      %4855 = vmatmul.f32.gmra.mxu0 %v4741
      %v4856 = vpop.f32.mrf.mxu0
      %v4857 = vadd.f32 0.0, %v4856
      %4858 = vmatmul.f32.gmra.mxu0 %v4744
      %v4859 = vpop.f32.mrf.mxu0
      %v4860 = vadd.f32 0.0, %v4859
      %4861 = vmatmul.f32.gmra.mxu0 %v4747
      %v4862 = vpop.f32.mrf.mxu0
      %v4863 = vadd.f32 0.0, %v4862
      %4864 = vmatmul.f32.gmra.mxu0 %v4750
      %v4865 = vpop.f32.mrf.mxu0
      %v4866 = vadd.f32 0.0, %v4865
      %4867 = vmatmul.f32.gmra.mxu0 %v4753
      %v4868 = vpop.f32.mrf.mxu0
      %v4869 = vadd.f32 0.0, %v4868
      %4870 = vmatmul.f32.gmra.mxu0 %v4756
      %v4871 = vpop.f32.mrf.mxu0
      %v4872 = vadd.f32 0.0, %v4871
      %4873 = vmatmul.f32.gmra.mxu0 %v4759
      %v4874 = vpop.f32.mrf.mxu0
      %v4875 = vadd.f32 0.0, %v4874
      %4876 = vmatmul.f32.gmra.mxu0 %v4762
      %v4877 = vpop.f32.mrf.mxu0
      %v4878 = vadd.f32 0.0, %v4877
      %4879 = vmatmul.f32.gmra.mxu0 %v4765
      %v4880 = vpop.f32.mrf.mxu0
      %v4881 = vadd.f32 0.0, %v4880
      %4882 = vmatmul.f32.gmra.mxu0 %v4768
      %v4883 = vpop.f32.mrf.mxu0
      %v4884 = vadd.f32 0.0, %v4883
      %4885 = vmatmul.f32.gmra.mxu0 %v4771
      %v4886 = vpop.f32.mrf.mxu0
      %v4887 = vadd.f32 0.0, %v4886
      %4888 = vmatmul.f32.gmra.mxu0 %v4774
      %v4889 = vpop.f32.mrf.mxu0
      %v4890 = vadd.f32 0.0, %v4889
      %4891 = vmatmul.f32.gmra.mxu0 %v4777
      %v4892 = vpop.f32.mrf.mxu0
      %v4893 = vadd.f32 0.0, %v4892
      %4894 = vdwg.mxu0
      %v4895 = vld [vmem:[%s12] sm:$0x1]
      %v4897 = vperm.slane %v4895, 0
      %v4899 = vmul.f32 %v4800, %v4897
      %v4900 = vmul.f32 %v4803, %v4897
      %v4901 = vmul.f32 %v4806, %v4897
      %v4902 = vmul.f32 %v4809, %v4897
      %v4903 = vmul.f32 %v4812, %v4897
      %v4904 = vmul.f32 %v4815, %v4897
      %v4905 = vmul.f32 %v4818, %v4897
      %v4906 = vmul.f32 %v4821, %v4897
      %v4907 = vmul.f32 %v4824, %v4897
      %v4908 = vmul.f32 %v4827, %v4897
      %v4909 = vmul.f32 %v4830, %v4897
      %v4910 = vmul.f32 %v4833, %v4897
      %v4911 = vmul.f32 %v4836, %v4897
      %v4912 = vmul.f32 %v4839, %v4897
      %v4913 = vmul.f32 %v4842, %v4897
      %v4914 = vmul.f32 %v4845, %v4897
      %v4915 = vmul.f32 %v4848, %v4897
      %v4916 = vmul.f32 %v4851, %v4897
      %v4917 = vmul.f32 %v4854, %v4897
      %v4918 = vmul.f32 %v4857, %v4897
      %v4919 = vmul.f32 %v4860, %v4897
      %v4920 = vmul.f32 %v4863, %v4897
      %v4921 = vmul.f32 %v4866, %v4897
      %v4922 = vmul.f32 %v4869, %v4897
      %v4923 = vmul.f32 %v4872, %v4897
      %v4924 = vmul.f32 %v4875, %v4897
      %v4925 = vmul.f32 %v4878, %v4897
      %v4926 = vmul.f32 %v4881, %v4897
      %v4927 = vmul.f32 %v4884, %v4897
      %v4928 = vmul.f32 %v4887, %v4897
      %v4929 = vmul.f32 %v4890, %v4897
      %v4930 = vmul.f32 %v4893, %v4897
      %v4931 = vld [vmem:[%s13] sm:$0x1]
      %v4933 = vperm.slane %v4931, 0
      %v4935 = vadd.f32 %v4899, %v4933
      %v4936 = vadd.f32 %v4900, %v4933
      %v4937 = vadd.f32 %v4901, %v4933
      %v4938 = vadd.f32 %v4902, %v4933
      %v4939 = vadd.f32 %v4903, %v4933
      %v4940 = vadd.f32 %v4904, %v4933
      %v4941 = vadd.f32 %v4905, %v4933
      %v4942 = vadd.f32 %v4906, %v4933
      %v4943 = vadd.f32 %v4907, %v4933
      %v4944 = vadd.f32 %v4908, %v4933
      %v4945 = vadd.f32 %v4909, %v4933
      %v4946 = vadd.f32 %v4910, %v4933
      %v4947 = vadd.f32 %v4911, %v4933
      %v4948 = vadd.f32 %v4912, %v4933
      %v4949 = vadd.f32 %v4913, %v4933
      %v4950 = vadd.f32 %v4914, %v4933
      %v4951 = vadd.f32 %v4915, %v4933
      %v4952 = vadd.f32 %v4916, %v4933
      %v4953 = vadd.f32 %v4917, %v4933
      %v4954 = vadd.f32 %v4918, %v4933
      %v4955 = vadd.f32 %v4919, %v4933
      %v4956 = vadd.f32 %v4920, %v4933
      %v4957 = vadd.f32 %v4921, %v4933
      %v4958 = vadd.f32 %v4922, %v4933
      %v4959 = vadd.f32 %v4923, %v4933
      %v4960 = vadd.f32 %v4924, %v4933
      %v4961 = vadd.f32 %v4925, %v4933
      %v4962 = vadd.f32 %v4926, %v4933
      %v4963 = vadd.f32 %v4927, %v4933
      %v4964 = vadd.f32 %v4928, %v4933
      %v4965 = vadd.f32 %v4929, %v4933
      %v4966 = vadd.f32 %v4930, %v4933
      %v4967 = vadd.f32 %v4617, %v4935
      %v4968 = vadd.f32 %v4618, %v4936
      %v4969 = vadd.f32 %v4619, %v4937
      %v4970 = vadd.f32 %v4620, %v4938
      %v4971 = vadd.f32 %v4621, %v4939
      %v4972 = vadd.f32 %v4622, %v4940
      %v4973 = vadd.f32 %v4623, %v4941
      %v4974 = vadd.f32 %v4624, %v4942
      %v4975 = vadd.f32 %v4625, %v4943
      %v4976 = vadd.f32 %v4626, %v4944
      %v4977 = vadd.f32 %v4627, %v4945
      %v4978 = vadd.f32 %v4628, %v4946
      %v4979 = vadd.f32 %v4629, %v4947
      %v4980 = vadd.f32 %v4630, %v4948
      %v4981 = vadd.f32 %v4631, %v4949
      %v4982 = vadd.f32 %v4632, %v4950
      %v4983 = vadd.f32 %v4633, %v4951
      %v4984 = vadd.f32 %v4634, %v4952
      %v4985 = vadd.f32 %v4635, %v4953
      %v4986 = vadd.f32 %v4636, %v4954
      %v4987 = vadd.f32 %v4637, %v4955
      %v4988 = vadd.f32 %v4638, %v4956
      %v4989 = vadd.f32 %v4639, %v4957
      %v4990 = vadd.f32 %v4640, %v4958
      %v4991 = vadd.f32 %v4641, %v4959
      %v4992 = vadd.f32 %v4642, %v4960
      %v4993 = vadd.f32 %v4643, %v4961
      %v4994 = vadd.f32 %v4644, %v4962
      %v4995 = vadd.f32 %v4645, %v4963
      %v4996 = vadd.f32 %v4646, %v4964
      %v4997 = vadd.f32 %v4647, %v4965
      %v4998 = vadd.f32 %v4648, %v4966
      %v4999 = vmax.f32 %v4967, 0.0
      %v5000 = vmax.f32 %v4968, 0.0
      %v5001 = vmax.f32 %v4969, 0.0
      %v5002 = vmax.f32 %v4970, 0.0
      %v5003 = vmax.f32 %v4971, 0.0
      %v5004 = vmax.f32 %v4972, 0.0
      %v5005 = vmax.f32 %v4973, 0.0
      %v5006 = vmax.f32 %v4974, 0.0
      %v5007 = vmax.f32 %v4975, 0.0
      %v5008 = vmax.f32 %v4976, 0.0
      %v5009 = vmax.f32 %v4977, 0.0
      %v5010 = vmax.f32 %v4978, 0.0
      %v5011 = vmax.f32 %v4979, 0.0
      %v5012 = vmax.f32 %v4980, 0.0
      %v5013 = vmax.f32 %v4981, 0.0
      %v5014 = vmax.f32 %v4982, 0.0
      %v5015 = vmax.f32 %v4983, 0.0
      %v5016 = vmax.f32 %v4984, 0.0
      %v5017 = vmax.f32 %v4985, 0.0
      %v5018 = vmax.f32 %v4986, 0.0
      %v5019 = vmax.f32 %v4987, 0.0
      %v5020 = vmax.f32 %v4988, 0.0
      %v5021 = vmax.f32 %v4989, 0.0
      %v5022 = vmax.f32 %v4990, 0.0
      %v5023 = vmax.f32 %v4991, 0.0
      %v5024 = vmax.f32 %v4992, 0.0
      %v5025 = vmax.f32 %v4993, 0.0
      %v5026 = vmax.f32 %v4994, 0.0
      %v5027 = vmax.f32 %v4995, 0.0
      %v5028 = vmax.f32 %v4996, 0.0
      %v5029 = vmax.f32 %v4997, 0.0
      %v5030 = vmax.f32 %v4998, 0.0
      %5031 = vst.msk [vmem:[#allocation4 + $0x18] sm:$0xff] %vm4682, %v4999
      %5032 = vst.msk [vmem:[#allocation4 + $0x20] sm:$0xff] %vm4682, %v5000
      %5033 = vst.msk [vmem:[#allocation4 + $0x28] sm:$0xff] %vm4682, %v5001
      %5034 = vst.msk [vmem:[#allocation4 + $0x30] sm:$0xff] %vm4682, %v5002
      %5035 = vst.msk [vmem:[#allocation4 + $0x38] sm:$0xff] %vm4682, %v5003
      %5036 = vst.msk [vmem:[#allocation4 + $0x40] sm:$0xff] %vm4682, %v5004
      %5037 = vst.msk [vmem:[#allocation4 + $0x48] sm:$0xff] %vm4682, %v5005
      %5038 = vst.msk [vmem:[#allocation4 + $0x50] sm:$0xff] %vm4682, %v5006
      %5039 = vst.msk [vmem:[#allocation4 + $0x58] sm:$0xff] %vm4682, %v5007
      %5040 = vst.msk [vmem:[#allocation4 + $0x60] sm:$0xff] %vm4682, %v5008
      %5041 = vst.msk [vmem:[#allocation4 + $0x68] sm:$0xff] %vm4682, %v5009
      %5042 = vst.msk [vmem:[#allocation4 + $0x70] sm:$0xff] %vm4682, %v5010
      %5043 = vst.msk [vmem:[#allocation4 + $0x78] sm:$0xff] %vm4682, %v5011
      %5044 = vst.msk [vmem:[#allocation4 + $0x80] sm:$0xff] %vm4682, %v5012
      %5045 = vst.msk [vmem:[#allocation4 + $0x88] sm:$0xff] %vm4682, %v5013
      %5046 = vst.msk [vmem:[#allocation4 + $0x90] sm:$0xff] %vm4682, %v5014
      %5047 = vst.msk [vmem:[#allocation4 + $0x98] sm:$0xff] %vm4682, %v5015
      %5048 = vst.msk [vmem:[#allocation4 + $0xa0] sm:$0xff] %vm4682, %v5016
      %5049 = vst.msk [vmem:[#allocation4 + $0xa8] sm:$0xff] %vm4682, %v5017
      %5050 = vst.msk [vmem:[#allocation4 + $0xb0] sm:$0xff] %vm4682, %v5018
      %5051 = vst.msk [vmem:[#allocation4 + $0xb8] sm:$0xff] %vm4682, %v5019
      %5052 = vst.msk [vmem:[#allocation4 + $0xc0] sm:$0xff] %vm4682, %v5020
      %5053 = vst.msk [vmem:[#allocation4 + $0xc8] sm:$0xff] %vm4682, %v5021
      %5054 = vst.msk [vmem:[#allocation4 + $0xd0] sm:$0xff] %vm4682, %v5022
      %5055 = vst.msk [vmem:[#allocation4 + $0xd8] sm:$0xff] %vm4682, %v5023
      %5056 = vst.msk [vmem:[#allocation4 + $0xe0] sm:$0xff] %vm4682, %v5024
      %5057 = vst.msk [vmem:[#allocation4 + $0xe8] sm:$0xff] %vm4682, %v5025
      %5058 = vst.msk [vmem:[#allocation4 + $0xf0] sm:$0xff] %vm4682, %v5026
      %5059 = vst.msk [vmem:[#allocation4 + $0xf8] sm:$0xff] %vm4682, %v5027
      %5060 = vst.msk [vmem:[#allocation4 + $0x100] sm:$0xff] %vm4682, %v5028
      %5061 = vst.msk [vmem:[#allocation4 + $0x108] sm:$0xff] %vm4682, %v5029
      %5062 = vst.msk [vmem:[#allocation4 + $0x110] sm:$0xff] %vm4682, %v5030
      %v5063 = vld [vmem:[#allocation4 + $0x7] sm:$0xff]
      %v5064 = vld [vmem:[#allocation4 + $0xf] sm:$0xff]
      %v5065 = vld [vmem:[#allocation4 + $0x17] sm:$0xff]
      %v5066 = vld [vmem:[#allocation4 + $0x1f] sm:$0xff]
      %v5067 = vld [vmem:[#allocation4 + $0x27] sm:$0xff]
      %v5068 = vld [vmem:[#allocation4 + $0x2f] sm:$0xff]
      %v5069 = vld [vmem:[#allocation4 + $0x37] sm:$0xff]
      %v5070 = vld [vmem:[#allocation4 + $0x3f] sm:$0xff]
      %v5071 = vld [vmem:[#allocation4 + $0x47] sm:$0xff]
      %v5072 = vld [vmem:[#allocation4 + $0x4f] sm:$0xff]
      %v5073 = vld [vmem:[#allocation4 + $0x57] sm:$0xff]
      %v5074 = vld [vmem:[#allocation4 + $0x5f] sm:$0xff]
      %v5075 = vld [vmem:[#allocation4 + $0x67] sm:$0xff]
      %v5076 = vld [vmem:[#allocation4 + $0x6f] sm:$0xff]
      %v5077 = vld [vmem:[#allocation4 + $0x77] sm:$0xff]
      %v5078 = vld [vmem:[#allocation4 + $0x7f] sm:$0xff]
      %v5079 = vld [vmem:[#allocation4 + $0x87] sm:$0xff]
      %v5080 = vld [vmem:[#allocation4 + $0x8f] sm:$0xff]
      %v5081 = vld [vmem:[#allocation4 + $0x97] sm:$0xff]
      %v5082 = vld [vmem:[#allocation4 + $0x9f] sm:$0xff]
      %v5083 = vld [vmem:[#allocation4 + $0xa7] sm:$0xff]
      %v5084 = vld [vmem:[#allocation4 + $0xaf] sm:$0xff]
      %v5085 = vld [vmem:[#allocation4 + $0xb7] sm:$0xff]
      %v5086 = vld [vmem:[#allocation4 + $0xbf] sm:$0xff]
      %v5087 = vld [vmem:[#allocation4 + $0xc7] sm:$0xff]
      %v5088 = vld [vmem:[#allocation4 + $0xcf] sm:$0xff]
      %v5089 = vld [vmem:[#allocation4 + $0xd7] sm:$0xff]
      %v5090 = vld [vmem:[#allocation4 + $0xdf] sm:$0xff]
      %v5091 = vld [vmem:[#allocation4 + $0xe7] sm:$0xff]
      %v5092 = vld [vmem:[#allocation4 + $0xef] sm:$0xff]
      %v5093 = vld [vmem:[#allocation4 + $0xf7] sm:$0xff]
      %v5094 = vld [vmem:[#allocation4 + $0xff] sm:$0xff]
      %v5095 = vsel %vm2956, %v5063, 0.0
      %v5096 = vsel %vm2957, %v5064, 0.0
      %v5097 = vsel %vm2958, %v5065, 0.0
      %v5098 = vsel %vm2959, %v5066, 0.0
      %v5099 = vsel %vm2960, %v5067, 0.0
      %v5100 = vsel %vm2961, %v5068, 0.0
      %v5101 = vsel %vm2962, %v5069, 0.0
      %v5102 = vsel %vm2963, %v5070, 0.0
      %v5103 = vsel %vm2964, %v5071, 0.0
      %v5104 = vsel %vm2965, %v5072, 0.0
      %v5105 = vsel %vm2966, %v5073, 0.0
      %v5106 = vsel %vm2967, %v5074, 0.0
      %v5107 = vsel %vm2968, %v5075, 0.0
      %v5108 = vsel %vm2969, %v5076, 0.0
      %v5109 = vsel %vm2970, %v5077, 0.0
      %v5110 = vsel %vm2971, %v5078, 0.0
      %v5111 = vsel %vm2972, %v5079, 0.0
      %v5112 = vsel %vm2973, %v5080, 0.0
      %v5113 = vsel %vm2974, %v5081, 0.0
      %v5114 = vsel %vm2975, %v5082, 0.0
      %v5115 = vsel %vm2976, %v5083, 0.0
      %v5116 = vsel %vm2977, %v5084, 0.0
      %v5117 = vsel %vm2978, %v5085, 0.0
      %v5118 = vsel %vm2979, %v5086, 0.0
      %v5119 = vsel %vm2980, %v5087, 0.0
      %v5120 = vsel %vm2981, %v5088, 0.0
      %v5121 = vsel %vm2982, %v5089, 0.0
      %v5122 = vsel %vm2983, %v5090, 0.0
      %v5123 = vsel %vm2984, %v5091, 0.0
      %v5124 = vsel %vm2985, %v5092, 0.0
      %v5125 = vsel %vm2986, %v5093, 0.0
      %v5126 = vsel %vm2987, %v5094, 0.0
      %v5127 = vld [vmem:[%s14] sm:$0xf]
      %v5128 = vld [vmem:[#allocation4 + $0x8] sm:$0xff]
      %v5129 = vld [vmem:[#allocation4 + $0x10] sm:$0xff]
      %v5130 = vld [vmem:[#allocation4 + $0x18] sm:$0xff]
      %v5131 = vld [vmem:[#allocation4 + $0x20] sm:$0xff]
      %v5132 = vld [vmem:[#allocation4 + $0x28] sm:$0xff]
      %v5133 = vld [vmem:[#allocation4 + $0x30] sm:$0xff]
      %v5134 = vld [vmem:[#allocation4 + $0x38] sm:$0xff]
      %v5135 = vld [vmem:[#allocation4 + $0x40] sm:$0xff]
      %v5136 = vld [vmem:[#allocation4 + $0x48] sm:$0xff]
      %v5137 = vld [vmem:[#allocation4 + $0x50] sm:$0xff]
      %v5138 = vld [vmem:[#allocation4 + $0x58] sm:$0xff]
      %v5139 = vld [vmem:[#allocation4 + $0x60] sm:$0xff]
      %v5140 = vld [vmem:[#allocation4 + $0x68] sm:$0xff]
      %v5141 = vld [vmem:[#allocation4 + $0x70] sm:$0xff]
      %v5142 = vld [vmem:[#allocation4 + $0x78] sm:$0xff]
      %v5143 = vld [vmem:[#allocation4 + $0x80] sm:$0xff]
      %v5144 = vld [vmem:[#allocation4 + $0x88] sm:$0xff]
      %v5145 = vld [vmem:[#allocation4 + $0x90] sm:$0xff]
      %v5146 = vld [vmem:[#allocation4 + $0x98] sm:$0xff]
      %v5147 = vld [vmem:[#allocation4 + $0xa0] sm:$0xff]
      %v5148 = vld [vmem:[#allocation4 + $0xa8] sm:$0xff]
      %v5149 = vld [vmem:[#allocation4 + $0xb0] sm:$0xff]
      %v5150 = vld [vmem:[#allocation4 + $0xb8] sm:$0xff]
      %v5151 = vld [vmem:[#allocation4 + $0xc0] sm:$0xff]
      %v5152 = vld [vmem:[#allocation4 + $0xc8] sm:$0xff]
      %v5153 = vld [vmem:[#allocation4 + $0xd0] sm:$0xff]
      %v5154 = vld [vmem:[#allocation4 + $0xd8] sm:$0xff]
      %v5155 = vld [vmem:[#allocation4 + $0xe0] sm:$0xff]
      %v5156 = vld [vmem:[#allocation4 + $0xe8] sm:$0xff]
      %v5157 = vld [vmem:[#allocation4 + $0xf0] sm:$0xff]
      %v5158 = vld [vmem:[#allocation4 + $0xf8] sm:$0xff]
      %v5159 = vld [vmem:[#allocation4 + $0x100] sm:$0xff]
      %v5160 = vsel %vm2892, %v5128, 0.0
      %v5161 = vsel %vm2893, %v5129, 0.0
      %v5162 = vsel %vm2894, %v5130, 0.0
      %v5163 = vsel %vm2895, %v5131, 0.0
      %v5164 = vsel %vm2896, %v5132, 0.0
      %v5165 = vsel %vm2897, %v5133, 0.0
      %v5166 = vsel %vm2898, %v5134, 0.0
      %v5167 = vsel %vm2899, %v5135, 0.0
      %v5168 = vsel %vm2900, %v5136, 0.0
      %v5169 = vsel %vm2901, %v5137, 0.0
      %v5170 = vsel %vm2902, %v5138, 0.0
      %v5171 = vsel %vm2903, %v5139, 0.0
      %v5172 = vsel %vm2904, %v5140, 0.0
      %v5173 = vsel %vm2905, %v5141, 0.0
      %v5174 = vsel %vm2906, %v5142, 0.0
      %v5175 = vsel %vm2907, %v5143, 0.0
      %v5176 = vsel %vm2908, %v5144, 0.0
      %v5177 = vsel %vm2909, %v5145, 0.0
      %v5178 = vsel %vm2910, %v5146, 0.0
      %v5179 = vsel %vm2911, %v5147, 0.0
      %v5180 = vsel %vm2912, %v5148, 0.0
      %v5181 = vsel %vm2913, %v5149, 0.0
      %v5182 = vsel %vm2914, %v5150, 0.0
      %v5183 = vsel %vm2915, %v5151, 0.0
      %v5184 = vsel %vm2916, %v5152, 0.0
      %v5185 = vsel %vm2917, %v5153, 0.0
      %v5186 = vsel %vm2918, %v5154, 0.0
      %v5187 = vsel %vm2919, %v5155, 0.0
      %v5188 = vsel %vm2920, %v5156, 0.0
      %v5189 = vsel %vm2921, %v5157, 0.0
      %v5190 = vsel %vm2922, %v5158, 0.0
      %v5191 = vsel %vm2923, %v5159, 0.0
      %s5192 = scalar_lea.vmem %s14, 4
      %v5193 = vld [vmem:[%s5192] sm:$0xf]
      %v5195 = vsel %vm4682, %v5160, 0
      %v5198 = vsel %vm4682, %v5161, 0
      %v5201 = vsel %vm4682, %v5162, 0
      %v5204 = vsel %vm4682, %v5163, 0
      %v5207 = vsel %vm4682, %v5164, 0
      %v5210 = vsel %vm4682, %v5165, 0
      %v5213 = vsel %vm4682, %v5166, 0
      %v5216 = vsel %vm4682, %v5167, 0
      %v5219 = vsel %vm4682, %v5168, 0
      %v5222 = vsel %vm4682, %v5169, 0
      %v5225 = vsel %vm4682, %v5170, 0
      %v5228 = vsel %vm4682, %v5171, 0
      %v5231 = vsel %vm4682, %v5172, 0
      %v5234 = vsel %vm4682, %v5173, 0
      %v5237 = vsel %vm4682, %v5174, 0
      %v5240 = vsel %vm4682, %v5175, 0
      %v5243 = vsel %vm4682, %v5176, 0
      %v5246 = vsel %vm4682, %v5177, 0
      %v5249 = vsel %vm4682, %v5178, 0
      %v5252 = vsel %vm4682, %v5179, 0
      %v5255 = vsel %vm4682, %v5180, 0
      %v5258 = vsel %vm4682, %v5181, 0
      %v5261 = vsel %vm4682, %v5182, 0
      %v5264 = vsel %vm4682, %v5183, 0
      %v5267 = vsel %vm4682, %v5184, 0
      %v5270 = vsel %vm4682, %v5185, 0
      %v5273 = vsel %vm4682, %v5186, 0
      %v5276 = vsel %vm4682, %v5187, 0
      %v5279 = vsel %vm4682, %v5188, 0
      %v5282 = vsel %vm4682, %v5189, 0
      %v5285 = vsel %vm4682, %v5190, 0
      %v5288 = vsel %vm4682, %v5191, 0
      %v5291 = vsel %vm768, %v5193, 0
      %5293 = vmatpush.msra.mxu0 0.0
      %5294 = vmatpush.msra.mxu0 0.0
      %5295 = vmatpush.msra.mxu0 0.0
      %5296 = vmatpush.msra.mxu0 0.0
      %5297 = vmatpush.msra.mxu0 0.0
      %5298 = vmatpush.msra.mxu0 0.0
      %5299 = vmatpush.msra.mxu0 0.0
      %5300 = vmatpush.msra.mxu0 0.0
      %5301 = vmatpush.msra.mxu0 0.0
      %5302 = vmatpush.msra.mxu0 0.0
      %5303 = vmatpush.msra.mxu0 0.0
      %5304 = vmatpush.msra.mxu0 0.0
      %5305 = vmatpush.msra.mxu0 0.0
      %5306 = vmatpush.msra.mxu0 0.0
      %5307 = vmatpush.msra.mxu0 0.0
      %5308 = vmatpush.msra.mxu0 %v5291
      %5309 = vmatmul.f32.gmra.mxu0 %v5195
      %v5310 = vpop.f32.mrf.mxu0
      %v5311 = vadd.f32 0.0, %v5310
      %5312 = vmatmul.f32.gmra.mxu0 %v5198
      %v5313 = vpop.f32.mrf.mxu0
      %v5314 = vadd.f32 0.0, %v5313
      %5315 = vmatmul.f32.gmra.mxu0 %v5201
      %v5316 = vpop.f32.mrf.mxu0
      %v5317 = vadd.f32 0.0, %v5316
      %5318 = vmatmul.f32.gmra.mxu0 %v5204
      %v5319 = vpop.f32.mrf.mxu0
      %v5320 = vadd.f32 0.0, %v5319
      %5321 = vmatmul.f32.gmra.mxu0 %v5207
      %v5322 = vpop.f32.mrf.mxu0
      %v5323 = vadd.f32 0.0, %v5322
      %5324 = vmatmul.f32.gmra.mxu0 %v5210
      %v5325 = vpop.f32.mrf.mxu0
      %v5326 = vadd.f32 0.0, %v5325
      %5327 = vmatmul.f32.gmra.mxu0 %v5213
      %v5328 = vpop.f32.mrf.mxu0
      %v5329 = vadd.f32 0.0, %v5328
      %5330 = vmatmul.f32.gmra.mxu0 %v5216
      %v5331 = vpop.f32.mrf.mxu0
      %v5332 = vadd.f32 0.0, %v5331
      %5333 = vmatmul.f32.gmra.mxu0 %v5219
      %v5334 = vpop.f32.mrf.mxu0
      %v5335 = vadd.f32 0.0, %v5334
      %5336 = vmatmul.f32.gmra.mxu0 %v5222
      %v5337 = vpop.f32.mrf.mxu0
      %v5338 = vadd.f32 0.0, %v5337
      %5339 = vmatmul.f32.gmra.mxu0 %v5225
      %v5340 = vpop.f32.mrf.mxu0
      %v5341 = vadd.f32 0.0, %v5340
      %5342 = vmatmul.f32.gmra.mxu0 %v5228
      %v5343 = vpop.f32.mrf.mxu0
      %v5344 = vadd.f32 0.0, %v5343
      %5345 = vmatmul.f32.gmra.mxu0 %v5231
      %v5346 = vpop.f32.mrf.mxu0
      %v5347 = vadd.f32 0.0, %v5346
      %5348 = vmatmul.f32.gmra.mxu0 %v5234
      %v5349 = vpop.f32.mrf.mxu0
      %v5350 = vadd.f32 0.0, %v5349
      %5351 = vmatmul.f32.gmra.mxu0 %v5237
      %v5352 = vpop.f32.mrf.mxu0
      %v5353 = vadd.f32 0.0, %v5352
      %5354 = vmatmul.f32.gmra.mxu0 %v5240
      %v5355 = vpop.f32.mrf.mxu0
      %v5356 = vadd.f32 0.0, %v5355
      %5357 = vmatmul.f32.gmra.mxu0 %v5243
      %v5358 = vpop.f32.mrf.mxu0
      %v5359 = vadd.f32 0.0, %v5358
      %5360 = vmatmul.f32.gmra.mxu0 %v5246
      %v5361 = vpop.f32.mrf.mxu0
      %v5362 = vadd.f32 0.0, %v5361
      %5363 = vmatmul.f32.gmra.mxu0 %v5249
      %v5364 = vpop.f32.mrf.mxu0
      %v5365 = vadd.f32 0.0, %v5364
      %5366 = vmatmul.f32.gmra.mxu0 %v5252
      %v5367 = vpop.f32.mrf.mxu0
      %v5368 = vadd.f32 0.0, %v5367
      %5369 = vmatmul.f32.gmra.mxu0 %v5255
      %v5370 = vpop.f32.mrf.mxu0
      %v5371 = vadd.f32 0.0, %v5370
      %5372 = vmatmul.f32.gmra.mxu0 %v5258
      %v5373 = vpop.f32.mrf.mxu0
      %v5374 = vadd.f32 0.0, %v5373
      %5375 = vmatmul.f32.gmra.mxu0 %v5261
      %v5376 = vpop.f32.mrf.mxu0
      %v5377 = vadd.f32 0.0, %v5376
      %5378 = vmatmul.f32.gmra.mxu0 %v5264
      %v5379 = vpop.f32.mrf.mxu0
      %v5380 = vadd.f32 0.0, %v5379
      %5381 = vmatmul.f32.gmra.mxu0 %v5267
      %v5382 = vpop.f32.mrf.mxu0
      %v5383 = vadd.f32 0.0, %v5382
      %5384 = vmatmul.f32.gmra.mxu0 %v5270
      %v5385 = vpop.f32.mrf.mxu0
      %v5386 = vadd.f32 0.0, %v5385
      %5387 = vmatmul.f32.gmra.mxu0 %v5273
      %v5388 = vpop.f32.mrf.mxu0
      %v5389 = vadd.f32 0.0, %v5388
      %5390 = vmatmul.f32.gmra.mxu0 %v5276
      %v5391 = vpop.f32.mrf.mxu0
      %v5392 = vadd.f32 0.0, %v5391
      %5393 = vmatmul.f32.gmra.mxu0 %v5279
      %v5394 = vpop.f32.mrf.mxu0
      %v5395 = vadd.f32 0.0, %v5394
      %5396 = vmatmul.f32.gmra.mxu0 %v5282
      %v5397 = vpop.f32.mrf.mxu0
      %v5398 = vadd.f32 0.0, %v5397
      %5399 = vmatmul.f32.gmra.mxu0 %v5285
      %v5400 = vpop.f32.mrf.mxu0
      %v5401 = vadd.f32 0.0, %v5400
      %5402 = vmatmul.f32.gmra.mxu0 %v5288
      %v5403 = vpop.f32.mrf.mxu0
      %v5404 = vadd.f32 0.0, %v5403
      %5405 = vdwg.mxu0
      %v5407 = vsel %vm4682, %v5095, 0
      %v5410 = vsel %vm4682, %v5096, 0
      %v5413 = vsel %vm4682, %v5097, 0
      %v5416 = vsel %vm4682, %v5098, 0
      %v5419 = vsel %vm4682, %v5099, 0
      %v5422 = vsel %vm4682, %v5100, 0
      %v5425 = vsel %vm4682, %v5101, 0
      %v5428 = vsel %vm4682, %v5102, 0
      %v5431 = vsel %vm4682, %v5103, 0
      %v5434 = vsel %vm4682, %v5104, 0
      %v5437 = vsel %vm4682, %v5105, 0
      %v5440 = vsel %vm4682, %v5106, 0
      %v5443 = vsel %vm4682, %v5107, 0
      %v5446 = vsel %vm4682, %v5108, 0
      %v5449 = vsel %vm4682, %v5109, 0
      %v5452 = vsel %vm4682, %v5110, 0
      %v5455 = vsel %vm4682, %v5111, 0
      %v5458 = vsel %vm4682, %v5112, 0
      %v5461 = vsel %vm4682, %v5113, 0
      %v5464 = vsel %vm4682, %v5114, 0
      %v5467 = vsel %vm4682, %v5115, 0
      %v5470 = vsel %vm4682, %v5116, 0
      %v5473 = vsel %vm4682, %v5117, 0
      %v5476 = vsel %vm4682, %v5118, 0
      %v5479 = vsel %vm4682, %v5119, 0
      %v5482 = vsel %vm4682, %v5120, 0
      %v5485 = vsel %vm4682, %v5121, 0
      %v5488 = vsel %vm4682, %v5122, 0
      %v5491 = vsel %vm4682, %v5123, 0
      %v5494 = vsel %vm4682, %v5124, 0
      %v5497 = vsel %vm4682, %v5125, 0
      %v5500 = vsel %vm4682, %v5126, 0
      %v5503 = vsel %vm768, %v5127, 0
      %5505 = vmatpush.msra.mxu0 0.0
      %5506 = vmatpush.msra.mxu0 0.0
      %5507 = vmatpush.msra.mxu0 0.0
      %5508 = vmatpush.msra.mxu0 0.0
      %5509 = vmatpush.msra.mxu0 0.0
      %5510 = vmatpush.msra.mxu0 0.0
      %5511 = vmatpush.msra.mxu0 0.0
      %5512 = vmatpush.msra.mxu0 0.0
      %5513 = vmatpush.msra.mxu0 0.0
      %5514 = vmatpush.msra.mxu0 0.0
      %5515 = vmatpush.msra.mxu0 0.0
      %5516 = vmatpush.msra.mxu0 0.0
      %5517 = vmatpush.msra.mxu0 0.0
      %5518 = vmatpush.msra.mxu0 0.0
      %5519 = vmatpush.msra.mxu0 0.0
      %5520 = vmatpush.msra.mxu0 %v5503
      %5521 = vmatmul.f32.gmra.mxu0 %v5407
      %v5522 = vpop.f32.mrf.mxu0
      %v5523 = vadd.f32 %v5311, %v5522
      %5524 = vmatmul.f32.gmra.mxu0 %v5410
      %v5525 = vpop.f32.mrf.mxu0
      %v5526 = vadd.f32 %v5314, %v5525
      %5527 = vmatmul.f32.gmra.mxu0 %v5413
      %v5528 = vpop.f32.mrf.mxu0
      %v5529 = vadd.f32 %v5317, %v5528
      %5530 = vmatmul.f32.gmra.mxu0 %v5416
      %v5531 = vpop.f32.mrf.mxu0
      %v5532 = vadd.f32 %v5320, %v5531
      %5533 = vmatmul.f32.gmra.mxu0 %v5419
      %v5534 = vpop.f32.mrf.mxu0
      %v5535 = vadd.f32 %v5323, %v5534
      %5536 = vmatmul.f32.gmra.mxu0 %v5422
      %v5537 = vpop.f32.mrf.mxu0
      %v5538 = vadd.f32 %v5326, %v5537
      %5539 = vmatmul.f32.gmra.mxu0 %v5425
      %v5540 = vpop.f32.mrf.mxu0
      %v5541 = vadd.f32 %v5329, %v5540
      %5542 = vmatmul.f32.gmra.mxu0 %v5428
      %v5543 = vpop.f32.mrf.mxu0
      %v5544 = vadd.f32 %v5332, %v5543
      %5545 = vmatmul.f32.gmra.mxu0 %v5431
      %v5546 = vpop.f32.mrf.mxu0
      %v5547 = vadd.f32 %v5335, %v5546
      %5548 = vmatmul.f32.gmra.mxu0 %v5434
      %v5549 = vpop.f32.mrf.mxu0
      %v5550 = vadd.f32 %v5338, %v5549
      %5551 = vmatmul.f32.gmra.mxu0 %v5437
      %v5552 = vpop.f32.mrf.mxu0
      %v5553 = vadd.f32 %v5341, %v5552
      %5554 = vmatmul.f32.gmra.mxu0 %v5440
      %v5555 = vpop.f32.mrf.mxu0
      %v5556 = vadd.f32 %v5344, %v5555
      %5557 = vmatmul.f32.gmra.mxu0 %v5443
      %v5558 = vpop.f32.mrf.mxu0
      %v5559 = vadd.f32 %v5347, %v5558
      %5560 = vmatmul.f32.gmra.mxu0 %v5446
      %v5561 = vpop.f32.mrf.mxu0
      %v5562 = vadd.f32 %v5350, %v5561
      %5563 = vmatmul.f32.gmra.mxu0 %v5449
      %v5564 = vpop.f32.mrf.mxu0
      %v5565 = vadd.f32 %v5353, %v5564
      %5566 = vmatmul.f32.gmra.mxu0 %v5452
      %v5567 = vpop.f32.mrf.mxu0
      %v5568 = vadd.f32 %v5356, %v5567
      %5569 = vmatmul.f32.gmra.mxu0 %v5455
      %v5570 = vpop.f32.mrf.mxu0
      %v5571 = vadd.f32 %v5359, %v5570
      %5572 = vmatmul.f32.gmra.mxu0 %v5458
      %v5573 = vpop.f32.mrf.mxu0
      %v5574 = vadd.f32 %v5362, %v5573
      %5575 = vmatmul.f32.gmra.mxu0 %v5461
      %v5576 = vpop.f32.mrf.mxu0
      %v5577 = vadd.f32 %v5365, %v5576
      %5578 = vmatmul.f32.gmra.mxu0 %v5464
      %v5579 = vpop.f32.mrf.mxu0
      %v5580 = vadd.f32 %v5368, %v5579
      %5581 = vmatmul.f32.gmra.mxu0 %v5467
      %v5582 = vpop.f32.mrf.mxu0
      %v5583 = vadd.f32 %v5371, %v5582
      %5584 = vmatmul.f32.gmra.mxu0 %v5470
      %v5585 = vpop.f32.mrf.mxu0
      %v5586 = vadd.f32 %v5374, %v5585
      %5587 = vmatmul.f32.gmra.mxu0 %v5473
      %v5588 = vpop.f32.mrf.mxu0
      %v5589 = vadd.f32 %v5377, %v5588
      %5590 = vmatmul.f32.gmra.mxu0 %v5476
      %v5591 = vpop.f32.mrf.mxu0
      %v5592 = vadd.f32 %v5380, %v5591
      %5593 = vmatmul.f32.gmra.mxu0 %v5479
      %v5594 = vpop.f32.mrf.mxu0
      %v5595 = vadd.f32 %v5383, %v5594
      %5596 = vmatmul.f32.gmra.mxu0 %v5482
      %v5597 = vpop.f32.mrf.mxu0
      %v5598 = vadd.f32 %v5386, %v5597
      %5599 = vmatmul.f32.gmra.mxu0 %v5485
      %v5600 = vpop.f32.mrf.mxu0
      %v5601 = vadd.f32 %v5389, %v5600
      %5602 = vmatmul.f32.gmra.mxu0 %v5488
      %v5603 = vpop.f32.mrf.mxu0
      %v5604 = vadd.f32 %v5392, %v5603
      %5605 = vmatmul.f32.gmra.mxu0 %v5491
      %v5606 = vpop.f32.mrf.mxu0
      %v5607 = vadd.f32 %v5395, %v5606
      %5608 = vmatmul.f32.gmra.mxu0 %v5494
      %v5609 = vpop.f32.mrf.mxu0
      %v5610 = vadd.f32 %v5398, %v5609
      %5611 = vmatmul.f32.gmra.mxu0 %v5497
      %v5612 = vpop.f32.mrf.mxu0
      %v5613 = vadd.f32 %v5401, %v5612
      %5614 = vmatmul.f32.gmra.mxu0 %v5500
      %v5615 = vpop.f32.mrf.mxu0
      %v5616 = vadd.f32 %v5404, %v5615
      %5617 = vdwg.mxu0
      %v5618 = vld [vmem:[#allocation4 + $0x9] sm:$0xff]
      %v5619 = vld [vmem:[#allocation4 + $0x11] sm:$0xff]
      %v5620 = vld [vmem:[#allocation4 + $0x19] sm:$0xff]
      %v5621 = vld [vmem:[#allocation4 + $0x21] sm:$0xff]
      %v5622 = vld [vmem:[#allocation4 + $0x29] sm:$0xff]
      %v5623 = vld [vmem:[#allocation4 + $0x31] sm:$0xff]
      %v5624 = vld [vmem:[#allocation4 + $0x39] sm:$0xff]
      %v5625 = vld [vmem:[#allocation4 + $0x41] sm:$0xff]
      %v5626 = vld [vmem:[#allocation4 + $0x49] sm:$0xff]
      %v5627 = vld [vmem:[#allocation4 + $0x51] sm:$0xff]
      %v5628 = vld [vmem:[#allocation4 + $0x59] sm:$0xff]
      %v5629 = vld [vmem:[#allocation4 + $0x61] sm:$0xff]
      %v5630 = vld [vmem:[#allocation4 + $0x69] sm:$0xff]
      %v5631 = vld [vmem:[#allocation4 + $0x71] sm:$0xff]
      %v5632 = vld [vmem:[#allocation4 + $0x79] sm:$0xff]
      %v5633 = vld [vmem:[#allocation4 + $0x81] sm:$0xff]
      %v5634 = vld [vmem:[#allocation4 + $0x89] sm:$0xff]
      %v5635 = vld [vmem:[#allocation4 + $0x91] sm:$0xff]
      %v5636 = vld [vmem:[#allocation4 + $0x99] sm:$0xff]
      %v5637 = vld [vmem:[#allocation4 + $0xa1] sm:$0xff]
      %v5638 = vld [vmem:[#allocation4 + $0xa9] sm:$0xff]
      %v5639 = vld [vmem:[#allocation4 + $0xb1] sm:$0xff]
      %v5640 = vld [vmem:[#allocation4 + $0xb9] sm:$0xff]
      %v5641 = vld [vmem:[#allocation4 + $0xc1] sm:$0xff]
      %v5642 = vld [vmem:[#allocation4 + $0xc9] sm:$0xff]
      %v5643 = vld [vmem:[#allocation4 + $0xd1] sm:$0xff]
      %v5644 = vld [vmem:[#allocation4 + $0xd9] sm:$0xff]
      %v5645 = vld [vmem:[#allocation4 + $0xe1] sm:$0xff]
      %v5646 = vld [vmem:[#allocation4 + $0xe9] sm:$0xff]
      %v5647 = vld [vmem:[#allocation4 + $0xf1] sm:$0xff]
      %v5648 = vld [vmem:[#allocation4 + $0xf9] sm:$0xff]
      %v5649 = vld [vmem:[#allocation4 + $0x101] sm:$0xff]
      %v5650 = vsel %vm3116, %v5618, 0.0
      %v5651 = vsel %vm3117, %v5619, 0.0
      %v5652 = vsel %vm3118, %v5620, 0.0
      %v5653 = vsel %vm3119, %v5621, 0.0
      %v5654 = vsel %vm3120, %v5622, 0.0
      %v5655 = vsel %vm3121, %v5623, 0.0
      %v5656 = vsel %vm3122, %v5624, 0.0
      %v5657 = vsel %vm3123, %v5625, 0.0
      %v5658 = vsel %vm3124, %v5626, 0.0
      %v5659 = vsel %vm3125, %v5627, 0.0
      %v5660 = vsel %vm3126, %v5628, 0.0
      %v5661 = vsel %vm3127, %v5629, 0.0
      %v5662 = vsel %vm3128, %v5630, 0.0
      %v5663 = vsel %vm3129, %v5631, 0.0
      %v5664 = vsel %vm3130, %v5632, 0.0
      %v5665 = vsel %vm3131, %v5633, 0.0
      %v5666 = vsel %vm3132, %v5634, 0.0
      %v5667 = vsel %vm3133, %v5635, 0.0
      %v5668 = vsel %vm3134, %v5636, 0.0
      %v5669 = vsel %vm3135, %v5637, 0.0
      %v5670 = vsel %vm3136, %v5638, 0.0
      %v5671 = vsel %vm3137, %v5639, 0.0
      %v5672 = vsel %vm3138, %v5640, 0.0
      %v5673 = vsel %vm3139, %v5641, 0.0
      %v5674 = vsel %vm3140, %v5642, 0.0
      %v5675 = vsel %vm3141, %v5643, 0.0
      %v5676 = vsel %vm3142, %v5644, 0.0
      %v5677 = vsel %vm3143, %v5645, 0.0
      %v5678 = vsel %vm3144, %v5646, 0.0
      %v5679 = vsel %vm3145, %v5647, 0.0
      %v5680 = vsel %vm3146, %v5648, 0.0
      %v5681 = vsel %vm3147, %v5649, 0.0
      %s5682 = scalar_lea.vmem %s14, 8
      %v5683 = vld [vmem:[%s5682] sm:$0xf]
      %v5685 = vsel %vm4682, %v5650, 0
      %v5688 = vsel %vm4682, %v5651, 0
      %v5691 = vsel %vm4682, %v5652, 0
      %v5694 = vsel %vm4682, %v5653, 0
      %v5697 = vsel %vm4682, %v5654, 0
      %v5700 = vsel %vm4682, %v5655, 0
      %v5703 = vsel %vm4682, %v5656, 0
      %v5706 = vsel %vm4682, %v5657, 0
      %v5709 = vsel %vm4682, %v5658, 0
      %v5712 = vsel %vm4682, %v5659, 0
      %v5715 = vsel %vm4682, %v5660, 0
      %v5718 = vsel %vm4682, %v5661, 0
      %v5721 = vsel %vm4682, %v5662, 0
      %v5724 = vsel %vm4682, %v5663, 0
      %v5727 = vsel %vm4682, %v5664, 0
      %v5730 = vsel %vm4682, %v5665, 0
      %v5733 = vsel %vm4682, %v5666, 0
      %v5736 = vsel %vm4682, %v5667, 0
      %v5739 = vsel %vm4682, %v5668, 0
      %v5742 = vsel %vm4682, %v5669, 0
      %v5745 = vsel %vm4682, %v5670, 0
      %v5748 = vsel %vm4682, %v5671, 0
      %v5751 = vsel %vm4682, %v5672, 0
      %v5754 = vsel %vm4682, %v5673, 0
      %v5757 = vsel %vm4682, %v5674, 0
      %v5760 = vsel %vm4682, %v5675, 0
      %v5763 = vsel %vm4682, %v5676, 0
      %v5766 = vsel %vm4682, %v5677, 0
      %v5769 = vsel %vm4682, %v5678, 0
      %v5772 = vsel %vm4682, %v5679, 0
      %v5775 = vsel %vm4682, %v5680, 0
      %v5778 = vsel %vm4682, %v5681, 0
      %v5781 = vsel %vm768, %v5683, 0
      %5783 = vmatpush.msra.mxu0 0.0
      %5784 = vmatpush.msra.mxu0 0.0
      %5785 = vmatpush.msra.mxu0 0.0
      %5786 = vmatpush.msra.mxu0 0.0
      %5787 = vmatpush.msra.mxu0 0.0
      %5788 = vmatpush.msra.mxu0 0.0
      %5789 = vmatpush.msra.mxu0 0.0
      %5790 = vmatpush.msra.mxu0 0.0
      %5791 = vmatpush.msra.mxu0 0.0
      %5792 = vmatpush.msra.mxu0 0.0
      %5793 = vmatpush.msra.mxu0 0.0
      %5794 = vmatpush.msra.mxu0 0.0
      %5795 = vmatpush.msra.mxu0 0.0
      %5796 = vmatpush.msra.mxu0 0.0
      %5797 = vmatpush.msra.mxu0 0.0
      %5798 = vmatpush.msra.mxu0 %v5781
      %5799 = vmatmul.f32.gmra.mxu0 %v5685
      %v5800 = vpop.f32.mrf.mxu0
      %v5801 = vadd.f32 0.0, %v5800
      %5802 = vmatmul.f32.gmra.mxu0 %v5688
      %v5803 = vpop.f32.mrf.mxu0
      %v5804 = vadd.f32 0.0, %v5803
      %5805 = vmatmul.f32.gmra.mxu0 %v5691
      %v5806 = vpop.f32.mrf.mxu0
      %v5807 = vadd.f32 0.0, %v5806
      %5808 = vmatmul.f32.gmra.mxu0 %v5694
      %v5809 = vpop.f32.mrf.mxu0
      %v5810 = vadd.f32 0.0, %v5809
      %5811 = vmatmul.f32.gmra.mxu0 %v5697
      %v5812 = vpop.f32.mrf.mxu0
      %v5813 = vadd.f32 0.0, %v5812
      %5814 = vmatmul.f32.gmra.mxu0 %v5700
      %v5815 = vpop.f32.mrf.mxu0
      %v5816 = vadd.f32 0.0, %v5815
      %5817 = vmatmul.f32.gmra.mxu0 %v5703
      %v5818 = vpop.f32.mrf.mxu0
      %v5819 = vadd.f32 0.0, %v5818
      %5820 = vmatmul.f32.gmra.mxu0 %v5706
      %v5821 = vpop.f32.mrf.mxu0
      %v5822 = vadd.f32 0.0, %v5821
      %5823 = vmatmul.f32.gmra.mxu0 %v5709
      %v5824 = vpop.f32.mrf.mxu0
      %v5825 = vadd.f32 0.0, %v5824
      %5826 = vmatmul.f32.gmra.mxu0 %v5712
      %v5827 = vpop.f32.mrf.mxu0
      %v5828 = vadd.f32 0.0, %v5827
      %5829 = vmatmul.f32.gmra.mxu0 %v5715
      %v5830 = vpop.f32.mrf.mxu0
      %v5831 = vadd.f32 0.0, %v5830
      %5832 = vmatmul.f32.gmra.mxu0 %v5718
      %v5833 = vpop.f32.mrf.mxu0
      %v5834 = vadd.f32 0.0, %v5833
      %5835 = vmatmul.f32.gmra.mxu0 %v5721
      %v5836 = vpop.f32.mrf.mxu0
      %v5837 = vadd.f32 0.0, %v5836
      %5838 = vmatmul.f32.gmra.mxu0 %v5724
      %v5839 = vpop.f32.mrf.mxu0
      %v5840 = vadd.f32 0.0, %v5839
      %5841 = vmatmul.f32.gmra.mxu0 %v5727
      %v5842 = vpop.f32.mrf.mxu0
      %v5843 = vadd.f32 0.0, %v5842
      %5844 = vmatmul.f32.gmra.mxu0 %v5730
      %v5845 = vpop.f32.mrf.mxu0
      %v5846 = vadd.f32 0.0, %v5845
      %5847 = vmatmul.f32.gmra.mxu0 %v5733
      %v5848 = vpop.f32.mrf.mxu0
      %v5849 = vadd.f32 0.0, %v5848
      %5850 = vmatmul.f32.gmra.mxu0 %v5736
      %v5851 = vpop.f32.mrf.mxu0
      %v5852 = vadd.f32 0.0, %v5851
      %5853 = vmatmul.f32.gmra.mxu0 %v5739
      %v5854 = vpop.f32.mrf.mxu0
      %v5855 = vadd.f32 0.0, %v5854
      %5856 = vmatmul.f32.gmra.mxu0 %v5742
      %v5857 = vpop.f32.mrf.mxu0
      %v5858 = vadd.f32 0.0, %v5857
      %5859 = vmatmul.f32.gmra.mxu0 %v5745
      %v5860 = vpop.f32.mrf.mxu0
      %v5861 = vadd.f32 0.0, %v5860
      %5862 = vmatmul.f32.gmra.mxu0 %v5748
      %v5863 = vpop.f32.mrf.mxu0
      %v5864 = vadd.f32 0.0, %v5863
      %5865 = vmatmul.f32.gmra.mxu0 %v5751
      %v5866 = vpop.f32.mrf.mxu0
      %v5867 = vadd.f32 0.0, %v5866
      %5868 = vmatmul.f32.gmra.mxu0 %v5754
      %v5869 = vpop.f32.mrf.mxu0
      %v5870 = vadd.f32 0.0, %v5869
      %5871 = vmatmul.f32.gmra.mxu0 %v5757
      %v5872 = vpop.f32.mrf.mxu0
      %v5873 = vadd.f32 0.0, %v5872
      %5874 = vmatmul.f32.gmra.mxu0 %v5760
      %v5875 = vpop.f32.mrf.mxu0
      %v5876 = vadd.f32 0.0, %v5875
      %5877 = vmatmul.f32.gmra.mxu0 %v5763
      %v5878 = vpop.f32.mrf.mxu0
      %v5879 = vadd.f32 0.0, %v5878
      %5880 = vmatmul.f32.gmra.mxu0 %v5766
      %v5881 = vpop.f32.mrf.mxu0
      %v5882 = vadd.f32 0.0, %v5881
      %5883 = vmatmul.f32.gmra.mxu0 %v5769
      %v5884 = vpop.f32.mrf.mxu0
      %v5885 = vadd.f32 0.0, %v5884
      %5886 = vmatmul.f32.gmra.mxu0 %v5772
      %v5887 = vpop.f32.mrf.mxu0
      %v5888 = vadd.f32 0.0, %v5887
      %5889 = vmatmul.f32.gmra.mxu0 %v5775
      %v5890 = vpop.f32.mrf.mxu0
      %v5891 = vadd.f32 0.0, %v5890
      %5892 = vmatmul.f32.gmra.mxu0 %v5778
      %v5893 = vpop.f32.mrf.mxu0
      %v5894 = vadd.f32 0.0, %v5893
      %5895 = vdwg.mxu0
      %v5896 = vadd.f32 %v5523, %v5801
      %v5897 = vadd.f32 %v5526, %v5804
      %v5898 = vadd.f32 %v5529, %v5807
      %v5899 = vadd.f32 %v5532, %v5810
      %v5900 = vadd.f32 %v5535, %v5813
      %v5901 = vadd.f32 %v5538, %v5816
      %v5902 = vadd.f32 %v5541, %v5819
      %v5903 = vadd.f32 %v5544, %v5822
      %v5904 = vadd.f32 %v5547, %v5825
      %v5905 = vadd.f32 %v5550, %v5828
      %v5906 = vadd.f32 %v5553, %v5831
      %v5907 = vadd.f32 %v5556, %v5834
      %v5908 = vadd.f32 %v5559, %v5837
      %v5909 = vadd.f32 %v5562, %v5840
      %v5910 = vadd.f32 %v5565, %v5843
      %v5911 = vadd.f32 %v5568, %v5846
      %v5912 = vadd.f32 %v5571, %v5849
      %v5913 = vadd.f32 %v5574, %v5852
      %v5914 = vadd.f32 %v5577, %v5855
      %v5915 = vadd.f32 %v5580, %v5858
      %v5916 = vadd.f32 %v5583, %v5861
      %v5917 = vadd.f32 %v5586, %v5864
      %v5918 = vadd.f32 %v5589, %v5867
      %v5919 = vadd.f32 %v5592, %v5870
      %v5920 = vadd.f32 %v5595, %v5873
      %v5921 = vadd.f32 %v5598, %v5876
      %v5922 = vadd.f32 %v5601, %v5879
      %v5923 = vadd.f32 %v5604, %v5882
      %v5924 = vadd.f32 %v5607, %v5885
      %v5925 = vadd.f32 %v5610, %v5888
      %v5926 = vadd.f32 %v5613, %v5891
      %v5927 = vadd.f32 %v5616, %v5894
      %v5928 = vld [vmem:[#allocation4 + $0x17] sm:$0xff]
      %v5929 = vld [vmem:[#allocation4 + $0x1f] sm:$0xff]
      %v5930 = vld [vmem:[#allocation4 + $0x27] sm:$0xff]
      %v5931 = vld [vmem:[#allocation4 + $0x2f] sm:$0xff]
      %v5932 = vld [vmem:[#allocation4 + $0x37] sm:$0xff]
      %v5933 = vld [vmem:[#allocation4 + $0x3f] sm:$0xff]
      %v5934 = vld [vmem:[#allocation4 + $0x47] sm:$0xff]
      %v5935 = vld [vmem:[#allocation4 + $0x4f] sm:$0xff]
      %v5936 = vld [vmem:[#allocation4 + $0x57] sm:$0xff]
      %v5937 = vld [vmem:[#allocation4 + $0x5f] sm:$0xff]
      %v5938 = vld [vmem:[#allocation4 + $0x67] sm:$0xff]
      %v5939 = vld [vmem:[#allocation4 + $0x6f] sm:$0xff]
      %v5940 = vld [vmem:[#allocation4 + $0x77] sm:$0xff]
      %v5941 = vld [vmem:[#allocation4 + $0x7f] sm:$0xff]
      %v5942 = vld [vmem:[#allocation4 + $0x87] sm:$0xff]
      %v5943 = vld [vmem:[#allocation4 + $0x8f] sm:$0xff]
      %v5944 = vld [vmem:[#allocation4 + $0x97] sm:$0xff]
      %v5945 = vld [vmem:[#allocation4 + $0x9f] sm:$0xff]
      %v5946 = vld [vmem:[#allocation4 + $0xa7] sm:$0xff]
      %v5947 = vld [vmem:[#allocation4 + $0xaf] sm:$0xff]
      %v5948 = vld [vmem:[#allocation4 + $0xb7] sm:$0xff]
      %v5949 = vld [vmem:[#allocation4 + $0xbf] sm:$0xff]
      %v5950 = vld [vmem:[#allocation4 + $0xc7] sm:$0xff]
      %v5951 = vld [vmem:[#allocation4 + $0xcf] sm:$0xff]
      %v5952 = vld [vmem:[#allocation4 + $0xd7] sm:$0xff]
      %v5953 = vld [vmem:[#allocation4 + $0xdf] sm:$0xff]
      %v5954 = vld [vmem:[#allocation4 + $0xe7] sm:$0xff]
      %v5955 = vld [vmem:[#allocation4 + $0xef] sm:$0xff]
      %v5956 = vld [vmem:[#allocation4 + $0xf7] sm:$0xff]
      %v5957 = vld [vmem:[#allocation4 + $0xff] sm:$0xff]
      %v5958 = vld [vmem:[#allocation4 + $0x107] sm:$0xff]
      %v5959 = vld [vmem:[#allocation4 + $0x10f] sm:$0xff]
      %v5960 = vsel %vm2924, %v5928, 0.0
      %v5961 = vsel %vm2925, %v5929, 0.0
      %v5962 = vsel %vm2926, %v5930, 0.0
      %v5963 = vsel %vm2927, %v5931, 0.0
      %v5964 = vsel %vm2928, %v5932, 0.0
      %v5965 = vsel %vm2929, %v5933, 0.0
      %v5966 = vsel %vm2930, %v5934, 0.0
      %v5967 = vsel %vm2931, %v5935, 0.0
      %v5968 = vsel %vm2932, %v5936, 0.0
      %v5969 = vsel %vm2933, %v5937, 0.0
      %v5970 = vsel %vm2934, %v5938, 0.0
      %v5971 = vsel %vm2935, %v5939, 0.0
      %v5972 = vsel %vm2936, %v5940, 0.0
      %v5973 = vsel %vm2937, %v5941, 0.0
      %v5974 = vsel %vm2938, %v5942, 0.0
      %v5975 = vsel %vm2939, %v5943, 0.0
      %v5976 = vsel %vm2940, %v5944, 0.0
      %v5977 = vsel %vm2941, %v5945, 0.0
      %v5978 = vsel %vm2942, %v5946, 0.0
      %v5979 = vsel %vm2943, %v5947, 0.0
      %v5980 = vsel %vm2944, %v5948, 0.0
      %v5981 = vsel %vm2945, %v5949, 0.0
      %v5982 = vsel %vm2946, %v5950, 0.0
      %v5983 = vsel %vm2947, %v5951, 0.0
      %v5984 = vsel %vm2948, %v5952, 0.0
      %v5985 = vsel %vm2949, %v5953, 0.0
      %v5986 = vsel %vm2950, %v5954, 0.0
      %v5987 = vsel %vm2951, %v5955, 0.0
      %v5988 = vsel %vm2952, %v5956, 0.0
      %v5989 = vsel %vm2953, %v5957, 0.0
      %v5990 = vsel %vm2954, %v5958, 0.0
      %v5991 = vsel %vm2955, %v5959, 0.0
      %s5992 = scalar_lea.vmem %s14, 12
      %v5993 = vld [vmem:[%s5992] sm:$0xf]
      %v5995 = vsel %vm4682, %v5960, 0
      %v5998 = vsel %vm4682, %v5961, 0
      %v6001 = vsel %vm4682, %v5962, 0
      %v6004 = vsel %vm4682, %v5963, 0
      %v6007 = vsel %vm4682, %v5964, 0
      %v6010 = vsel %vm4682, %v5965, 0
      %v6013 = vsel %vm4682, %v5966, 0
      %v6016 = vsel %vm4682, %v5967, 0
      %v6019 = vsel %vm4682, %v5968, 0
      %v6022 = vsel %vm4682, %v5969, 0
      %v6025 = vsel %vm4682, %v5970, 0
      %v6028 = vsel %vm4682, %v5971, 0
      %v6031 = vsel %vm4682, %v5972, 0
      %v6034 = vsel %vm4682, %v5973, 0
      %v6037 = vsel %vm4682, %v5974, 0
      %v6040 = vsel %vm4682, %v5975, 0
      %v6043 = vsel %vm4682, %v5976, 0
      %v6046 = vsel %vm4682, %v5977, 0
      %v6049 = vsel %vm4682, %v5978, 0
      %v6052 = vsel %vm4682, %v5979, 0
      %v6055 = vsel %vm4682, %v5980, 0
      %v6058 = vsel %vm4682, %v5981, 0
      %v6061 = vsel %vm4682, %v5982, 0
      %v6064 = vsel %vm4682, %v5983, 0
      %v6067 = vsel %vm4682, %v5984, 0
      %v6070 = vsel %vm4682, %v5985, 0
      %v6073 = vsel %vm4682, %v5986, 0
      %v6076 = vsel %vm4682, %v5987, 0
      %v6079 = vsel %vm4682, %v5988, 0
      %v6082 = vsel %vm4682, %v5989, 0
      %v6085 = vsel %vm4682, %v5990, 0
      %v6088 = vsel %vm4682, %v5991, 0
      %v6091 = vsel %vm768, %v5993, 0
      %6093 = vmatpush.msra.mxu0 0.0
      %6094 = vmatpush.msra.mxu0 0.0
      %6095 = vmatpush.msra.mxu0 0.0
      %6096 = vmatpush.msra.mxu0 0.0
      %6097 = vmatpush.msra.mxu0 0.0
      %6098 = vmatpush.msra.mxu0 0.0
      %6099 = vmatpush.msra.mxu0 0.0
      %6100 = vmatpush.msra.mxu0 0.0
      %6101 = vmatpush.msra.mxu0 0.0
      %6102 = vmatpush.msra.mxu0 0.0
      %6103 = vmatpush.msra.mxu0 0.0
      %6104 = vmatpush.msra.mxu0 0.0
      %6105 = vmatpush.msra.mxu0 0.0
      %6106 = vmatpush.msra.mxu0 0.0
      %6107 = vmatpush.msra.mxu0 0.0
      %6108 = vmatpush.msra.mxu0 %v6091
      %6109 = vmatmul.f32.gmra.mxu0 %v5995
      %v6110 = vpop.f32.mrf.mxu0
      %v6111 = vadd.f32 0.0, %v6110
      %6112 = vmatmul.f32.gmra.mxu0 %v5998
      %v6113 = vpop.f32.mrf.mxu0
      %v6114 = vadd.f32 0.0, %v6113
      %6115 = vmatmul.f32.gmra.mxu0 %v6001
      %v6116 = vpop.f32.mrf.mxu0
      %v6117 = vadd.f32 0.0, %v6116
      %6118 = vmatmul.f32.gmra.mxu0 %v6004
      %v6119 = vpop.f32.mrf.mxu0
      %v6120 = vadd.f32 0.0, %v6119
      %6121 = vmatmul.f32.gmra.mxu0 %v6007
      %v6122 = vpop.f32.mrf.mxu0
      %v6123 = vadd.f32 0.0, %v6122
      %6124 = vmatmul.f32.gmra.mxu0 %v6010
      %v6125 = vpop.f32.mrf.mxu0
      %v6126 = vadd.f32 0.0, %v6125
      %6127 = vmatmul.f32.gmra.mxu0 %v6013
      %v6128 = vpop.f32.mrf.mxu0
      %v6129 = vadd.f32 0.0, %v6128
      %6130 = vmatmul.f32.gmra.mxu0 %v6016
      %v6131 = vpop.f32.mrf.mxu0
      %v6132 = vadd.f32 0.0, %v6131
      %6133 = vmatmul.f32.gmra.mxu0 %v6019
      %v6134 = vpop.f32.mrf.mxu0
      %v6135 = vadd.f32 0.0, %v6134
      %6136 = vmatmul.f32.gmra.mxu0 %v6022
      %v6137 = vpop.f32.mrf.mxu0
      %v6138 = vadd.f32 0.0, %v6137
      %6139 = vmatmul.f32.gmra.mxu0 %v6025
      %v6140 = vpop.f32.mrf.mxu0
      %v6141 = vadd.f32 0.0, %v6140
      %6142 = vmatmul.f32.gmra.mxu0 %v6028
      %v6143 = vpop.f32.mrf.mxu0
      %v6144 = vadd.f32 0.0, %v6143
      %6145 = vmatmul.f32.gmra.mxu0 %v6031
      %v6146 = vpop.f32.mrf.mxu0
      %v6147 = vadd.f32 0.0, %v6146
      %6148 = vmatmul.f32.gmra.mxu0 %v6034
      %v6149 = vpop.f32.mrf.mxu0
      %v6150 = vadd.f32 0.0, %v6149
      %6151 = vmatmul.f32.gmra.mxu0 %v6037
      %v6152 = vpop.f32.mrf.mxu0
      %v6153 = vadd.f32 0.0, %v6152
      %6154 = vmatmul.f32.gmra.mxu0 %v6040
      %v6155 = vpop.f32.mrf.mxu0
      %v6156 = vadd.f32 0.0, %v6155
      %6157 = vmatmul.f32.gmra.mxu0 %v6043
      %v6158 = vpop.f32.mrf.mxu0
      %v6159 = vadd.f32 0.0, %v6158
      %6160 = vmatmul.f32.gmra.mxu0 %v6046
      %v6161 = vpop.f32.mrf.mxu0
      %v6162 = vadd.f32 0.0, %v6161
      %6163 = vmatmul.f32.gmra.mxu0 %v6049
      %v6164 = vpop.f32.mrf.mxu0
      %v6165 = vadd.f32 0.0, %v6164
      %6166 = vmatmul.f32.gmra.mxu0 %v6052
      %v6167 = vpop.f32.mrf.mxu0
      %v6168 = vadd.f32 0.0, %v6167
      %6169 = vmatmul.f32.gmra.mxu0 %v6055
      %v6170 = vpop.f32.mrf.mxu0
      %v6171 = vadd.f32 0.0, %v6170
      %6172 = vmatmul.f32.gmra.mxu0 %v6058
      %v6173 = vpop.f32.mrf.mxu0
      %v6174 = vadd.f32 0.0, %v6173
      %6175 = vmatmul.f32.gmra.mxu0 %v6061
      %v6176 = vpop.f32.mrf.mxu0
      %v6177 = vadd.f32 0.0, %v6176
      %6178 = vmatmul.f32.gmra.mxu0 %v6064
      %v6179 = vpop.f32.mrf.mxu0
      %v6180 = vadd.f32 0.0, %v6179
      %6181 = vmatmul.f32.gmra.mxu0 %v6067
      %v6182 = vpop.f32.mrf.mxu0
      %v6183 = vadd.f32 0.0, %v6182
      %6184 = vmatmul.f32.gmra.mxu0 %v6070
      %v6185 = vpop.f32.mrf.mxu0
      %v6186 = vadd.f32 0.0, %v6185
      %6187 = vmatmul.f32.gmra.mxu0 %v6073
      %v6188 = vpop.f32.mrf.mxu0
      %v6189 = vadd.f32 0.0, %v6188
      %6190 = vmatmul.f32.gmra.mxu0 %v6076
      %v6191 = vpop.f32.mrf.mxu0
      %v6192 = vadd.f32 0.0, %v6191
      %6193 = vmatmul.f32.gmra.mxu0 %v6079
      %v6194 = vpop.f32.mrf.mxu0
      %v6195 = vadd.f32 0.0, %v6194
      %6196 = vmatmul.f32.gmra.mxu0 %v6082
      %v6197 = vpop.f32.mrf.mxu0
      %v6198 = vadd.f32 0.0, %v6197
      %6199 = vmatmul.f32.gmra.mxu0 %v6085
      %v6200 = vpop.f32.mrf.mxu0
      %v6201 = vadd.f32 0.0, %v6200
      %6202 = vmatmul.f32.gmra.mxu0 %v6088
      %v6203 = vpop.f32.mrf.mxu0
      %v6204 = vadd.f32 0.0, %v6203
      %6205 = vdwg.mxu0
      %v6206 = vadd.f32 %v5896, %v6111
      %v6207 = vadd.f32 %v5897, %v6114
      %v6208 = vadd.f32 %v5898, %v6117
      %v6209 = vadd.f32 %v5899, %v6120
      %v6210 = vadd.f32 %v5900, %v6123
      %v6211 = vadd.f32 %v5901, %v6126
      %v6212 = vadd.f32 %v5902, %v6129
      %v6213 = vadd.f32 %v5903, %v6132
      %v6214 = vadd.f32 %v5904, %v6135
      %v6215 = vadd.f32 %v5905, %v6138
      %v6216 = vadd.f32 %v5906, %v6141
      %v6217 = vadd.f32 %v5907, %v6144
      %v6218 = vadd.f32 %v5908, %v6147
      %v6219 = vadd.f32 %v5909, %v6150
      %v6220 = vadd.f32 %v5910, %v6153
      %v6221 = vadd.f32 %v5911, %v6156
      %v6222 = vadd.f32 %v5912, %v6159
      %v6223 = vadd.f32 %v5913, %v6162
      %v6224 = vadd.f32 %v5914, %v6165
      %v6225 = vadd.f32 %v5915, %v6168
      %v6226 = vadd.f32 %v5916, %v6171
      %v6227 = vadd.f32 %v5917, %v6174
      %v6228 = vadd.f32 %v5918, %v6177
      %v6229 = vadd.f32 %v5919, %v6180
      %v6230 = vadd.f32 %v5920, %v6183
      %v6231 = vadd.f32 %v5921, %v6186
      %v6232 = vadd.f32 %v5922, %v6189
      %v6233 = vadd.f32 %v5923, %v6192
      %v6234 = vadd.f32 %v5924, %v6195
      %v6235 = vadd.f32 %v5925, %v6198
      %v6236 = vadd.f32 %v5926, %v6201
      %v6237 = vadd.f32 %v5927, %v6204
      %v6238 = vld [vmem:[#allocation4 + $0x18] sm:$0xff]
      %v6239 = vld [vmem:[#allocation4 + $0x20] sm:$0xff]
      %v6240 = vld [vmem:[#allocation4 + $0x28] sm:$0xff]
      %v6241 = vld [vmem:[#allocation4 + $0x30] sm:$0xff]
      %v6242 = vld [vmem:[#allocation4 + $0x38] sm:$0xff]
      %v6243 = vld [vmem:[#allocation4 + $0x40] sm:$0xff]
      %v6244 = vld [vmem:[#allocation4 + $0x48] sm:$0xff]
      %v6245 = vld [vmem:[#allocation4 + $0x50] sm:$0xff]
      %v6246 = vld [vmem:[#allocation4 + $0x58] sm:$0xff]
      %v6247 = vld [vmem:[#allocation4 + $0x60] sm:$0xff]
      %v6248 = vld [vmem:[#allocation4 + $0x68] sm:$0xff]
      %v6249 = vld [vmem:[#allocation4 + $0x70] sm:$0xff]
      %v6250 = vld [vmem:[#allocation4 + $0x78] sm:$0xff]
      %v6251 = vld [vmem:[#allocation4 + $0x80] sm:$0xff]
      %v6252 = vld [vmem:[#allocation4 + $0x88] sm:$0xff]
      %v6253 = vld [vmem:[#allocation4 + $0x90] sm:$0xff]
      %v6254 = vld [vmem:[#allocation4 + $0x98] sm:$0xff]
      %v6255 = vld [vmem:[#allocation4 + $0xa0] sm:$0xff]
      %v6256 = vld [vmem:[#allocation4 + $0xa8] sm:$0xff]
      %v6257 = vld [vmem:[#allocation4 + $0xb0] sm:$0xff]
      %v6258 = vld [vmem:[#allocation4 + $0xb8] sm:$0xff]
      %v6259 = vld [vmem:[#allocation4 + $0xc0] sm:$0xff]
      %v6260 = vld [vmem:[#allocation4 + $0xc8] sm:$0xff]
      %v6261 = vld [vmem:[#allocation4 + $0xd0] sm:$0xff]
      %v6262 = vld [vmem:[#allocation4 + $0xd8] sm:$0xff]
      %v6263 = vld [vmem:[#allocation4 + $0xe0] sm:$0xff]
      %v6264 = vld [vmem:[#allocation4 + $0xe8] sm:$0xff]
      %v6265 = vld [vmem:[#allocation4 + $0xf0] sm:$0xff]
      %v6266 = vld [vmem:[#allocation4 + $0xf8] sm:$0xff]
      %v6267 = vld [vmem:[#allocation4 + $0x100] sm:$0xff]
      %v6268 = vld [vmem:[#allocation4 + $0x108] sm:$0xff]
      %v6269 = vld [vmem:[#allocation4 + $0x110] sm:$0xff]
      %s6270 = scalar_lea.vmem %s14, 16
      %v6271 = vld [vmem:[%s6270] sm:$0xf]
      %v6273 = vsel %vm4682, %v6238, 0
      %v6276 = vsel %vm4682, %v6239, 0
      %v6279 = vsel %vm4682, %v6240, 0
      %v6282 = vsel %vm4682, %v6241, 0
      %v6285 = vsel %vm4682, %v6242, 0
      %v6288 = vsel %vm4682, %v6243, 0
      %v6291 = vsel %vm4682, %v6244, 0
      %v6294 = vsel %vm4682, %v6245, 0
      %v6297 = vsel %vm4682, %v6246, 0
      %v6300 = vsel %vm4682, %v6247, 0
      %v6303 = vsel %vm4682, %v6248, 0
      %v6306 = vsel %vm4682, %v6249, 0
      %v6309 = vsel %vm4682, %v6250, 0
      %v6312 = vsel %vm4682, %v6251, 0
      %v6315 = vsel %vm4682, %v6252, 0
      %v6318 = vsel %vm4682, %v6253, 0
      %v6321 = vsel %vm4682, %v6254, 0
      %v6324 = vsel %vm4682, %v6255, 0
      %v6327 = vsel %vm4682, %v6256, 0
      %v6330 = vsel %vm4682, %v6257, 0
      %v6333 = vsel %vm4682, %v6258, 0
      %v6336 = vsel %vm4682, %v6259, 0
      %v6339 = vsel %vm4682, %v6260, 0
      %v6342 = vsel %vm4682, %v6261, 0
      %v6345 = vsel %vm4682, %v6262, 0
      %v6348 = vsel %vm4682, %v6263, 0
      %v6351 = vsel %vm4682, %v6264, 0
      %v6354 = vsel %vm4682, %v6265, 0
      %v6357 = vsel %vm4682, %v6266, 0
      %v6360 = vsel %vm4682, %v6267, 0
      %v6363 = vsel %vm4682, %v6268, 0
      %v6366 = vsel %vm4682, %v6269, 0
      %v6369 = vsel %vm768, %v6271, 0
      %6371 = vmatpush.msra.mxu0 0.0
      %6372 = vmatpush.msra.mxu0 0.0
      %6373 = vmatpush.msra.mxu0 0.0
      %6374 = vmatpush.msra.mxu0 0.0
      %6375 = vmatpush.msra.mxu0 0.0
      %6376 = vmatpush.msra.mxu0 0.0
      %6377 = vmatpush.msra.mxu0 0.0
      %6378 = vmatpush.msra.mxu0 0.0
      %6379 = vmatpush.msra.mxu0 0.0
      %6380 = vmatpush.msra.mxu0 0.0
      %6381 = vmatpush.msra.mxu0 0.0
      %6382 = vmatpush.msra.mxu0 0.0
      %6383 = vmatpush.msra.mxu0 0.0
      %6384 = vmatpush.msra.mxu0 0.0
      %6385 = vmatpush.msra.mxu0 0.0
      %6386 = vmatpush.msra.mxu0 %v6369
      %6387 = vmatmul.f32.gmra.mxu0 %v6273
      %v6388 = vpop.f32.mrf.mxu0
      %v6389 = vadd.f32 0.0, %v6388
      %6390 = vmatmul.f32.gmra.mxu0 %v6276
      %v6391 = vpop.f32.mrf.mxu0
      %v6392 = vadd.f32 0.0, %v6391
      %6393 = vmatmul.f32.gmra.mxu0 %v6279
      %v6394 = vpop.f32.mrf.mxu0
      %v6395 = vadd.f32 0.0, %v6394
      %6396 = vmatmul.f32.gmra.mxu0 %v6282
      %v6397 = vpop.f32.mrf.mxu0
      %v6398 = vadd.f32 0.0, %v6397
      %6399 = vmatmul.f32.gmra.mxu0 %v6285
      %v6400 = vpop.f32.mrf.mxu0
      %v6401 = vadd.f32 0.0, %v6400
      %6402 = vmatmul.f32.gmra.mxu0 %v6288
      %v6403 = vpop.f32.mrf.mxu0
      %v6404 = vadd.f32 0.0, %v6403
      %6405 = vmatmul.f32.gmra.mxu0 %v6291
      %v6406 = vpop.f32.mrf.mxu0
      %v6407 = vadd.f32 0.0, %v6406
      %6408 = vmatmul.f32.gmra.mxu0 %v6294
      %v6409 = vpop.f32.mrf.mxu0
      %v6410 = vadd.f32 0.0, %v6409
      %6411 = vmatmul.f32.gmra.mxu0 %v6297
      %v6412 = vpop.f32.mrf.mxu0
      %v6413 = vadd.f32 0.0, %v6412
      %6414 = vmatmul.f32.gmra.mxu0 %v6300
      %v6415 = vpop.f32.mrf.mxu0
      %v6416 = vadd.f32 0.0, %v6415
      %6417 = vmatmul.f32.gmra.mxu0 %v6303
      %v6418 = vpop.f32.mrf.mxu0
      %v6419 = vadd.f32 0.0, %v6418
      %6420 = vmatmul.f32.gmra.mxu0 %v6306
      %v6421 = vpop.f32.mrf.mxu0
      %v6422 = vadd.f32 0.0, %v6421
      %6423 = vmatmul.f32.gmra.mxu0 %v6309
      %v6424 = vpop.f32.mrf.mxu0
      %v6425 = vadd.f32 0.0, %v6424
      %6426 = vmatmul.f32.gmra.mxu0 %v6312
      %v6427 = vpop.f32.mrf.mxu0
      %v6428 = vadd.f32 0.0, %v6427
      %6429 = vmatmul.f32.gmra.mxu0 %v6315
      %v6430 = vpop.f32.mrf.mxu0
      %v6431 = vadd.f32 0.0, %v6430
      %6432 = vmatmul.f32.gmra.mxu0 %v6318
      %v6433 = vpop.f32.mrf.mxu0
      %v6434 = vadd.f32 0.0, %v6433
      %6435 = vmatmul.f32.gmra.mxu0 %v6321
      %v6436 = vpop.f32.mrf.mxu0
      %v6437 = vadd.f32 0.0, %v6436
      %6438 = vmatmul.f32.gmra.mxu0 %v6324
      %v6439 = vpop.f32.mrf.mxu0
      %v6440 = vadd.f32 0.0, %v6439
      %6441 = vmatmul.f32.gmra.mxu0 %v6327
      %v6442 = vpop.f32.mrf.mxu0
      %v6443 = vadd.f32 0.0, %v6442
      %6444 = vmatmul.f32.gmra.mxu0 %v6330
      %v6445 = vpop.f32.mrf.mxu0
      %v6446 = vadd.f32 0.0, %v6445
      %6447 = vmatmul.f32.gmra.mxu0 %v6333
      %v6448 = vpop.f32.mrf.mxu0
      %v6449 = vadd.f32 0.0, %v6448
      %6450 = vmatmul.f32.gmra.mxu0 %v6336
      %v6451 = vpop.f32.mrf.mxu0
      %v6452 = vadd.f32 0.0, %v6451
      %6453 = vmatmul.f32.gmra.mxu0 %v6339
      %v6454 = vpop.f32.mrf.mxu0
      %v6455 = vadd.f32 0.0, %v6454
      %6456 = vmatmul.f32.gmra.mxu0 %v6342
      %v6457 = vpop.f32.mrf.mxu0
      %v6458 = vadd.f32 0.0, %v6457
      %6459 = vmatmul.f32.gmra.mxu0 %v6345
      %v6460 = vpop.f32.mrf.mxu0
      %v6461 = vadd.f32 0.0, %v6460
      %6462 = vmatmul.f32.gmra.mxu0 %v6348
      %v6463 = vpop.f32.mrf.mxu0
      %v6464 = vadd.f32 0.0, %v6463
      %6465 = vmatmul.f32.gmra.mxu0 %v6351
      %v6466 = vpop.f32.mrf.mxu0
      %v6467 = vadd.f32 0.0, %v6466
      %6468 = vmatmul.f32.gmra.mxu0 %v6354
      %v6469 = vpop.f32.mrf.mxu0
      %v6470 = vadd.f32 0.0, %v6469
      %6471 = vmatmul.f32.gmra.mxu0 %v6357
      %v6472 = vpop.f32.mrf.mxu0
      %v6473 = vadd.f32 0.0, %v6472
      %6474 = vmatmul.f32.gmra.mxu0 %v6360
      %v6475 = vpop.f32.mrf.mxu0
      %v6476 = vadd.f32 0.0, %v6475
      %6477 = vmatmul.f32.gmra.mxu0 %v6363
      %v6478 = vpop.f32.mrf.mxu0
      %v6479 = vadd.f32 0.0, %v6478
      %6480 = vmatmul.f32.gmra.mxu0 %v6366
      %v6481 = vpop.f32.mrf.mxu0
      %v6482 = vadd.f32 0.0, %v6481
      %6483 = vdwg.mxu0
      %v6484 = vadd.f32 %v6206, %v6389
      %v6485 = vadd.f32 %v6207, %v6392
      %v6486 = vadd.f32 %v6208, %v6395
      %v6487 = vadd.f32 %v6209, %v6398
      %v6488 = vadd.f32 %v6210, %v6401
      %v6489 = vadd.f32 %v6211, %v6404
      %v6490 = vadd.f32 %v6212, %v6407
      %v6491 = vadd.f32 %v6213, %v6410
      %v6492 = vadd.f32 %v6214, %v6413
      %v6493 = vadd.f32 %v6215, %v6416
      %v6494 = vadd.f32 %v6216, %v6419
      %v6495 = vadd.f32 %v6217, %v6422
      %v6496 = vadd.f32 %v6218, %v6425
      %v6497 = vadd.f32 %v6219, %v6428
      %v6498 = vadd.f32 %v6220, %v6431
      %v6499 = vadd.f32 %v6221, %v6434
      %v6500 = vadd.f32 %v6222, %v6437
      %v6501 = vadd.f32 %v6223, %v6440
      %v6502 = vadd.f32 %v6224, %v6443
      %v6503 = vadd.f32 %v6225, %v6446
      %v6504 = vadd.f32 %v6226, %v6449
      %v6505 = vadd.f32 %v6227, %v6452
      %v6506 = vadd.f32 %v6228, %v6455
      %v6507 = vadd.f32 %v6229, %v6458
      %v6508 = vadd.f32 %v6230, %v6461
      %v6509 = vadd.f32 %v6231, %v6464
      %v6510 = vadd.f32 %v6232, %v6467
      %v6511 = vadd.f32 %v6233, %v6470
      %v6512 = vadd.f32 %v6234, %v6473
      %v6513 = vadd.f32 %v6235, %v6476
      %v6514 = vadd.f32 %v6236, %v6479
      %v6515 = vadd.f32 %v6237, %v6482
      %v6516 = vld [vmem:[#allocation4 + $0x19] sm:$0xff]
      %v6517 = vld [vmem:[#allocation4 + $0x21] sm:$0xff]
      %v6518 = vld [vmem:[#allocation4 + $0x29] sm:$0xff]
      %v6519 = vld [vmem:[#allocation4 + $0x31] sm:$0xff]
      %v6520 = vld [vmem:[#allocation4 + $0x39] sm:$0xff]
      %v6521 = vld [vmem:[#allocation4 + $0x41] sm:$0xff]
      %v6522 = vld [vmem:[#allocation4 + $0x49] sm:$0xff]
      %v6523 = vld [vmem:[#allocation4 + $0x51] sm:$0xff]
      %v6524 = vld [vmem:[#allocation4 + $0x59] sm:$0xff]
      %v6525 = vld [vmem:[#allocation4 + $0x61] sm:$0xff]
      %v6526 = vld [vmem:[#allocation4 + $0x69] sm:$0xff]
      %v6527 = vld [vmem:[#allocation4 + $0x71] sm:$0xff]
      %v6528 = vld [vmem:[#allocation4 + $0x79] sm:$0xff]
      %v6529 = vld [vmem:[#allocation4 + $0x81] sm:$0xff]
      %v6530 = vld [vmem:[#allocation4 + $0x89] sm:$0xff]
      %v6531 = vld [vmem:[#allocation4 + $0x91] sm:$0xff]
      %v6532 = vld [vmem:[#allocation4 + $0x99] sm:$0xff]
      %v6533 = vld [vmem:[#allocation4 + $0xa1] sm:$0xff]
      %v6534 = vld [vmem:[#allocation4 + $0xa9] sm:$0xff]
      %v6535 = vld [vmem:[#allocation4 + $0xb1] sm:$0xff]
      %v6536 = vld [vmem:[#allocation4 + $0xb9] sm:$0xff]
      %v6537 = vld [vmem:[#allocation4 + $0xc1] sm:$0xff]
      %v6538 = vld [vmem:[#allocation4 + $0xc9] sm:$0xff]
      %v6539 = vld [vmem:[#allocation4 + $0xd1] sm:$0xff]
      %v6540 = vld [vmem:[#allocation4 + $0xd9] sm:$0xff]
      %v6541 = vld [vmem:[#allocation4 + $0xe1] sm:$0xff]
      %v6542 = vld [vmem:[#allocation4 + $0xe9] sm:$0xff]
      %v6543 = vld [vmem:[#allocation4 + $0xf1] sm:$0xff]
      %v6544 = vld [vmem:[#allocation4 + $0xf9] sm:$0xff]
      %v6545 = vld [vmem:[#allocation4 + $0x101] sm:$0xff]
      %v6546 = vld [vmem:[#allocation4 + $0x109] sm:$0xff]
      %v6547 = vld [vmem:[#allocation4 + $0x111] sm:$0xff]
      %v6548 = vsel %vm2028, %v6516, 0.0
      %v6549 = vsel %vm2029, %v6517, 0.0
      %v6550 = vsel %vm2030, %v6518, 0.0
      %v6551 = vsel %vm2031, %v6519, 0.0
      %v6552 = vsel %vm2032, %v6520, 0.0
      %v6553 = vsel %vm2033, %v6521, 0.0
      %v6554 = vsel %vm2034, %v6522, 0.0
      %v6555 = vsel %vm2035, %v6523, 0.0
      %v6556 = vsel %vm2036, %v6524, 0.0
      %v6557 = vsel %vm2037, %v6525, 0.0
      %v6558 = vsel %vm2038, %v6526, 0.0
      %v6559 = vsel %vm2039, %v6527, 0.0
      %v6560 = vsel %vm2040, %v6528, 0.0
      %v6561 = vsel %vm2041, %v6529, 0.0
      %v6562 = vsel %vm2042, %v6530, 0.0
      %v6563 = vsel %vm2043, %v6531, 0.0
      %v6564 = vsel %vm2044, %v6532, 0.0
      %v6565 = vsel %vm2045, %v6533, 0.0
      %v6566 = vsel %vm2046, %v6534, 0.0
      %v6567 = vsel %vm2047, %v6535, 0.0
      %v6568 = vsel %vm2048, %v6536, 0.0
      %v6569 = vsel %vm2049, %v6537, 0.0
      %v6570 = vsel %vm2050, %v6538, 0.0
      %v6571 = vsel %vm2051, %v6539, 0.0
      %v6572 = vsel %vm2052, %v6540, 0.0
      %v6573 = vsel %vm2053, %v6541, 0.0
      %v6574 = vsel %vm2054, %v6542, 0.0
      %v6575 = vsel %vm2055, %v6543, 0.0
      %v6576 = vsel %vm2056, %v6544, 0.0
      %v6577 = vsel %vm2057, %v6545, 0.0
      %v6578 = vsel %vm2058, %v6546, 0.0
      %v6579 = vsel %vm2059, %v6547, 0.0
      %s6580 = scalar_lea.vmem %s14, 20
      %v6581 = vld [vmem:[%s6580] sm:$0xf]
      %v6583 = vsel %vm4682, %v6548, 0
      %v6586 = vsel %vm4682, %v6549, 0
      %v6589 = vsel %vm4682, %v6550, 0
      %v6592 = vsel %vm4682, %v6551, 0
      %v6595 = vsel %vm4682, %v6552, 0
      %v6598 = vsel %vm4682, %v6553, 0
      %v6601 = vsel %vm4682, %v6554, 0
      %v6604 = vsel %vm4682, %v6555, 0
      %v6607 = vsel %vm4682, %v6556, 0
      %v6610 = vsel %vm4682, %v6557, 0
      %v6613 = vsel %vm4682, %v6558, 0
      %v6616 = vsel %vm4682, %v6559, 0
      %v6619 = vsel %vm4682, %v6560, 0
      %v6622 = vsel %vm4682, %v6561, 0
      %v6625 = vsel %vm4682, %v6562, 0
      %v6628 = vsel %vm4682, %v6563, 0
      %v6631 = vsel %vm4682, %v6564, 0
      %v6634 = vsel %vm4682, %v6565, 0
      %v6637 = vsel %vm4682, %v6566, 0
      %v6640 = vsel %vm4682, %v6567, 0
      %v6643 = vsel %vm4682, %v6568, 0
      %v6646 = vsel %vm4682, %v6569, 0
      %v6649 = vsel %vm4682, %v6570, 0
      %v6652 = vsel %vm4682, %v6571, 0
      %v6655 = vsel %vm4682, %v6572, 0
      %v6658 = vsel %vm4682, %v6573, 0
      %v6661 = vsel %vm4682, %v6574, 0
      %v6664 = vsel %vm4682, %v6575, 0
      %v6667 = vsel %vm4682, %v6576, 0
      %v6670 = vsel %vm4682, %v6577, 0
      %v6673 = vsel %vm4682, %v6578, 0
      %v6676 = vsel %vm4682, %v6579, 0
      %v6679 = vsel %vm768, %v6581, 0
      %6681 = vmatpush.msra.mxu0 0.0
      %6682 = vmatpush.msra.mxu0 0.0
      %6683 = vmatpush.msra.mxu0 0.0
      %6684 = vmatpush.msra.mxu0 0.0
      %6685 = vmatpush.msra.mxu0 0.0
      %6686 = vmatpush.msra.mxu0 0.0
      %6687 = vmatpush.msra.mxu0 0.0
      %6688 = vmatpush.msra.mxu0 0.0
      %6689 = vmatpush.msra.mxu0 0.0
      %6690 = vmatpush.msra.mxu0 0.0
      %6691 = vmatpush.msra.mxu0 0.0
      %6692 = vmatpush.msra.mxu0 0.0
      %6693 = vmatpush.msra.mxu0 0.0
      %6694 = vmatpush.msra.mxu0 0.0
      %6695 = vmatpush.msra.mxu0 0.0
      %6696 = vmatpush.msra.mxu0 %v6679
      %6697 = vmatmul.f32.gmra.mxu0 %v6583
      %v6698 = vpop.f32.mrf.mxu0
      %v6699 = vadd.f32 0.0, %v6698
      %6700 = vmatmul.f32.gmra.mxu0 %v6586
      %v6701 = vpop.f32.mrf.mxu0
      %v6702 = vadd.f32 0.0, %v6701
      %6703 = vmatmul.f32.gmra.mxu0 %v6589
      %v6704 = vpop.f32.mrf.mxu0
      %v6705 = vadd.f32 0.0, %v6704
      %6706 = vmatmul.f32.gmra.mxu0 %v6592
      %v6707 = vpop.f32.mrf.mxu0
      %v6708 = vadd.f32 0.0, %v6707
      %6709 = vmatmul.f32.gmra.mxu0 %v6595
      %v6710 = vpop.f32.mrf.mxu0
      %v6711 = vadd.f32 0.0, %v6710
      %6712 = vmatmul.f32.gmra.mxu0 %v6598
      %v6713 = vpop.f32.mrf.mxu0
      %v6714 = vadd.f32 0.0, %v6713
      %6715 = vmatmul.f32.gmra.mxu0 %v6601
      %v6716 = vpop.f32.mrf.mxu0
      %v6717 = vadd.f32 0.0, %v6716
      %6718 = vmatmul.f32.gmra.mxu0 %v6604
      %v6719 = vpop.f32.mrf.mxu0
      %v6720 = vadd.f32 0.0, %v6719
      %6721 = vmatmul.f32.gmra.mxu0 %v6607
      %v6722 = vpop.f32.mrf.mxu0
      %v6723 = vadd.f32 0.0, %v6722
      %6724 = vmatmul.f32.gmra.mxu0 %v6610
      %v6725 = vpop.f32.mrf.mxu0
      %v6726 = vadd.f32 0.0, %v6725
      %6727 = vmatmul.f32.gmra.mxu0 %v6613
      %v6728 = vpop.f32.mrf.mxu0
      %v6729 = vadd.f32 0.0, %v6728
      %6730 = vmatmul.f32.gmra.mxu0 %v6616
      %v6731 = vpop.f32.mrf.mxu0
      %v6732 = vadd.f32 0.0, %v6731
      %6733 = vmatmul.f32.gmra.mxu0 %v6619
      %v6734 = vpop.f32.mrf.mxu0
      %v6735 = vadd.f32 0.0, %v6734
      %6736 = vmatmul.f32.gmra.mxu0 %v6622
      %v6737 = vpop.f32.mrf.mxu0
      %v6738 = vadd.f32 0.0, %v6737
      %6739 = vmatmul.f32.gmra.mxu0 %v6625
      %v6740 = vpop.f32.mrf.mxu0
      %v6741 = vadd.f32 0.0, %v6740
      %6742 = vmatmul.f32.gmra.mxu0 %v6628
      %v6743 = vpop.f32.mrf.mxu0
      %v6744 = vadd.f32 0.0, %v6743
      %6745 = vmatmul.f32.gmra.mxu0 %v6631
      %v6746 = vpop.f32.mrf.mxu0
      %v6747 = vadd.f32 0.0, %v6746
      %6748 = vmatmul.f32.gmra.mxu0 %v6634
      %v6749 = vpop.f32.mrf.mxu0
      %v6750 = vadd.f32 0.0, %v6749
      %6751 = vmatmul.f32.gmra.mxu0 %v6637
      %v6752 = vpop.f32.mrf.mxu0
      %v6753 = vadd.f32 0.0, %v6752
      %6754 = vmatmul.f32.gmra.mxu0 %v6640
      %v6755 = vpop.f32.mrf.mxu0
      %v6756 = vadd.f32 0.0, %v6755
      %6757 = vmatmul.f32.gmra.mxu0 %v6643
      %v6758 = vpop.f32.mrf.mxu0
      %v6759 = vadd.f32 0.0, %v6758
      %6760 = vmatmul.f32.gmra.mxu0 %v6646
      %v6761 = vpop.f32.mrf.mxu0
      %v6762 = vadd.f32 0.0, %v6761
      %6763 = vmatmul.f32.gmra.mxu0 %v6649
      %v6764 = vpop.f32.mrf.mxu0
      %v6765 = vadd.f32 0.0, %v6764
      %6766 = vmatmul.f32.gmra.mxu0 %v6652
      %v6767 = vpop.f32.mrf.mxu0
      %v6768 = vadd.f32 0.0, %v6767
      %6769 = vmatmul.f32.gmra.mxu0 %v6655
      %v6770 = vpop.f32.mrf.mxu0
      %v6771 = vadd.f32 0.0, %v6770
      %6772 = vmatmul.f32.gmra.mxu0 %v6658
      %v6773 = vpop.f32.mrf.mxu0
      %v6774 = vadd.f32 0.0, %v6773
      %6775 = vmatmul.f32.gmra.mxu0 %v6661
      %v6776 = vpop.f32.mrf.mxu0
      %v6777 = vadd.f32 0.0, %v6776
      %6778 = vmatmul.f32.gmra.mxu0 %v6664
      %v6779 = vpop.f32.mrf.mxu0
      %v6780 = vadd.f32 0.0, %v6779
      %6781 = vmatmul.f32.gmra.mxu0 %v6667
      %v6782 = vpop.f32.mrf.mxu0
      %v6783 = vadd.f32 0.0, %v6782
      %6784 = vmatmul.f32.gmra.mxu0 %v6670
      %v6785 = vpop.f32.mrf.mxu0
      %v6786 = vadd.f32 0.0, %v6785
      %6787 = vmatmul.f32.gmra.mxu0 %v6673
      %v6788 = vpop.f32.mrf.mxu0
      %v6789 = vadd.f32 0.0, %v6788
      %6790 = vmatmul.f32.gmra.mxu0 %v6676
      %v6791 = vpop.f32.mrf.mxu0
      %v6792 = vadd.f32 0.0, %v6791
      %6793 = vdwg.mxu0
      %v6794 = vadd.f32 %v6484, %v6699
      %v6795 = vadd.f32 %v6485, %v6702
      %v6796 = vadd.f32 %v6486, %v6705
      %v6797 = vadd.f32 %v6487, %v6708
      %v6798 = vadd.f32 %v6488, %v6711
      %v6799 = vadd.f32 %v6489, %v6714
      %v6800 = vadd.f32 %v6490, %v6717
      %v6801 = vadd.f32 %v6491, %v6720
      %v6802 = vadd.f32 %v6492, %v6723
      %v6803 = vadd.f32 %v6493, %v6726
      %v6804 = vadd.f32 %v6494, %v6729
      %v6805 = vadd.f32 %v6495, %v6732
      %v6806 = vadd.f32 %v6496, %v6735
      %v6807 = vadd.f32 %v6497, %v6738
      %v6808 = vadd.f32 %v6498, %v6741
      %v6809 = vadd.f32 %v6499, %v6744
      %v6810 = vadd.f32 %v6500, %v6747
      %v6811 = vadd.f32 %v6501, %v6750
      %v6812 = vadd.f32 %v6502, %v6753
      %v6813 = vadd.f32 %v6503, %v6756
      %v6814 = vadd.f32 %v6504, %v6759
      %v6815 = vadd.f32 %v6505, %v6762
      %v6816 = vadd.f32 %v6506, %v6765
      %v6817 = vadd.f32 %v6507, %v6768
      %v6818 = vadd.f32 %v6508, %v6771
      %v6819 = vadd.f32 %v6509, %v6774
      %v6820 = vadd.f32 %v6510, %v6777
      %v6821 = vadd.f32 %v6511, %v6780
      %v6822 = vadd.f32 %v6512, %v6783
      %v6823 = vadd.f32 %v6513, %v6786
      %v6824 = vadd.f32 %v6514, %v6789
      %v6825 = vadd.f32 %v6515, %v6792
      %v6826 = vld [vmem:[#allocation4 + $0x27] sm:$0xff]
      %v6827 = vld [vmem:[#allocation4 + $0x2f] sm:$0xff]
      %v6828 = vld [vmem:[#allocation4 + $0x37] sm:$0xff]
      %v6829 = vld [vmem:[#allocation4 + $0x3f] sm:$0xff]
      %v6830 = vld [vmem:[#allocation4 + $0x47] sm:$0xff]
      %v6831 = vld [vmem:[#allocation4 + $0x4f] sm:$0xff]
      %v6832 = vld [vmem:[#allocation4 + $0x57] sm:$0xff]
      %v6833 = vld [vmem:[#allocation4 + $0x5f] sm:$0xff]
      %v6834 = vld [vmem:[#allocation4 + $0x67] sm:$0xff]
      %v6835 = vld [vmem:[#allocation4 + $0x6f] sm:$0xff]
      %v6836 = vld [vmem:[#allocation4 + $0x77] sm:$0xff]
      %v6837 = vld [vmem:[#allocation4 + $0x7f] sm:$0xff]
      %v6838 = vld [vmem:[#allocation4 + $0x87] sm:$0xff]
      %v6839 = vld [vmem:[#allocation4 + $0x8f] sm:$0xff]
      %v6840 = vld [vmem:[#allocation4 + $0x97] sm:$0xff]
      %v6841 = vld [vmem:[#allocation4 + $0x9f] sm:$0xff]
      %v6842 = vld [vmem:[#allocation4 + $0xa7] sm:$0xff]
      %v6843 = vld [vmem:[#allocation4 + $0xaf] sm:$0xff]
      %v6844 = vld [vmem:[#allocation4 + $0xb7] sm:$0xff]
      %v6845 = vld [vmem:[#allocation4 + $0xbf] sm:$0xff]
      %v6846 = vld [vmem:[#allocation4 + $0xc7] sm:$0xff]
      %v6847 = vld [vmem:[#allocation4 + $0xcf] sm:$0xff]
      %v6848 = vld [vmem:[#allocation4 + $0xd7] sm:$0xff]
      %v6849 = vld [vmem:[#allocation4 + $0xdf] sm:$0xff]
      %v6850 = vld [vmem:[#allocation4 + $0xe7] sm:$0xff]
      %v6851 = vld [vmem:[#allocation4 + $0xef] sm:$0xff]
      %v6852 = vld [vmem:[#allocation4 + $0xf7] sm:$0xff]
      %v6853 = vld [vmem:[#allocation4 + $0xff] sm:$0xff]
      %v6854 = vld [vmem:[#allocation4 + $0x107] sm:$0xff]
      %v6855 = vld [vmem:[#allocation4 + $0x10f] sm:$0xff]
      %v6856 = vld [vmem:[#allocation4 + $0x117] sm:$0xff]
      %v6857 = vld [vmem:[#allocation4 + $0x11f] sm:$0xff]
      %v6858 = vsel %vm3252, %v6826, 0.0
      %v6859 = vsel %vm3253, %v6827, 0.0
      %v6860 = vsel %vm3254, %v6828, 0.0
      %v6861 = vsel %vm3255, %v6829, 0.0
      %v6862 = vsel %vm3256, %v6830, 0.0
      %v6863 = vsel %vm3257, %v6831, 0.0
      %v6864 = vsel %vm3258, %v6832, 0.0
      %v6865 = vsel %vm3259, %v6833, 0.0
      %v6866 = vsel %vm3260, %v6834, 0.0
      %v6867 = vsel %vm3261, %v6835, 0.0
      %v6868 = vsel %vm3262, %v6836, 0.0
      %v6869 = vsel %vm3263, %v6837, 0.0
      %v6870 = vsel %vm3264, %v6838, 0.0
      %v6871 = vsel %vm3265, %v6839, 0.0
      %v6872 = vsel %vm3266, %v6840, 0.0
      %v6873 = vsel %vm3267, %v6841, 0.0
      %v6874 = vsel %vm3268, %v6842, 0.0
      %v6875 = vsel %vm3269, %v6843, 0.0
      %v6876 = vsel %vm3270, %v6844, 0.0
      %v6877 = vsel %vm3271, %v6845, 0.0
      %v6878 = vsel %vm3272, %v6846, 0.0
      %v6879 = vsel %vm3273, %v6847, 0.0
      %v6880 = vsel %vm3274, %v6848, 0.0
      %v6881 = vsel %vm3275, %v6849, 0.0
      %v6882 = vsel %vm3276, %v6850, 0.0
      %v6883 = vsel %vm3277, %v6851, 0.0
      %v6884 = vsel %vm3278, %v6852, 0.0
      %v6885 = vsel %vm3279, %v6853, 0.0
      %v6886 = vsel %vm3280, %v6854, 0.0
      %v6887 = vsel %vm3281, %v6855, 0.0
      %v6888 = vsel %vm3282, %v6856, 0.0
      %v6889 = vsel %vm3283, %v6857, 0.0
      %s6890 = scalar_lea.vmem %s14, 24
      %v6891 = vld [vmem:[%s6890] sm:$0xf]
      %v6893 = vsel %vm4682, %v6858, 0
      %v6896 = vsel %vm4682, %v6859, 0
      %v6899 = vsel %vm4682, %v6860, 0
      %v6902 = vsel %vm4682, %v6861, 0
      %v6905 = vsel %vm4682, %v6862, 0
      %v6908 = vsel %vm4682, %v6863, 0
      %v6911 = vsel %vm4682, %v6864, 0
      %v6914 = vsel %vm4682, %v6865, 0
      %v6917 = vsel %vm4682, %v6866, 0
      %v6920 = vsel %vm4682, %v6867, 0
      %v6923 = vsel %vm4682, %v6868, 0
      %v6926 = vsel %vm4682, %v6869, 0
      %v6929 = vsel %vm4682, %v6870, 0
      %v6932 = vsel %vm4682, %v6871, 0
      %v6935 = vsel %vm4682, %v6872, 0
      %v6938 = vsel %vm4682, %v6873, 0
      %v6941 = vsel %vm4682, %v6874, 0
      %v6944 = vsel %vm4682, %v6875, 0
      %v6947 = vsel %vm4682, %v6876, 0
      %v6950 = vsel %vm4682, %v6877, 0
      %v6953 = vsel %vm4682, %v6878, 0
      %v6956 = vsel %vm4682, %v6879, 0
      %v6959 = vsel %vm4682, %v6880, 0
      %v6962 = vsel %vm4682, %v6881, 0
      %v6965 = vsel %vm4682, %v6882, 0
      %v6968 = vsel %vm4682, %v6883, 0
      %v6971 = vsel %vm4682, %v6884, 0
      %v6974 = vsel %vm4682, %v6885, 0
      %v6977 = vsel %vm4682, %v6886, 0
      %v6980 = vsel %vm4682, %v6887, 0
      %v6983 = vsel %vm4682, %v6888, 0
      %v6986 = vsel %vm4682, %v6889, 0
      %v6989 = vsel %vm768, %v6891, 0
      %6991 = vmatpush.msra.mxu0 0.0
      %6992 = vmatpush.msra.mxu0 0.0
      %6993 = vmatpush.msra.mxu0 0.0
      %6994 = vmatpush.msra.mxu0 0.0
      %6995 = vmatpush.msra.mxu0 0.0
      %6996 = vmatpush.msra.mxu0 0.0
      %6997 = vmatpush.msra.mxu0 0.0
      %6998 = vmatpush.msra.mxu0 0.0
      %6999 = vmatpush.msra.mxu0 0.0
      %7000 = vmatpush.msra.mxu0 0.0
      %7001 = vmatpush.msra.mxu0 0.0
      %7002 = vmatpush.msra.mxu0 0.0
      %7003 = vmatpush.msra.mxu0 0.0
      %7004 = vmatpush.msra.mxu0 0.0
      %7005 = vmatpush.msra.mxu0 0.0
      %7006 = vmatpush.msra.mxu0 %v6989
      %7007 = vmatmul.f32.gmra.mxu0 %v6893
      %v7008 = vpop.f32.mrf.mxu0
      %v7009 = vadd.f32 0.0, %v7008
      %7010 = vmatmul.f32.gmra.mxu0 %v6896
      %v7011 = vpop.f32.mrf.mxu0
      %v7012 = vadd.f32 0.0, %v7011
      %7013 = vmatmul.f32.gmra.mxu0 %v6899
      %v7014 = vpop.f32.mrf.mxu0
      %v7015 = vadd.f32 0.0, %v7014
      %7016 = vmatmul.f32.gmra.mxu0 %v6902
      %v7017 = vpop.f32.mrf.mxu0
      %v7018 = vadd.f32 0.0, %v7017
      %7019 = vmatmul.f32.gmra.mxu0 %v6905
      %v7020 = vpop.f32.mrf.mxu0
      %v7021 = vadd.f32 0.0, %v7020
      %7022 = vmatmul.f32.gmra.mxu0 %v6908
      %v7023 = vpop.f32.mrf.mxu0
      %v7024 = vadd.f32 0.0, %v7023
      %7025 = vmatmul.f32.gmra.mxu0 %v6911
      %v7026 = vpop.f32.mrf.mxu0
      %v7027 = vadd.f32 0.0, %v7026
      %7028 = vmatmul.f32.gmra.mxu0 %v6914
      %v7029 = vpop.f32.mrf.mxu0
      %v7030 = vadd.f32 0.0, %v7029
      %7031 = vmatmul.f32.gmra.mxu0 %v6917
      %v7032 = vpop.f32.mrf.mxu0
      %v7033 = vadd.f32 0.0, %v7032
      %7034 = vmatmul.f32.gmra.mxu0 %v6920
      %v7035 = vpop.f32.mrf.mxu0
      %v7036 = vadd.f32 0.0, %v7035
      %7037 = vmatmul.f32.gmra.mxu0 %v6923
      %v7038 = vpop.f32.mrf.mxu0
      %v7039 = vadd.f32 0.0, %v7038
      %7040 = vmatmul.f32.gmra.mxu0 %v6926
      %v7041 = vpop.f32.mrf.mxu0
      %v7042 = vadd.f32 0.0, %v7041
      %7043 = vmatmul.f32.gmra.mxu0 %v6929
      %v7044 = vpop.f32.mrf.mxu0
      %v7045 = vadd.f32 0.0, %v7044
      %7046 = vmatmul.f32.gmra.mxu0 %v6932
      %v7047 = vpop.f32.mrf.mxu0
      %v7048 = vadd.f32 0.0, %v7047
      %7049 = vmatmul.f32.gmra.mxu0 %v6935
      %v7050 = vpop.f32.mrf.mxu0
      %v7051 = vadd.f32 0.0, %v7050
      %7052 = vmatmul.f32.gmra.mxu0 %v6938
      %v7053 = vpop.f32.mrf.mxu0
      %v7054 = vadd.f32 0.0, %v7053
      %7055 = vmatmul.f32.gmra.mxu0 %v6941
      %v7056 = vpop.f32.mrf.mxu0
      %v7057 = vadd.f32 0.0, %v7056
      %7058 = vmatmul.f32.gmra.mxu0 %v6944
      %v7059 = vpop.f32.mrf.mxu0
      %v7060 = vadd.f32 0.0, %v7059
      %7061 = vmatmul.f32.gmra.mxu0 %v6947
      %v7062 = vpop.f32.mrf.mxu0
      %v7063 = vadd.f32 0.0, %v7062
      %7064 = vmatmul.f32.gmra.mxu0 %v6950
      %v7065 = vpop.f32.mrf.mxu0
      %v7066 = vadd.f32 0.0, %v7065
      %7067 = vmatmul.f32.gmra.mxu0 %v6953
      %v7068 = vpop.f32.mrf.mxu0
      %v7069 = vadd.f32 0.0, %v7068
      %7070 = vmatmul.f32.gmra.mxu0 %v6956
      %v7071 = vpop.f32.mrf.mxu0
      %v7072 = vadd.f32 0.0, %v7071
      %7073 = vmatmul.f32.gmra.mxu0 %v6959
      %v7074 = vpop.f32.mrf.mxu0
      %v7075 = vadd.f32 0.0, %v7074
      %7076 = vmatmul.f32.gmra.mxu0 %v6962
      %v7077 = vpop.f32.mrf.mxu0
      %v7078 = vadd.f32 0.0, %v7077
      %7079 = vmatmul.f32.gmra.mxu0 %v6965
      %v7080 = vpop.f32.mrf.mxu0
      %v7081 = vadd.f32 0.0, %v7080
      %7082 = vmatmul.f32.gmra.mxu0 %v6968
      %v7083 = vpop.f32.mrf.mxu0
      %v7084 = vadd.f32 0.0, %v7083
      %7085 = vmatmul.f32.gmra.mxu0 %v6971
      %v7086 = vpop.f32.mrf.mxu0
      %v7087 = vadd.f32 0.0, %v7086
      %7088 = vmatmul.f32.gmra.mxu0 %v6974
      %v7089 = vpop.f32.mrf.mxu0
      %v7090 = vadd.f32 0.0, %v7089
      %7091 = vmatmul.f32.gmra.mxu0 %v6977
      %v7092 = vpop.f32.mrf.mxu0
      %v7093 = vadd.f32 0.0, %v7092
      %7094 = vmatmul.f32.gmra.mxu0 %v6980
      %v7095 = vpop.f32.mrf.mxu0
      %v7096 = vadd.f32 0.0, %v7095
      %7097 = vmatmul.f32.gmra.mxu0 %v6983
      %v7098 = vpop.f32.mrf.mxu0
      %v7099 = vadd.f32 0.0, %v7098
      %7100 = vmatmul.f32.gmra.mxu0 %v6986
      %v7101 = vpop.f32.mrf.mxu0
      %v7102 = vadd.f32 0.0, %v7101
      %7103 = vdwg.mxu0
      %v7104 = vadd.f32 %v6794, %v7009
      %v7105 = vadd.f32 %v6795, %v7012
      %v7106 = vadd.f32 %v6796, %v7015
      %v7107 = vadd.f32 %v6797, %v7018
      %v7108 = vadd.f32 %v6798, %v7021
      %v7109 = vadd.f32 %v6799, %v7024
      %v7110 = vadd.f32 %v6800, %v7027
      %v7111 = vadd.f32 %v6801, %v7030
      %v7112 = vadd.f32 %v6802, %v7033
      %v7113 = vadd.f32 %v6803, %v7036
      %v7114 = vadd.f32 %v6804, %v7039
      %v7115 = vadd.f32 %v6805, %v7042
      %v7116 = vadd.f32 %v6806, %v7045
      %v7117 = vadd.f32 %v6807, %v7048
      %v7118 = vadd.f32 %v6808, %v7051
      %v7119 = vadd.f32 %v6809, %v7054
      %v7120 = vadd.f32 %v6810, %v7057
      %v7121 = vadd.f32 %v6811, %v7060
      %v7122 = vadd.f32 %v6812, %v7063
      %v7123 = vadd.f32 %v6813, %v7066
      %v7124 = vadd.f32 %v6814, %v7069
      %v7125 = vadd.f32 %v6815, %v7072
      %v7126 = vadd.f32 %v6816, %v7075
      %v7127 = vadd.f32 %v6817, %v7078
      %v7128 = vadd.f32 %v6818, %v7081
      %v7129 = vadd.f32 %v6819, %v7084
      %v7130 = vadd.f32 %v6820, %v7087
      %v7131 = vadd.f32 %v6821, %v7090
      %v7132 = vadd.f32 %v6822, %v7093
      %v7133 = vadd.f32 %v6823, %v7096
      %v7134 = vadd.f32 %v6824, %v7099
      %v7135 = vadd.f32 %v6825, %v7102
      %v7136 = vld [vmem:[#allocation4 + $0x28] sm:$0xff]
      %v7137 = vld [vmem:[#allocation4 + $0x30] sm:$0xff]
      %v7138 = vld [vmem:[#allocation4 + $0x38] sm:$0xff]
      %v7139 = vld [vmem:[#allocation4 + $0x40] sm:$0xff]
      %v7140 = vld [vmem:[#allocation4 + $0x48] sm:$0xff]
      %v7141 = vld [vmem:[#allocation4 + $0x50] sm:$0xff]
      %v7142 = vld [vmem:[#allocation4 + $0x58] sm:$0xff]
      %v7143 = vld [vmem:[#allocation4 + $0x60] sm:$0xff]
      %v7144 = vld [vmem:[#allocation4 + $0x68] sm:$0xff]
      %v7145 = vld [vmem:[#allocation4 + $0x70] sm:$0xff]
      %v7146 = vld [vmem:[#allocation4 + $0x78] sm:$0xff]
      %v7147 = vld [vmem:[#allocation4 + $0x80] sm:$0xff]
      %v7148 = vld [vmem:[#allocation4 + $0x88] sm:$0xff]
      %v7149 = vld [vmem:[#allocation4 + $0x90] sm:$0xff]
      %v7150 = vld [vmem:[#allocation4 + $0x98] sm:$0xff]
      %v7151 = vld [vmem:[#allocation4 + $0xa0] sm:$0xff]
      %v7152 = vld [vmem:[#allocation4 + $0xa8] sm:$0xff]
      %v7153 = vld [vmem:[#allocation4 + $0xb0] sm:$0xff]
      %v7154 = vld [vmem:[#allocation4 + $0xb8] sm:$0xff]
      %v7155 = vld [vmem:[#allocation4 + $0xc0] sm:$0xff]
      %v7156 = vld [vmem:[#allocation4 + $0xc8] sm:$0xff]
      %v7157 = vld [vmem:[#allocation4 + $0xd0] sm:$0xff]
      %v7158 = vld [vmem:[#allocation4 + $0xd8] sm:$0xff]
      %v7159 = vld [vmem:[#allocation4 + $0xe0] sm:$0xff]
      %v7160 = vld [vmem:[#allocation4 + $0xe8] sm:$0xff]
      %v7161 = vld [vmem:[#allocation4 + $0xf0] sm:$0xff]
      %v7162 = vld [vmem:[#allocation4 + $0xf8] sm:$0xff]
      %v7163 = vld [vmem:[#allocation4 + $0x100] sm:$0xff]
      %v7164 = vld [vmem:[#allocation4 + $0x108] sm:$0xff]
      %v7165 = vld [vmem:[#allocation4 + $0x110] sm:$0xff]
      %v7166 = vld [vmem:[#allocation4 + $0x118] sm:$0xff]
      %v7167 = vld [vmem:[#allocation4 + $0x120] sm:$0xff]
      %v7168 = vsel %vm1280, %v7136, 0.0
      %v7169 = vsel %vm1281, %v7137, 0.0
      %v7170 = vsel %vm1282, %v7138, 0.0
      %v7171 = vsel %vm1283, %v7139, 0.0
      %v7172 = vsel %vm1284, %v7140, 0.0
      %v7173 = vsel %vm1285, %v7141, 0.0
      %v7174 = vsel %vm1286, %v7142, 0.0
      %v7175 = vsel %vm1287, %v7143, 0.0
      %v7176 = vsel %vm1288, %v7144, 0.0
      %v7177 = vsel %vm1289, %v7145, 0.0
      %v7178 = vsel %vm1290, %v7146, 0.0
      %v7179 = vsel %vm1291, %v7147, 0.0
      %v7180 = vsel %vm1292, %v7148, 0.0
      %v7181 = vsel %vm1293, %v7149, 0.0
      %v7182 = vsel %vm1294, %v7150, 0.0
      %v7183 = vsel %vm1295, %v7151, 0.0
      %v7184 = vsel %vm1296, %v7152, 0.0
      %v7185 = vsel %vm1297, %v7153, 0.0
      %v7186 = vsel %vm1298, %v7154, 0.0
      %v7187 = vsel %vm1299, %v7155, 0.0
      %v7188 = vsel %vm1300, %v7156, 0.0
      %v7189 = vsel %vm1301, %v7157, 0.0
      %v7190 = vsel %vm1302, %v7158, 0.0
      %v7191 = vsel %vm1303, %v7159, 0.0
      %v7192 = vsel %vm1304, %v7160, 0.0
      %v7193 = vsel %vm1305, %v7161, 0.0
      %v7194 = vsel %vm1306, %v7162, 0.0
      %v7195 = vsel %vm1307, %v7163, 0.0
      %v7196 = vsel %vm1308, %v7164, 0.0
      %v7197 = vsel %vm1309, %v7165, 0.0
      %v7198 = vsel %vm1310, %v7166, 0.0
      %v7199 = vsel %vm1311, %v7167, 0.0
      %s7200 = scalar_lea.vmem %s14, 28
      %v7201 = vld [vmem:[%s7200] sm:$0xf]
      %v7203 = vsel %vm4682, %v7168, 0
      %v7206 = vsel %vm4682, %v7169, 0
      %v7209 = vsel %vm4682, %v7170, 0
      %v7212 = vsel %vm4682, %v7171, 0
      %v7215 = vsel %vm4682, %v7172, 0
      %v7218 = vsel %vm4682, %v7173, 0
      %v7221 = vsel %vm4682, %v7174, 0
      %v7224 = vsel %vm4682, %v7175, 0
      %v7227 = vsel %vm4682, %v7176, 0
      %v7230 = vsel %vm4682, %v7177, 0
      %v7233 = vsel %vm4682, %v7178, 0
      %v7236 = vsel %vm4682, %v7179, 0
      %v7239 = vsel %vm4682, %v7180, 0
      %v7242 = vsel %vm4682, %v7181, 0
      %v7245 = vsel %vm4682, %v7182, 0
      %v7248 = vsel %vm4682, %v7183, 0
      %v7251 = vsel %vm4682, %v7184, 0
      %v7254 = vsel %vm4682, %v7185, 0
      %v7257 = vsel %vm4682, %v7186, 0
      %v7260 = vsel %vm4682, %v7187, 0
      %v7263 = vsel %vm4682, %v7188, 0
      %v7266 = vsel %vm4682, %v7189, 0
      %v7269 = vsel %vm4682, %v7190, 0
      %v7272 = vsel %vm4682, %v7191, 0
      %v7275 = vsel %vm4682, %v7192, 0
      %v7278 = vsel %vm4682, %v7193, 0
      %v7281 = vsel %vm4682, %v7194, 0
      %v7284 = vsel %vm4682, %v7195, 0
      %v7287 = vsel %vm4682, %v7196, 0
      %v7290 = vsel %vm4682, %v7197, 0
      %v7293 = vsel %vm4682, %v7198, 0
      %v7296 = vsel %vm4682, %v7199, 0
      %v7299 = vsel %vm768, %v7201, 0
      %7301 = vmatpush.msra.mxu0 0.0
      %7302 = vmatpush.msra.mxu0 0.0
      %7303 = vmatpush.msra.mxu0 0.0
      %7304 = vmatpush.msra.mxu0 0.0
      %7305 = vmatpush.msra.mxu0 0.0
      %7306 = vmatpush.msra.mxu0 0.0
      %7307 = vmatpush.msra.mxu0 0.0
      %7308 = vmatpush.msra.mxu0 0.0
      %7309 = vmatpush.msra.mxu0 0.0
      %7310 = vmatpush.msra.mxu0 0.0
      %7311 = vmatpush.msra.mxu0 0.0
      %7312 = vmatpush.msra.mxu0 0.0
      %7313 = vmatpush.msra.mxu0 0.0
      %7314 = vmatpush.msra.mxu0 0.0
      %7315 = vmatpush.msra.mxu0 0.0
      %7316 = vmatpush.msra.mxu0 %v7299
      %7317 = vmatmul.f32.gmra.mxu0 %v7203
      %v7318 = vpop.f32.mrf.mxu0
      %v7319 = vadd.f32 0.0, %v7318
      %7320 = vmatmul.f32.gmra.mxu0 %v7206
      %v7321 = vpop.f32.mrf.mxu0
      %v7322 = vadd.f32 0.0, %v7321
      %7323 = vmatmul.f32.gmra.mxu0 %v7209
      %v7324 = vpop.f32.mrf.mxu0
      %v7325 = vadd.f32 0.0, %v7324
      %7326 = vmatmul.f32.gmra.mxu0 %v7212
      %v7327 = vpop.f32.mrf.mxu0
      %v7328 = vadd.f32 0.0, %v7327
      %7329 = vmatmul.f32.gmra.mxu0 %v7215
      %v7330 = vpop.f32.mrf.mxu0
      %v7331 = vadd.f32 0.0, %v7330
      %7332 = vmatmul.f32.gmra.mxu0 %v7218
      %v7333 = vpop.f32.mrf.mxu0
      %v7334 = vadd.f32 0.0, %v7333
      %7335 = vmatmul.f32.gmra.mxu0 %v7221
      %v7336 = vpop.f32.mrf.mxu0
      %v7337 = vadd.f32 0.0, %v7336
      %7338 = vmatmul.f32.gmra.mxu0 %v7224
      %v7339 = vpop.f32.mrf.mxu0
      %v7340 = vadd.f32 0.0, %v7339
      %7341 = vmatmul.f32.gmra.mxu0 %v7227
      %v7342 = vpop.f32.mrf.mxu0
      %v7343 = vadd.f32 0.0, %v7342
      %7344 = vmatmul.f32.gmra.mxu0 %v7230
      %v7345 = vpop.f32.mrf.mxu0
      %v7346 = vadd.f32 0.0, %v7345
      %7347 = vmatmul.f32.gmra.mxu0 %v7233
      %v7348 = vpop.f32.mrf.mxu0
      %v7349 = vadd.f32 0.0, %v7348
      %7350 = vmatmul.f32.gmra.mxu0 %v7236
      %v7351 = vpop.f32.mrf.mxu0
      %v7352 = vadd.f32 0.0, %v7351
      %7353 = vmatmul.f32.gmra.mxu0 %v7239
      %v7354 = vpop.f32.mrf.mxu0
      %v7355 = vadd.f32 0.0, %v7354
      %7356 = vmatmul.f32.gmra.mxu0 %v7242
      %v7357 = vpop.f32.mrf.mxu0
      %v7358 = vadd.f32 0.0, %v7357
      %7359 = vmatmul.f32.gmra.mxu0 %v7245
      %v7360 = vpop.f32.mrf.mxu0
      %v7361 = vadd.f32 0.0, %v7360
      %7362 = vmatmul.f32.gmra.mxu0 %v7248
      %v7363 = vpop.f32.mrf.mxu0
      %v7364 = vadd.f32 0.0, %v7363
      %7365 = vmatmul.f32.gmra.mxu0 %v7251
      %v7366 = vpop.f32.mrf.mxu0
      %v7367 = vadd.f32 0.0, %v7366
      %7368 = vmatmul.f32.gmra.mxu0 %v7254
      %v7369 = vpop.f32.mrf.mxu0
      %v7370 = vadd.f32 0.0, %v7369
      %7371 = vmatmul.f32.gmra.mxu0 %v7257
      %v7372 = vpop.f32.mrf.mxu0
      %v7373 = vadd.f32 0.0, %v7372
      %7374 = vmatmul.f32.gmra.mxu0 %v7260
      %v7375 = vpop.f32.mrf.mxu0
      %v7376 = vadd.f32 0.0, %v7375
      %7377 = vmatmul.f32.gmra.mxu0 %v7263
      %v7378 = vpop.f32.mrf.mxu0
      %v7379 = vadd.f32 0.0, %v7378
      %7380 = vmatmul.f32.gmra.mxu0 %v7266
      %v7381 = vpop.f32.mrf.mxu0
      %v7382 = vadd.f32 0.0, %v7381
      %7383 = vmatmul.f32.gmra.mxu0 %v7269
      %v7384 = vpop.f32.mrf.mxu0
      %v7385 = vadd.f32 0.0, %v7384
      %7386 = vmatmul.f32.gmra.mxu0 %v7272
      %v7387 = vpop.f32.mrf.mxu0
      %v7388 = vadd.f32 0.0, %v7387
      %7389 = vmatmul.f32.gmra.mxu0 %v7275
      %v7390 = vpop.f32.mrf.mxu0
      %v7391 = vadd.f32 0.0, %v7390
      %7392 = vmatmul.f32.gmra.mxu0 %v7278
      %v7393 = vpop.f32.mrf.mxu0
      %v7394 = vadd.f32 0.0, %v7393
      %7395 = vmatmul.f32.gmra.mxu0 %v7281
      %v7396 = vpop.f32.mrf.mxu0
      %v7397 = vadd.f32 0.0, %v7396
      %7398 = vmatmul.f32.gmra.mxu0 %v7284
      %v7399 = vpop.f32.mrf.mxu0
      %v7400 = vadd.f32 0.0, %v7399
      %7401 = vmatmul.f32.gmra.mxu0 %v7287
      %v7402 = vpop.f32.mrf.mxu0
      %v7403 = vadd.f32 0.0, %v7402
      %7404 = vmatmul.f32.gmra.mxu0 %v7290
      %v7405 = vpop.f32.mrf.mxu0
      %v7406 = vadd.f32 0.0, %v7405
      %7407 = vmatmul.f32.gmra.mxu0 %v7293
      %v7408 = vpop.f32.mrf.mxu0
      %v7409 = vadd.f32 0.0, %v7408
      %7410 = vmatmul.f32.gmra.mxu0 %v7296
      %v7411 = vpop.f32.mrf.mxu0
      %v7412 = vadd.f32 0.0, %v7411
      %7413 = vdwg.mxu0
      %v7414 = vadd.f32 %v7104, %v7319
      %v7415 = vadd.f32 %v7105, %v7322
      %v7416 = vadd.f32 %v7106, %v7325
      %v7417 = vadd.f32 %v7107, %v7328
      %v7418 = vadd.f32 %v7108, %v7331
      %v7419 = vadd.f32 %v7109, %v7334
      %v7420 = vadd.f32 %v7110, %v7337
      %v7421 = vadd.f32 %v7111, %v7340
      %v7422 = vadd.f32 %v7112, %v7343
      %v7423 = vadd.f32 %v7113, %v7346
      %v7424 = vadd.f32 %v7114, %v7349
      %v7425 = vadd.f32 %v7115, %v7352
      %v7426 = vadd.f32 %v7116, %v7355
      %v7427 = vadd.f32 %v7117, %v7358
      %v7428 = vadd.f32 %v7118, %v7361
      %v7429 = vadd.f32 %v7119, %v7364
      %v7430 = vadd.f32 %v7120, %v7367
      %v7431 = vadd.f32 %v7121, %v7370
      %v7432 = vadd.f32 %v7122, %v7373
      %v7433 = vadd.f32 %v7123, %v7376
      %v7434 = vadd.f32 %v7124, %v7379
      %v7435 = vadd.f32 %v7125, %v7382
      %v7436 = vadd.f32 %v7126, %v7385
      %v7437 = vadd.f32 %v7127, %v7388
      %v7438 = vadd.f32 %v7128, %v7391
      %v7439 = vadd.f32 %v7129, %v7394
      %v7440 = vadd.f32 %v7130, %v7397
      %v7441 = vadd.f32 %v7131, %v7400
      %v7442 = vadd.f32 %v7132, %v7403
      %v7443 = vadd.f32 %v7133, %v7406
      %v7444 = vadd.f32 %v7134, %v7409
      %v7445 = vadd.f32 %v7135, %v7412
      %v7446 = vld [vmem:[#allocation4 + $0x29] sm:$0xff]
      %v7447 = vld [vmem:[#allocation4 + $0x31] sm:$0xff]
      %v7448 = vld [vmem:[#allocation4 + $0x39] sm:$0xff]
      %v7449 = vld [vmem:[#allocation4 + $0x41] sm:$0xff]
      %v7450 = vld [vmem:[#allocation4 + $0x49] sm:$0xff]
      %v7451 = vld [vmem:[#allocation4 + $0x51] sm:$0xff]
      %v7452 = vld [vmem:[#allocation4 + $0x59] sm:$0xff]
      %v7453 = vld [vmem:[#allocation4 + $0x61] sm:$0xff]
      %v7454 = vld [vmem:[#allocation4 + $0x69] sm:$0xff]
      %v7455 = vld [vmem:[#allocation4 + $0x71] sm:$0xff]
      %v7456 = vld [vmem:[#allocation4 + $0x79] sm:$0xff]
      %v7457 = vld [vmem:[#allocation4 + $0x81] sm:$0xff]
      %v7458 = vld [vmem:[#allocation4 + $0x89] sm:$0xff]
      %v7459 = vld [vmem:[#allocation4 + $0x91] sm:$0xff]
      %v7460 = vld [vmem:[#allocation4 + $0x99] sm:$0xff]
      %v7461 = vld [vmem:[#allocation4 + $0xa1] sm:$0xff]
      %v7462 = vld [vmem:[#allocation4 + $0xa9] sm:$0xff]
      %v7463 = vld [vmem:[#allocation4 + $0xb1] sm:$0xff]
      %v7464 = vld [vmem:[#allocation4 + $0xb9] sm:$0xff]
      %v7465 = vld [vmem:[#allocation4 + $0xc1] sm:$0xff]
      %v7466 = vld [vmem:[#allocation4 + $0xc9] sm:$0xff]
      %v7467 = vld [vmem:[#allocation4 + $0xd1] sm:$0xff]
      %v7468 = vld [vmem:[#allocation4 + $0xd9] sm:$0xff]
      %v7469 = vld [vmem:[#allocation4 + $0xe1] sm:$0xff]
      %v7470 = vld [vmem:[#allocation4 + $0xe9] sm:$0xff]
      %v7471 = vld [vmem:[#allocation4 + $0xf1] sm:$0xff]
      %v7472 = vld [vmem:[#allocation4 + $0xf9] sm:$0xff]
      %v7473 = vld [vmem:[#allocation4 + $0x101] sm:$0xff]
      %v7474 = vld [vmem:[#allocation4 + $0x109] sm:$0xff]
      %v7475 = vld [vmem:[#allocation4 + $0x111] sm:$0xff]
      %v7476 = vld [vmem:[#allocation4 + $0x119] sm:$0xff]
      %v7477 = vld [vmem:[#allocation4 + $0x121] sm:$0xff]
      %v7478 = vsel %vm3352, %v7446, 0.0
      %v7479 = vsel %vm3353, %v7447, 0.0
      %v7480 = vsel %vm3354, %v7448, 0.0
      %v7481 = vsel %vm3355, %v7449, 0.0
      %v7482 = vsel %vm3356, %v7450, 0.0
      %v7483 = vsel %vm3357, %v7451, 0.0
      %v7484 = vsel %vm3358, %v7452, 0.0
      %v7485 = vsel %vm3359, %v7453, 0.0
      %v7486 = vsel %vm3360, %v7454, 0.0
      %v7487 = vsel %vm3361, %v7455, 0.0
      %v7488 = vsel %vm3362, %v7456, 0.0
      %v7489 = vsel %vm3363, %v7457, 0.0
      %v7490 = vsel %vm3364, %v7458, 0.0
      %v7491 = vsel %vm3365, %v7459, 0.0
      %v7492 = vsel %vm3366, %v7460, 0.0
      %v7493 = vsel %vm3367, %v7461, 0.0
      %v7494 = vsel %vm3368, %v7462, 0.0
      %v7495 = vsel %vm3369, %v7463, 0.0
      %v7496 = vsel %vm3370, %v7464, 0.0
      %v7497 = vsel %vm3371, %v7465, 0.0
      %v7498 = vsel %vm3372, %v7466, 0.0
      %v7499 = vsel %vm3373, %v7467, 0.0
      %v7500 = vsel %vm3374, %v7468, 0.0
      %v7501 = vsel %vm3375, %v7469, 0.0
      %v7502 = vsel %vm3376, %v7470, 0.0
      %v7503 = vsel %vm3377, %v7471, 0.0
      %v7504 = vsel %vm3378, %v7472, 0.0
      %v7505 = vsel %vm3379, %v7473, 0.0
      %v7506 = vsel %vm3380, %v7474, 0.0
      %v7507 = vsel %vm3381, %v7475, 0.0
      %v7508 = vsel %vm3382, %v7476, 0.0
      %v7509 = vsel %vm3383, %v7477, 0.0
      %s7510 = scalar_lea.vmem %s14, 32
      %v7511 = vld [vmem:[%s7510] sm:$0xf]
      %v7513 = vsel %vm4682, %v7478, 0
      %v7516 = vsel %vm4682, %v7479, 0
      %v7519 = vsel %vm4682, %v7480, 0
      %v7522 = vsel %vm4682, %v7481, 0
      %v7525 = vsel %vm4682, %v7482, 0
      %v7528 = vsel %vm4682, %v7483, 0
      %v7531 = vsel %vm4682, %v7484, 0
      %v7534 = vsel %vm4682, %v7485, 0
      %v7537 = vsel %vm4682, %v7486, 0
      %v7540 = vsel %vm4682, %v7487, 0
      %v7543 = vsel %vm4682, %v7488, 0
      %v7546 = vsel %vm4682, %v7489, 0
      %v7549 = vsel %vm4682, %v7490, 0
      %v7552 = vsel %vm4682, %v7491, 0
      %v7555 = vsel %vm4682, %v7492, 0
      %v7558 = vsel %vm4682, %v7493, 0
      %v7561 = vsel %vm4682, %v7494, 0
      %v7564 = vsel %vm4682, %v7495, 0
      %v7567 = vsel %vm4682, %v7496, 0
      %v7570 = vsel %vm4682, %v7497, 0
      %v7573 = vsel %vm4682, %v7498, 0
      %v7576 = vsel %vm4682, %v7499, 0
      %v7579 = vsel %vm4682, %v7500, 0
      %v7582 = vsel %vm4682, %v7501, 0
      %v7585 = vsel %vm4682, %v7502, 0
      %v7588 = vsel %vm4682, %v7503, 0
      %v7591 = vsel %vm4682, %v7504, 0
      %v7594 = vsel %vm4682, %v7505, 0
      %v7597 = vsel %vm4682, %v7506, 0
      %v7600 = vsel %vm4682, %v7507, 0
      %v7603 = vsel %vm4682, %v7508, 0
      %v7606 = vsel %vm4682, %v7509, 0
      %v7609 = vsel %vm768, %v7511, 0
      %7611 = vmatpush.msra.mxu0 0.0
      %7612 = vmatpush.msra.mxu0 0.0
      %7613 = vmatpush.msra.mxu0 0.0
      %7614 = vmatpush.msra.mxu0 0.0
      %7615 = vmatpush.msra.mxu0 0.0
      %7616 = vmatpush.msra.mxu0 0.0
      %7617 = vmatpush.msra.mxu0 0.0
      %7618 = vmatpush.msra.mxu0 0.0
      %7619 = vmatpush.msra.mxu0 0.0
      %7620 = vmatpush.msra.mxu0 0.0
      %7621 = vmatpush.msra.mxu0 0.0
      %7622 = vmatpush.msra.mxu0 0.0
      %7623 = vmatpush.msra.mxu0 0.0
      %7624 = vmatpush.msra.mxu0 0.0
      %7625 = vmatpush.msra.mxu0 0.0
      %7626 = vmatpush.msra.mxu0 %v7609
      %7627 = vmatmul.f32.gmra.mxu0 %v7513
      %v7628 = vpop.f32.mrf.mxu0
      %v7629 = vadd.f32 0.0, %v7628
      %7630 = vmatmul.f32.gmra.mxu0 %v7516
      %v7631 = vpop.f32.mrf.mxu0
      %v7632 = vadd.f32 0.0, %v7631
      %7633 = vmatmul.f32.gmra.mxu0 %v7519
      %v7634 = vpop.f32.mrf.mxu0
      %v7635 = vadd.f32 0.0, %v7634
      %7636 = vmatmul.f32.gmra.mxu0 %v7522
      %v7637 = vpop.f32.mrf.mxu0
      %v7638 = vadd.f32 0.0, %v7637
      %7639 = vmatmul.f32.gmra.mxu0 %v7525
      %v7640 = vpop.f32.mrf.mxu0
      %v7641 = vadd.f32 0.0, %v7640
      %7642 = vmatmul.f32.gmra.mxu0 %v7528
      %v7643 = vpop.f32.mrf.mxu0
      %v7644 = vadd.f32 0.0, %v7643
      %7645 = vmatmul.f32.gmra.mxu0 %v7531
      %v7646 = vpop.f32.mrf.mxu0
      %v7647 = vadd.f32 0.0, %v7646
      %7648 = vmatmul.f32.gmra.mxu0 %v7534
      %v7649 = vpop.f32.mrf.mxu0
      %v7650 = vadd.f32 0.0, %v7649
      %7651 = vmatmul.f32.gmra.mxu0 %v7537
      %v7652 = vpop.f32.mrf.mxu0
      %v7653 = vadd.f32 0.0, %v7652
      %7654 = vmatmul.f32.gmra.mxu0 %v7540
      %v7655 = vpop.f32.mrf.mxu0
      %v7656 = vadd.f32 0.0, %v7655
      %7657 = vmatmul.f32.gmra.mxu0 %v7543
      %v7658 = vpop.f32.mrf.mxu0
      %v7659 = vadd.f32 0.0, %v7658
      %7660 = vmatmul.f32.gmra.mxu0 %v7546
      %v7661 = vpop.f32.mrf.mxu0
      %v7662 = vadd.f32 0.0, %v7661
      %7663 = vmatmul.f32.gmra.mxu0 %v7549
      %v7664 = vpop.f32.mrf.mxu0
      %v7665 = vadd.f32 0.0, %v7664
      %7666 = vmatmul.f32.gmra.mxu0 %v7552
      %v7667 = vpop.f32.mrf.mxu0
      %v7668 = vadd.f32 0.0, %v7667
      %7669 = vmatmul.f32.gmra.mxu0 %v7555
      %v7670 = vpop.f32.mrf.mxu0
      %v7671 = vadd.f32 0.0, %v7670
      %7672 = vmatmul.f32.gmra.mxu0 %v7558
      %v7673 = vpop.f32.mrf.mxu0
      %v7674 = vadd.f32 0.0, %v7673
      %7675 = vmatmul.f32.gmra.mxu0 %v7561
      %v7676 = vpop.f32.mrf.mxu0
      %v7677 = vadd.f32 0.0, %v7676
      %7678 = vmatmul.f32.gmra.mxu0 %v7564
      %v7679 = vpop.f32.mrf.mxu0
      %v7680 = vadd.f32 0.0, %v7679
      %7681 = vmatmul.f32.gmra.mxu0 %v7567
      %v7682 = vpop.f32.mrf.mxu0
      %v7683 = vadd.f32 0.0, %v7682
      %7684 = vmatmul.f32.gmra.mxu0 %v7570
      %v7685 = vpop.f32.mrf.mxu0
      %v7686 = vadd.f32 0.0, %v7685
      %7687 = vmatmul.f32.gmra.mxu0 %v7573
      %v7688 = vpop.f32.mrf.mxu0
      %v7689 = vadd.f32 0.0, %v7688
      %7690 = vmatmul.f32.gmra.mxu0 %v7576
      %v7691 = vpop.f32.mrf.mxu0
      %v7692 = vadd.f32 0.0, %v7691
      %7693 = vmatmul.f32.gmra.mxu0 %v7579
      %v7694 = vpop.f32.mrf.mxu0
      %v7695 = vadd.f32 0.0, %v7694
      %7696 = vmatmul.f32.gmra.mxu0 %v7582
      %v7697 = vpop.f32.mrf.mxu0
      %v7698 = vadd.f32 0.0, %v7697
      %7699 = vmatmul.f32.gmra.mxu0 %v7585
      %v7700 = vpop.f32.mrf.mxu0
      %v7701 = vadd.f32 0.0, %v7700
      %7702 = vmatmul.f32.gmra.mxu0 %v7588
      %v7703 = vpop.f32.mrf.mxu0
      %v7704 = vadd.f32 0.0, %v7703
      %7705 = vmatmul.f32.gmra.mxu0 %v7591
      %v7706 = vpop.f32.mrf.mxu0
      %v7707 = vadd.f32 0.0, %v7706
      %7708 = vmatmul.f32.gmra.mxu0 %v7594
      %v7709 = vpop.f32.mrf.mxu0
      %v7710 = vadd.f32 0.0, %v7709
      %7711 = vmatmul.f32.gmra.mxu0 %v7597
      %v7712 = vpop.f32.mrf.mxu0
      %v7713 = vadd.f32 0.0, %v7712
      %7714 = vmatmul.f32.gmra.mxu0 %v7600
      %v7715 = vpop.f32.mrf.mxu0
      %v7716 = vadd.f32 0.0, %v7715
      %7717 = vmatmul.f32.gmra.mxu0 %v7603
      %v7718 = vpop.f32.mrf.mxu0
      %v7719 = vadd.f32 0.0, %v7718
      %7720 = vmatmul.f32.gmra.mxu0 %v7606
      %v7721 = vpop.f32.mrf.mxu0
      %v7722 = vadd.f32 0.0, %v7721
      %7723 = vdwg.mxu0
      %v7724 = vadd.f32 %v7414, %v7629
      %v7725 = vadd.f32 %v7415, %v7632
      %v7726 = vadd.f32 %v7416, %v7635
      %v7727 = vadd.f32 %v7417, %v7638
      %v7728 = vadd.f32 %v7418, %v7641
      %v7729 = vadd.f32 %v7419, %v7644
      %v7730 = vadd.f32 %v7420, %v7647
      %v7731 = vadd.f32 %v7421, %v7650
      %v7732 = vadd.f32 %v7422, %v7653
      %v7733 = vadd.f32 %v7423, %v7656
      %v7734 = vadd.f32 %v7424, %v7659
      %v7735 = vadd.f32 %v7425, %v7662
      %v7736 = vadd.f32 %v7426, %v7665
      %v7737 = vadd.f32 %v7427, %v7668
      %v7738 = vadd.f32 %v7428, %v7671
      %v7739 = vadd.f32 %v7429, %v7674
      %v7740 = vadd.f32 %v7430, %v7677
      %v7741 = vadd.f32 %v7431, %v7680
      %v7742 = vadd.f32 %v7432, %v7683
      %v7743 = vadd.f32 %v7433, %v7686
      %v7744 = vadd.f32 %v7434, %v7689
      %v7745 = vadd.f32 %v7435, %v7692
      %v7746 = vadd.f32 %v7436, %v7695
      %v7747 = vadd.f32 %v7437, %v7698
      %v7748 = vadd.f32 %v7438, %v7701
      %v7749 = vadd.f32 %v7439, %v7704
      %v7750 = vadd.f32 %v7440, %v7707
      %v7751 = vadd.f32 %v7441, %v7710
      %v7752 = vadd.f32 %v7442, %v7713
      %v7753 = vadd.f32 %v7443, %v7716
      %v7754 = vadd.f32 %v7444, %v7719
      %v7755 = vadd.f32 %v7445, %v7722
      %v7756 = vld [vmem:[%s15] sm:$0x1]
      %v7758 = vperm.slane %v7756, 0
      %v7760 = vmul.f32 %v7724, %v7758
      %v7761 = vmul.f32 %v7725, %v7758
      %v7762 = vmul.f32 %v7726, %v7758
      %v7763 = vmul.f32 %v7727, %v7758
      %v7764 = vmul.f32 %v7728, %v7758
      %v7765 = vmul.f32 %v7729, %v7758
      %v7766 = vmul.f32 %v7730, %v7758
      %v7767 = vmul.f32 %v7731, %v7758
      %v7768 = vmul.f32 %v7732, %v7758
      %v7769 = vmul.f32 %v7733, %v7758
      %v7770 = vmul.f32 %v7734, %v7758
      %v7771 = vmul.f32 %v7735, %v7758
      %v7772 = vmul.f32 %v7736, %v7758
      %v7773 = vmul.f32 %v7737, %v7758
      %v7774 = vmul.f32 %v7738, %v7758
      %v7775 = vmul.f32 %v7739, %v7758
      %v7776 = vmul.f32 %v7740, %v7758
      %v7777 = vmul.f32 %v7741, %v7758
      %v7778 = vmul.f32 %v7742, %v7758
      %v7779 = vmul.f32 %v7743, %v7758
      %v7780 = vmul.f32 %v7744, %v7758
      %v7781 = vmul.f32 %v7745, %v7758
      %v7782 = vmul.f32 %v7746, %v7758
      %v7783 = vmul.f32 %v7747, %v7758
      %v7784 = vmul.f32 %v7748, %v7758
      %v7785 = vmul.f32 %v7749, %v7758
      %v7786 = vmul.f32 %v7750, %v7758
      %v7787 = vmul.f32 %v7751, %v7758
      %v7788 = vmul.f32 %v7752, %v7758
      %v7789 = vmul.f32 %v7753, %v7758
      %v7790 = vmul.f32 %v7754, %v7758
      %v7791 = vmul.f32 %v7755, %v7758
      %v7792 = vld [vmem:[%s16] sm:$0x1]
      %v7794 = vperm.slane %v7792, 0
      %v7796 = vadd.f32 %v7760, %v7794
      %v7797 = vadd.f32 %v7761, %v7794
      %v7798 = vadd.f32 %v7762, %v7794
      %v7799 = vadd.f32 %v7763, %v7794
      %v7800 = vadd.f32 %v7764, %v7794
      %v7801 = vadd.f32 %v7765, %v7794
      %v7802 = vadd.f32 %v7766, %v7794
      %v7803 = vadd.f32 %v7767, %v7794
      %v7804 = vadd.f32 %v7768, %v7794
      %v7805 = vadd.f32 %v7769, %v7794
      %v7806 = vadd.f32 %v7770, %v7794
      %v7807 = vadd.f32 %v7771, %v7794
      %v7808 = vadd.f32 %v7772, %v7794
      %v7809 = vadd.f32 %v7773, %v7794
      %v7810 = vadd.f32 %v7774, %v7794
      %v7811 = vadd.f32 %v7775, %v7794
      %v7812 = vadd.f32 %v7776, %v7794
      %v7813 = vadd.f32 %v7777, %v7794
      %v7814 = vadd.f32 %v7778, %v7794
      %v7815 = vadd.f32 %v7779, %v7794
      %v7816 = vadd.f32 %v7780, %v7794
      %v7817 = vadd.f32 %v7781, %v7794
      %v7818 = vadd.f32 %v7782, %v7794
      %v7819 = vadd.f32 %v7783, %v7794
      %v7820 = vadd.f32 %v7784, %v7794
      %v7821 = vadd.f32 %v7785, %v7794
      %v7822 = vadd.f32 %v7786, %v7794
      %v7823 = vadd.f32 %v7787, %v7794
      %v7824 = vadd.f32 %v7788, %v7794
      %v7825 = vadd.f32 %v7789, %v7794
      %v7826 = vadd.f32 %v7790, %v7794
      %v7827 = vadd.f32 %v7791, %v7794
      %v7828 = vmax.f32 %v7796, 0.0
      %v7829 = vmax.f32 %v7797, 0.0
      %v7830 = vmax.f32 %v7798, 0.0
      %v7831 = vmax.f32 %v7799, 0.0
      %v7832 = vmax.f32 %v7800, 0.0
      %v7833 = vmax.f32 %v7801, 0.0
      %v7834 = vmax.f32 %v7802, 0.0
      %v7835 = vmax.f32 %v7803, 0.0
      %v7836 = vmax.f32 %v7804, 0.0
      %v7837 = vmax.f32 %v7805, 0.0
      %v7838 = vmax.f32 %v7806, 0.0
      %v7839 = vmax.f32 %v7807, 0.0
      %v7840 = vmax.f32 %v7808, 0.0
      %v7841 = vmax.f32 %v7809, 0.0
      %v7842 = vmax.f32 %v7810, 0.0
      %v7843 = vmax.f32 %v7811, 0.0
      %v7844 = vmax.f32 %v7812, 0.0
      %v7845 = vmax.f32 %v7813, 0.0
      %v7846 = vmax.f32 %v7814, 0.0
      %v7847 = vmax.f32 %v7815, 0.0
      %v7848 = vmax.f32 %v7816, 0.0
      %v7849 = vmax.f32 %v7817, 0.0
      %v7850 = vmax.f32 %v7818, 0.0
      %v7851 = vmax.f32 %v7819, 0.0
      %v7852 = vmax.f32 %v7820, 0.0
      %v7853 = vmax.f32 %v7821, 0.0
      %v7854 = vmax.f32 %v7822, 0.0
      %v7855 = vmax.f32 %v7823, 0.0
      %v7856 = vmax.f32 %v7824, 0.0
      %v7857 = vmax.f32 %v7825, 0.0
      %v7858 = vmax.f32 %v7826, 0.0
      %v7859 = vmax.f32 %v7827, 0.0
      %7860 = vst.msk [vmem:[%s568] sm:$0xff] %vm4682, %v7828
      %7861 = vst.msk [vmem:[%s568 + $0x8] sm:$0xff] %vm4682, %v7829
      %7862 = vst.msk [vmem:[%s568 + $0x10] sm:$0xff] %vm4682, %v7830
      %7863 = vst.msk [vmem:[%s568 + $0x18] sm:$0xff] %vm4682, %v7831
      %7864 = vst.msk [vmem:[%s568 + $0x20] sm:$0xff] %vm4682, %v7832
      %7865 = vst.msk [vmem:[%s568 + $0x28] sm:$0xff] %vm4682, %v7833
      %7866 = vst.msk [vmem:[%s568 + $0x30] sm:$0xff] %vm4682, %v7834
      %7867 = vst.msk [vmem:[%s568 + $0x38] sm:$0xff] %vm4682, %v7835
      %7868 = vst.msk [vmem:[%s568 + $0x40] sm:$0xff] %vm4682, %v7836
      %7869 = vst.msk [vmem:[%s568 + $0x48] sm:$0xff] %vm4682, %v7837
      %7870 = vst.msk [vmem:[%s568 + $0x50] sm:$0xff] %vm4682, %v7838
      %7871 = vst.msk [vmem:[%s568 + $0x58] sm:$0xff] %vm4682, %v7839
      %7872 = vst.msk [vmem:[%s568 + $0x60] sm:$0xff] %vm4682, %v7840
      %7873 = vst.msk [vmem:[%s568 + $0x68] sm:$0xff] %vm4682, %v7841
      %7874 = vst.msk [vmem:[%s568 + $0x70] sm:$0xff] %vm4682, %v7842
      %7875 = vst.msk [vmem:[%s568 + $0x78] sm:$0xff] %vm4682, %v7843
      %7876 = vst.msk [vmem:[%s568 + $0x80] sm:$0xff] %vm4682, %v7844
      %7877 = vst.msk [vmem:[%s568 + $0x88] sm:$0xff] %vm4682, %v7845
      %7878 = vst.msk [vmem:[%s568 + $0x90] sm:$0xff] %vm4682, %v7846
      %7879 = vst.msk [vmem:[%s568 + $0x98] sm:$0xff] %vm4682, %v7847
      %7880 = vst.msk [vmem:[%s568 + $0xa0] sm:$0xff] %vm4682, %v7848
      %7881 = vst.msk [vmem:[%s568 + $0xa8] sm:$0xff] %vm4682, %v7849
      %7882 = vst.msk [vmem:[%s568 + $0xb0] sm:$0xff] %vm4682, %v7850
      %7883 = vst.msk [vmem:[%s568 + $0xb8] sm:$0xff] %vm4682, %v7851
      %7884 = vst.msk [vmem:[%s568 + $0xc0] sm:$0xff] %vm4682, %v7852
      %7885 = vst.msk [vmem:[%s568 + $0xc8] sm:$0xff] %vm4682, %v7853
      %7886 = vst.msk [vmem:[%s568 + $0xd0] sm:$0xff] %vm4682, %v7854
      %7887 = vst.msk [vmem:[%s568 + $0xd8] sm:$0xff] %vm4682, %v7855
      %7888 = vst.msk [vmem:[%s568 + $0xe0] sm:$0xff] %vm4682, %v7856
      %7889 = vst.msk [vmem:[%s568 + $0xe8] sm:$0xff] %vm4682, %v7857
      %7890 = vst.msk [vmem:[%s568 + $0xf0] sm:$0xff] %vm4682, %v7858
      %7891 = vst.msk [vmem:[%s568 + $0xf8] sm:$0xff] %vm4682, %v7859
      %p7892 = scmp.lt.s32.totalorder %s28, 1
      %s7893 = scalar_select %p7892, %s28, 1
      %s7894 = smul.addr %s7893, 32
      %s7895 = smul.addr %s7894, 8
      %s7896 = scalar_lea.vmem %s17, %s7895
      // Predicated region
      $region89: #{corner_pool_forward.1} parent=87 // pred_check
        %p7897 = pneg %p413
      $region90: #{corner_pool_forward.1} parent=87 // pred_check_branch
        %7899 = sbr.rel (%p7897) target = $region92
      $region91: #{corner_pool_forward.1} parent=87 // pred_region
        _
      $region92: #{corner_pool_forward.1} parent=87 // pred_fallthru
        _
    $region88: #{corner_pool_forward.1} parent=5 // pred_fallthru
      _
    %p7900 = scmp.le.s32.totalorder 2, %s23
    // Predicated region
    $region93: #{corner_pool_forward.1} parent=5 // pred_check
      %p7901 = pneg %p7900
    $region94: #{corner_pool_forward.1} parent=5 // pred_check_branch
      %7903 = sbr.rel (%p7901) target = $region96
    $region95: #{corner_pool_forward.1} parent=5 // pred_region
      %s7904 = ssub.s32 %s23, 2
      // Predicated region
      $region97: #{corner_pool_forward.1} parent=95 // pred_check
        %p7905 = pneg %p419
      $region98: #{corner_pool_forward.1} parent=95 // pred_check_branch
        %7907 = sbr.rel (%p7905) target = $region100
      $region99: #{corner_pool_forward.1} parent=95 // pred_region
        %p7908 = scmp.lt.s32.totalorder %s29, 1
        %s7909 = scalar_select %p7908, %s29, 1
        %s7910 = smul.addr %s7909, 32
        %s7911 = smul.addr %s7910, 8
        %s7912 = scalar_lea.vmem %s17, %s7911
      $region100: #{corner_pool_forward.1} parent=95 // pred_fallthru
        _
    $region96: #{corner_pool_forward.1} parent=5 // pred_fallthru
      _
  $region6: #{corner_pool_forward.1} parent=0 // loop_footer
    %s27 = sadd.s32 1, %s23
  $region7: #{corner_pool_forward.1} parent=0 // loop_footer_branch
    %22 = sbr.rel target = $region3
  $region8: #{corner_pool_forward.1} parent=0 // loop_exit
    _

</llo_original>
